<compile_context>
chip_gen: v5e
topology: v5e:2x2
jax: 0.10.0
libtpu: 0.0.40
codegen_flags: <defaults>
</compile_context>

<pallas_src>
import functools
import math

import jax
import jax.numpy as jnp
from jax.experimental import pallas as pl
from jax.experimental.pallas import tpu as pltpu

NUM_BINS = 10
TAIL_BOUND = 5.0
LOG_2PI = math.log(2.0 * math.pi)
N_POST_FLOWS = 4            # the PyTorch module hard-codes 4 posterior ConvFlows
LANE = 128                  # TPU lane width; time axis is padded to a multiple of this

DDS_KEYS = ('pre_w', 'pre_b', 'sep_w', 'sep_b', 'ln1_g', 'ln1_b',
            'w1x1', 'b1x1', 'ln2_g', 'ln2_b', 'proj_w', 'proj_b')
N_DDS = len(DDS_KEYS)


# ----------------------------------------------------------------------------- helpers

def _mm(w, x):
    # bf16 MXU matmul with f32 accumulation (weights/activations are small; the cast
    # is cheap VPU work and buys 2x MXU throughput + half the operand footprint).
    return jnp.dot(w.astype(jnp.bfloat16), x.astype(jnp.bfloat16),
                   preferred_element_type=jnp.float32)


def _softplus(x):
    return jnp.maximum(x, 0.0) + jnp.log(1.0 + jnp.exp(-jnp.abs(x)))


def _sigmoid(x):
    # exact: sigma(x) = 0.5*(tanh(x/2)+1)  (tanh lands on the EUP slot)
    return 0.5 * (jnp.tanh(0.5 * x) + 1.0)


def _log_sigmoid(x):
    return -_softplus(-x)


def _gelu(x):
    # tanh-approximation GELU (see TODO above)
    c = 0.7978845608028654  # sqrt(2/pi)
    return 0.5 * x * (1.0 + jnp.tanh(c * (x + 0.044715 * x * x * x)))


def _layer_norm_channels(y, gamma, beta, eps=1e-5):
    # LayerNorm over the channel (sublane) axis; var = E[y^2] - mu^2 so the two
    # cross-sublane reductions are independent (no mean->center->mean chain).
    inv_c = 1.0 / y.shape[0]
    mu = jnp.sum(y, axis=0, keepdims=True) * inv_c
    ms = jnp.sum(y * y, axis=0, keepdims=True) * inv_c
    var = jnp.maximum(ms - mu * mu, 0.0)
    return (y - mu) * jax.lax.rsqrt(var + eps) * gamma + beta


def _msum(a):
    # full masked-sum (inputs already carry the mask); keeps everything rank-2 -> (1, 1)
    return jnp.sum(jnp.sum(a, axis=1, keepdims=True), axis=0, keepdims=True)


# ---------------------------------------------------------------- shared DDSConv body

def _dds_body(x, g, m, pre_w, pre_b, sep_w, sep_b, ln1_g, ln1_b,
              w1, b1, ln2_g, ln2_b, proj_w, proj_b):
    """1x1 'pre' conv -> DDSConv (3 dilated depthwise convs, channel-LN, GELU, 1x1)
    -> 1x1 'proj' conv, masked.  x: (Cin, T), g: (Cf, T) or None, m: (1, T)."""
    cin, T = x.shape
    if cin == 1:
        h = pre_w * x + pre_b
    else:
        h = _mm(pre_w, x) + pre_b
    if g is not None:
        h = h + g                                  # g may be bf16; promotes to f32

    n_layers, cf, ksize = sep_w.shape
    lane = jax.lax.broadcasted_iota(jnp.int32, (1, T), 1)

    for i in range(n_layers):
        dil = ksize ** i
        pad = (ksize * dil - dil) // 2
        xm = h * m
        y = None
        for k in range(ksize):
            off = k * dil - pad                    # tap reads xm[:, t + off]
            wk = sep_w[i, :, k:k + 1]
            if off == 0:
                tap = xm
            else:
                # pltpu.roll matches jnp.roll: out[t] = in[(t - shift) % T].
                tap = pltpu.roll(xm, (-off) % T, axis=1)
                if off > 0:
                    tap = jnp.where(lane < T - off, tap, 0.0)   # zero wrapped lanes
                else:
                    tap = jnp.where(lane >= -off, tap, 0.0)
            y = wk * tap if y is None else y + wk * tap
        y = y + sep_b[i]
        y = _layer_norm_channels(y, ln1_g[i], ln1_b[i])
        y = _gelu(y)
        y = _mm(w1[i], y) + b1[i]
        y = _layer_norm_channels(y, ln2_g[i], ln2_b[i])
        y = _gelu(y)
        h = h + y

    h = h * m
    out = _mm(proj_w, h) + proj_b
    return out * m


# -------------------------------------------------- rational-quadratic spline (forward)

def _spline_body(x1, m, uw, uh, ud):
    """x1: (1, T) input, m: (1, T) mask, uw/uh: (nb, T), ud: (nb-1, T) (un-padded).
    Returns (y (1, T), masked logdet sum (1, 1))."""
    nb = NUM_BINS
    min_bin = 1e-3
    min_d = 1e-3
    left, right = -TAIL_BOUND, TAIL_BOUND          # width and height ranges coincide
    T = x1.shape[1]

    inside = jnp.logical_and(x1 >= left, x1 <= right)
    xi = jnp.clip(x1, left, right)

    # prefix-sum matrix: cum[j] = sum_{i<j} p[i]  (j = 0..nb)
    row = jax.lax.broadcasted_iota(jnp.int32, (nb + 1, nb), 0)
    col = jax.lax.broadcasted_iota(jnp.int32, (nb + 1, nb), 1)
    prefix = (col < row).astype(jnp.float32)                    # (nb+1, nb)

    # merged widths/heights knots: one softmax + one prefix matmul over [uw | uh]
    ub = jnp.concatenate([uw, uh], axis=1)                      # (nb, 2T), lane-aligned
    mx = jnp.max(ub, axis=0, keepdims=True)
    e = jnp.exp(ub - mx)
    p = e * pl.reciprocal(jnp.sum(e, axis=0, keepdims=True), approx=False)
    p = min_bin + (1.0 - min_bin * nb) * p
    cum = jnp.dot(prefix, p, preferred_element_type=jnp.float32)  # (nb+1, 2T)
    cum = (right - left) * cum + left
    row2 = jax.lax.broadcasted_iota(jnp.int32, (nb + 1, 2 * T), 0)
    cum = jnp.where(row2 == nb, right, cum)                     # exact right knot
    sizes = cum[1:, :] - cum[:-1, :]                            # (nb, 2T)
    cumw, cumh = cum[:, :T], cum[:, T:]
    widths, heights = sizes[:, :T], sizes[:, T:]

    # 'linear' tails: boundary derivative is exactly 1.0 (= min_d + softplus(DERIV_CONST))
    dmid = min_d + _softplus(ud)                                # (nb-1, T)
    one = jnp.ones((1, T), jnp.float32)
    d_lo = jnp.concatenate([one, dmid], axis=0)                 # derivatives[:nb]
    d_hi = jnp.concatenate([dmid, one], axis=0)                 # derivatives[1:]

    # searchsorted(cumwidths, x): sum(x >= locs) - 1, eps added to last knot
    row_t = jax.lax.broadcasted_iota(jnp.int32, (nb + 1, T), 0)
    locs = jnp.where(row_t == nb, cumw + 1e-6, cumw)
    idx = jnp.sum((xi >= locs).astype(jnp.int32), axis=0, keepdims=True) - 1
    idx = jnp.clip(idx, 0, nb - 1)                              # (1, T)

    iota_b = jax.lax.broadcasted_iota(jnp.int32, (nb, T), 0)
    onehot = (iota_b == idx).astype(jnp.float32)                # (nb, T)

    def gather(v):
        return jnp.sum(v * onehot, axis=0, keepdims=True)       # (1, T)

    in_cw = gather(cumw[:nb, :])
    in_w = gather(widths)
    in_ch = gather(cumh[:nb, :])
    in_h = gather(heights)
    in_d = gather(d_lo)
    in_d1 = gather(d_hi)

    inv_w = pl.reciprocal(in_w, approx=False)
    in_delta = in_h * inv_w
    theta = (xi - in_cw) * inv_w
    t1m = theta * (1.0 - theta)
    numer = in_h * (in_delta * theta * theta + in_d * t1m)
    denom = in_delta + (in_d + in_d1 - 2.0 * in_delta) * t1m
    inv_den = pl.reciprocal(denom, approx=False)
    y_spline = in_ch + numer * inv_den
    dnum = (in_delta * in_delta) * (in_d1 * theta * theta + 2.0 * in_delta * t1m
                                    + in_d * (1.0 - theta) * (1.0 - theta))
    lad = jnp.log(dnum * (inv_den * inv_den))    # = log(dnum) - 2*log(denom), one log

    y = jnp.where(inside, y_spline, x1)          # identity outside the interval
    lad = jnp.where(inside, lad, 0.0)
    return y, _msum(lad * m)


# ------------------------------------------------------------ kernel 1: fused encoder

def _encoder_kernel(*refs):
    x_ref, w_ref, m_ref = refs[0], refs[1], refs[2]
    main_refs = refs[3:3 + N_DDS]
    post_refs = refs[3 + N_DDS:3 + 2 * N_DDS]
    out_ref = refs[3 + 2 * N_DDS]

    x = x_ref[0]                 # (Cin, Tp)
    wv = w_ref[0]                # (1, Tp)
    m = m_ref[0]                 # (1, Tp)

    x_enc = _dds_body(x, None, m, *(r[...] for r in main_refs))   # pre/convs/proj
    h_w = _dds_body(wv, None, m, *(r[...] for r in post_refs))    # post_pre/.../post_proj

    out_ref[0, 0] = (x_enc + h_w).astype(out_ref.dtype)   # g for the posterior flows
    out_ref[0, 1] = x_enc.astype(out_ref.dtype)            # g for the prior flows


def _encode(x, w, mask, pmain, ppost):
    B, cin, Tp = x.shape
    cf = pmain['proj_w'].shape[0]

    data_specs = [
        pl.BlockSpec((1, cin, Tp), lambda b: (b, 0, 0)),
        pl.BlockSpec((1, 1, Tp), lambda b: (b, 0, 0)),
        pl.BlockSpec((1, 1, Tp), lambda b: (b, 0, 0)),
    ]

    def const_specs(p):
        return [pl.BlockSpec(p[k].shape, (lambda b, nd=p[k].ndim: (0,) * nd))
                for k in DDS_KEYS]

    return pl.pallas_call(
        _encoder_kernel,
        out_shape=jax.ShapeDtypeStruct((B, 2, cf, Tp), jnp.bfloat16),
        grid=(B,),
        in_specs=data_specs + const_specs(pmain) + const_specs(ppost),
        out_specs=pl.BlockSpec((1, 2, cf, Tp), lambda b: (b, 0, 0, 0)),
        compiler_params=pltpu.CompilerParams(
            dimension_semantics=("parallel",),
            vmem_limit_bytes=64 * 1024 * 1024),
    )(x, w, mask, *[pmain[k] for k in DDS_KEYS], *[ppost[k] for k in DDS_KEYS])


# --------------------------------------------------------- kernel 2: fused flow program

def _flows_kernel(*args, scale, n_post):
    eq_ref, w_ref, m_ref, g_ref, eaq_ref, eam_ref = args[:6]
    fr = args[6:6 + N_DDS]                     # stacked per-flow DDS/proj weights
    out_ref = args[6 + N_DDS]
    z_scr, ldq_scr, ldm_scr, lqb_scr = args[7 + N_DDS:11 + N_DDS]

    f = pl.program_id(1)
    m = m_ref[0]                               # (1, Tp)
    nb = NUM_BINS

    # ---- init (first posterior flow): ElementwiseAffine + constant logq terms ----
    @pl.when(f == 0)
    def _():
        eq = eq_ref[0]                         # (2, Tp)
        ea_m, ea_l = eaq_ref[0], eaq_ref[1]    # (2, 1) each
        z_scr[...] = (ea_m + jnp.exp(ea_l) * eq) * m
        ldq_scr[...] = _msum(ea_l * m)
        ldm_scr[...] = jnp.zeros((1, 1), jnp.float32)
        lqb_scr[...] = -_msum(0.5 * (LOG_2PI + eq * eq) * m)

    # ---- one ConvFlow (+ Flip) per grid step ----
    z = z_scr[...]                             # (2, Tp)
    x0 = z[0:1, :]
    x1 = z[1:2, :]
    g = g_ref[0, 0]                            # (cf, Tp) bf16; slot chosen by index_map

    h = _dds_body(x0, g, m, *(r[0] for r in fr))           # (3*nb - 1, Tp), masked
    uw = h[:nb, :] * scale
    uh = h[nb:2 * nb, :] * scale
    ud = h[2 * nb:, :]

    y1, ld = _spline_body(x1, m, uw, uh, ud)
    # ConvFlow output cat([x0, y1]) followed by Flip -> [y1, x0]; store rows directly
    z_scr[0:1, :] = y1 * m
    z_scr[1:2, :] = x0 * m

    zero = jnp.zeros((1, 1), jnp.float32)
    is_q = f < n_post
    ldq_scr[...] = ldq_scr[...] + jnp.where(is_q, ld, zero)
    ldm_scr[...] = ldm_scr[...] + jnp.where(is_q, zero, ld)

    # ---- posterior -> prior transition after the last posterior flow ----
    @pl.when(f == n_post - 1)
    def _():
        zq = z_scr[...]
        z_u = zq[0:1, :]
        z1 = zq[1:2, :]
        wv = w_ref[0]                          # (1, Tp)
        u = _sigmoid(z_u) * m
        z0 = (wv - u) * m
        ldq_scr[...] = ldq_scr[...] + _msum((_log_sigmoid(z_u) + _log_sigmoid(-z_u)) * m)
        # Log flow
        z0l = jnp.log(jnp.maximum(z0, 1e-5)) * m
        ldm_scr[...] = ldm_scr[...] + _msum(-z0l)
        # prior ElementwiseAffine (per-channel, stored row by row)
        ea_m, ea_l = eam_ref[0], eam_ref[1]    # (2, 1) each
        z_scr[0:1, :] = (ea_m[0:1] + jnp.exp(ea_l[0:1]) * z0l) * m
        z_scr[1:2, :] = (ea_m[1:2] + jnp.exp(ea_l[1:2]) * z1) * m
        ldm_scr[...] = ldm_scr[...] + _msum(ea_l * m)

    # ---- finalize: nll + logq ----
    @pl.when(f == pl.num_programs(1) - 1)
    def _():
        zf = z_scr[...]
        nll = _msum(0.5 * (LOG_2PI + zf * zf) * m) - ldm_scr[...]
        logq = lqb_scr[...] - ldq_scr[...]
        out_ref[0] = nll + logq


def _run_flows(e_q, w, mask, g_both, ea_q, ea_main, fp):
    B, _, Tp = e_q.shape
    n_total = fp['pre_w'].shape[0]             # 4 posterior + n_flows prior ConvFlows
    cf = fp['pre_w'].shape[1]
    scale = 1.0 / math.sqrt(cf)                # filter_channels == cf

    kernel = functools.partial(_flows_kernel, scale=scale, n_post=N_POST_FLOWS)

    data_specs = [
        pl.BlockSpec((1, 2, Tp), lambda b, f: (b, 0, 0)),        # e_q
        pl.BlockSpec((1, 1, Tp), lambda b, f: (b, 0, 0)),        # w
        pl.BlockSpec((1, 1, Tp), lambda b, f: (b, 0, 0)),        # mask
        # g slot selected in the index_map: posterior (slot 0) for f < 4, prior (slot 1)
        pl.BlockSpec((1, 1, cf, Tp),
                     lambda b, f: (b, (f >= N_POST_FLOWS).astype(jnp.int32), 0, 0)),
        pl.BlockSpec((2, 2, 1), lambda b, f: (0, 0, 0)),          # posterior EA [m; logs]
        pl.BlockSpec((2, 2, 1), lambda b, f: (0, 0, 0)),          # prior EA [m; logs]
    ]
    flow_specs = [
        pl.BlockSpec((1,) + fp[k].shape[1:],
                     (lambda b, f, nd=fp[k].ndim: (f,) + (0,) * (nd - 1)))
        for k in DDS_KEYS
    ]

    out = pl.pallas_call(
        kernel,
        out_shape=jax.ShapeDtypeStruct((B, 1, 1), jnp.float32),
        grid=(B, n_total),
        in_specs=data_specs + flow_specs,
        out_specs=pl.BlockSpec((1, 1, 1), lambda b, f: (b, 0, 0)),
        scratch_shapes=[pltpu.VMEM((2, Tp), jnp.float32),   # resident z
                        pltpu.VMEM((1, 1), jnp.float32),    # logdet_tot_q
                        pltpu.VMEM((1, 1), jnp.float32),    # logdet_tot (prior)
                        pltpu.VMEM((1, 1), jnp.float32)],   # -0.5*sum(log2pi + e_q^2)
        compiler_params=pltpu.CompilerParams(
            dimension_semantics=("parallel", "arbitrary"),
            vmem_limit_bytes=64 * 1024 * 1024),
    )(e_q, w, mask, g_both, ea_q, ea_main, *[fp[k] for k in DDS_KEYS])
    return out[:, 0, 0]


# ------------------------------------------------------------------- full forward pass

def sdp_forward(params, x, x_mask, w, e_q):
    """StochasticDurationPredictor.forward, reverse=False, g=None (gin_channels=0)."""
    B, _, T = x.shape
    Tp = ((T + LANE - 1) // LANE) * LANE       # lane-dense time axis
    pad = Tp - T
    if pad:
        pz = lambda a: jnp.pad(a, ((0, 0), (0, 0), (0, pad)))
        x, x_mask, w, e_q = pz(x), pz(x_mask), pz(w), pz(e_q)

    # fused pre/convs/proj (x) + post_pre/post_convs/post_proj (w) -> stacked bf16 g
    g_both = _encode(x, w, x_mask, params['main'], params['post'])

    # fused posterior + prior flow program -> nll + logq per batch element
    return _run_flows(e_q, w, x_mask, g_both,
                      params['ea_q'], params['ea_main'], params['flows'])


# ----------------------------------------------------------------- deterministic params

def _init_dds_params(key, cin, cf, cout, n_layers, ksize, zero_proj=False, scale=0.2):
    ks = jax.random.split(key, 8)
    p = {
        'pre_w': scale * jax.random.normal(ks[0], (cf, cin), jnp.float32),
        'pre_b': scale * jax.random.normal(ks[1], (cf, 1), jnp.float32),
        'sep_w': scale * jax.random.normal(ks[2], (n_layers, cf, ksize), jnp.float32),
        'sep_b': scale * jax.random.normal(ks[3], (n_layers, cf, 1), jnp.float32),
        'ln1_g': jnp.ones((n_layers, cf, 1), jnp.float32),
        'ln1_b': jnp.zeros((n_layers, cf, 1), jnp.float32),
        'w1x1': scale * jax.random.normal(ks[4], (n_layers, cf, cf), jnp.float32),
        'b1x1': scale * jax.random.normal(ks[5], (n_layers, cf, 1), jnp.float32),
        'ln2_g': jnp.ones((n_layers, cf, 1), jnp.float32),
        'ln2_b': jnp.zeros((n_layers, cf, 1), jnp.float32),
    }
    if zero_proj:
        # ConvFlow zero-initializes its spline-parameter projection (matches PyTorch)
        p['proj_w'] = jnp.zeros((cout, cf), jnp.float32)
        p['proj_b'] = jnp.zeros((cout, 1), jnp.float32)
    else:
        p['proj_w'] = scale * jax.random.normal(ks[6], (cout, cf), jnp.float32)
        p['proj_b'] = scale * jax.random.normal(ks[7], (cout, 1), jnp.float32)
    return p


def make_params(key, in_channels, kernel_size, n_flows=4):
    filt = in_channels                         # module sets filter_channels = in_channels
    cf_out = 3 * NUM_BINS - 1                  # ConvFlow proj output channels (half=1)
    keys = jax.random.split(key, 2 + N_POST_FLOWS + n_flows)

    post_cfs = [_init_dds_params(keys[2 + i], 1, filt, cf_out, 3, kernel_size,
                                 zero_proj=True) for i in range(N_POST_FLOWS)]
    main_cfs = [_init_dds_params(keys[2 + N_POST_FLOWS + i], 1, filt, cf_out, 3,
                                 kernel_size, zero_proj=True) for i in range(n_flows)]
    flows = {k: jnp.stack([d[k] for d in (post_cfs + main_cfs)], axis=0)
             for k in DDS_KEYS}

    ea = jnp.zeros((2, 2, 1), jnp.float32)     # [m ; logs], both zero-init as in PyTorch
    return {
        'main': _init_dds_params(keys[0], in_channels, filt, filt, 3, kernel_size),
        'post': _init_dds_params(keys[1], 1, filt, filt, 3, kernel_size),
        'ea_q': ea,
        'ea_main': ea,
        'flows': flows,
    }


# --------------------------------------------------------------------------------- main

if __name__ == "__main__":
    B, C, T = 2, 8, 16          # batch, in_channels (= filter_channels), time
    kernel_size = 3
    n_flows = 4                 # gin_channels = 0 -> no cond conv, g=None

    key = jax.random.PRNGKey(0)
    k_par, k_x, k_w, k_e = jax.random.split(key, 4)

    params = make_params(k_par, C, kernel_size, n_flows)

    x = jax.random.normal(k_x, (B, C, T), jnp.float32)
    lengths = jnp.array([T, 12], jnp.int32)
    x_mask = (jnp.arange(T)[None, None, :] < lengths[:, None, None]).astype(jnp.float32)
    w = (jnp.abs(jax.random.normal(k_w, (B, 1, T), jnp.float32)) + 1.0) * x_mask
    # torch.randn noise of the posterior path, generated deterministically here:
    e_q = jax.random.normal(k_e, (B, 2, T), jnp.float32) * x_mask

    out = jax.jit(sdp_forward)(params, x, x_mask, w, e_q)   # = nll + logq, shape (B,)
    out = jax.block_until_ready(out)

    assert out.shape == (B,)
    assert bool(jnp.all(jnp.isfinite(out)))
    print("KERNEL_OK")
</pallas_src>

<mosaic_0001>
module attributes {stable_mosaic.version = 11 : i64} {
  func.func @_encoder_kernel(%arg0: i32, %arg1: memref<1x8x128xf32, #tpu.memory_space<vmem>>, %arg2: memref<1x1x128xf32, #tpu.memory_space<vmem>>, %arg3: memref<1x1x128xf32, #tpu.memory_space<vmem>>, %arg4: memref<8x8xf32, #tpu.memory_space<vmem>>, %arg5: memref<8x1xf32, #tpu.memory_space<vmem>>, %arg6: memref<3x8x3xf32, #tpu.memory_space<vmem>>, %arg7: memref<3x8x1xf32, #tpu.memory_space<vmem>>, %arg8: memref<3x8x1xf32, #tpu.memory_space<vmem>>, %arg9: memref<3x8x1xf32, #tpu.memory_space<vmem>>, %arg10: memref<3x8x8xf32, #tpu.memory_space<vmem>>, %arg11: memref<3x8x1xf32, #tpu.memory_space<vmem>>, %arg12: memref<3x8x1xf32, #tpu.memory_space<vmem>>, %arg13: memref<3x8x1xf32, #tpu.memory_space<vmem>>, %arg14: memref<8x8xf32, #tpu.memory_space<vmem>>, %arg15: memref<8x1xf32, #tpu.memory_space<vmem>>, %arg16: memref<8x1xf32, #tpu.memory_space<vmem>>, %arg17: memref<8x1xf32, #tpu.memory_space<vmem>>, %arg18: memref<3x8x3xf32, #tpu.memory_space<vmem>>, %arg19: memref<3x8x1xf32, #tpu.memory_space<vmem>>, %arg20: memref<3x8x1xf32, #tpu.memory_space<vmem>>, %arg21: memref<3x8x1xf32, #tpu.memory_space<vmem>>, %arg22: memref<3x8x8xf32, #tpu.memory_space<vmem>>, %arg23: memref<3x8x1xf32, #tpu.memory_space<vmem>>, %arg24: memref<3x8x1xf32, #tpu.memory_space<vmem>>, %arg25: memref<3x8x1xf32, #tpu.memory_space<vmem>>, %arg26: memref<8x8xf32, #tpu.memory_space<vmem>>, %arg27: memref<8x1xf32, #tpu.memory_space<vmem>>, %arg28: memref<1x2x8x128xbf16, #tpu.memory_space<vmem>>) attributes {dimension_semantics = [#tpu.dimension_semantics<parallel>], iteration_bounds = array<i64: 2>, scalar_prefetch = 0 : i64, scratch_operands = 0 : i64, tpu.core_type = #tpu.core_type<tc>, window_params = [{transform_indices = @transform_0, window_bounds = array<i64: 1, 8, 128>}, {transform_indices = @transform_1, window_bounds = array<i64: 1, 1, 128>}, {transform_indices = @transform_2, window_bounds = array<i64: 1, 1, 128>}, {pipeline_mode = #tpu.pipeline_mode<synchronous>, transform_indices = @transform_3, window_bounds = array<i64: 8, 8>}, {pipeline_mode = #tpu.pipeline_mode<synchronous>, transform_indices = @transform_4, window_bounds = array<i64: 8, 1>}, {pipeline_mode = #tpu.pipeline_mode<synchronous>, transform_indices = @transform_5, window_bounds = array<i64: 3, 8, 3>}, {pipeline_mode = #tpu.pipeline_mode<synchronous>, transform_indices = @transform_6, window_bounds = array<i64: 3, 8, 1>}, {pipeline_mode = #tpu.pipeline_mode<synchronous>, transform_indices = @transform_7, window_bounds = array<i64: 3, 8, 1>}, {pipeline_mode = #tpu.pipeline_mode<synchronous>, transform_indices = @transform_8, window_bounds = array<i64: 3, 8, 1>}, {pipeline_mode = #tpu.pipeline_mode<synchronous>, transform_indices = @transform_9, window_bounds = array<i64: 3, 8, 8>}, {pipeline_mode = #tpu.pipeline_mode<synchronous>, transform_indices = @transform_10, window_bounds = array<i64: 3, 8, 1>}, {pipeline_mode = #tpu.pipeline_mode<synchronous>, transform_indices = @transform_11, window_bounds = array<i64: 3, 8, 1>}, {pipeline_mode = #tpu.pipeline_mode<synchronous>, transform_indices = @transform_12, window_bounds = array<i64: 3, 8, 1>}, {pipeline_mode = #tpu.pipeline_mode<synchronous>, transform_indices = @transform_13, window_bounds = array<i64: 8, 8>}, {pipeline_mode = #tpu.pipeline_mode<synchronous>, transform_indices = @transform_14, window_bounds = array<i64: 8, 1>}, {pipeline_mode = #tpu.pipeline_mode<synchronous>, transform_indices = @transform_15, window_bounds = array<i64: 8, 1>}, {pipeline_mode = #tpu.pipeline_mode<synchronous>, transform_indices = @transform_16, window_bounds = array<i64: 8, 1>}, {pipeline_mode = #tpu.pipeline_mode<synchronous>, transform_indices = @transform_17, window_bounds = array<i64: 3, 8, 3>}, {pipeline_mode = #tpu.pipeline_mode<synchronous>, transform_indices = @transform_18, window_bounds = array<i64: 3, 8, 1>}, {pipeline_mode = #tpu.pipeline_mode<synchronous>, transform_indices = @transform_19, window_bounds = array<i64: 3, 8, 1>}, {pipeline_mode = #tpu.pipeline_mode<synchronous>, transform_indices = @transform_20, window_bounds = array<i64: 3, 8, 1>}, {pipeline_mode = #tpu.pipeline_mode<synchronous>, transform_indices = @transform_21, window_bounds = array<i64: 3, 8, 8>}, {pipeline_mode = #tpu.pipeline_mode<synchronous>, transform_indices = @transform_22, window_bounds = array<i64: 3, 8, 1>}, {pipeline_mode = #tpu.pipeline_mode<synchronous>, transform_indices = @transform_23, window_bounds = array<i64: 3, 8, 1>}, {pipeline_mode = #tpu.pipeline_mode<synchronous>, transform_indices = @transform_24, window_bounds = array<i64: 3, 8, 1>}, {pipeline_mode = #tpu.pipeline_mode<synchronous>, transform_indices = @transform_25, window_bounds = array<i64: 8, 8>}, {pipeline_mode = #tpu.pipeline_mode<synchronous>, transform_indices = @transform_26, window_bounds = array<i64: 8, 1>}, {transform_indices = @transform_27, window_bounds = array<i64: 1, 2, 8, 128>}]} {
    %c0 = arith.constant 0 : index
    %c0_0 = arith.constant 0 : index
    %c0_1 = arith.constant 0 : index
    %0 = vector.load %arg1[%c0, %c0_0, %c0_1] : memref<1x8x128xf32, #tpu.memory_space<vmem>>, vector<1x8x128xf32>
    %1 = vector.shape_cast %0 : vector<1x8x128xf32> to vector<8x128xf32>
    %c0_2 = arith.constant 0 : index
    %c0_3 = arith.constant 0 : index
    %c0_4 = arith.constant 0 : index
    %2 = vector.load %arg2[%c0_2, %c0_3, %c0_4] : memref<1x1x128xf32, #tpu.memory_space<vmem>>, vector<1x1x128xf32>
    %3 = vector.shape_cast %2 : vector<1x1x128xf32> to vector<1x128xf32>
    %c0_5 = arith.constant 0 : index
    %c0_6 = arith.constant 0 : index
    %c0_7 = arith.constant 0 : index
    %4 = vector.load %arg3[%c0_5, %c0_6, %c0_7] : memref<1x1x128xf32, #tpu.memory_space<vmem>>, vector<1x1x128xf32>
    %5 = vector.shape_cast %4 : vector<1x1x128xf32> to vector<1x128xf32>
    %c0_8 = arith.constant 0 : index
    %c0_9 = arith.constant 0 : index
    %6 = vector.load %arg4[%c0_8, %c0_9] : memref<8x8xf32, #tpu.memory_space<vmem>>, vector<8x8xf32>
    %c0_10 = arith.constant 0 : index
    %c0_11 = arith.constant 0 : index
    %7 = vector.load %arg5[%c0_10, %c0_11] : memref<8x1xf32, #tpu.memory_space<vmem>>, vector<8x1xf32>
    %c0_12 = arith.constant 0 : index
    %c0_13 = arith.constant 0 : index
    %c0_14 = arith.constant 0 : index
    %8 = vector.load %arg6[%c0_12, %c0_13, %c0_14] : memref<3x8x3xf32, #tpu.memory_space<vmem>>, vector<3x8x3xf32>
    %c0_15 = arith.constant 0 : index
    %c0_16 = arith.constant 0 : index
    %c0_17 = arith.constant 0 : index
    %9 = vector.load %arg7[%c0_15, %c0_16, %c0_17] : memref<3x8x1xf32, #tpu.memory_space<vmem>>, vector<3x8x1xf32>
    %c0_18 = arith.constant 0 : index
    %c0_19 = arith.constant 0 : index
    %c0_20 = arith.constant 0 : index
    %10 = vector.load %arg8[%c0_18, %c0_19, %c0_20] : memref<3x8x1xf32, #tpu.memory_space<vmem>>, vector<3x8x1xf32>
    %c0_21 = arith.constant 0 : index
    %c0_22 = arith.constant 0 : index
    %c0_23 = arith.constant 0 : index
    %11 = vector.load %arg9[%c0_21, %c0_22, %c0_23] : memref<3x8x1xf32, #tpu.memory_space<vmem>>, vector<3x8x1xf32>
    %c0_24 = arith.constant 0 : index
    %c0_25 = arith.constant 0 : index
    %c0_26 = arith.constant 0 : index
    %12 = vector.load %arg10[%c0_24, %c0_25, %c0_26] : memref<3x8x8xf32, #tpu.memory_space<vmem>>, vector<3x8x8xf32>
    %c0_27 = arith.constant 0 : index
    %c0_28 = arith.constant 0 : index
    %c0_29 = arith.constant 0 : index
    %13 = vector.load %arg11[%c0_27, %c0_28, %c0_29] : memref<3x8x1xf32, #tpu.memory_space<vmem>>, vector<3x8x1xf32>
    %c0_30 = arith.constant 0 : index
    %c0_31 = arith.constant 0 : index
    %c0_32 = arith.constant 0 : index
    %14 = vector.load %arg12[%c0_30, %c0_31, %c0_32] : memref<3x8x1xf32, #tpu.memory_space<vmem>>, vector<3x8x1xf32>
    %c0_33 = arith.constant 0 : index
    %c0_34 = arith.constant 0 : index
    %c0_35 = arith.constant 0 : index
    %15 = vector.load %arg13[%c0_33, %c0_34, %c0_35] : memref<3x8x1xf32, #tpu.memory_space<vmem>>, vector<3x8x1xf32>
    %c0_36 = arith.constant 0 : index
    %c0_37 = arith.constant 0 : index
    %16 = vector.load %arg14[%c0_36, %c0_37] : memref<8x8xf32, #tpu.memory_space<vmem>>, vector<8x8xf32>
    %c0_38 = arith.constant 0 : index
    %c0_39 = arith.constant 0 : index
    %17 = vector.load %arg15[%c0_38, %c0_39] : memref<8x1xf32, #tpu.memory_space<vmem>>, vector<8x1xf32>
    %18 = arith.truncf %6 : vector<8x8xf32> to vector<8x8xbf16>
    %19 = arith.truncf %1 : vector<8x128xf32> to vector<8x128xbf16>
    %cst = arith.constant dense<0.000000e+00> : vector<8x128xf32>
    %20 = tpu.matmul %18, %19, %cst {dimension_numbers = #tpu.dot_dimension_numbers<[1], [0], [0], [1], [0, 0, 1, 1], [], []>} : vector<8x8xbf16>, vector<8x128xbf16>, vector<8x128xf32> -> vector<8x128xf32>
    %21 = vector.broadcast %7 : vector<8x1xf32> to vector<8x128xf32>
    %22 = arith.addf %20, %21 : vector<8x128xf32>
    %23 = tpu.iota {dimensions = array<i32: 1>} : vector<1x128xi32>
    %24 = vector.broadcast %5 : vector<1x128xf32> to vector<8x128xf32>
    %25 = arith.mulf %22, %24 : vector<8x128xf32>
    %26 = vector.extract_strided_slice %8 {offsets = [0, 0, 0], sizes = [1, 8, 1], strides = [1, 1, 1]} : vector<3x8x3xf32> to vector<1x8x1xf32>
    %27 = vector.shape_cast %26 : vector<1x8x1xf32> to vector<8x1xf32>
    %c1_i32 = arith.constant 1 : i32
    %28 = tpu.dynamic_rotate %25 by %c1_i32 dim 1 : vector<8x128xf32>, i32 -> vector<8x128xf32>
    %c1_i32_40 = arith.constant 1 : i32
    %29 = vector.broadcast %c1_i32_40 : i32 to vector<1x128xi32>
    %30 = arith.cmpi sge, %23, %29 : vector<1x128xi32>
    %cst_41 = arith.constant 0.000000e+00 : f32
    %31 = vector.shape_cast %30 : vector<1x128xi1> to vector<1x128xi1>
    %32 = vector.broadcast %31 : vector<1x128xi1> to vector<8x128xi1>
    %33 = vector.broadcast %cst_41 : f32 to vector<8x128xf32>
    %34 = arith.select %32, %28, %33 : vector<8x128xi1>, vector<8x128xf32>
    %35 = vector.broadcast %27 : vector<8x1xf32> to vector<8x128xf32>
    %36 = arith.mulf %35, %34 : vector<8x128xf32>
    %37 = vector.extract_strided_slice %8 {offsets = [0, 0, 1], sizes = [1, 8, 1], strides = [1, 1, 1]} : vector<3x8x3xf32> to vector<1x8x1xf32>
    %38 = vector.shape_cast %37 : vector<1x8x1xf32> to vector<8x1xf32>
    %39 = vector.broadcast %38 : vector<8x1xf32> to vector<8x128xf32>
    %40 = arith.mulf %39, %25 : vector<8x128xf32>
    %41 = arith.addf %36, %40 : vector<8x128xf32>
    %42 = vector.extract_strided_slice %8 {offsets = [0, 0, 2], sizes = [1, 8, 1], strides = [1, 1, 1]} : vector<3x8x3xf32> to vector<1x8x1xf32>
    %43 = vector.shape_cast %42 : vector<1x8x1xf32> to vector<8x1xf32>
    %c127_i32 = arith.constant 127 : i32
    %44 = tpu.dynamic_rotate %25 by %c127_i32 dim 1 : vector<8x128xf32>, i32 -> vector<8x128xf32>
    %c127_i32_42 = arith.constant 127 : i32
    %45 = vector.broadcast %c127_i32_42 : i32 to vector<1x128xi32>
    %46 = arith.cmpi slt, %23, %45 : vector<1x128xi32>
    %cst_43 = arith.constant 0.000000e+00 : f32
    %47 = vector.shape_cast %46 : vector<1x128xi1> to vector<1x128xi1>
    %48 = vector.broadcast %47 : vector<1x128xi1> to vector<8x128xi1>
    %49 = vector.broadcast %cst_43 : f32 to vector<8x128xf32>
    %50 = arith.select %48, %44, %49 : vector<8x128xi1>, vector<8x128xf32>
    %51 = vector.broadcast %43 : vector<8x1xf32> to vector<8x128xf32>
    %52 = arith.mulf %51, %50 : vector<8x128xf32>
    %53 = arith.addf %41, %52 : vector<8x128xf32>
    %54 = vector.extract_strided_slice %9 {offsets = [0, 0, 0], sizes = [1, 8, 1], strides = [1, 1, 1]} : vector<3x8x1xf32> to vector<1x8x1xf32>
    %55 = vector.shape_cast %54 : vector<1x8x1xf32> to vector<8x1xf32>
    %56 = vector.broadcast %55 : vector<8x1xf32> to vector<8x128xf32>
    %57 = arith.addf %53, %56 : vector<8x128xf32>
    %58 = vector.extract_strided_slice %10 {offsets = [0, 0, 0], sizes = [1, 8, 1], strides = [1, 1, 1]} : vector<3x8x1xf32> to vector<1x8x1xf32>
    %59 = vector.shape_cast %58 : vector<1x8x1xf32> to vector<8x1xf32>
    %60 = vector.extract_strided_slice %11 {offsets = [0, 0, 0], sizes = [1, 8, 1], strides = [1, 1, 1]} : vector<3x8x1xf32> to vector<1x8x1xf32>
    %61 = vector.shape_cast %60 : vector<1x8x1xf32> to vector<8x1xf32>
    %cst_44 = arith.constant dense<0.000000e+00> : vector<128xf32>
    %62 = vector.multi_reduction <add>, %57, %cst_44 [0] : vector<8x128xf32> to vector<128xf32>
    %63 = vector.shape_cast %62 : vector<128xf32> to vector<1x128xf32>
    %cst_45 = arith.constant 1.250000e-01 : f32
    %64 = vector.broadcast %cst_45 : f32 to vector<1x128xf32>
    %65 = arith.mulf %63, %64 : vector<1x128xf32>
    %66 = arith.mulf %57, %57 : vector<8x128xf32>
    %cst_46 = arith.constant dense<0.000000e+00> : vector<128xf32>
    %67 = vector.multi_reduction <add>, %66, %cst_46 [0] : vector<8x128xf32> to vector<128xf32>
    %68 = vector.shape_cast %67 : vector<128xf32> to vector<1x128xf32>
    %cst_47 = arith.constant 1.250000e-01 : f32
    %69 = vector.broadcast %cst_47 : f32 to vector<1x128xf32>
    %70 = arith.mulf %68, %69 : vector<1x128xf32>
    %71 = arith.mulf %65, %65 : vector<1x128xf32>
    %72 = arith.subf %70, %71 : vector<1x128xf32>
    %cst_48 = arith.constant 0.000000e+00 : f32
    %73 = vector.broadcast %cst_48 : f32 to vector<1x128xf32>
    %74 = arith.maximumf %72, %73 : vector<1x128xf32>
    %75 = vector.broadcast %65 : vector<1x128xf32> to vector<8x128xf32>
    %76 = arith.subf %57, %75 : vector<8x128xf32>
    %cst_49 = arith.constant 9.99999974E-6 : f32
    %77 = vector.broadcast %cst_49 : f32 to vector<1x128xf32>
    %78 = arith.addf %74, %77 : vector<1x128xf32>
    %79 = math.rsqrt %78 : vector<1x128xf32>
    %80 = vector.broadcast %79 : vector<1x128xf32> to vector<8x128xf32>
    %81 = arith.mulf %76, %80 : vector<8x128xf32>
    %82 = vector.broadcast %59 : vector<8x1xf32> to vector<8x128xf32>
    %83 = arith.mulf %81, %82 : vector<8x128xf32>
    %84 = vector.broadcast %61 : vector<8x1xf32> to vector<8x128xf32>
    %85 = arith.addf %83, %84 : vector<8x128xf32>
    %cst_50 = arith.constant 5.000000e-01 : f32
    %86 = vector.broadcast %cst_50 : f32 to vector<8x128xf32>
    %87 = arith.mulf %86, %85 : vector<8x128xf32>
    %cst_51 = arith.constant 4.471500e-02 : f32
    %88 = vector.broadcast %cst_51 : f32 to vector<8x128xf32>
    %89 = arith.mulf %88, %85 : vector<8x128xf32>
    %90 = arith.mulf %89, %85 : vector<8x128xf32>
    %91 = arith.mulf %90, %85 : vector<8x128xf32>
    %92 = arith.addf %85, %91 : vector<8x128xf32>
    %cst_52 = arith.constant 0.797884583 : f32
    %93 = vector.broadcast %cst_52 : f32 to vector<8x128xf32>
    %94 = arith.mulf %93, %92 : vector<8x128xf32>
    %95 = math.tanh %94 : vector<8x128xf32>
    %cst_53 = arith.constant 1.000000e+00 : f32
    %96 = vector.broadcast %cst_53 : f32 to vector<8x128xf32>
    %97 = arith.addf %96, %95 : vector<8x128xf32>
    %98 = arith.mulf %87, %97 : vector<8x128xf32>
    %99 = vector.extract_strided_slice %12 {offsets = [0, 0, 0], sizes = [1, 8, 8], strides = [1, 1, 1]} : vector<3x8x8xf32> to vector<1x8x8xf32>
    %100 = vector.shape_cast %99 : vector<1x8x8xf32> to vector<8x8xf32>
    %101 = arith.truncf %100 : vector<8x8xf32> to vector<8x8xbf16>
    %102 = arith.truncf %98 : vector<8x128xf32> to vector<8x128xbf16>
    %cst_54 = arith.constant dense<0.000000e+00> : vector<8x128xf32>
    %103 = tpu.matmul %101, %102, %cst_54 {dimension_numbers = #tpu.dot_dimension_numbers<[1], [0], [0], [1], [0, 0, 1, 1], [], []>} : vector<8x8xbf16>, vector<8x128xbf16>, vector<8x128xf32> -> vector<8x128xf32>
    %104 = vector.extract_strided_slice %13 {offsets = [0, 0, 0], sizes = [1, 8, 1], strides = [1, 1, 1]} : vector<3x8x1xf32> to vector<1x8x1xf32>
    %105 = vector.shape_cast %104 : vector<1x8x1xf32> to vector<8x1xf32>
    %106 = vector.broadcast %105 : vector<8x1xf32> to vector<8x128xf32>
    %107 = arith.addf %103, %106 : vector<8x128xf32>
    %108 = vector.extract_strided_slice %14 {offsets = [0, 0, 0], sizes = [1, 8, 1], strides = [1, 1, 1]} : vector<3x8x1xf32> to vector<1x8x1xf32>
    %109 = vector.shape_cast %108 : vector<1x8x1xf32> to vector<8x1xf32>
    %110 = vector.extract_strided_slice %15 {offsets = [0, 0, 0], sizes = [1, 8, 1], strides = [1, 1, 1]} : vector<3x8x1xf32> to vector<1x8x1xf32>
    %111 = vector.shape_cast %110 : vector<1x8x1xf32> to vector<8x1xf32>
    %cst_55 = arith.constant dense<0.000000e+00> : vector<128xf32>
    %112 = vector.multi_reduction <add>, %107, %cst_55 [0] : vector<8x128xf32> to vector<128xf32>
    %113 = vector.shape_cast %112 : vector<128xf32> to vector<1x128xf32>
    %cst_56 = arith.constant 1.250000e-01 : f32
    %114 = vector.broadcast %cst_56 : f32 to vector<1x128xf32>
    %115 = arith.mulf %113, %114 : vector<1x128xf32>
    %116 = arith.mulf %107, %107 : vector<8x128xf32>
    %cst_57 = arith.constant dense<0.000000e+00> : vector<128xf32>
    %117 = vector.multi_reduction <add>, %116, %cst_57 [0] : vector<8x128xf32> to vector<128xf32>
    %118 = vector.shape_cast %117 : vector<128xf32> to vector<1x128xf32>
    %cst_58 = arith.constant 1.250000e-01 : f32
    %119 = vector.broadcast %cst_58 : f32 to vector<1x128xf32>
    %120 = arith.mulf %118, %119 : vector<1x128xf32>
    %121 = arith.mulf %115, %115 : vector<1x128xf32>
    %122 = arith.subf %120, %121 : vector<1x128xf32>
    %cst_59 = arith.constant 0.000000e+00 : f32
    %123 = vector.broadcast %cst_59 : f32 to vector<1x128xf32>
    %124 = arith.maximumf %122, %123 : vector<1x128xf32>
    %125 = vector.broadcast %115 : vector<1x128xf32> to vector<8x128xf32>
    %126 = arith.subf %107, %125 : vector<8x128xf32>
    %cst_60 = arith.constant 9.99999974E-6 : f32
    %127 = vector.broadcast %cst_60 : f32 to vector<1x128xf32>
    %128 = arith.addf %124, %127 : vector<1x128xf32>
    %129 = math.rsqrt %128 : vector<1x128xf32>
    %130 = vector.broadcast %129 : vector<1x128xf32> to vector<8x128xf32>
    %131 = arith.mulf %126, %130 : vector<8x128xf32>
    %132 = vector.broadcast %109 : vector<8x1xf32> to vector<8x128xf32>
    %133 = arith.mulf %131, %132 : vector<8x128xf32>
    %134 = vector.broadcast %111 : vector<8x1xf32> to vector<8x128xf32>
    %135 = arith.addf %133, %134 : vector<8x128xf32>
    %cst_61 = arith.constant 5.000000e-01 : f32
    %136 = vector.broadcast %cst_61 : f32 to vector<8x128xf32>
    %137 = arith.mulf %136, %135 : vector<8x128xf32>
    %cst_62 = arith.constant 4.471500e-02 : f32
    %138 = vector.broadcast %cst_62 : f32 to vector<8x128xf32>
    %139 = arith.mulf %138, %135 : vector<8x128xf32>
    %140 = arith.mulf %139, %135 : vector<8x128xf32>
    %141 = arith.mulf %140, %135 : vector<8x128xf32>
    %142 = arith.addf %135, %141 : vector<8x128xf32>
    %cst_63 = arith.constant 0.797884583 : f32
    %143 = vector.broadcast %cst_63 : f32 to vector<8x128xf32>
    %144 = arith.mulf %143, %142 : vector<8x128xf32>
    %145 = math.tanh %144 : vector<8x128xf32>
    %cst_64 = arith.constant 1.000000e+00 : f32
    %146 = vector.broadcast %cst_64 : f32 to vector<8x128xf32>
    %147 = arith.addf %146, %145 : vector<8x128xf32>
    %148 = arith.mulf %137, %147 : vector<8x128xf32>
    %149 = arith.addf %22, %148 : vector<8x128xf32>
    %150 = vector.broadcast %5 : vector<1x128xf32> to vector<8x128xf32>
    %151 = arith.mulf %149, %150 : vector<8x128xf32>
    %152 = vector.extract_strided_slice %8 {offsets = [1, 0, 0], sizes = [1, 8, 1], strides = [1, 1, 1]} : vector<3x8x3xf32> to vector<1x8x1xf32>
    %153 = vector.shape_cast %152 : vector<1x8x1xf32> to vector<8x1xf32>
    %c3_i32 = arith.constant 3 : i32
    %154 = tpu.dynamic_rotate %151 by %c3_i32 dim 1 : vector<8x128xf32>, i32 -> vector<8x128xf32>
    %c3_i32_65 = arith.constant 3 : i32
    %155 = vector.broadcast %c3_i32_65 : i32 to vector<1x128xi32>
    %156 = arith.cmpi sge, %23, %155 : vector<1x128xi32>
    %cst_66 = arith.constant 0.000000e+00 : f32
    %157 = vector.shape_cast %156 : vector<1x128xi1> to vector<1x128xi1>
    %158 = vector.broadcast %157 : vector<1x128xi1> to vector<8x128xi1>
    %159 = vector.broadcast %cst_66 : f32 to vector<8x128xf32>
    %160 = arith.select %158, %154, %159 : vector<8x128xi1>, vector<8x128xf32>
    %161 = vector.broadcast %153 : vector<8x1xf32> to vector<8x128xf32>
    %162 = arith.mulf %161, %160 : vector<8x128xf32>
    %163 = vector.extract_strided_slice %8 {offsets = [1, 0, 1], sizes = [1, 8, 1], strides = [1, 1, 1]} : vector<3x8x3xf32> to vector<1x8x1xf32>
    %164 = vector.shape_cast %163 : vector<1x8x1xf32> to vector<8x1xf32>
    %165 = vector.broadcast %164 : vector<8x1xf32> to vector<8x128xf32>
    %166 = arith.mulf %165, %151 : vector<8x128xf32>
    %167 = arith.addf %162, %166 : vector<8x128xf32>
    %168 = vector.extract_strided_slice %8 {offsets = [1, 0, 2], sizes = [1, 8, 1], strides = [1, 1, 1]} : vector<3x8x3xf32> to vector<1x8x1xf32>
    %169 = vector.shape_cast %168 : vector<1x8x1xf32> to vector<8x1xf32>
    %c125_i32 = arith.constant 125 : i32
    %170 = tpu.dynamic_rotate %151 by %c125_i32 dim 1 : vector<8x128xf32>, i32 -> vector<8x128xf32>
    %c125_i32_67 = arith.constant 125 : i32
    %171 = vector.broadcast %c125_i32_67 : i32 to vector<1x128xi32>
    %172 = arith.cmpi slt, %23, %171 : vector<1x128xi32>
    %cst_68 = arith.constant 0.000000e+00 : f32
    %173 = vector.shape_cast %172 : vector<1x128xi1> to vector<1x128xi1>
    %174 = vector.broadcast %173 : vector<1x128xi1> to vector<8x128xi1>
    %175 = vector.broadcast %cst_68 : f32 to vector<8x128xf32>
    %176 = arith.select %174, %170, %175 : vector<8x128xi1>, vector<8x128xf32>
    %177 = vector.broadcast %169 : vector<8x1xf32> to vector<8x128xf32>
    %178 = arith.mulf %177, %176 : vector<8x128xf32>
    %179 = arith.addf %167, %178 : vector<8x128xf32>
    %180 = vector.extract_strided_slice %9 {offsets = [1, 0, 0], sizes = [1, 8, 1], strides = [1, 1, 1]} : vector<3x8x1xf32> to vector<1x8x1xf32>
    %181 = vector.shape_cast %180 : vector<1x8x1xf32> to vector<8x1xf32>
    %182 = vector.broadcast %181 : vector<8x1xf32> to vector<8x128xf32>
    %183 = arith.addf %179, %182 : vector<8x128xf32>
    %184 = vector.extract_strided_slice %10 {offsets = [1, 0, 0], sizes = [1, 8, 1], strides = [1, 1, 1]} : vector<3x8x1xf32> to vector<1x8x1xf32>
    %185 = vector.shape_cast %184 : vector<1x8x1xf32> to vector<8x1xf32>
    %186 = vector.extract_strided_slice %11 {offsets = [1, 0, 0], sizes = [1, 8, 1], strides = [1, 1, 1]} : vector<3x8x1xf32> to vector<1x8x1xf32>
    %187 = vector.shape_cast %186 : vector<1x8x1xf32> to vector<8x1xf32>
    %cst_69 = arith.constant dense<0.000000e+00> : vector<128xf32>
    %188 = vector.multi_reduction <add>, %183, %cst_69 [0] : vector<8x128xf32> to vector<128xf32>
    %189 = vector.shape_cast %188 : vector<128xf32> to vector<1x128xf32>
    %cst_70 = arith.constant 1.250000e-01 : f32
    %190 = vector.broadcast %cst_70 : f32 to vector<1x128xf32>
    %191 = arith.mulf %189, %190 : vector<1x128xf32>
    %192 = arith.mulf %183, %183 : vector<8x128xf32>
    %cst_71 = arith.constant dense<0.000000e+00> : vector<128xf32>
    %193 = vector.multi_reduction <add>, %192, %cst_71 [0] : vector<8x128xf32> to vector<128xf32>
    %194 = vector.shape_cast %193 : vector<128xf32> to vector<1x128xf32>
    %cst_72 = arith.constant 1.250000e-01 : f32
    %195 = vector.broadcast %cst_72 : f32 to vector<1x128xf32>
    %196 = arith.mulf %194, %195 : vector<1x128xf32>
    %197 = arith.mulf %191, %191 : vector<1x128xf32>
    %198 = arith.subf %196, %197 : vector<1x128xf32>
    %cst_73 = arith.constant 0.000000e+00 : f32
    %199 = vector.broadcast %cst_73 : f32 to vector<1x128xf32>
    %200 = arith.maximumf %198, %199 : vector<1x128xf32>
    %201 = vector.broadcast %191 : vector<1x128xf32> to vector<8x128xf32>
    %202 = arith.subf %183, %201 : vector<8x128xf32>
    %cst_74 = arith.constant 9.99999974E-6 : f32
    %203 = vector.broadcast %cst_74 : f32 to vector<1x128xf32>
    %204 = arith.addf %200, %203 : vector<1x128xf32>
    %205 = math.rsqrt %204 : vector<1x128xf32>
    %206 = vector.broadcast %205 : vector<1x128xf32> to vector<8x128xf32>
    %207 = arith.mulf %202, %206 : vector<8x128xf32>
    %208 = vector.broadcast %185 : vector<8x1xf32> to vector<8x128xf32>
    %209 = arith.mulf %207, %208 : vector<8x128xf32>
    %210 = vector.broadcast %187 : vector<8x1xf32> to vector<8x128xf32>
    %211 = arith.addf %209, %210 : vector<8x128xf32>
    %cst_75 = arith.constant 5.000000e-01 : f32
    %212 = vector.broadcast %cst_75 : f32 to vector<8x128xf32>
    %213 = arith.mulf %212, %211 : vector<8x128xf32>
    %cst_76 = arith.constant 4.471500e-02 : f32
    %214 = vector.broadcast %cst_76 : f32 to vector<8x128xf32>
    %215 = arith.mulf %214, %211 : vector<8x128xf32>
    %216 = arith.mulf %215, %211 : vector<8x128xf32>
    %217 = arith.mulf %216, %211 : vector<8x128xf32>
    %218 = arith.addf %211, %217 : vector<8x128xf32>
    %cst_77 = arith.constant 0.797884583 : f32
    %219 = vector.broadcast %cst_77 : f32 to vector<8x128xf32>
    %220 = arith.mulf %219, %218 : vector<8x128xf32>
    %221 = math.tanh %220 : vector<8x128xf32>
    %cst_78 = arith.constant 1.000000e+00 : f32
    %222 = vector.broadcast %cst_78 : f32 to vector<8x128xf32>
    %223 = arith.addf %222, %221 : vector<8x128xf32>
    %224 = arith.mulf %213, %223 : vector<8x128xf32>
    %225 = vector.extract_strided_slice %12 {offsets = [1, 0, 0], sizes = [1, 8, 8], strides = [1, 1, 1]} : vector<3x8x8xf32> to vector<1x8x8xf32>
    %226 = vector.shape_cast %225 : vector<1x8x8xf32> to vector<8x8xf32>
    %227 = arith.truncf %226 : vector<8x8xf32> to vector<8x8xbf16>
    %228 = arith.truncf %224 : vector<8x128xf32> to vector<8x128xbf16>
    %cst_79 = arith.constant dense<0.000000e+00> : vector<8x128xf32>
    %229 = tpu.matmul %227, %228, %cst_79 {dimension_numbers = #tpu.dot_dimension_numbers<[1], [0], [0], [1], [0, 0, 1, 1], [], []>} : vector<8x8xbf16>, vector<8x128xbf16>, vector<8x128xf32> -> vector<8x128xf32>
    %230 = vector.extract_strided_slice %13 {offsets = [1, 0, 0], sizes = [1, 8, 1], strides = [1, 1, 1]} : vector<3x8x1xf32> to vector<1x8x1xf32>
    %231 = vector.shape_cast %230 : vector<1x8x1xf32> to vector<8x1xf32>
    %232 = vector.broadcast %231 : vector<8x1xf32> to vector<8x128xf32>
    %233 = arith.addf %229, %232 : vector<8x128xf32>
    %234 = vector.extract_strided_slice %14 {offsets = [1, 0, 0], sizes = [1, 8, 1], strides = [1, 1, 1]} : vector<3x8x1xf32> to vector<1x8x1xf32>
    %235 = vector.shape_cast %234 : vector<1x8x1xf32> to vector<8x1xf32>
    %236 = vector.extract_strided_slice %15 {offsets = [1, 0, 0], sizes = [1, 8, 1], strides = [1, 1, 1]} : vector<3x8x1xf32> to vector<1x8x1xf32>
    %237 = vector.shape_cast %236 : vector<1x8x1xf32> to vector<8x1xf32>
    %cst_80 = arith.constant dense<0.000000e+00> : vector<128xf32>
    %238 = vector.multi_reduction <add>, %233, %cst_80 [0] : vector<8x128xf32> to vector<128xf32>
    %239 = vector.shape_cast %238 : vector<128xf32> to vector<1x128xf32>
    %cst_81 = arith.constant 1.250000e-01 : f32
    %240 = vector.broadcast %cst_81 : f32 to vector<1x128xf32>
    %241 = arith.mulf %239, %240 : vector<1x128xf32>
    %242 = arith.mulf %233, %233 : vector<8x128xf32>
    %cst_82 = arith.constant dense<0.000000e+00> : vector<128xf32>
    %243 = vector.multi_reduction <add>, %242, %cst_82 [0] : vector<8x128xf32> to vector<128xf32>
    %244 = vector.shape_cast %243 : vector<128xf32> to vector<1x128xf32>
    %cst_83 = arith.constant 1.250000e-01 : f32
    %245 = vector.broadcast %cst_83 : f32 to vector<1x128xf32>
    %246 = arith.mulf %244, %245 : vector<1x128xf32>
    %247 = arith.mulf %241, %241 : vector<1x128xf32>
    %248 = arith.subf %246, %247 : vector<1x128xf32>
    %cst_84 = arith.constant 0.000000e+00 : f32
    %249 = vector.broadcast %cst_84 : f32 to vector<1x128xf32>
    %250 = arith.maximumf %248, %249 : vector<1x128xf32>
    %251 = vector.broadcast %241 : vector<1x128xf32> to vector<8x128xf32>
    %252 = arith.subf %233, %251 : vector<8x128xf32>
    %cst_85 = arith.constant 9.99999974E-6 : f32
    %253 = vector.broadcast %cst_85 : f32 to vector<1x128xf32>
    %254 = arith.addf %250, %253 : vector<1x128xf32>
    %255 = math.rsqrt %254 : vector<1x128xf32>
    %256 = vector.broadcast %255 : vector<1x128xf32> to vector<8x128xf32>
    %257 = arith.mulf %252, %256 : vector<8x128xf32>
    %258 = vector.broadcast %235 : vector<8x1xf32> to vector<8x128xf32>
    %259 = arith.mulf %257, %258 : vector<8x128xf32>
    %260 = vector.broadcast %237 : vector<8x1xf32> to vector<8x128xf32>
    %261 = arith.addf %259, %260 : vector<8x128xf32>
    %cst_86 = arith.constant 5.000000e-01 : f32
    %262 = vector.broadcast %cst_86 : f32 to vector<8x128xf32>
    %263 = arith.mulf %262, %261 : vector<8x128xf32>
    %cst_87 = arith.constant 4.471500e-02 : f32
    %264 = vector.broadcast %cst_87 : f32 to vector<8x128xf32>
    %265 = arith.mulf %264, %261 : vector<8x128xf32>
    %266 = arith.mulf %265, %261 : vector<8x128xf32>
    %267 = arith.mulf %266, %261 : vector<8x128xf32>
    %268 = arith.addf %261, %267 : vector<8x128xf32>
    %cst_88 = arith.constant 0.797884583 : f32
    %269 = vector.broadcast %cst_88 : f32 to vector<8x128xf32>
    %270 = arith.mulf %269, %268 : vector<8x128xf32>
    %271 = math.tanh %270 : vector<8x128xf32>
    %cst_89 = arith.constant 1.000000e+00 : f32
    %272 = vector.broadcast %cst_89 : f32 to vector<8x128xf32>
    %273 = arith.addf %272, %271 : vector<8x128xf32>
    %274 = arith.mulf %263, %273 : vector<8x128xf32>
    %275 = arith.addf %149, %274 : vector<8x128xf32>
    %276 = vector.broadcast %5 : vector<1x128xf32> to vector<8x128xf32>
    %277 = arith.mulf %275, %276 : vector<8x128xf32>
    %278 = vector.extract_strided_slice %8 {offsets = [2, 0, 0], sizes = [1, 8, 1], strides = [1, 1, 1]} : vector<3x8x3xf32> to vector<1x8x1xf32>
    %279 = vector.shape_cast %278 : vector<1x8x1xf32> to vector<8x1xf32>
    %c9_i32 = arith.constant 9 : i32
    %280 = tpu.dynamic_rotate %277 by %c9_i32 dim 1 : vector<8x128xf32>, i32 -> vector<8x128xf32>
    %c9_i32_90 = arith.constant 9 : i32
    %281 = vector.broadcast %c9_i32_90 : i32 to vector<1x128xi32>
    %282 = arith.cmpi sge, %23, %281 : vector<1x128xi32>
    %cst_91 = arith.constant 0.000000e+00 : f32
    %283 = vector.shape_cast %282 : vector<1x128xi1> to vector<1x128xi1>
    %284 = vector.broadcast %283 : vector<1x128xi1> to vector<8x128xi1>
    %285 = vector.broadcast %cst_91 : f32 to vector<8x128xf32>
    %286 = arith.select %284, %280, %285 : vector<8x128xi1>, vector<8x128xf32>
    %287 = vector.broadcast %279 : vector<8x1xf32> to vector<8x128xf32>
    %288 = arith.mulf %287, %286 : vector<8x128xf32>
    %289 = vector.extract_strided_slice %8 {offsets = [2, 0, 1], sizes = [1, 8, 1], strides = [1, 1, 1]} : vector<3x8x3xf32> to vector<1x8x1xf32>
    %290 = vector.shape_cast %289 : vector<1x8x1xf32> to vector<8x1xf32>
    %291 = vector.broadcast %290 : vector<8x1xf32> to vector<8x128xf32>
    %292 = arith.mulf %291, %277 : vector<8x128xf32>
    %293 = arith.addf %288, %292 : vector<8x128xf32>
    %294 = vector.extract_strided_slice %8 {offsets = [2, 0, 2], sizes = [1, 8, 1], strides = [1, 1, 1]} : vector<3x8x3xf32> to vector<1x8x1xf32>
    %295 = vector.shape_cast %294 : vector<1x8x1xf32> to vector<8x1xf32>
    %c119_i32 = arith.constant 119 : i32
    %296 = tpu.dynamic_rotate %277 by %c119_i32 dim 1 : vector<8x128xf32>, i32 -> vector<8x128xf32>
    %c119_i32_92 = arith.constant 119 : i32
    %297 = vector.broadcast %c119_i32_92 : i32 to vector<1x128xi32>
    %298 = arith.cmpi slt, %23, %297 : vector<1x128xi32>
    %cst_93 = arith.constant 0.000000e+00 : f32
    %299 = vector.shape_cast %298 : vector<1x128xi1> to vector<1x128xi1>
    %300 = vector.broadcast %299 : vector<1x128xi1> to vector<8x128xi1>
    %301 = vector.broadcast %cst_93 : f32 to vector<8x128xf32>
    %302 = arith.select %300, %296, %301 : vector<8x128xi1>, vector<8x128xf32>
    %303 = vector.broadcast %295 : vector<8x1xf32> to vector<8x128xf32>
    %304 = arith.mulf %303, %302 : vector<8x128xf32>
    %305 = arith.addf %293, %304 : vector<8x128xf32>
    %306 = vector.extract_strided_slice %9 {offsets = [2, 0, 0], sizes = [1, 8, 1], strides = [1, 1, 1]} : vector<3x8x1xf32> to vector<1x8x1xf32>
    %307 = vector.shape_cast %306 : vector<1x8x1xf32> to vector<8x1xf32>
    %308 = vector.broadcast %307 : vector<8x1xf32> to vector<8x128xf32>
    %309 = arith.addf %305, %308 : vector<8x128xf32>
    %310 = vector.extract_strided_slice %10 {offsets = [2, 0, 0], sizes = [1, 8, 1], strides = [1, 1, 1]} : vector<3x8x1xf32> to vector<1x8x1xf32>
    %311 = vector.shape_cast %310 : vector<1x8x1xf32> to vector<8x1xf32>
    %312 = vector.extract_strided_slice %11 {offsets = [2, 0, 0], sizes = [1, 8, 1], strides = [1, 1, 1]} : vector<3x8x1xf32> to vector<1x8x1xf32>
    %313 = vector.shape_cast %312 : vector<1x8x1xf32> to vector<8x1xf32>
    %cst_94 = arith.constant dense<0.000000e+00> : vector<128xf32>
    %314 = vector.multi_reduction <add>, %309, %cst_94 [0] : vector<8x128xf32> to vector<128xf32>
    %315 = vector.shape_cast %314 : vector<128xf32> to vector<1x128xf32>
    %cst_95 = arith.constant 1.250000e-01 : f32
    %316 = vector.broadcast %cst_95 : f32 to vector<1x128xf32>
    %317 = arith.mulf %315, %316 : vector<1x128xf32>
    %318 = arith.mulf %309, %309 : vector<8x128xf32>
    %cst_96 = arith.constant dense<0.000000e+00> : vector<128xf32>
    %319 = vector.multi_reduction <add>, %318, %cst_96 [0] : vector<8x128xf32> to vector<128xf32>
    %320 = vector.shape_cast %319 : vector<128xf32> to vector<1x128xf32>
    %cst_97 = arith.constant 1.250000e-01 : f32
    %321 = vector.broadcast %cst_97 : f32 to vector<1x128xf32>
    %322 = arith.mulf %320, %321 : vector<1x128xf32>
    %323 = arith.mulf %317, %317 : vector<1x128xf32>
    %324 = arith.subf %322, %323 : vector<1x128xf32>
    %cst_98 = arith.constant 0.000000e+00 : f32
    %325 = vector.broadcast %cst_98 : f32 to vector<1x128xf32>
    %326 = arith.maximumf %324, %325 : vector<1x128xf32>
    %327 = vector.broadcast %317 : vector<1x128xf32> to vector<8x128xf32>
    %328 = arith.subf %309, %327 : vector<8x128xf32>
    %cst_99 = arith.constant 9.99999974E-6 : f32
    %329 = vector.broadcast %cst_99 : f32 to vector<1x128xf32>
    %330 = arith.addf %326, %329 : vector<1x128xf32>
    %331 = math.rsqrt %330 : vector<1x128xf32>
    %332 = vector.broadcast %331 : vector<1x128xf32> to vector<8x128xf32>
    %333 = arith.mulf %328, %332 : vector<8x128xf32>
    %334 = vector.broadcast %311 : vector<8x1xf32> to vector<8x128xf32>
    %335 = arith.mulf %333, %334 : vector<8x128xf32>
    %336 = vector.broadcast %313 : vector<8x1xf32> to vector<8x128xf32>
    %337 = arith.addf %335, %336 : vector<8x128xf32>
    %cst_100 = arith.constant 5.000000e-01 : f32
    %338 = vector.broadcast %cst_100 : f32 to vector<8x128xf32>
    %339 = arith.mulf %338, %337 : vector<8x128xf32>
    %cst_101 = arith.constant 4.471500e-02 : f32
    %340 = vector.broadcast %cst_101 : f32 to vector<8x128xf32>
    %341 = arith.mulf %340, %337 : vector<8x128xf32>
    %342 = arith.mulf %341, %337 : vector<8x128xf32>
    %343 = arith.mulf %342, %337 : vector<8x128xf32>
    %344 = arith.addf %337, %343 : vector<8x128xf32>
    %cst_102 = arith.constant 0.797884583 : f32
    %345 = vector.broadcast %cst_102 : f32 to vector<8x128xf32>
    %346 = arith.mulf %345, %344 : vector<8x128xf32>
    %347 = math.tanh %346 : vector<8x128xf32>
    %cst_103 = arith.constant 1.000000e+00 : f32
    %348 = vector.broadcast %cst_103 : f32 to vector<8x128xf32>
    %349 = arith.addf %348, %347 : vector<8x128xf32>
    %350 = arith.mulf %339, %349 : vector<8x128xf32>
    %351 = vector.extract_strided_slice %12 {offsets = [2, 0, 0], sizes = [1, 8, 8], strides = [1, 1, 1]} : vector<3x8x8xf32> to vector<1x8x8xf32>
    %352 = vector.shape_cast %351 : vector<1x8x8xf32> to vector<8x8xf32>
    %353 = arith.truncf %352 : vector<8x8xf32> to vector<8x8xbf16>
    %354 = arith.truncf %350 : vector<8x128xf32> to vector<8x128xbf16>
    %cst_104 = arith.constant dense<0.000000e+00> : vector<8x128xf32>
    %355 = tpu.matmul %353, %354, %cst_104 {dimension_numbers = #tpu.dot_dimension_numbers<[1], [0], [0], [1], [0, 0, 1, 1], [], []>} : vector<8x8xbf16>, vector<8x128xbf16>, vector<8x128xf32> -> vector<8x128xf32>
    %356 = vector.extract_strided_slice %13 {offsets = [2, 0, 0], sizes = [1, 8, 1], strides = [1, 1, 1]} : vector<3x8x1xf32> to vector<1x8x1xf32>
    %357 = vector.shape_cast %356 : vector<1x8x1xf32> to vector<8x1xf32>
    %358 = vector.broadcast %357 : vector<8x1xf32> to vector<8x128xf32>
    %359 = arith.addf %355, %358 : vector<8x128xf32>
    %360 = vector.extract_strided_slice %14 {offsets = [2, 0, 0], sizes = [1, 8, 1], strides = [1, 1, 1]} : vector<3x8x1xf32> to vector<1x8x1xf32>
    %361 = vector.shape_cast %360 : vector<1x8x1xf32> to vector<8x1xf32>
    %362 = vector.extract_strided_slice %15 {offsets = [2, 0, 0], sizes = [1, 8, 1], strides = [1, 1, 1]} : vector<3x8x1xf32> to vector<1x8x1xf32>
    %363 = vector.shape_cast %362 : vector<1x8x1xf32> to vector<8x1xf32>
    %cst_105 = arith.constant dense<0.000000e+00> : vector<128xf32>
    %364 = vector.multi_reduction <add>, %359, %cst_105 [0] : vector<8x128xf32> to vector<128xf32>
    %365 = vector.shape_cast %364 : vector<128xf32> to vector<1x128xf32>
    %cst_106 = arith.constant 1.250000e-01 : f32
    %366 = vector.broadcast %cst_106 : f32 to vector<1x128xf32>
    %367 = arith.mulf %365, %366 : vector<1x128xf32>
    %368 = arith.mulf %359, %359 : vector<8x128xf32>
    %cst_107 = arith.constant dense<0.000000e+00> : vector<128xf32>
    %369 = vector.multi_reduction <add>, %368, %cst_107 [0] : vector<8x128xf32> to vector<128xf32>
    %370 = vector.shape_cast %369 : vector<128xf32> to vector<1x128xf32>
    %cst_108 = arith.constant 1.250000e-01 : f32
    %371 = vector.broadcast %cst_108 : f32 to vector<1x128xf32>
    %372 = arith.mulf %370, %371 : vector<1x128xf32>
    %373 = arith.mulf %367, %367 : vector<1x128xf32>
    %374 = arith.subf %372, %373 : vector<1x128xf32>
    %cst_109 = arith.constant 0.000000e+00 : f32
    %375 = vector.broadcast %cst_109 : f32 to vector<1x128xf32>
    %376 = arith.maximumf %374, %375 : vector<1x128xf32>
    %377 = vector.broadcast %367 : vector<1x128xf32> to vector<8x128xf32>
    %378 = arith.subf %359, %377 : vector<8x128xf32>
    %cst_110 = arith.constant 9.99999974E-6 : f32
    %379 = vector.broadcast %cst_110 : f32 to vector<1x128xf32>
    %380 = arith.addf %376, %379 : vector<1x128xf32>
    %381 = math.rsqrt %380 : vector<1x128xf32>
    %382 = vector.broadcast %381 : vector<1x128xf32> to vector<8x128xf32>
    %383 = arith.mulf %378, %382 : vector<8x128xf32>
    %384 = vector.broadcast %361 : vector<8x1xf32> to vector<8x128xf32>
    %385 = arith.mulf %383, %384 : vector<8x128xf32>
    %386 = vector.broadcast %363 : vector<8x1xf32> to vector<8x128xf32>
    %387 = arith.addf %385, %386 : vector<8x128xf32>
    %cst_111 = arith.constant 5.000000e-01 : f32
    %388 = vector.broadcast %cst_111 : f32 to vector<8x128xf32>
    %389 = arith.mulf %388, %387 : vector<8x128xf32>
    %cst_112 = arith.constant 4.471500e-02 : f32
    %390 = vector.broadcast %cst_112 : f32 to vector<8x128xf32>
    %391 = arith.mulf %390, %387 : vector<8x128xf32>
    %392 = arith.mulf %391, %387 : vector<8x128xf32>
    %393 = arith.mulf %392, %387 : vector<8x128xf32>
    %394 = arith.addf %387, %393 : vector<8x128xf32>
    %cst_113 = arith.constant 0.797884583 : f32
    %395 = vector.broadcast %cst_113 : f32 to vector<8x128xf32>
    %396 = arith.mulf %395, %394 : vector<8x128xf32>
    %397 = math.tanh %396 : vector<8x128xf32>
    %cst_114 = arith.constant 1.000000e+00 : f32
    %398 = vector.broadcast %cst_114 : f32 to vector<8x128xf32>
    %399 = arith.addf %398, %397 : vector<8x128xf32>
    %400 = arith.mulf %389, %399 : vector<8x128xf32>
    %401 = arith.addf %275, %400 : vector<8x128xf32>
    %402 = vector.broadcast %5 : vector<1x128xf32> to vector<8x128xf32>
    %403 = arith.mulf %401, %402 : vector<8x128xf32>
    %404 = arith.truncf %16 : vector<8x8xf32> to vector<8x8xbf16>
    %405 = arith.truncf %403 : vector<8x128xf32> to vector<8x128xbf16>
    %cst_115 = arith.constant dense<0.000000e+00> : vector<8x128xf32>
    %406 = tpu.matmul %404, %405, %cst_115 {dimension_numbers = #tpu.dot_dimension_numbers<[1], [0], [0], [1], [0, 0, 1, 1], [], []>} : vector<8x8xbf16>, vector<8x128xbf16>, vector<8x128xf32> -> vector<8x128xf32>
    %407 = vector.broadcast %17 : vector<8x1xf32> to vector<8x128xf32>
    %408 = arith.addf %406, %407 : vector<8x128xf32>
    %409 = vector.broadcast %5 : vector<1x128xf32> to vector<8x128xf32>
    %410 = arith.mulf %408, %409 : vector<8x128xf32>
    %c0_116 = arith.constant 0 : index
    %c0_117 = arith.constant 0 : index
    %411 = vector.load %arg16[%c0_116, %c0_117] : memref<8x1xf32, #tpu.memory_space<vmem>>, vector<8x1xf32>
    %c0_118 = arith.constant 0 : index
    %c0_119 = arith.constant 0 : index
    %412 = vector.load %arg17[%c0_118, %c0_119] : memref<8x1xf32, #tpu.memory_space<vmem>>, vector<8x1xf32>
    %c0_120 = arith.constant 0 : index
    %c0_121 = arith.constant 0 : index
    %c0_122 = arith.constant 0 : index
    %413 = vector.load %arg18[%c0_120, %c0_121, %c0_122] : memref<3x8x3xf32, #tpu.memory_space<vmem>>, vector<3x8x3xf32>
    %c0_123 = arith.constant 0 : index
    %c0_124 = arith.constant 0 : index
    %c0_125 = arith.constant 0 : index
    %414 = vector.load %arg19[%c0_123, %c0_124, %c0_125] : memref<3x8x1xf32, #tpu.memory_space<vmem>>, vector<3x8x1xf32>
    %c0_126 = arith.constant 0 : index
    %c0_127 = arith.constant 0 : index
    %c0_128 = arith.constant 0 : index
    %415 = vector.load %arg20[%c0_126, %c0_127, %c0_128] : memref<3x8x1xf32, #tpu.memory_space<vmem>>, vector<3x8x1xf32>
    %c0_129 = arith.constant 0 : index
    %c0_130 = arith.constant 0 : index
    %c0_131 = arith.constant 0 : index
    %416 = vector.load %arg21[%c0_129, %c0_130, %c0_131] : memref<3x8x1xf32, #tpu.memory_space<vmem>>, vector<3x8x1xf32>
    %c0_132 = arith.constant 0 : index
    %c0_133 = arith.constant 0 : index
    %c0_134 = arith.constant 0 : index
    %417 = vector.load %arg22[%c0_132, %c0_133, %c0_134] : memref<3x8x8xf32, #tpu.memory_space<vmem>>, vector<3x8x8xf32>
    %c0_135 = arith.constant 0 : index
    %c0_136 = arith.constant 0 : index
    %c0_137 = arith.constant 0 : index
    %418 = vector.load %arg23[%c0_135, %c0_136, %c0_137] : memref<3x8x1xf32, #tpu.memory_space<vmem>>, vector<3x8x1xf32>
    %c0_138 = arith.constant 0 : index
    %c0_139 = arith.constant 0 : index
    %c0_140 = arith.constant 0 : index
    %419 = vector.load %arg24[%c0_138, %c0_139, %c0_140] : memref<3x8x1xf32, #tpu.memory_space<vmem>>, vector<3x8x1xf32>
    %c0_141 = arith.constant 0 : index
    %c0_142 = arith.constant 0 : index
    %c0_143 = arith.constant 0 : index
    %420 = vector.load %arg25[%c0_141, %c0_142, %c0_143] : memref<3x8x1xf32, #tpu.memory_space<vmem>>, vector<3x8x1xf32>
    %c0_144 = arith.constant 0 : index
    %c0_145 = arith.constant 0 : index
    %421 = vector.load %arg26[%c0_144, %c0_145] : memref<8x8xf32, #tpu.memory_space<vmem>>, vector<8x8xf32>
    %c0_146 = arith.constant 0 : index
    %c0_147 = arith.constant 0 : index
    %422 = vector.load %arg27[%c0_146, %c0_147] : memref<8x1xf32, #tpu.memory_space<vmem>>, vector<8x1xf32>
    %423 = vector.broadcast %411 : vector<8x1xf32> to vector<8x128xf32>
    %424 = vector.broadcast %3 : vector<1x128xf32> to vector<8x128xf32>
    %425 = arith.mulf %423, %424 : vector<8x128xf32>
    %426 = vector.broadcast %412 : vector<8x1xf32> to vector<8x128xf32>
    %427 = arith.addf %425, %426 : vector<8x128xf32>
    %428 = tpu.iota {dimensions = array<i32: 1>} : vector<1x128xi32>
    %429 = vector.broadcast %5 : vector<1x128xf32> to vector<8x128xf32>
    %430 = arith.mulf %427, %429 : vector<8x128xf32>
    %431 = vector.extract_strided_slice %413 {offsets = [0, 0, 0], sizes = [1, 8, 1], strides = [1, 1, 1]} : vector<3x8x3xf32> to vector<1x8x1xf32>
    %432 = vector.shape_cast %431 : vector<1x8x1xf32> to vector<8x1xf32>
    %c1_i32_148 = arith.constant 1 : i32
    %433 = tpu.dynamic_rotate %430 by %c1_i32_148 dim 1 : vector<8x128xf32>, i32 -> vector<8x128xf32>
    %c1_i32_149 = arith.constant 1 : i32
    %434 = vector.broadcast %c1_i32_149 : i32 to vector<1x128xi32>
    %435 = arith.cmpi sge, %428, %434 : vector<1x128xi32>
    %cst_150 = arith.constant 0.000000e+00 : f32
    %436 = vector.shape_cast %435 : vector<1x128xi1> to vector<1x128xi1>
    %437 = vector.broadcast %436 : vector<1x128xi1> to vector<8x128xi1>
    %438 = vector.broadcast %cst_150 : f32 to vector<8x128xf32>
    %439 = arith.select %437, %433, %438 : vector<8x128xi1>, vector<8x128xf32>
    %440 = vector.broadcast %432 : vector<8x1xf32> to vector<8x128xf32>
    %441 = arith.mulf %440, %439 : vector<8x128xf32>
    %442 = vector.extract_strided_slice %413 {offsets = [0, 0, 1], sizes = [1, 8, 1], strides = [1, 1, 1]} : vector<3x8x3xf32> to vector<1x8x1xf32>
    %443 = vector.shape_cast %442 : vector<1x8x1xf32> to vector<8x1xf32>
    %444 = vector.broadcast %443 : vector<8x1xf32> to vector<8x128xf32>
    %445 = arith.mulf %444, %430 : vector<8x128xf32>
    %446 = arith.addf %441, %445 : vector<8x128xf32>
    %447 = vector.extract_strided_slice %413 {offsets = [0, 0, 2], sizes = [1, 8, 1], strides = [1, 1, 1]} : vector<3x8x3xf32> to vector<1x8x1xf32>
    %448 = vector.shape_cast %447 : vector<1x8x1xf32> to vector<8x1xf32>
    %c127_i32_151 = arith.constant 127 : i32
    %449 = tpu.dynamic_rotate %430 by %c127_i32_151 dim 1 : vector<8x128xf32>, i32 -> vector<8x128xf32>
    %c127_i32_152 = arith.constant 127 : i32
    %450 = vector.broadcast %c127_i32_152 : i32 to vector<1x128xi32>
    %451 = arith.cmpi slt, %428, %450 : vector<1x128xi32>
    %cst_153 = arith.constant 0.000000e+00 : f32
    %452 = vector.shape_cast %451 : vector<1x128xi1> to vector<1x128xi1>
    %453 = vector.broadcast %452 : vector<1x128xi1> to vector<8x128xi1>
    %454 = vector.broadcast %cst_153 : f32 to vector<8x128xf32>
    %455 = arith.select %453, %449, %454 : vector<8x128xi1>, vector<8x128xf32>
    %456 = vector.broadcast %448 : vector<8x1xf32> to vector<8x128xf32>
    %457 = arith.mulf %456, %455 : vector<8x128xf32>
    %458 = arith.addf %446, %457 : vector<8x128xf32>
    %459 = vector.extract_strided_slice %414 {offsets = [0, 0, 0], sizes = [1, 8, 1], strides = [1, 1, 1]} : vector<3x8x1xf32> to vector<1x8x1xf32>
    %460 = vector.shape_cast %459 : vector<1x8x1xf32> to vector<8x1xf32>
    %461 = vector.broadcast %460 : vector<8x1xf32> to vector<8x128xf32>
    %462 = arith.addf %458, %461 : vector<8x128xf32>
    %463 = vector.extract_strided_slice %415 {offsets = [0, 0, 0], sizes = [1, 8, 1], strides = [1, 1, 1]} : vector<3x8x1xf32> to vector<1x8x1xf32>
    %464 = vector.shape_cast %463 : vector<1x8x1xf32> to vector<8x1xf32>
    %465 = vector.extract_strided_slice %416 {offsets = [0, 0, 0], sizes = [1, 8, 1], strides = [1, 1, 1]} : vector<3x8x1xf32> to vector<1x8x1xf32>
    %466 = vector.shape_cast %465 : vector<1x8x1xf32> to vector<8x1xf32>
    %cst_154 = arith.constant dense<0.000000e+00> : vector<128xf32>
    %467 = vector.multi_reduction <add>, %462, %cst_154 [0] : vector<8x128xf32> to vector<128xf32>
    %468 = vector.shape_cast %467 : vector<128xf32> to vector<1x128xf32>
    %cst_155 = arith.constant 1.250000e-01 : f32
    %469 = vector.broadcast %cst_155 : f32 to vector<1x128xf32>
    %470 = arith.mulf %468, %469 : vector<1x128xf32>
    %471 = arith.mulf %462, %462 : vector<8x128xf32>
    %cst_156 = arith.constant dense<0.000000e+00> : vector<128xf32>
    %472 = vector.multi_reduction <add>, %471, %cst_156 [0] : vector<8x128xf32> to vector<128xf32>
    %473 = vector.shape_cast %472 : vector<128xf32> to vector<1x128xf32>
    %cst_157 = arith.constant 1.250000e-01 : f32
    %474 = vector.broadcast %cst_157 : f32 to vector<1x128xf32>
    %475 = arith.mulf %473, %474 : vector<1x128xf32>
    %476 = arith.mulf %470, %470 : vector<1x128xf32>
    %477 = arith.subf %475, %476 : vector<1x128xf32>
    %cst_158 = arith.constant 0.000000e+00 : f32
    %478 = vector.broadcast %cst_158 : f32 to vector<1x128xf32>
    %479 = arith.maximumf %477, %478 : vector<1x128xf32>
    %480 = vector.broadcast %470 : vector<1x128xf32> to vector<8x128xf32>
    %481 = arith.subf %462, %480 : vector<8x128xf32>
    %cst_159 = arith.constant 9.99999974E-6 : f32
    %482 = vector.broadcast %cst_159 : f32 to vector<1x128xf32>
    %483 = arith.addf %479, %482 : vector<1x128xf32>
    %484 = math.rsqrt %483 : vector<1x128xf32>
    %485 = vector.broadcast %484 : vector<1x128xf32> to vector<8x128xf32>
    %486 = arith.mulf %481, %485 : vector<8x128xf32>
    %487 = vector.broadcast %464 : vector<8x1xf32> to vector<8x128xf32>
    %488 = arith.mulf %486, %487 : vector<8x128xf32>
    %489 = vector.broadcast %466 : vector<8x1xf32> to vector<8x128xf32>
    %490 = arith.addf %488, %489 : vector<8x128xf32>
    %cst_160 = arith.constant 5.000000e-01 : f32
    %491 = vector.broadcast %cst_160 : f32 to vector<8x128xf32>
    %492 = arith.mulf %491, %490 : vector<8x128xf32>
    %cst_161 = arith.constant 4.471500e-02 : f32
    %493 = vector.broadcast %cst_161 : f32 to vector<8x128xf32>
    %494 = arith.mulf %493, %490 : vector<8x128xf32>
    %495 = arith.mulf %494, %490 : vector<8x128xf32>
    %496 = arith.mulf %495, %490 : vector<8x128xf32>
    %497 = arith.addf %490, %496 : vector<8x128xf32>
    %cst_162 = arith.constant 0.797884583 : f32
    %498 = vector.broadcast %cst_162 : f32 to vector<8x128xf32>
    %499 = arith.mulf %498, %497 : vector<8x128xf32>
    %500 = math.tanh %499 : vector<8x128xf32>
    %cst_163 = arith.constant 1.000000e+00 : f32
    %501 = vector.broadcast %cst_163 : f32 to vector<8x128xf32>
    %502 = arith.addf %501, %500 : vector<8x128xf32>
    %503 = arith.mulf %492, %502 : vector<8x128xf32>
    %504 = vector.extract_strided_slice %417 {offsets = [0, 0, 0], sizes = [1, 8, 8], strides = [1, 1, 1]} : vector<3x8x8xf32> to vector<1x8x8xf32>
    %505 = vector.shape_cast %504 : vector<1x8x8xf32> to vector<8x8xf32>
    %506 = arith.truncf %505 : vector<8x8xf32> to vector<8x8xbf16>
    %507 = arith.truncf %503 : vector<8x128xf32> to vector<8x128xbf16>
    %cst_164 = arith.constant dense<0.000000e+00> : vector<8x128xf32>
    %508 = tpu.matmul %506, %507, %cst_164 {dimension_numbers = #tpu.dot_dimension_numbers<[1], [0], [0], [1], [0, 0, 1, 1], [], []>} : vector<8x8xbf16>, vector<8x128xbf16>, vector<8x128xf32> -> vector<8x128xf32>
    %509 = vector.extract_strided_slice %418 {offsets = [0, 0, 0], sizes = [1, 8, 1], strides = [1, 1, 1]} : vector<3x8x1xf32> to vector<1x8x1xf32>
    %510 = vector.shape_cast %509 : vector<1x8x1xf32> to vector<8x1xf32>
    %511 = vector.broadcast %510 : vector<8x1xf32> to vector<8x128xf32>
    %512 = arith.addf %508, %511 : vector<8x128xf32>
    %513 = vector.extract_strided_slice %419 {offsets = [0, 0, 0], sizes = [1, 8, 1], strides = [1, 1, 1]} : vector<3x8x1xf32> to vector<1x8x1xf32>
    %514 = vector.shape_cast %513 : vector<1x8x1xf32> to vector<8x1xf32>
    %515 = vector.extract_strided_slice %420 {offsets = [0, 0, 0], sizes = [1, 8, 1], strides = [1, 1, 1]} : vector<3x8x1xf32> to vector<1x8x1xf32>
    %516 = vector.shape_cast %515 : vector<1x8x1xf32> to vector<8x1xf32>
    %cst_165 = arith.constant dense<0.000000e+00> : vector<128xf32>
    %517 = vector.multi_reduction <add>, %512, %cst_165 [0] : vector<8x128xf32> to vector<128xf32>
    %518 = vector.shape_cast %517 : vector<128xf32> to vector<1x128xf32>
    %cst_166 = arith.constant 1.250000e-01 : f32
    %519 = vector.broadcast %cst_166 : f32 to vector<1x128xf32>
    %520 = arith.mulf %518, %519 : vector<1x128xf32>
    %521 = arith.mulf %512, %512 : vector<8x128xf32>
    %cst_167 = arith.constant dense<0.000000e+00> : vector<128xf32>
    %522 = vector.multi_reduction <add>, %521, %cst_167 [0] : vector<8x128xf32> to vector<128xf32>
    %523 = vector.shape_cast %522 : vector<128xf32> to vector<1x128xf32>
    %cst_168 = arith.constant 1.250000e-01 : f32
    %524 = vector.broadcast %cst_168 : f32 to vector<1x128xf32>
    %525 = arith.mulf %523, %524 : vector<1x128xf32>
    %526 = arith.mulf %520, %520 : vector<1x128xf32>
    %527 = arith.subf %525, %526 : vector<1x128xf32>
    %cst_169 = arith.constant 0.000000e+00 : f32
    %528 = vector.broadcast %cst_169 : f32 to vector<1x128xf32>
    %529 = arith.maximumf %527, %528 : vector<1x128xf32>
    %530 = vector.broadcast %520 : vector<1x128xf32> to vector<8x128xf32>
    %531 = arith.subf %512, %530 : vector<8x128xf32>
    %cst_170 = arith.constant 9.99999974E-6 : f32
    %532 = vector.broadcast %cst_170 : f32 to vector<1x128xf32>
    %533 = arith.addf %529, %532 : vector<1x128xf32>
    %534 = math.rsqrt %533 : vector<1x128xf32>
    %535 = vector.broadcast %534 : vector<1x128xf32> to vector<8x128xf32>
    %536 = arith.mulf %531, %535 : vector<8x128xf32>
    %537 = vector.broadcast %514 : vector<8x1xf32> to vector<8x128xf32>
    %538 = arith.mulf %536, %537 : vector<8x128xf32>
    %539 = vector.broadcast %516 : vector<8x1xf32> to vector<8x128xf32>
    %540 = arith.addf %538, %539 : vector<8x128xf32>
    %cst_171 = arith.constant 5.000000e-01 : f32
    %541 = vector.broadcast %cst_171 : f32 to vector<8x128xf32>
    %542 = arith.mulf %541, %540 : vector<8x128xf32>
    %cst_172 = arith.constant 4.471500e-02 : f32
    %543 = vector.broadcast %cst_172 : f32 to vector<8x128xf32>
    %544 = arith.mulf %543, %540 : vector<8x128xf32>
    %545 = arith.mulf %544, %540 : vector<8x128xf32>
    %546 = arith.mulf %545, %540 : vector<8x128xf32>
    %547 = arith.addf %540, %546 : vector<8x128xf32>
    %cst_173 = arith.constant 0.797884583 : f32
    %548 = vector.broadcast %cst_173 : f32 to vector<8x128xf32>
    %549 = arith.mulf %548, %547 : vector<8x128xf32>
    %550 = math.tanh %549 : vector<8x128xf32>
    %cst_174 = arith.constant 1.000000e+00 : f32
    %551 = vector.broadcast %cst_174 : f32 to vector<8x128xf32>
    %552 = arith.addf %551, %550 : vector<8x128xf32>
    %553 = arith.mulf %542, %552 : vector<8x128xf32>
    %554 = arith.addf %427, %553 : vector<8x128xf32>
    %555 = vector.broadcast %5 : vector<1x128xf32> to vector<8x128xf32>
    %556 = arith.mulf %554, %555 : vector<8x128xf32>
    %557 = vector.extract_strided_slice %413 {offsets = [1, 0, 0], sizes = [1, 8, 1], strides = [1, 1, 1]} : vector<3x8x3xf32> to vector<1x8x1xf32>
    %558 = vector.shape_cast %557 : vector<1x8x1xf32> to vector<8x1xf32>
    %c3_i32_175 = arith.constant 3 : i32
    %559 = tpu.dynamic_rotate %556 by %c3_i32_175 dim 1 : vector<8x128xf32>, i32 -> vector<8x128xf32>
    %c3_i32_176 = arith.constant 3 : i32
    %560 = vector.broadcast %c3_i32_176 : i32 to vector<1x128xi32>
    %561 = arith.cmpi sge, %428, %560 : vector<1x128xi32>
    %cst_177 = arith.constant 0.000000e+00 : f32
    %562 = vector.shape_cast %561 : vector<1x128xi1> to vector<1x128xi1>
    %563 = vector.broadcast %562 : vector<1x128xi1> to vector<8x128xi1>
    %564 = vector.broadcast %cst_177 : f32 to vector<8x128xf32>
    %565 = arith.select %563, %559, %564 : vector<8x128xi1>, vector<8x128xf32>
    %566 = vector.broadcast %558 : vector<8x1xf32> to vector<8x128xf32>
    %567 = arith.mulf %566, %565 : vector<8x128xf32>
    %568 = vector.extract_strided_slice %413 {offsets = [1, 0, 1], sizes = [1, 8, 1], strides = [1, 1, 1]} : vector<3x8x3xf32> to vector<1x8x1xf32>
    %569 = vector.shape_cast %568 : vector<1x8x1xf32> to vector<8x1xf32>
    %570 = vector.broadcast %569 : vector<8x1xf32> to vector<8x128xf32>
    %571 = arith.mulf %570, %556 : vector<8x128xf32>
    %572 = arith.addf %567, %571 : vector<8x128xf32>
    %573 = vector.extract_strided_slice %413 {offsets = [1, 0, 2], sizes = [1, 8, 1], strides = [1, 1, 1]} : vector<3x8x3xf32> to vector<1x8x1xf32>
    %574 = vector.shape_cast %573 : vector<1x8x1xf32> to vector<8x1xf32>
    %c125_i32_178 = arith.constant 125 : i32
    %575 = tpu.dynamic_rotate %556 by %c125_i32_178 dim 1 : vector<8x128xf32>, i32 -> vector<8x128xf32>
    %c125_i32_179 = arith.constant 125 : i32
    %576 = vector.broadcast %c125_i32_179 : i32 to vector<1x128xi32>
    %577 = arith.cmpi slt, %428, %576 : vector<1x128xi32>
    %cst_180 = arith.constant 0.000000e+00 : f32
    %578 = vector.shape_cast %577 : vector<1x128xi1> to vector<1x128xi1>
    %579 = vector.broadcast %578 : vector<1x128xi1> to vector<8x128xi1>
    %580 = vector.broadcast %cst_180 : f32 to vector<8x128xf32>
    %581 = arith.select %579, %575, %580 : vector<8x128xi1>, vector<8x128xf32>
    %582 = vector.broadcast %574 : vector<8x1xf32> to vector<8x128xf32>
    %583 = arith.mulf %582, %581 : vector<8x128xf32>
    %584 = arith.addf %572, %583 : vector<8x128xf32>
    %585 = vector.extract_strided_slice %414 {offsets = [1, 0, 0], sizes = [1, 8, 1], strides = [1, 1, 1]} : vector<3x8x1xf32> to vector<1x8x1xf32>
    %586 = vector.shape_cast %585 : vector<1x8x1xf32> to vector<8x1xf32>
    %587 = vector.broadcast %586 : vector<8x1xf32> to vector<8x128xf32>
    %588 = arith.addf %584, %587 : vector<8x128xf32>
    %589 = vector.extract_strided_slice %415 {offsets = [1, 0, 0], sizes = [1, 8, 1], strides = [1, 1, 1]} : vector<3x8x1xf32> to vector<1x8x1xf32>
    %590 = vector.shape_cast %589 : vector<1x8x1xf32> to vector<8x1xf32>
    %591 = vector.extract_strided_slice %416 {offsets = [1, 0, 0], sizes = [1, 8, 1], strides = [1, 1, 1]} : vector<3x8x1xf32> to vector<1x8x1xf32>
    %592 = vector.shape_cast %591 : vector<1x8x1xf32> to vector<8x1xf32>
    %cst_181 = arith.constant dense<0.000000e+00> : vector<128xf32>
    %593 = vector.multi_reduction <add>, %588, %cst_181 [0] : vector<8x128xf32> to vector<128xf32>
    %594 = vector.shape_cast %593 : vector<128xf32> to vector<1x128xf32>
    %cst_182 = arith.constant 1.250000e-01 : f32
    %595 = vector.broadcast %cst_182 : f32 to vector<1x128xf32>
    %596 = arith.mulf %594, %595 : vector<1x128xf32>
    %597 = arith.mulf %588, %588 : vector<8x128xf32>
    %cst_183 = arith.constant dense<0.000000e+00> : vector<128xf32>
    %598 = vector.multi_reduction <add>, %597, %cst_183 [0] : vector<8x128xf32> to vector<128xf32>
    %599 = vector.shape_cast %598 : vector<128xf32> to vector<1x128xf32>
    %cst_184 = arith.constant 1.250000e-01 : f32
    %600 = vector.broadcast %cst_184 : f32 to vector<1x128xf32>
    %601 = arith.mulf %599, %600 : vector<1x128xf32>
    %602 = arith.mulf %596, %596 : vector<1x128xf32>
    %603 = arith.subf %601, %602 : vector<1x128xf32>
    %cst_185 = arith.constant 0.000000e+00 : f32
    %604 = vector.broadcast %cst_185 : f32 to vector<1x128xf32>
    %605 = arith.maximumf %603, %604 : vector<1x128xf32>
    %606 = vector.broadcast %596 : vector<1x128xf32> to vector<8x128xf32>
    %607 = arith.subf %588, %606 : vector<8x128xf32>
    %cst_186 = arith.constant 9.99999974E-6 : f32
    %608 = vector.broadcast %cst_186 : f32 to vector<1x128xf32>
    %609 = arith.addf %605, %608 : vector<1x128xf32>
    %610 = math.rsqrt %609 : vector<1x128xf32>
    %611 = vector.broadcast %610 : vector<1x128xf32> to vector<8x128xf32>
    %612 = arith.mulf %607, %611 : vector<8x128xf32>
    %613 = vector.broadcast %590 : vector<8x1xf32> to vector<8x128xf32>
    %614 = arith.mulf %612, %613 : vector<8x128xf32>
    %615 = vector.broadcast %592 : vector<8x1xf32> to vector<8x128xf32>
    %616 = arith.addf %614, %615 : vector<8x128xf32>
    %cst_187 = arith.constant 5.000000e-01 : f32
    %617 = vector.broadcast %cst_187 : f32 to vector<8x128xf32>
    %618 = arith.mulf %617, %616 : vector<8x128xf32>
    %cst_188 = arith.constant 4.471500e-02 : f32
    %619 = vector.broadcast %cst_188 : f32 to vector<8x128xf32>
    %620 = arith.mulf %619, %616 : vector<8x128xf32>
    %621 = arith.mulf %620, %616 : vector<8x128xf32>
    %622 = arith.mulf %621, %616 : vector<8x128xf32>
    %623 = arith.addf %616, %622 : vector<8x128xf32>
    %cst_189 = arith.constant 0.797884583 : f32
    %624 = vector.broadcast %cst_189 : f32 to vector<8x128xf32>
    %625 = arith.mulf %624, %623 : vector<8x128xf32>
    %626 = math.tanh %625 : vector<8x128xf32>
    %cst_190 = arith.constant 1.000000e+00 : f32
    %627 = vector.broadcast %cst_190 : f32 to vector<8x128xf32>
    %628 = arith.addf %627, %626 : vector<8x128xf32>
    %629 = arith.mulf %618, %628 : vector<8x128xf32>
    %630 = vector.extract_strided_slice %417 {offsets = [1, 0, 0], sizes = [1, 8, 8], strides = [1, 1, 1]} : vector<3x8x8xf32> to vector<1x8x8xf32>
    %631 = vector.shape_cast %630 : vector<1x8x8xf32> to vector<8x8xf32>
    %632 = arith.truncf %631 : vector<8x8xf32> to vector<8x8xbf16>
    %633 = arith.truncf %629 : vector<8x128xf32> to vector<8x128xbf16>
    %cst_191 = arith.constant dense<0.000000e+00> : vector<8x128xf32>
    %634 = tpu.matmul %632, %633, %cst_191 {dimension_numbers = #tpu.dot_dimension_numbers<[1], [0], [0], [1], [0, 0, 1, 1], [], []>} : vector<8x8xbf16>, vector<8x128xbf16>, vector<8x128xf32> -> vector<8x128xf32>
    %635 = vector.extract_strided_slice %418 {offsets = [1, 0, 0], sizes = [1, 8, 1], strides = [1, 1, 1]} : vector<3x8x1xf32> to vector<1x8x1xf32>
    %636 = vector.shape_cast %635 : vector<1x8x1xf32> to vector<8x1xf32>
    %637 = vector.broadcast %636 : vector<8x1xf32> to vector<8x128xf32>
    %638 = arith.addf %634, %637 : vector<8x128xf32>
    %639 = vector.extract_strided_slice %419 {offsets = [1, 0, 0], sizes = [1, 8, 1], strides = [1, 1, 1]} : vector<3x8x1xf32> to vector<1x8x1xf32>
    %640 = vector.shape_cast %639 : vector<1x8x1xf32> to vector<8x1xf32>
    %641 = vector.extract_strided_slice %420 {offsets = [1, 0, 0], sizes = [1, 8, 1], strides = [1, 1, 1]} : vector<3x8x1xf32> to vector<1x8x1xf32>
    %642 = vector.shape_cast %641 : vector<1x8x1xf32> to vector<8x1xf32>
    %cst_192 = arith.constant dense<0.000000e+00> : vector<128xf32>
    %643 = vector.multi_reduction <add>, %638, %cst_192 [0] : vector<8x128xf32> to vector<128xf32>
    %644 = vector.shape_cast %643 : vector<128xf32> to vector<1x128xf32>
    %cst_193 = arith.constant 1.250000e-01 : f32
    %645 = vector.broadcast %cst_193 : f32 to vector<1x128xf32>
    %646 = arith.mulf %644, %645 : vector<1x128xf32>
    %647 = arith.mulf %638, %638 : vector<8x128xf32>
    %cst_194 = arith.constant dense<0.000000e+00> : vector<128xf32>
    %648 = vector.multi_reduction <add>, %647, %cst_194 [0] : vector<8x128xf32> to vector<128xf32>
    %649 = vector.shape_cast %648 : vector<128xf32> to vector<1x128xf32>
    %cst_195 = arith.constant 1.250000e-01 : f32
    %650 = vector.broadcast %cst_195 : f32 to vector<1x128xf32>
    %651 = arith.mulf %649, %650 : vector<1x128xf32>
    %652 = arith.mulf %646, %646 : vector<1x128xf32>
    %653 = arith.subf %651, %652 : vector<1x128xf32>
    %cst_196 = arith.constant 0.000000e+00 : f32
    %654 = vector.broadcast %cst_196 : f32 to vector<1x128xf32>
    %655 = arith.maximumf %653, %654 : vector<1x128xf32>
    %656 = vector.broadcast %646 : vector<1x128xf32> to vector<8x128xf32>
    %657 = arith.subf %638, %656 : vector<8x128xf32>
    %cst_197 = arith.constant 9.99999974E-6 : f32
    %658 = vector.broadcast %cst_197 : f32 to vector<1x128xf32>
    %659 = arith.addf %655, %658 : vector<1x128xf32>
    %660 = math.rsqrt %659 : vector<1x128xf32>
    %661 = vector.broadcast %660 : vector<1x128xf32> to vector<8x128xf32>
    %662 = arith.mulf %657, %661 : vector<8x128xf32>
    %663 = vector.broadcast %640 : vector<8x1xf32> to vector<8x128xf32>
    %664 = arith.mulf %662, %663 : vector<8x128xf32>
    %665 = vector.broadcast %642 : vector<8x1xf32> to vector<8x128xf32>
    %666 = arith.addf %664, %665 : vector<8x128xf32>
    %cst_198 = arith.constant 5.000000e-01 : f32
    %667 = vector.broadcast %cst_198 : f32 to vector<8x128xf32>
    %668 = arith.mulf %667, %666 : vector<8x128xf32>
    %cst_199 = arith.constant 4.471500e-02 : f32
    %669 = vector.broadcast %cst_199 : f32 to vector<8x128xf32>
    %670 = arith.mulf %669, %666 : vector<8x128xf32>
    %671 = arith.mulf %670, %666 : vector<8x128xf32>
    %672 = arith.mulf %671, %666 : vector<8x128xf32>
    %673 = arith.addf %666, %672 : vector<8x128xf32>
    %cst_200 = arith.constant 0.797884583 : f32
    %674 = vector.broadcast %cst_200 : f32 to vector<8x128xf32>
    %675 = arith.mulf %674, %673 : vector<8x128xf32>
    %676 = math.tanh %675 : vector<8x128xf32>
    %cst_201 = arith.constant 1.000000e+00 : f32
    %677 = vector.broadcast %cst_201 : f32 to vector<8x128xf32>
    %678 = arith.addf %677, %676 : vector<8x128xf32>
    %679 = arith.mulf %668, %678 : vector<8x128xf32>
    %680 = arith.addf %554, %679 : vector<8x128xf32>
    %681 = vector.broadcast %5 : vector<1x128xf32> to vector<8x128xf32>
    %682 = arith.mulf %680, %681 : vector<8x128xf32>
    %683 = vector.extract_strided_slice %413 {offsets = [2, 0, 0], sizes = [1, 8, 1], strides = [1, 1, 1]} : vector<3x8x3xf32> to vector<1x8x1xf32>
    %684 = vector.shape_cast %683 : vector<1x8x1xf32> to vector<8x1xf32>
    %c9_i32_202 = arith.constant 9 : i32
    %685 = tpu.dynamic_rotate %682 by %c9_i32_202 dim 1 : vector<8x128xf32>, i32 -> vector<8x128xf32>
    %c9_i32_203 = arith.constant 9 : i32
    %686 = vector.broadcast %c9_i32_203 : i32 to vector<1x128xi32>
    %687 = arith.cmpi sge, %428, %686 : vector<1x128xi32>
    %cst_204 = arith.constant 0.000000e+00 : f32
    %688 = vector.shape_cast %687 : vector<1x128xi1> to vector<1x128xi1>
    %689 = vector.broadcast %688 : vector<1x128xi1> to vector<8x128xi1>
    %690 = vector.broadcast %cst_204 : f32 to vector<8x128xf32>
    %691 = arith.select %689, %685, %690 : vector<8x128xi1>, vector<8x128xf32>
    %692 = vector.broadcast %684 : vector<8x1xf32> to vector<8x128xf32>
    %693 = arith.mulf %692, %691 : vector<8x128xf32>
    %694 = vector.extract_strided_slice %413 {offsets = [2, 0, 1], sizes = [1, 8, 1], strides = [1, 1, 1]} : vector<3x8x3xf32> to vector<1x8x1xf32>
    %695 = vector.shape_cast %694 : vector<1x8x1xf32> to vector<8x1xf32>
    %696 = vector.broadcast %695 : vector<8x1xf32> to vector<8x128xf32>
    %697 = arith.mulf %696, %682 : vector<8x128xf32>
    %698 = arith.addf %693, %697 : vector<8x128xf32>
    %699 = vector.extract_strided_slice %413 {offsets = [2, 0, 2], sizes = [1, 8, 1], strides = [1, 1, 1]} : vector<3x8x3xf32> to vector<1x8x1xf32>
    %700 = vector.shape_cast %699 : vector<1x8x1xf32> to vector<8x1xf32>
    %c119_i32_205 = arith.constant 119 : i32
    %701 = tpu.dynamic_rotate %682 by %c119_i32_205 dim 1 : vector<8x128xf32>, i32 -> vector<8x128xf32>
    %c119_i32_206 = arith.constant 119 : i32
    %702 = vector.broadcast %c119_i32_206 : i32 to vector<1x128xi32>
    %703 = arith.cmpi slt, %428, %702 : vector<1x128xi32>
    %cst_207 = arith.constant 0.000000e+00 : f32
    %704 = vector.shape_cast %703 : vector<1x128xi1> to vector<1x128xi1>
    %705 = vector.broadcast %704 : vector<1x128xi1> to vector<8x128xi1>
    %706 = vector.broadcast %cst_207 : f32 to vector<8x128xf32>
    %707 = arith.select %705, %701, %706 : vector<8x128xi1>, vector<8x128xf32>
    %708 = vector.broadcast %700 : vector<8x1xf32> to vector<8x128xf32>
    %709 = arith.mulf %708, %707 : vector<8x128xf32>
    %710 = arith.addf %698, %709 : vector<8x128xf32>
    %711 = vector.extract_strided_slice %414 {offsets = [2, 0, 0], sizes = [1, 8, 1], strides = [1, 1, 1]} : vector<3x8x1xf32> to vector<1x8x1xf32>
    %712 = vector.shape_cast %711 : vector<1x8x1xf32> to vector<8x1xf32>
    %713 = vector.broadcast %712 : vector<8x1xf32> to vector<8x128xf32>
    %714 = arith.addf %710, %713 : vector<8x128xf32>
    %715 = vector.extract_strided_slice %415 {offsets = [2, 0, 0], sizes = [1, 8, 1], strides = [1, 1, 1]} : vector<3x8x1xf32> to vector<1x8x1xf32>
    %716 = vector.shape_cast %715 : vector<1x8x1xf32> to vector<8x1xf32>
    %717 = vector.extract_strided_slice %416 {offsets = [2, 0, 0], sizes = [1, 8, 1], strides = [1, 1, 1]} : vector<3x8x1xf32> to vector<1x8x1xf32>
    %718 = vector.shape_cast %717 : vector<1x8x1xf32> to vector<8x1xf32>
    %cst_208 = arith.constant dense<0.000000e+00> : vector<128xf32>
    %719 = vector.multi_reduction <add>, %714, %cst_208 [0] : vector<8x128xf32> to vector<128xf32>
    %720 = vector.shape_cast %719 : vector<128xf32> to vector<1x128xf32>
    %cst_209 = arith.constant 1.250000e-01 : f32
    %721 = vector.broadcast %cst_209 : f32 to vector<1x128xf32>
    %722 = arith.mulf %720, %721 : vector<1x128xf32>
    %723 = arith.mulf %714, %714 : vector<8x128xf32>
    %cst_210 = arith.constant dense<0.000000e+00> : vector<128xf32>
    %724 = vector.multi_reduction <add>, %723, %cst_210 [0] : vector<8x128xf32> to vector<128xf32>
    %725 = vector.shape_cast %724 : vector<128xf32> to vector<1x128xf32>
    %cst_211 = arith.constant 1.250000e-01 : f32
    %726 = vector.broadcast %cst_211 : f32 to vector<1x128xf32>
    %727 = arith.mulf %725, %726 : vector<1x128xf32>
    %728 = arith.mulf %722, %722 : vector<1x128xf32>
    %729 = arith.subf %727, %728 : vector<1x128xf32>
    %cst_212 = arith.constant 0.000000e+00 : f32
    %730 = vector.broadcast %cst_212 : f32 to vector<1x128xf32>
    %731 = arith.maximumf %729, %730 : vector<1x128xf32>
    %732 = vector.broadcast %722 : vector<1x128xf32> to vector<8x128xf32>
    %733 = arith.subf %714, %732 : vector<8x128xf32>
    %cst_213 = arith.constant 9.99999974E-6 : f32
    %734 = vector.broadcast %cst_213 : f32 to vector<1x128xf32>
    %735 = arith.addf %731, %734 : vector<1x128xf32>
    %736 = math.rsqrt %735 : vector<1x128xf32>
    %737 = vector.broadcast %736 : vector<1x128xf32> to vector<8x128xf32>
    %738 = arith.mulf %733, %737 : vector<8x128xf32>
    %739 = vector.broadcast %716 : vector<8x1xf32> to vector<8x128xf32>
    %740 = arith.mulf %738, %739 : vector<8x128xf32>
    %741 = vector.broadcast %718 : vector<8x1xf32> to vector<8x128xf32>
    %742 = arith.addf %740, %741 : vector<8x128xf32>
    %cst_214 = arith.constant 5.000000e-01 : f32
    %743 = vector.broadcast %cst_214 : f32 to vector<8x128xf32>
    %744 = arith.mulf %743, %742 : vector<8x128xf32>
    %cst_215 = arith.constant 4.471500e-02 : f32
    %745 = vector.broadcast %cst_215 : f32 to vector<8x128xf32>
    %746 = arith.mulf %745, %742 : vector<8x128xf32>
    %747 = arith.mulf %746, %742 : vector<8x128xf32>
    %748 = arith.mulf %747, %742 : vector<8x128xf32>
    %749 = arith.addf %742, %748 : vector<8x128xf32>
    %cst_216 = arith.constant 0.797884583 : f32
    %750 = vector.broadcast %cst_216 : f32 to vector<8x128xf32>
    %751 = arith.mulf %750, %749 : vector<8x128xf32>
    %752 = math.tanh %751 : vector<8x128xf32>
    %cst_217 = arith.constant 1.000000e+00 : f32
    %753 = vector.broadcast %cst_217 : f32 to vector<8x128xf32>
    %754 = arith.addf %753, %752 : vector<8x128xf32>
    %755 = arith.mulf %744, %754 : vector<8x128xf32>
    %756 = vector.extract_strided_slice %417 {offsets = [2, 0, 0], sizes = [1, 8, 8], strides = [1, 1, 1]} : vector<3x8x8xf32> to vector<1x8x8xf32>
    %757 = vector.shape_cast %756 : vector<1x8x8xf32> to vector<8x8xf32>
    %758 = arith.truncf %757 : vector<8x8xf32> to vector<8x8xbf16>
    %759 = arith.truncf %755 : vector<8x128xf32> to vector<8x128xbf16>
    %cst_218 = arith.constant dense<0.000000e+00> : vector<8x128xf32>
    %760 = tpu.matmul %758, %759, %cst_218 {dimension_numbers = #tpu.dot_dimension_numbers<[1], [0], [0], [1], [0, 0, 1, 1], [], []>} : vector<8x8xbf16>, vector<8x128xbf16>, vector<8x128xf32> -> vector<8x128xf32>
    %761 = vector.extract_strided_slice %418 {offsets = [2, 0, 0], sizes = [1, 8, 1], strides = [1, 1, 1]} : vector<3x8x1xf32> to vector<1x8x1xf32>
    %762 = vector.shape_cast %761 : vector<1x8x1xf32> to vector<8x1xf32>
    %763 = vector.broadcast %762 : vector<8x1xf32> to vector<8x128xf32>
    %764 = arith.addf %760, %763 : vector<8x128xf32>
    %765 = vector.extract_strided_slice %419 {offsets = [2, 0, 0], sizes = [1, 8, 1], strides = [1, 1, 1]} : vector<3x8x1xf32> to vector<1x8x1xf32>
    %766 = vector.shape_cast %765 : vector<1x8x1xf32> to vector<8x1xf32>
    %767 = vector.extract_strided_slice %420 {offsets = [2, 0, 0], sizes = [1, 8, 1], strides = [1, 1, 1]} : vector<3x8x1xf32> to vector<1x8x1xf32>
    %768 = vector.shape_cast %767 : vector<1x8x1xf32> to vector<8x1xf32>
    %cst_219 = arith.constant dense<0.000000e+00> : vector<128xf32>
    %769 = vector.multi_reduction <add>, %764, %cst_219 [0] : vector<8x128xf32> to vector<128xf32>
    %770 = vector.shape_cast %769 : vector<128xf32> to vector<1x128xf32>
    %cst_220 = arith.constant 1.250000e-01 : f32
    %771 = vector.broadcast %cst_220 : f32 to vector<1x128xf32>
    %772 = arith.mulf %770, %771 : vector<1x128xf32>
    %773 = arith.mulf %764, %764 : vector<8x128xf32>
    %cst_221 = arith.constant dense<0.000000e+00> : vector<128xf32>
    %774 = vector.multi_reduction <add>, %773, %cst_221 [0] : vector<8x128xf32> to vector<128xf32>
    %775 = vector.shape_cast %774 : vector<128xf32> to vector<1x128xf32>
    %cst_222 = arith.constant 1.250000e-01 : f32
    %776 = vector.broadcast %cst_222 : f32 to vector<1x128xf32>
    %777 = arith.mulf %775, %776 : vector<1x128xf32>
    %778 = arith.mulf %772, %772 : vector<1x128xf32>
    %779 = arith.subf %777, %778 : vector<1x128xf32>
    %cst_223 = arith.constant 0.000000e+00 : f32
    %780 = vector.broadcast %cst_223 : f32 to vector<1x128xf32>
    %781 = arith.maximumf %779, %780 : vector<1x128xf32>
    %782 = vector.broadcast %772 : vector<1x128xf32> to vector<8x128xf32>
    %783 = arith.subf %764, %782 : vector<8x128xf32>
    %cst_224 = arith.constant 9.99999974E-6 : f32
    %784 = vector.broadcast %cst_224 : f32 to vector<1x128xf32>
    %785 = arith.addf %781, %784 : vector<1x128xf32>
    %786 = math.rsqrt %785 : vector<1x128xf32>
    %787 = vector.broadcast %786 : vector<1x128xf32> to vector<8x128xf32>
    %788 = arith.mulf %783, %787 : vector<8x128xf32>
    %789 = vector.broadcast %766 : vector<8x1xf32> to vector<8x128xf32>
    %790 = arith.mulf %788, %789 : vector<8x128xf32>
    %791 = vector.broadcast %768 : vector<8x1xf32> to vector<8x128xf32>
    %792 = arith.addf %790, %791 : vector<8x128xf32>
    %cst_225 = arith.constant 5.000000e-01 : f32
    %793 = vector.broadcast %cst_225 : f32 to vector<8x128xf32>
    %794 = arith.mulf %793, %792 : vector<8x128xf32>
    %cst_226 = arith.constant 4.471500e-02 : f32
    %795 = vector.broadcast %cst_226 : f32 to vector<8x128xf32>
    %796 = arith.mulf %795, %792 : vector<8x128xf32>
    %797 = arith.mulf %796, %792 : vector<8x128xf32>
    %798 = arith.mulf %797, %792 : vector<8x128xf32>
    %799 = arith.addf %792, %798 : vector<8x128xf32>
    %cst_227 = arith.constant 0.797884583 : f32
    %800 = vector.broadcast %cst_227 : f32 to vector<8x128xf32>
    %801 = arith.mulf %800, %799 : vector<8x128xf32>
    %802 = math.tanh %801 : vector<8x128xf32>
    %cst_228 = arith.constant 1.000000e+00 : f32
    %803 = vector.broadcast %cst_228 : f32 to vector<8x128xf32>
    %804 = arith.addf %803, %802 : vector<8x128xf32>
    %805 = arith.mulf %794, %804 : vector<8x128xf32>
    %806 = arith.addf %680, %805 : vector<8x128xf32>
    %807 = vector.broadcast %5 : vector<1x128xf32> to vector<8x128xf32>
    %808 = arith.mulf %806, %807 : vector<8x128xf32>
    %809 = arith.truncf %421 : vector<8x8xf32> to vector<8x8xbf16>
    %810 = arith.truncf %808 : vector<8x128xf32> to vector<8x128xbf16>
    %cst_229 = arith.constant dense<0.000000e+00> : vector<8x128xf32>
    %811 = tpu.matmul %809, %810, %cst_229 {dimension_numbers = #tpu.dot_dimension_numbers<[1], [0], [0], [1], [0, 0, 1, 1], [], []>} : vector<8x8xbf16>, vector<8x128xbf16>, vector<8x128xf32> -> vector<8x128xf32>
    %812 = vector.broadcast %422 : vector<8x1xf32> to vector<8x128xf32>
    %813 = arith.addf %811, %812 : vector<8x128xf32>
    %814 = vector.broadcast %5 : vector<1x128xf32> to vector<8x128xf32>
    %815 = arith.mulf %813, %814 : vector<8x128xf32>
    %816 = arith.addf %410, %815 : vector<8x128xf32>
    %817 = arith.truncf %816 : vector<8x128xf32> to vector<8x128xbf16>
    %c0_230 = arith.constant 0 : index
    %c0_231 = arith.constant 0 : index
    %c0_232 = arith.constant 0 : index
    %c0_233 = arith.constant 0 : index
    %818 = vector.load %arg28[%c0_230, %c0_231, %c0_232, %c0_233] : memref<1x2x8x128xbf16, #tpu.memory_space<vmem>>, vector<1x1x8x128xbf16>
    %819 = vector.shape_cast %818 : vector<1x1x8x128xbf16> to vector<8x128xbf16>
    %820 = vector.shape_cast %817 : vector<8x128xbf16> to vector<1x1x8x128xbf16>
    tpu.vector_store %arg28[%c0_230, %c0_231, %c0_232, %c0_233], %820 {strides = array<i32>} : memref<1x2x8x128xbf16, #tpu.memory_space<vmem>>, vector<1x1x8x128xbf16>,
    %821 = arith.truncf %410 : vector<8x128xf32> to vector<8x128xbf16>
    %c0_234 = arith.constant 0 : index
    %c1 = arith.constant 1 : index
    %c0_235 = arith.constant 0 : index
    %c0_236 = arith.constant 0 : index
    %822 = vector.load %arg28[%c0_234, %c1, %c0_235, %c0_236] : memref<1x2x8x128xbf16, #tpu.memory_space<vmem>>, vector<1x1x8x128xbf16>
    %823 = vector.shape_cast %822 : vector<1x1x8x128xbf16> to vector<8x128xbf16>
    %824 = vector.shape_cast %821 : vector<8x128xbf16> to vector<1x1x8x128xbf16>
    tpu.vector_store %arg28[%c0_234, %c1, %c0_235, %c0_236], %824 {strides = array<i32>} : memref<1x2x8x128xbf16, #tpu.memory_space<vmem>>, vector<1x1x8x128xbf16>,
    return
  }
  func.func @transform_0(%arg0: i32) -> (i32, i32, i32) {
    %c0_i32 = arith.constant 0 : i32
    %c0_i32_0 = arith.constant 0 : i32
    %c0_i32_1 = arith.constant 0 : i32
    return %arg0, %c0_i32, %c0_i32_0 : i32, i32, i32
  }
  func.func @transform_1(%arg0: i32) -> (i32, i32, i32) {
    %c0_i32 = arith.constant 0 : i32
    %c0_i32_0 = arith.constant 0 : i32
    %c0_i32_1 = arith.constant 0 : i32
    return %arg0, %c0_i32, %c0_i32_0 : i32, i32, i32
  }
  func.func @transform_2(%arg0: i32) -> (i32, i32, i32) {
    %c0_i32 = arith.constant 0 : i32
    %c0_i32_0 = arith.constant 0 : i32
    %c0_i32_1 = arith.constant 0 : i32
    return %arg0, %c0_i32, %c0_i32_0 : i32, i32, i32
  }
  func.func @transform_3(%arg0: i32) -> (i32, i32) {
    %c0_i32 = arith.constant 0 : i32
    %c0_i32_0 = arith.constant 0 : i32
    %c0_i32_1 = arith.constant 0 : i32
    return %c0_i32, %c0_i32_0 : i32, i32
  }
  func.func @transform_4(%arg0: i32) -> (i32, i32) {
    %c0_i32 = arith.constant 0 : i32
    %c0_i32_0 = arith.constant 0 : i32
    %c0_i32_1 = arith.constant 0 : i32
    return %c0_i32, %c0_i32_0 : i32, i32
  }
  func.func @transform_5(%arg0: i32) -> (i32, i32, i32) {
    %c0_i32 = arith.constant 0 : i32
    %c0_i32_0 = arith.constant 0 : i32
    %c0_i32_1 = arith.constant 0 : i32
    %c0_i32_2 = arith.constant 0 : i32
    return %c0_i32, %c0_i32_0, %c0_i32_1 : i32, i32, i32
  }
  func.func @transform_6(%arg0: i32) -> (i32, i32, i32) {
    %c0_i32 = arith.constant 0 : i32
    %c0_i32_0 = arith.constant 0 : i32
    %c0_i32_1 = arith.constant 0 : i32
    %c0_i32_2 = arith.constant 0 : i32
    return %c0_i32, %c0_i32_0, %c0_i32_1 : i32, i32, i32
  }
  func.func @transform_7(%arg0: i32) -> (i32, i32, i32) {
    %c0_i32 = arith.constant 0 : i32
    %c0_i32_0 = arith.constant 0 : i32
    %c0_i32_1 = arith.constant 0 : i32
    %c0_i32_2 = arith.constant 0 : i32
    return %c0_i32, %c0_i32_0, %c0_i32_1 : i32, i32, i32
  }
  func.func @transform_8(%arg0: i32) -> (i32, i32, i32) {
    %c0_i32 = arith.constant 0 : i32
    %c0_i32_0 = arith.constant 0 : i32
    %c0_i32_1 = arith.constant 0 : i32
    %c0_i32_2 = arith.constant 0 : i32
    return %c0_i32, %c0_i32_0, %c0_i32_1 : i32, i32, i32
  }
  func.func @transform_9(%arg0: i32) -> (i32, i32, i32) {
    %c0_i32 = arith.constant 0 : i32
    %c0_i32_0 = arith.constant 0 : i32
    %c0_i32_1 = arith.constant 0 : i32
    %c0_i32_2 = arith.constant 0 : i32
    return %c0_i32, %c0_i32_0, %c0_i32_1 : i32, i32, i32
  }
  func.func @transform_10(%arg0: i32) -> (i32, i32, i32) {
    %c0_i32 = arith.constant 0 : i32
    %c0_i32_0 = arith.constant 0 : i32
    %c0_i32_1 = arith.constant 0 : i32
    %c0_i32_2 = arith.constant 0 : i32
    return %c0_i32, %c0_i32_0, %c0_i32_1 : i32, i32, i32
  }
  func.func @transform_11(%arg0: i32) -> (i32, i32, i32) {
    %c0_i32 = arith.constant 0 : i32
    %c0_i32_0 = arith.constant 0 : i32
    %c0_i32_1 = arith.constant 0 : i32
    %c0_i32_2 = arith.constant 0 : i32
    return %c0_i32, %c0_i32_0, %c0_i32_1 : i32, i32, i32
  }
  func.func @transform_12(%arg0: i32) -> (i32, i32, i32) {
    %c0_i32 = arith.constant 0 : i32
    %c0_i32_0 = arith.constant 0 : i32
    %c0_i32_1 = arith.constant 0 : i32
    %c0_i32_2 = arith.constant 0 : i32
    return %c0_i32, %c0_i32_0, %c0_i32_1 : i32, i32, i32
  }
  func.func @transform_13(%arg0: i32) -> (i32, i32) {
    %c0_i32 = arith.constant 0 : i32
    %c0_i32_0 = arith.constant 0 : i32
    %c0_i32_1 = arith.constant 0 : i32
    return %c0_i32, %c0_i32_0 : i32, i32
  }
  func.func @transform_14(%arg0: i32) -> (i32, i32) {
    %c0_i32 = arith.constant 0 : i32
    %c0_i32_0 = arith.constant 0 : i32
    %c0_i32_1 = arith.constant 0 : i32
    return %c0_i32, %c0_i32_0 : i32, i32
  }
  func.func @transform_15(%arg0: i32) -> (i32, i32) {
    %c0_i32 = arith.constant 0 : i32
    %c0_i32_0 = arith.constant 0 : i32
    %c0_i32_1 = arith.constant 0 : i32
    return %c0_i32, %c0_i32_0 : i32, i32
  }
  func.func @transform_16(%arg0: i32) -> (i32, i32) {
    %c0_i32 = arith.constant 0 : i32
    %c0_i32_0 = arith.constant 0 : i32
    %c0_i32_1 = arith.constant 0 : i32
    return %c0_i32, %c0_i32_0 : i32, i32
  }
  func.func @transform_17(%arg0: i32) -> (i32, i32, i32) {
    %c0_i32 = arith.constant 0 : i32
    %c0_i32_0 = arith.constant 0 : i32
    %c0_i32_1 = arith.constant 0 : i32
    %c0_i32_2 = arith.constant 0 : i32
    return %c0_i32, %c0_i32_0, %c0_i32_1 : i32, i32, i32
  }
  func.func @transform_18(%arg0: i32) -> (i32, i32, i32) {
    %c0_i32 = arith.constant 0 : i32
    %c0_i32_0 = arith.constant 0 : i32
    %c0_i32_1 = arith.constant 0 : i32
    %c0_i32_2 = arith.constant 0 : i32
    return %c0_i32, %c0_i32_0, %c0_i32_1 : i32, i32, i32
  }
  func.func @transform_19(%arg0: i32) -> (i32, i32, i32) {
    %c0_i32 = arith.constant 0 : i32
    %c0_i32_0 = arith.constant 0 : i32
    %c0_i32_1 = arith.constant 0 : i32
    %c0_i32_2 = arith.constant 0 : i32
    return %c0_i32, %c0_i32_0, %c0_i32_1 : i32, i32, i32
  }
  func.func @transform_20(%arg0: i32) -> (i32, i32, i32) {
    %c0_i32 = arith.constant 0 : i32
    %c0_i32_0 = arith.constant 0 : i32
    %c0_i32_1 = arith.constant 0 : i32
    %c0_i32_2 = arith.constant 0 : i32
    return %c0_i32, %c0_i32_0, %c0_i32_1 : i32, i32, i32
  }
  func.func @transform_21(%arg0: i32) -> (i32, i32, i32) {
    %c0_i32 = arith.constant 0 : i32
    %c0_i32_0 = arith.constant 0 : i32
    %c0_i32_1 = arith.constant 0 : i32
    %c0_i32_2 = arith.constant 0 : i32
    return %c0_i32, %c0_i32_0, %c0_i32_1 : i32, i32, i32
  }
  func.func @transform_22(%arg0: i32) -> (i32, i32, i32) {
    %c0_i32 = arith.constant 0 : i32
    %c0_i32_0 = arith.constant 0 : i32
    %c0_i32_1 = arith.constant 0 : i32
    %c0_i32_2 = arith.constant 0 : i32
    return %c0_i32, %c0_i32_0, %c0_i32_1 : i32, i32, i32
  }
  func.func @transform_23(%arg0: i32) -> (i32, i32, i32) {
    %c0_i32 = arith.constant 0 : i32
    %c0_i32_0 = arith.constant 0 : i32
    %c0_i32_1 = arith.constant 0 : i32
    %c0_i32_2 = arith.constant 0 : i32
    return %c0_i32, %c0_i32_0, %c0_i32_1 : i32, i32, i32
  }
  func.func @transform_24(%arg0: i32) -> (i32, i32, i32) {
    %c0_i32 = arith.constant 0 : i32
    %c0_i32_0 = arith.constant 0 : i32
    %c0_i32_1 = arith.constant 0 : i32
    %c0_i32_2 = arith.constant 0 : i32
    return %c0_i32, %c0_i32_0, %c0_i32_1 : i32, i32, i32
  }
  func.func @transform_25(%arg0: i32) -> (i32, i32) {
    %c0_i32 = arith.constant 0 : i32
    %c0_i32_0 = arith.constant 0 : i32
    %c0_i32_1 = arith.constant 0 : i32
    return %c0_i32, %c0_i32_0 : i32, i32
  }
  func.func @transform_26(%arg0: i32) -> (i32, i32) {
    %c0_i32 = arith.constant 0 : i32
    %c0_i32_0 = arith.constant 0 : i32
    %c0_i32_1 = arith.constant 0 : i32
    return %c0_i32, %c0_i32_0 : i32, i32
  }
  func.func @transform_27(%arg0: i32) -> (i32, i32, i32, i32) {
    %c0_i32 = arith.constant 0 : i32
    %c0_i32_0 = arith.constant 0 : i32
    %c0_i32_1 = arith.constant 0 : i32
    %c0_i32_2 = arith.constant 0 : i32
    return %arg0, %c0_i32, %c0_i32_0, %c0_i32_1 : i32, i32, i32, i32
  }
}

module attributes {stable_mosaic.version = 11 : i64} {
  func.func @_flows_kernel(%arg0: i32, %arg1: i32, %arg2: memref<1x2x128xf32, #tpu.memory_space<vmem>>, %arg3: memref<1x1x128xf32, #tpu.memory_space<vmem>>, %arg4: memref<1x1x128xf32, #tpu.memory_space<vmem>>, %arg5: memref<1x1x8x128xbf16, #tpu.memory_space<vmem>>, %arg6: memref<2x2x1xf32, #tpu.memory_space<vmem>>, %arg7: memref<2x2x1xf32, #tpu.memory_space<vmem>>, %arg8: memref<1x8x1xf32, #tpu.memory_space<vmem>>, %arg9: memref<1x8x1xf32, #tpu.memory_space<vmem>>, %arg10: memref<1x3x8x3xf32, #tpu.memory_space<vmem>>, %arg11: memref<1x3x8x1xf32, #tpu.memory_space<vmem>>, %arg12: memref<1x3x8x1xf32, #tpu.memory_space<vmem>>, %arg13: memref<1x3x8x1xf32, #tpu.memory_space<vmem>>, %arg14: memref<1x3x8x8xf32, #tpu.memory_space<vmem>>, %arg15: memref<1x3x8x1xf32, #tpu.memory_space<vmem>>, %arg16: memref<1x3x8x1xf32, #tpu.memory_space<vmem>>, %arg17: memref<1x3x8x1xf32, #tpu.memory_space<vmem>>, %arg18: memref<1x29x8xf32, #tpu.memory_space<vmem>>, %arg19: memref<1x29x1xf32, #tpu.memory_space<vmem>>, %arg20: memref<1x1x1xf32, #tpu.memory_space<vmem>>, %arg21: memref<2x128xf32, #tpu.memory_space<vmem>>, %arg22: memref<1x1xf32, #tpu.memory_space<vmem>>, %arg23: memref<1x1xf32, #tpu.memory_space<vmem>>, %arg24: memref<1x1xf32, #tpu.memory_space<vmem>>) attributes {dimension_semantics = [#tpu.dimension_semantics<parallel>, #tpu.dimension_semantics<arbitrary>], iteration_bounds = array<i64: 2, 8>, scalar_prefetch = 0 : i64, scratch_operands = 4 : i64, tpu.core_type = #tpu.core_type<tc>, window_params = [{transform_indices = @transform_0, window_bounds = array<i64: 1, 2, 128>}, {transform_indices = @transform_1, window_bounds = array<i64: 1, 1, 128>}, {transform_indices = @transform_2, window_bounds = array<i64: 1, 1, 128>}, {transform_indices = @transform_3, window_bounds = array<i64: 1, 1, 8, 128>}, {pipeline_mode = #tpu.pipeline_mode<synchronous>, transform_indices = @transform_4, window_bounds = array<i64: 2, 2, 1>}, {pipeline_mode = #tpu.pipeline_mode<synchronous>, transform_indices = @transform_5, window_bounds = array<i64: 2, 2, 1>}, {transform_indices = @transform_6, window_bounds = array<i64: 1, 8, 1>}, {transform_indices = @transform_7, window_bounds = array<i64: 1, 8, 1>}, {transform_indices = @transform_8, window_bounds = array<i64: 1, 3, 8, 3>}, {transform_indices = @transform_9, window_bounds = array<i64: 1, 3, 8, 1>}, {transform_indices = @transform_10, window_bounds = array<i64: 1, 3, 8, 1>}, {transform_indices = @transform_11, window_bounds = array<i64: 1, 3, 8, 1>}, {transform_indices = @transform_12, window_bounds = array<i64: 1, 3, 8, 8>}, {transform_indices = @transform_13, window_bounds = array<i64: 1, 3, 8, 1>}, {transform_indices = @transform_14, window_bounds = array<i64: 1, 3, 8, 1>}, {transform_indices = @transform_15, window_bounds = array<i64: 1, 3, 8, 1>}, {transform_indices = @transform_16, window_bounds = array<i64: 1, 29, 8>}, {transform_indices = @transform_17, window_bounds = array<i64: 1, 29, 1>}, {transform_indices = @transform_18, window_bounds = array<i64: 1, 1, 1>}]} {
    %c0 = arith.constant 0 : index
    %c0_0 = arith.constant 0 : index
    %c0_1 = arith.constant 0 : index
    %0 = vector.load %arg4[%c0, %c0_0, %c0_1] : memref<1x1x128xf32, #tpu.memory_space<vmem>>, vector<1x1x128xf32>
    %1 = vector.shape_cast %0 : vector<1x1x128xf32> to vector<1x128xf32>
    %c0_i32 = arith.constant 0 : i32
    %2 = arith.cmpi eq, %arg1, %c0_i32 : i32
    %3 = arith.extui %2 : i1 to i32
    %c0_i32_2 = arith.constant 0 : i32
    %4 = arith.cmpi ne, %3, %c0_i32_2 : i32
    scf.if %4 {
      %c0_182 = arith.constant 0 : index
      %c0_183 = arith.constant 0 : index
      %c0_184 = arith.constant 0 : index
      %606 = vector.load %arg2[%c0_182, %c0_183, %c0_184] : memref<1x2x128xf32, #tpu.memory_space<vmem>>, vector<1x2x128xf32>
      %607 = vector.shape_cast %606 : vector<1x2x128xf32> to vector<2x128xf32>
      %c0_185 = arith.constant 0 : index
      %c0_186 = arith.constant 0 : index
      %c0_187 = arith.constant 0 : index
      %608 = vector.load %arg6[%c0_185, %c0_186, %c0_187] : memref<2x2x1xf32, #tpu.memory_space<vmem>>, vector<1x2x1xf32>
      %609 = vector.shape_cast %608 : vector<1x2x1xf32> to vector<2x1xf32>
      %c1_188 = arith.constant 1 : index
      %c0_189 = arith.constant 0 : index
      %c0_190 = arith.constant 0 : index
      %610 = vector.load %arg6[%c1_188, %c0_189, %c0_190] : memref<2x2x1xf32, #tpu.memory_space<vmem>>, vector<1x2x1xf32>
      %611 = vector.shape_cast %610 : vector<1x2x1xf32> to vector<2x1xf32>
      %612 = math.exp %611 : vector<2x1xf32>
      %613 = vector.broadcast %612 : vector<2x1xf32> to vector<2x128xf32>
      %614 = arith.mulf %613, %607 : vector<2x128xf32>
      %615 = vector.broadcast %609 : vector<2x1xf32> to vector<2x128xf32>
      %616 = arith.addf %615, %614 : vector<2x128xf32>
      %617 = vector.broadcast %1 : vector<1x128xf32> to vector<2x128xf32>
      %618 = arith.mulf %616, %617 : vector<2x128xf32>
      %c0_191 = arith.constant 0 : index
      %c0_192 = arith.constant 0 : index
      %619 = vector.load %arg21[%c0_191, %c0_192] : memref<2x128xf32, #tpu.memory_space<vmem>>, vector<2x128xf32>
      tpu.vector_store %arg21[%c0_191, %c0_192], %618 {strides = array<i32>} : memref<2x128xf32, #tpu.memory_space<vmem>>, vector<2x128xf32>,
      %620 = vector.broadcast %611 : vector<2x1xf32> to vector<2x128xf32>
      %621 = vector.broadcast %1 : vector<1x128xf32> to vector<2x128xf32>
      %622 = arith.mulf %620, %621 : vector<2x128xf32>
      %cst_193 = arith.constant dense<0.000000e+00> : vector<2xf32>
      %623 = vector.multi_reduction <add>, %622, %cst_193 [1] : vector<2x128xf32> to vector<2xf32>
      %624 = vector.shape_cast %623 : vector<2xf32> to vector<2x1xf32>
      %cst_194 = arith.constant dense<0.000000e+00> : vector<1xf32>
      %625 = vector.multi_reduction <add>, %624, %cst_194 [0] : vector<2x1xf32> to vector<1xf32>
      %626 = vector.shape_cast %625 : vector<1xf32> to vector<1x1xf32>
      %c0_195 = arith.constant 0 : index
      %c0_196 = arith.constant 0 : index
      %627 = vector.load %arg22[%c0_195, %c0_196] : memref<1x1xf32, #tpu.memory_space<vmem>>, vector<1x1xf32>
      tpu.vector_store %arg22[%c0_195, %c0_196], %626 {strides = array<i32>} : memref<1x1xf32, #tpu.memory_space<vmem>>, vector<1x1xf32>,
      %cst_197 = arith.constant 0.000000e+00 : f32
      %628 = vector.broadcast %cst_197 : f32 to vector<1x1xf32>
      %c0_198 = arith.constant 0 : index
      %c0_199 = arith.constant 0 : index
      %629 = vector.load %arg23[%c0_198, %c0_199] : memref<1x1xf32, #tpu.memory_space<vmem>>, vector<1x1xf32>
      tpu.vector_store %arg23[%c0_198, %c0_199], %628 {strides = array<i32>} : memref<1x1xf32, #tpu.memory_space<vmem>>, vector<1x1xf32>,
      %630 = arith.mulf %607, %607 : vector<2x128xf32>
      %cst_200 = arith.constant 1.83787704 : f32
      %631 = vector.broadcast %cst_200 : f32 to vector<2x128xf32>
      %632 = arith.addf %631, %630 : vector<2x128xf32>
      %cst_201 = arith.constant 5.000000e-01 : f32
      %633 = vector.broadcast %cst_201 : f32 to vector<2x128xf32>
      %634 = arith.mulf %633, %632 : vector<2x128xf32>
      %635 = vector.broadcast %1 : vector<1x128xf32> to vector<2x128xf32>
      %636 = arith.mulf %634, %635 : vector<2x128xf32>
      %cst_202 = arith.constant dense<0.000000e+00> : vector<2xf32>
      %637 = vector.multi_reduction <add>, %636, %cst_202 [1] : vector<2x128xf32> to vector<2xf32>
      %638 = vector.shape_cast %637 : vector<2xf32> to vector<2x1xf32>
      %cst_203 = arith.constant dense<0.000000e+00> : vector<1xf32>
      %639 = vector.multi_reduction <add>, %638, %cst_203 [0] : vector<2x1xf32> to vector<1xf32>
      %640 = vector.shape_cast %639 : vector<1xf32> to vector<1x1xf32>
      %cst_204 = arith.constant 0.000000e+00 : f32
      %641 = vector.broadcast %cst_204 : f32 to vector<1x1xf32>
      %642 = arith.subf %641, %640 : vector<1x1xf32>
      %c0_205 = arith.constant 0 : index
      %c0_206 = arith.constant 0 : index
      %643 = vector.load %arg24[%c0_205, %c0_206] : memref<1x1xf32, #tpu.memory_space<vmem>>, vector<1x1xf32>
      tpu.vector_store %arg24[%c0_205, %c0_206], %642 {strides = array<i32>} : memref<1x1xf32, #tpu.memory_space<vmem>>, vector<1x1xf32>,
    } else {
    }
    %c0_3 = arith.constant 0 : index
    %c0_4 = arith.constant 0 : index
    %5 = vector.load %arg21[%c0_3, %c0_4] : memref<2x128xf32, #tpu.memory_space<vmem>>, vector<2x128xf32>
    %6 = vector.extract_strided_slice %5 {offsets = [0, 0], sizes = [1, 128], strides = [1, 1]} : vector<2x128xf32> to vector<1x128xf32>
    %7 = vector.extract_strided_slice %5 {offsets = [1, 0], sizes = [1, 128], strides = [1, 1]} : vector<2x128xf32> to vector<1x128xf32>
    %c0_5 = arith.constant 0 : index
    %c0_6 = arith.constant 0 : index
    %c0_7 = arith.constant 0 : index
    %c0_8 = arith.constant 0 : index
    %8 = vector.load %arg5[%c0_5, %c0_6, %c0_7, %c0_8] : memref<1x1x8x128xbf16, #tpu.memory_space<vmem>>, vector<1x1x8x128xbf16>
    %9 = vector.shape_cast %8 : vector<1x1x8x128xbf16> to vector<8x128xbf16>
    %c0_9 = arith.constant 0 : index
    %c0_10 = arith.constant 0 : index
    %c0_11 = arith.constant 0 : index
    %10 = vector.load %arg8[%c0_9, %c0_10, %c0_11] : memref<1x8x1xf32, #tpu.memory_space<vmem>>, vector<1x8x1xf32>
    %11 = vector.shape_cast %10 : vector<1x8x1xf32> to vector<8x1xf32>
    %c0_12 = arith.constant 0 : index
    %c0_13 = arith.constant 0 : index
    %c0_14 = arith.constant 0 : index
    %12 = vector.load %arg9[%c0_12, %c0_13, %c0_14] : memref<1x8x1xf32, #tpu.memory_space<vmem>>, vector<1x8x1xf32>
    %13 = vector.shape_cast %12 : vector<1x8x1xf32> to vector<8x1xf32>
    %c0_15 = arith.constant 0 : index
    %c0_16 = arith.constant 0 : index
    %c0_17 = arith.constant 0 : index
    %c0_18 = arith.constant 0 : index
    %14 = vector.load %arg10[%c0_15, %c0_16, %c0_17, %c0_18] : memref<1x3x8x3xf32, #tpu.memory_space<vmem>>, vector<1x3x8x3xf32>
    %15 = vector.shape_cast %14 : vector<1x3x8x3xf32> to vector<3x8x3xf32>
    %c0_19 = arith.constant 0 : index
    %c0_20 = arith.constant 0 : index
    %c0_21 = arith.constant 0 : index
    %c0_22 = arith.constant 0 : index
    %16 = vector.load %arg11[%c0_19, %c0_20, %c0_21, %c0_22] : memref<1x3x8x1xf32, #tpu.memory_space<vmem>>, vector<1x3x8x1xf32>
    %17 = vector.shape_cast %16 : vector<1x3x8x1xf32> to vector<3x8x1xf32>
    %c0_23 = arith.constant 0 : index
    %c0_24 = arith.constant 0 : index
    %c0_25 = arith.constant 0 : index
    %c0_26 = arith.constant 0 : index
    %18 = vector.load %arg12[%c0_23, %c0_24, %c0_25, %c0_26] : memref<1x3x8x1xf32, #tpu.memory_space<vmem>>, vector<1x3x8x1xf32>
    %19 = vector.shape_cast %18 : vector<1x3x8x1xf32> to vector<3x8x1xf32>
    %c0_27 = arith.constant 0 : index
    %c0_28 = arith.constant 0 : index
    %c0_29 = arith.constant 0 : index
    %c0_30 = arith.constant 0 : index
    %20 = vector.load %arg13[%c0_27, %c0_28, %c0_29, %c0_30] : memref<1x3x8x1xf32, #tpu.memory_space<vmem>>, vector<1x3x8x1xf32>
    %21 = vector.shape_cast %20 : vector<1x3x8x1xf32> to vector<3x8x1xf32>
    %c0_31 = arith.constant 0 : index
    %c0_32 = arith.constant 0 : index
    %c0_33 = arith.constant 0 : index
    %c0_34 = arith.constant 0 : index
    %22 = vector.load %arg14[%c0_31, %c0_32, %c0_33, %c0_34] : memref<1x3x8x8xf32, #tpu.memory_space<vmem>>, vector<1x3x8x8xf32>
    %23 = vector.shape_cast %22 : vector<1x3x8x8xf32> to vector<3x8x8xf32>
    %c0_35 = arith.constant 0 : index
    %c0_36 = arith.constant 0 : index
    %c0_37 = arith.constant 0 : index
    %c0_38 = arith.constant 0 : index
    %24 = vector.load %arg15[%c0_35, %c0_36, %c0_37, %c0_38] : memref<1x3x8x1xf32, #tpu.memory_space<vmem>>, vector<1x3x8x1xf32>
    %25 = vector.shape_cast %24 : vector<1x3x8x1xf32> to vector<3x8x1xf32>
    %c0_39 = arith.constant 0 : index
    %c0_40 = arith.constant 0 : index
    %c0_41 = arith.constant 0 : index
    %c0_42 = arith.constant 0 : index
    %26 = vector.load %arg16[%c0_39, %c0_40, %c0_41, %c0_42] : memref<1x3x8x1xf32, #tpu.memory_space<vmem>>, vector<1x3x8x1xf32>
    %27 = vector.shape_cast %26 : vector<1x3x8x1xf32> to vector<3x8x1xf32>
    %c0_43 = arith.constant 0 : index
    %c0_44 = arith.constant 0 : index
    %c0_45 = arith.constant 0 : index
    %c0_46 = arith.constant 0 : index
    %28 = vector.load %arg17[%c0_43, %c0_44, %c0_45, %c0_46] : memref<1x3x8x1xf32, #tpu.memory_space<vmem>>, vector<1x3x8x1xf32>
    %29 = vector.shape_cast %28 : vector<1x3x8x1xf32> to vector<3x8x1xf32>
    %c0_47 = arith.constant 0 : index
    %c0_48 = arith.constant 0 : index
    %c0_49 = arith.constant 0 : index
    %30 = vector.load %arg18[%c0_47, %c0_48, %c0_49] : memref<1x29x8xf32, #tpu.memory_space<vmem>>, vector<1x29x8xf32>
    %31 = vector.shape_cast %30 : vector<1x29x8xf32> to vector<29x8xf32>
    %c0_50 = arith.constant 0 : index
    %c0_51 = arith.constant 0 : index
    %c0_52 = arith.constant 0 : index
    %32 = vector.load %arg19[%c0_50, %c0_51, %c0_52] : memref<1x29x1xf32, #tpu.memory_space<vmem>>, vector<1x29x1xf32>
    %33 = vector.shape_cast %32 : vector<1x29x1xf32> to vector<29x1xf32>
    %34 = vector.broadcast %11 : vector<8x1xf32> to vector<8x128xf32>
    %35 = vector.broadcast %6 : vector<1x128xf32> to vector<8x128xf32>
    %36 = arith.mulf %34, %35 : vector<8x128xf32>
    %37 = vector.broadcast %13 : vector<8x1xf32> to vector<8x128xf32>
    %38 = arith.addf %36, %37 : vector<8x128xf32>
    %39 = arith.extf %9 : vector<8x128xbf16> to vector<8x128xf32>
    %40 = arith.addf %38, %39 : vector<8x128xf32>
    %41 = tpu.iota {dimensions = array<i32: 1>} : vector<1x128xi32>
    %42 = vector.broadcast %1 : vector<1x128xf32> to vector<8x128xf32>
    %43 = arith.mulf %40, %42 : vector<8x128xf32>
    %44 = vector.extract_strided_slice %15 {offsets = [0, 0, 0], sizes = [1, 8, 1], strides = [1, 1, 1]} : vector<3x8x3xf32> to vector<1x8x1xf32>
    %45 = vector.shape_cast %44 : vector<1x8x1xf32> to vector<8x1xf32>
    %c1_i32 = arith.constant 1 : i32
    %46 = tpu.dynamic_rotate %43 by %c1_i32 dim 1 : vector<8x128xf32>, i32 -> vector<8x128xf32>
    %c1_i32_53 = arith.constant 1 : i32
    %47 = vector.broadcast %c1_i32_53 : i32 to vector<1x128xi32>
    %48 = arith.cmpi sge, %41, %47 : vector<1x128xi32>
    %cst = arith.constant 0.000000e+00 : f32
    %49 = vector.shape_cast %48 : vector<1x128xi1> to vector<1x128xi1>
    %50 = vector.broadcast %49 : vector<1x128xi1> to vector<8x128xi1>
    %51 = vector.broadcast %cst : f32 to vector<8x128xf32>
    %52 = arith.select %50, %46, %51 : vector<8x128xi1>, vector<8x128xf32>
    %53 = vector.broadcast %45 : vector<8x1xf32> to vector<8x128xf32>
    %54 = arith.mulf %53, %52 : vector<8x128xf32>
    %55 = vector.extract_strided_slice %15 {offsets = [0, 0, 1], sizes = [1, 8, 1], strides = [1, 1, 1]} : vector<3x8x3xf32> to vector<1x8x1xf32>
    %56 = vector.shape_cast %55 : vector<1x8x1xf32> to vector<8x1xf32>
    %57 = vector.broadcast %56 : vector<8x1xf32> to vector<8x128xf32>
    %58 = arith.mulf %57, %43 : vector<8x128xf32>
    %59 = arith.addf %54, %58 : vector<8x128xf32>
    %60 = vector.extract_strided_slice %15 {offsets = [0, 0, 2], sizes = [1, 8, 1], strides = [1, 1, 1]} : vector<3x8x3xf32> to vector<1x8x1xf32>
    %61 = vector.shape_cast %60 : vector<1x8x1xf32> to vector<8x1xf32>
    %c127_i32 = arith.constant 127 : i32
    %62 = tpu.dynamic_rotate %43 by %c127_i32 dim 1 : vector<8x128xf32>, i32 -> vector<8x128xf32>
    %c127_i32_54 = arith.constant 127 : i32
    %63 = vector.broadcast %c127_i32_54 : i32 to vector<1x128xi32>
    %64 = arith.cmpi slt, %41, %63 : vector<1x128xi32>
    %cst_55 = arith.constant 0.000000e+00 : f32
    %65 = vector.shape_cast %64 : vector<1x128xi1> to vector<1x128xi1>
    %66 = vector.broadcast %65 : vector<1x128xi1> to vector<8x128xi1>
    %67 = vector.broadcast %cst_55 : f32 to vector<8x128xf32>
    %68 = arith.select %66, %62, %67 : vector<8x128xi1>, vector<8x128xf32>
    %69 = vector.broadcast %61 : vector<8x1xf32> to vector<8x128xf32>
    %70 = arith.mulf %69, %68 : vector<8x128xf32>
    %71 = arith.addf %59, %70 : vector<8x128xf32>
    %72 = vector.extract_strided_slice %17 {offsets = [0, 0, 0], sizes = [1, 8, 1], strides = [1, 1, 1]} : vector<3x8x1xf32> to vector<1x8x1xf32>
    %73 = vector.shape_cast %72 : vector<1x8x1xf32> to vector<8x1xf32>
    %74 = vector.broadcast %73 : vector<8x1xf32> to vector<8x128xf32>
    %75 = arith.addf %71, %74 : vector<8x128xf32>
    %76 = vector.extract_strided_slice %19 {offsets = [0, 0, 0], sizes = [1, 8, 1], strides = [1, 1, 1]} : vector<3x8x1xf32> to vector<1x8x1xf32>
    %77 = vector.shape_cast %76 : vector<1x8x1xf32> to vector<8x1xf32>
    %78 = vector.extract_strided_slice %21 {offsets = [0, 0, 0], sizes = [1, 8, 1], strides = [1, 1, 1]} : vector<3x8x1xf32> to vector<1x8x1xf32>
    %79 = vector.shape_cast %78 : vector<1x8x1xf32> to vector<8x1xf32>
    %cst_56 = arith.constant dense<0.000000e+00> : vector<128xf32>
    %80 = vector.multi_reduction <add>, %75, %cst_56 [0] : vector<8x128xf32> to vector<128xf32>
    %81 = vector.shape_cast %80 : vector<128xf32> to vector<1x128xf32>
    %cst_57 = arith.constant 1.250000e-01 : f32
    %82 = vector.broadcast %cst_57 : f32 to vector<1x128xf32>
    %83 = arith.mulf %81, %82 : vector<1x128xf32>
    %84 = arith.mulf %75, %75 : vector<8x128xf32>
    %cst_58 = arith.constant dense<0.000000e+00> : vector<128xf32>
    %85 = vector.multi_reduction <add>, %84, %cst_58 [0] : vector<8x128xf32> to vector<128xf32>
    %86 = vector.shape_cast %85 : vector<128xf32> to vector<1x128xf32>
    %cst_59 = arith.constant 1.250000e-01 : f32
    %87 = vector.broadcast %cst_59 : f32 to vector<1x128xf32>
    %88 = arith.mulf %86, %87 : vector<1x128xf32>
    %89 = arith.mulf %83, %83 : vector<1x128xf32>
    %90 = arith.subf %88, %89 : vector<1x128xf32>
    %cst_60 = arith.constant 0.000000e+00 : f32
    %91 = vector.broadcast %cst_60 : f32 to vector<1x128xf32>
    %92 = arith.maximumf %90, %91 : vector<1x128xf32>
    %93 = vector.broadcast %83 : vector<1x128xf32> to vector<8x128xf32>
    %94 = arith.subf %75, %93 : vector<8x128xf32>
    %cst_61 = arith.constant 9.99999974E-6 : f32
    %95 = vector.broadcast %cst_61 : f32 to vector<1x128xf32>
    %96 = arith.addf %92, %95 : vector<1x128xf32>
    %97 = math.rsqrt %96 : vector<1x128xf32>
    %98 = vector.broadcast %97 : vector<1x128xf32> to vector<8x128xf32>
    %99 = arith.mulf %94, %98 : vector<8x128xf32>
    %100 = vector.broadcast %77 : vector<8x1xf32> to vector<8x128xf32>
    %101 = arith.mulf %99, %100 : vector<8x128xf32>
    %102 = vector.broadcast %79 : vector<8x1xf32> to vector<8x128xf32>
    %103 = arith.addf %101, %102 : vector<8x128xf32>
    %cst_62 = arith.constant 5.000000e-01 : f32
    %104 = vector.broadcast %cst_62 : f32 to vector<8x128xf32>
    %105 = arith.mulf %104, %103 : vector<8x128xf32>
    %cst_63 = arith.constant 4.471500e-02 : f32
    %106 = vector.broadcast %cst_63 : f32 to vector<8x128xf32>
    %107 = arith.mulf %106, %103 : vector<8x128xf32>
    %108 = arith.mulf %107, %103 : vector<8x128xf32>
    %109 = arith.mulf %108, %103 : vector<8x128xf32>
    %110 = arith.addf %103, %109 : vector<8x128xf32>
    %cst_64 = arith.constant 0.797884583 : f32
    %111 = vector.broadcast %cst_64 : f32 to vector<8x128xf32>
    %112 = arith.mulf %111, %110 : vector<8x128xf32>
    %113 = math.tanh %112 : vector<8x128xf32>
    %cst_65 = arith.constant 1.000000e+00 : f32
    %114 = vector.broadcast %cst_65 : f32 to vector<8x128xf32>
    %115 = arith.addf %114, %113 : vector<8x128xf32>
    %116 = arith.mulf %105, %115 : vector<8x128xf32>
    %117 = vector.extract_strided_slice %23 {offsets = [0, 0, 0], sizes = [1, 8, 8], strides = [1, 1, 1]} : vector<3x8x8xf32> to vector<1x8x8xf32>
    %118 = vector.shape_cast %117 : vector<1x8x8xf32> to vector<8x8xf32>
    %119 = arith.truncf %118 : vector<8x8xf32> to vector<8x8xbf16>
    %120 = arith.truncf %116 : vector<8x128xf32> to vector<8x128xbf16>
    %cst_66 = arith.constant dense<0.000000e+00> : vector<8x128xf32>
    %121 = tpu.matmul %119, %120, %cst_66 {dimension_numbers = #tpu.dot_dimension_numbers<[1], [0], [0], [1], [0, 0, 1, 1], [], []>} : vector<8x8xbf16>, vector<8x128xbf16>, vector<8x128xf32> -> vector<8x128xf32>
    %122 = vector.extract_strided_slice %25 {offsets = [0, 0, 0], sizes = [1, 8, 1], strides = [1, 1, 1]} : vector<3x8x1xf32> to vector<1x8x1xf32>
    %123 = vector.shape_cast %122 : vector<1x8x1xf32> to vector<8x1xf32>
    %124 = vector.broadcast %123 : vector<8x1xf32> to vector<8x128xf32>
    %125 = arith.addf %121, %124 : vector<8x128xf32>
    %126 = vector.extract_strided_slice %27 {offsets = [0, 0, 0], sizes = [1, 8, 1], strides = [1, 1, 1]} : vector<3x8x1xf32> to vector<1x8x1xf32>
    %127 = vector.shape_cast %126 : vector<1x8x1xf32> to vector<8x1xf32>
    %128 = vector.extract_strided_slice %29 {offsets = [0, 0, 0], sizes = [1, 8, 1], strides = [1, 1, 1]} : vector<3x8x1xf32> to vector<1x8x1xf32>
    %129 = vector.shape_cast %128 : vector<1x8x1xf32> to vector<8x1xf32>
    %cst_67 = arith.constant dense<0.000000e+00> : vector<128xf32>
    %130 = vector.multi_reduction <add>, %125, %cst_67 [0] : vector<8x128xf32> to vector<128xf32>
    %131 = vector.shape_cast %130 : vector<128xf32> to vector<1x128xf32>
    %cst_68 = arith.constant 1.250000e-01 : f32
    %132 = vector.broadcast %cst_68 : f32 to vector<1x128xf32>
    %133 = arith.mulf %131, %132 : vector<1x128xf32>
    %134 = arith.mulf %125, %125 : vector<8x128xf32>
    %cst_69 = arith.constant dense<0.000000e+00> : vector<128xf32>
    %135 = vector.multi_reduction <add>, %134, %cst_69 [0] : vector<8x128xf32> to vector<128xf32>
    %136 = vector.shape_cast %135 : vector<128xf32> to vector<1x128xf32>
    %cst_70 = arith.constant 1.250000e-01 : f32
    %137 = vector.broadcast %cst_70 : f32 to vector<1x128xf32>
    %138 = arith.mulf %136, %137 : vector<1x128xf32>
    %139 = arith.mulf %133, %133 : vector<1x128xf32>
    %140 = arith.subf %138, %139 : vector<1x128xf32>
    %cst_71 = arith.constant 0.000000e+00 : f32
    %141 = vector.broadcast %cst_71 : f32 to vector<1x128xf32>
    %142 = arith.maximumf %140, %141 : vector<1x128xf32>
    %143 = vector.broadcast %133 : vector<1x128xf32> to vector<8x128xf32>
    %144 = arith.subf %125, %143 : vector<8x128xf32>
    %cst_72 = arith.constant 9.99999974E-6 : f32
    %145 = vector.broadcast %cst_72 : f32 to vector<1x128xf32>
    %146 = arith.addf %142, %145 : vector<1x128xf32>
    %147 = math.rsqrt %146 : vector<1x128xf32>
    %148 = vector.broadcast %147 : vector<1x128xf32> to vector<8x128xf32>
    %149 = arith.mulf %144, %148 : vector<8x128xf32>
    %150 = vector.broadcast %127 : vector<8x1xf32> to vector<8x128xf32>
    %151 = arith.mulf %149, %150 : vector<8x128xf32>
    %152 = vector.broadcast %129 : vector<8x1xf32> to vector<8x128xf32>
    %153 = arith.addf %151, %152 : vector<8x128xf32>
    %cst_73 = arith.constant 5.000000e-01 : f32
    %154 = vector.broadcast %cst_73 : f32 to vector<8x128xf32>
    %155 = arith.mulf %154, %153 : vector<8x128xf32>
    %cst_74 = arith.constant 4.471500e-02 : f32
    %156 = vector.broadcast %cst_74 : f32 to vector<8x128xf32>
    %157 = arith.mulf %156, %153 : vector<8x128xf32>
    %158 = arith.mulf %157, %153 : vector<8x128xf32>
    %159 = arith.mulf %158, %153 : vector<8x128xf32>
    %160 = arith.addf %153, %159 : vector<8x128xf32>
    %cst_75 = arith.constant 0.797884583 : f32
    %161 = vector.broadcast %cst_75 : f32 to vector<8x128xf32>
    %162 = arith.mulf %161, %160 : vector<8x128xf32>
    %163 = math.tanh %162 : vector<8x128xf32>
    %cst_76 = arith.constant 1.000000e+00 : f32
    %164 = vector.broadcast %cst_76 : f32 to vector<8x128xf32>
    %165 = arith.addf %164, %163 : vector<8x128xf32>
    %166 = arith.mulf %155, %165 : vector<8x128xf32>
    %167 = arith.addf %40, %166 : vector<8x128xf32>
    %168 = vector.broadcast %1 : vector<1x128xf32> to vector<8x128xf32>
    %169 = arith.mulf %167, %168 : vector<8x128xf32>
    %170 = vector.extract_strided_slice %15 {offsets = [1, 0, 0], sizes = [1, 8, 1], strides = [1, 1, 1]} : vector<3x8x3xf32> to vector<1x8x1xf32>
    %171 = vector.shape_cast %170 : vector<1x8x1xf32> to vector<8x1xf32>
    %c3_i32 = arith.constant 3 : i32
    %172 = tpu.dynamic_rotate %169 by %c3_i32 dim 1 : vector<8x128xf32>, i32 -> vector<8x128xf32>
    %c3_i32_77 = arith.constant 3 : i32
    %173 = vector.broadcast %c3_i32_77 : i32 to vector<1x128xi32>
    %174 = arith.cmpi sge, %41, %173 : vector<1x128xi32>
    %cst_78 = arith.constant 0.000000e+00 : f32
    %175 = vector.shape_cast %174 : vector<1x128xi1> to vector<1x128xi1>
    %176 = vector.broadcast %175 : vector<1x128xi1> to vector<8x128xi1>
    %177 = vector.broadcast %cst_78 : f32 to vector<8x128xf32>
    %178 = arith.select %176, %172, %177 : vector<8x128xi1>, vector<8x128xf32>
    %179 = vector.broadcast %171 : vector<8x1xf32> to vector<8x128xf32>
    %180 = arith.mulf %179, %178 : vector<8x128xf32>
    %181 = vector.extract_strided_slice %15 {offsets = [1, 0, 1], sizes = [1, 8, 1], strides = [1, 1, 1]} : vector<3x8x3xf32> to vector<1x8x1xf32>
    %182 = vector.shape_cast %181 : vector<1x8x1xf32> to vector<8x1xf32>
    %183 = vector.broadcast %182 : vector<8x1xf32> to vector<8x128xf32>
    %184 = arith.mulf %183, %169 : vector<8x128xf32>
    %185 = arith.addf %180, %184 : vector<8x128xf32>
    %186 = vector.extract_strided_slice %15 {offsets = [1, 0, 2], sizes = [1, 8, 1], strides = [1, 1, 1]} : vector<3x8x3xf32> to vector<1x8x1xf32>
    %187 = vector.shape_cast %186 : vector<1x8x1xf32> to vector<8x1xf32>
    %c125_i32 = arith.constant 125 : i32
    %188 = tpu.dynamic_rotate %169 by %c125_i32 dim 1 : vector<8x128xf32>, i32 -> vector<8x128xf32>
    %c125_i32_79 = arith.constant 125 : i32
    %189 = vector.broadcast %c125_i32_79 : i32 to vector<1x128xi32>
    %190 = arith.cmpi slt, %41, %189 : vector<1x128xi32>
    %cst_80 = arith.constant 0.000000e+00 : f32
    %191 = vector.shape_cast %190 : vector<1x128xi1> to vector<1x128xi1>
    %192 = vector.broadcast %191 : vector<1x128xi1> to vector<8x128xi1>
    %193 = vector.broadcast %cst_80 : f32 to vector<8x128xf32>
    %194 = arith.select %192, %188, %193 : vector<8x128xi1>, vector<8x128xf32>
    %195 = vector.broadcast %187 : vector<8x1xf32> to vector<8x128xf32>
    %196 = arith.mulf %195, %194 : vector<8x128xf32>
    %197 = arith.addf %185, %196 : vector<8x128xf32>
    %198 = vector.extract_strided_slice %17 {offsets = [1, 0, 0], sizes = [1, 8, 1], strides = [1, 1, 1]} : vector<3x8x1xf32> to vector<1x8x1xf32>
    %199 = vector.shape_cast %198 : vector<1x8x1xf32> to vector<8x1xf32>
    %200 = vector.broadcast %199 : vector<8x1xf32> to vector<8x128xf32>
    %201 = arith.addf %197, %200 : vector<8x128xf32>
    %202 = vector.extract_strided_slice %19 {offsets = [1, 0, 0], sizes = [1, 8, 1], strides = [1, 1, 1]} : vector<3x8x1xf32> to vector<1x8x1xf32>
    %203 = vector.shape_cast %202 : vector<1x8x1xf32> to vector<8x1xf32>
    %204 = vector.extract_strided_slice %21 {offsets = [1, 0, 0], sizes = [1, 8, 1], strides = [1, 1, 1]} : vector<3x8x1xf32> to vector<1x8x1xf32>
    %205 = vector.shape_cast %204 : vector<1x8x1xf32> to vector<8x1xf32>
    %cst_81 = arith.constant dense<0.000000e+00> : vector<128xf32>
    %206 = vector.multi_reduction <add>, %201, %cst_81 [0] : vector<8x128xf32> to vector<128xf32>
    %207 = vector.shape_cast %206 : vector<128xf32> to vector<1x128xf32>
    %cst_82 = arith.constant 1.250000e-01 : f32
    %208 = vector.broadcast %cst_82 : f32 to vector<1x128xf32>
    %209 = arith.mulf %207, %208 : vector<1x128xf32>
    %210 = arith.mulf %201, %201 : vector<8x128xf32>
    %cst_83 = arith.constant dense<0.000000e+00> : vector<128xf32>
    %211 = vector.multi_reduction <add>, %210, %cst_83 [0] : vector<8x128xf32> to vector<128xf32>
    %212 = vector.shape_cast %211 : vector<128xf32> to vector<1x128xf32>
    %cst_84 = arith.constant 1.250000e-01 : f32
    %213 = vector.broadcast %cst_84 : f32 to vector<1x128xf32>
    %214 = arith.mulf %212, %213 : vector<1x128xf32>
    %215 = arith.mulf %209, %209 : vector<1x128xf32>
    %216 = arith.subf %214, %215 : vector<1x128xf32>
    %cst_85 = arith.constant 0.000000e+00 : f32
    %217 = vector.broadcast %cst_85 : f32 to vector<1x128xf32>
    %218 = arith.maximumf %216, %217 : vector<1x128xf32>
    %219 = vector.broadcast %209 : vector<1x128xf32> to vector<8x128xf32>
    %220 = arith.subf %201, %219 : vector<8x128xf32>
    %cst_86 = arith.constant 9.99999974E-6 : f32
    %221 = vector.broadcast %cst_86 : f32 to vector<1x128xf32>
    %222 = arith.addf %218, %221 : vector<1x128xf32>
    %223 = math.rsqrt %222 : vector<1x128xf32>
    %224 = vector.broadcast %223 : vector<1x128xf32> to vector<8x128xf32>
    %225 = arith.mulf %220, %224 : vector<8x128xf32>
    %226 = vector.broadcast %203 : vector<8x1xf32> to vector<8x128xf32>
    %227 = arith.mulf %225, %226 : vector<8x128xf32>
    %228 = vector.broadcast %205 : vector<8x1xf32> to vector<8x128xf32>
    %229 = arith.addf %227, %228 : vector<8x128xf32>
    %cst_87 = arith.constant 5.000000e-01 : f32
    %230 = vector.broadcast %cst_87 : f32 to vector<8x128xf32>
    %231 = arith.mulf %230, %229 : vector<8x128xf32>
    %cst_88 = arith.constant 4.471500e-02 : f32
    %232 = vector.broadcast %cst_88 : f32 to vector<8x128xf32>
    %233 = arith.mulf %232, %229 : vector<8x128xf32>
    %234 = arith.mulf %233, %229 : vector<8x128xf32>
    %235 = arith.mulf %234, %229 : vector<8x128xf32>
    %236 = arith.addf %229, %235 : vector<8x128xf32>
    %cst_89 = arith.constant 0.797884583 : f32
    %237 = vector.broadcast %cst_89 : f32 to vector<8x128xf32>
    %238 = arith.mulf %237, %236 : vector<8x128xf32>
    %239 = math.tanh %238 : vector<8x128xf32>
    %cst_90 = arith.constant 1.000000e+00 : f32
    %240 = vector.broadcast %cst_90 : f32 to vector<8x128xf32>
    %241 = arith.addf %240, %239 : vector<8x128xf32>
    %242 = arith.mulf %231, %241 : vector<8x128xf32>
    %243 = vector.extract_strided_slice %23 {offsets = [1, 0, 0], sizes = [1, 8, 8], strides = [1, 1, 1]} : vector<3x8x8xf32> to vector<1x8x8xf32>
    %244 = vector.shape_cast %243 : vector<1x8x8xf32> to vector<8x8xf32>
    %245 = arith.truncf %244 : vector<8x8xf32> to vector<8x8xbf16>
    %246 = arith.truncf %242 : vector<8x128xf32> to vector<8x128xbf16>
    %cst_91 = arith.constant dense<0.000000e+00> : vector<8x128xf32>
    %247 = tpu.matmul %245, %246, %cst_91 {dimension_numbers = #tpu.dot_dimension_numbers<[1], [0], [0], [1], [0, 0, 1, 1], [], []>} : vector<8x8xbf16>, vector<8x128xbf16>, vector<8x128xf32> -> vector<8x128xf32>
    %248 = vector.extract_strided_slice %25 {offsets = [1, 0, 0], sizes = [1, 8, 1], strides = [1, 1, 1]} : vector<3x8x1xf32> to vector<1x8x1xf32>
    %249 = vector.shape_cast %248 : vector<1x8x1xf32> to vector<8x1xf32>
    %250 = vector.broadcast %249 : vector<8x1xf32> to vector<8x128xf32>
    %251 = arith.addf %247, %250 : vector<8x128xf32>
    %252 = vector.extract_strided_slice %27 {offsets = [1, 0, 0], sizes = [1, 8, 1], strides = [1, 1, 1]} : vector<3x8x1xf32> to vector<1x8x1xf32>
    %253 = vector.shape_cast %252 : vector<1x8x1xf32> to vector<8x1xf32>
    %254 = vector.extract_strided_slice %29 {offsets = [1, 0, 0], sizes = [1, 8, 1], strides = [1, 1, 1]} : vector<3x8x1xf32> to vector<1x8x1xf32>
    %255 = vector.shape_cast %254 : vector<1x8x1xf32> to vector<8x1xf32>
    %cst_92 = arith.constant dense<0.000000e+00> : vector<128xf32>
    %256 = vector.multi_reduction <add>, %251, %cst_92 [0] : vector<8x128xf32> to vector<128xf32>
    %257 = vector.shape_cast %256 : vector<128xf32> to vector<1x128xf32>
    %cst_93 = arith.constant 1.250000e-01 : f32
    %258 = vector.broadcast %cst_93 : f32 to vector<1x128xf32>
    %259 = arith.mulf %257, %258 : vector<1x128xf32>
    %260 = arith.mulf %251, %251 : vector<8x128xf32>
    %cst_94 = arith.constant dense<0.000000e+00> : vector<128xf32>
    %261 = vector.multi_reduction <add>, %260, %cst_94 [0] : vector<8x128xf32> to vector<128xf32>
    %262 = vector.shape_cast %261 : vector<128xf32> to vector<1x128xf32>
    %cst_95 = arith.constant 1.250000e-01 : f32
    %263 = vector.broadcast %cst_95 : f32 to vector<1x128xf32>
    %264 = arith.mulf %262, %263 : vector<1x128xf32>
    %265 = arith.mulf %259, %259 : vector<1x128xf32>
    %266 = arith.subf %264, %265 : vector<1x128xf32>
    %cst_96 = arith.constant 0.000000e+00 : f32
    %267 = vector.broadcast %cst_96 : f32 to vector<1x128xf32>
    %268 = arith.maximumf %266, %267 : vector<1x128xf32>
    %269 = vector.broadcast %259 : vector<1x128xf32> to vector<8x128xf32>
    %270 = arith.subf %251, %269 : vector<8x128xf32>
    %cst_97 = arith.constant 9.99999974E-6 : f32
    %271 = vector.broadcast %cst_97 : f32 to vector<1x128xf32>
    %272 = arith.addf %268, %271 : vector<1x128xf32>
    %273 = math.rsqrt %272 : vector<1x128xf32>
    %274 = vector.broadcast %273 : vector<1x128xf32> to vector<8x128xf32>
    %275 = arith.mulf %270, %274 : vector<8x128xf32>
    %276 = vector.broadcast %253 : vector<8x1xf32> to vector<8x128xf32>
    %277 = arith.mulf %275, %276 : vector<8x128xf32>
    %278 = vector.broadcast %255 : vector<8x1xf32> to vector<8x128xf32>
    %279 = arith.addf %277, %278 : vector<8x128xf32>
    %cst_98 = arith.constant 5.000000e-01 : f32
    %280 = vector.broadcast %cst_98 : f32 to vector<8x128xf32>
    %281 = arith.mulf %280, %279 : vector<8x128xf32>
    %cst_99 = arith.constant 4.471500e-02 : f32
    %282 = vector.broadcast %cst_99 : f32 to vector<8x128xf32>
    %283 = arith.mulf %282, %279 : vector<8x128xf32>
    %284 = arith.mulf %283, %279 : vector<8x128xf32>
    %285 = arith.mulf %284, %279 : vector<8x128xf32>
    %286 = arith.addf %279, %285 : vector<8x128xf32>
    %cst_100 = arith.constant 0.797884583 : f32
    %287 = vector.broadcast %cst_100 : f32 to vector<8x128xf32>
    %288 = arith.mulf %287, %286 : vector<8x128xf32>
    %289 = math.tanh %288 : vector<8x128xf32>
    %cst_101 = arith.constant 1.000000e+00 : f32
    %290 = vector.broadcast %cst_101 : f32 to vector<8x128xf32>
    %291 = arith.addf %290, %289 : vector<8x128xf32>
    %292 = arith.mulf %281, %291 : vector<8x128xf32>
    %293 = arith.addf %167, %292 : vector<8x128xf32>
    %294 = vector.broadcast %1 : vector<1x128xf32> to vector<8x128xf32>
    %295 = arith.mulf %293, %294 : vector<8x128xf32>
    %296 = vector.extract_strided_slice %15 {offsets = [2, 0, 0], sizes = [1, 8, 1], strides = [1, 1, 1]} : vector<3x8x3xf32> to vector<1x8x1xf32>
    %297 = vector.shape_cast %296 : vector<1x8x1xf32> to vector<8x1xf32>
    %c9_i32 = arith.constant 9 : i32
    %298 = tpu.dynamic_rotate %295 by %c9_i32 dim 1 : vector<8x128xf32>, i32 -> vector<8x128xf32>
    %c9_i32_102 = arith.constant 9 : i32
    %299 = vector.broadcast %c9_i32_102 : i32 to vector<1x128xi32>
    %300 = arith.cmpi sge, %41, %299 : vector<1x128xi32>
    %cst_103 = arith.constant 0.000000e+00 : f32
    %301 = vector.shape_cast %300 : vector<1x128xi1> to vector<1x128xi1>
    %302 = vector.broadcast %301 : vector<1x128xi1> to vector<8x128xi1>
    %303 = vector.broadcast %cst_103 : f32 to vector<8x128xf32>
    %304 = arith.select %302, %298, %303 : vector<8x128xi1>, vector<8x128xf32>
    %305 = vector.broadcast %297 : vector<8x1xf32> to vector<8x128xf32>
    %306 = arith.mulf %305, %304 : vector<8x128xf32>
    %307 = vector.extract_strided_slice %15 {offsets = [2, 0, 1], sizes = [1, 8, 1], strides = [1, 1, 1]} : vector<3x8x3xf32> to vector<1x8x1xf32>
    %308 = vector.shape_cast %307 : vector<1x8x1xf32> to vector<8x1xf32>
    %309 = vector.broadcast %308 : vector<8x1xf32> to vector<8x128xf32>
    %310 = arith.mulf %309, %295 : vector<8x128xf32>
    %311 = arith.addf %306, %310 : vector<8x128xf32>
    %312 = vector.extract_strided_slice %15 {offsets = [2, 0, 2], sizes = [1, 8, 1], strides = [1, 1, 1]} : vector<3x8x3xf32> to vector<1x8x1xf32>
    %313 = vector.shape_cast %312 : vector<1x8x1xf32> to vector<8x1xf32>
    %c119_i32 = arith.constant 119 : i32
    %314 = tpu.dynamic_rotate %295 by %c119_i32 dim 1 : vector<8x128xf32>, i32 -> vector<8x128xf32>
    %c119_i32_104 = arith.constant 119 : i32
    %315 = vector.broadcast %c119_i32_104 : i32 to vector<1x128xi32>
    %316 = arith.cmpi slt, %41, %315 : vector<1x128xi32>
    %cst_105 = arith.constant 0.000000e+00 : f32
    %317 = vector.shape_cast %316 : vector<1x128xi1> to vector<1x128xi1>
    %318 = vector.broadcast %317 : vector<1x128xi1> to vector<8x128xi1>
    %319 = vector.broadcast %cst_105 : f32 to vector<8x128xf32>
    %320 = arith.select %318, %314, %319 : vector<8x128xi1>, vector<8x128xf32>
    %321 = vector.broadcast %313 : vector<8x1xf32> to vector<8x128xf32>
    %322 = arith.mulf %321, %320 : vector<8x128xf32>
    %323 = arith.addf %311, %322 : vector<8x128xf32>
    %324 = vector.extract_strided_slice %17 {offsets = [2, 0, 0], sizes = [1, 8, 1], strides = [1, 1, 1]} : vector<3x8x1xf32> to vector<1x8x1xf32>
    %325 = vector.shape_cast %324 : vector<1x8x1xf32> to vector<8x1xf32>
    %326 = vector.broadcast %325 : vector<8x1xf32> to vector<8x128xf32>
    %327 = arith.addf %323, %326 : vector<8x128xf32>
    %328 = vector.extract_strided_slice %19 {offsets = [2, 0, 0], sizes = [1, 8, 1], strides = [1, 1, 1]} : vector<3x8x1xf32> to vector<1x8x1xf32>
    %329 = vector.shape_cast %328 : vector<1x8x1xf32> to vector<8x1xf32>
    %330 = vector.extract_strided_slice %21 {offsets = [2, 0, 0], sizes = [1, 8, 1], strides = [1, 1, 1]} : vector<3x8x1xf32> to vector<1x8x1xf32>
    %331 = vector.shape_cast %330 : vector<1x8x1xf32> to vector<8x1xf32>
    %cst_106 = arith.constant dense<0.000000e+00> : vector<128xf32>
    %332 = vector.multi_reduction <add>, %327, %cst_106 [0] : vector<8x128xf32> to vector<128xf32>
    %333 = vector.shape_cast %332 : vector<128xf32> to vector<1x128xf32>
    %cst_107 = arith.constant 1.250000e-01 : f32
    %334 = vector.broadcast %cst_107 : f32 to vector<1x128xf32>
    %335 = arith.mulf %333, %334 : vector<1x128xf32>
    %336 = arith.mulf %327, %327 : vector<8x128xf32>
    %cst_108 = arith.constant dense<0.000000e+00> : vector<128xf32>
    %337 = vector.multi_reduction <add>, %336, %cst_108 [0] : vector<8x128xf32> to vector<128xf32>
    %338 = vector.shape_cast %337 : vector<128xf32> to vector<1x128xf32>
    %cst_109 = arith.constant 1.250000e-01 : f32
    %339 = vector.broadcast %cst_109 : f32 to vector<1x128xf32>
    %340 = arith.mulf %338, %339 : vector<1x128xf32>
    %341 = arith.mulf %335, %335 : vector<1x128xf32>
    %342 = arith.subf %340, %341 : vector<1x128xf32>
    %cst_110 = arith.constant 0.000000e+00 : f32
    %343 = vector.broadcast %cst_110 : f32 to vector<1x128xf32>
    %344 = arith.maximumf %342, %343 : vector<1x128xf32>
    %345 = vector.broadcast %335 : vector<1x128xf32> to vector<8x128xf32>
    %346 = arith.subf %327, %345 : vector<8x128xf32>
    %cst_111 = arith.constant 9.99999974E-6 : f32
    %347 = vector.broadcast %cst_111 : f32 to vector<1x128xf32>
    %348 = arith.addf %344, %347 : vector<1x128xf32>
    %349 = math.rsqrt %348 : vector<1x128xf32>
    %350 = vector.broadcast %349 : vector<1x128xf32> to vector<8x128xf32>
    %351 = arith.mulf %346, %350 : vector<8x128xf32>
    %352 = vector.broadcast %329 : vector<8x1xf32> to vector<8x128xf32>
    %353 = arith.mulf %351, %352 : vector<8x128xf32>
    %354 = vector.broadcast %331 : vector<8x1xf32> to vector<8x128xf32>
    %355 = arith.addf %353, %354 : vector<8x128xf32>
    %cst_112 = arith.constant 5.000000e-01 : f32
    %356 = vector.broadcast %cst_112 : f32 to vector<8x128xf32>
    %357 = arith.mulf %356, %355 : vector<8x128xf32>
    %cst_113 = arith.constant 4.471500e-02 : f32
    %358 = vector.broadcast %cst_113 : f32 to vector<8x128xf32>
    %359 = arith.mulf %358, %355 : vector<8x128xf32>
    %360 = arith.mulf %359, %355 : vector<8x128xf32>
    %361 = arith.mulf %360, %355 : vector<8x128xf32>
    %362 = arith.addf %355, %361 : vector<8x128xf32>
    %cst_114 = arith.constant 0.797884583 : f32
    %363 = vector.broadcast %cst_114 : f32 to vector<8x128xf32>
    %364 = arith.mulf %363, %362 : vector<8x128xf32>
    %365 = math.tanh %364 : vector<8x128xf32>
    %cst_115 = arith.constant 1.000000e+00 : f32
    %366 = vector.broadcast %cst_115 : f32 to vector<8x128xf32>
    %367 = arith.addf %366, %365 : vector<8x128xf32>
    %368 = arith.mulf %357, %367 : vector<8x128xf32>
    %369 = vector.extract_strided_slice %23 {offsets = [2, 0, 0], sizes = [1, 8, 8], strides = [1, 1, 1]} : vector<3x8x8xf32> to vector<1x8x8xf32>
    %370 = vector.shape_cast %369 : vector<1x8x8xf32> to vector<8x8xf32>
    %371 = arith.truncf %370 : vector<8x8xf32> to vector<8x8xbf16>
    %372 = arith.truncf %368 : vector<8x128xf32> to vector<8x128xbf16>
    %cst_116 = arith.constant dense<0.000000e+00> : vector<8x128xf32>
    %373 = tpu.matmul %371, %372, %cst_116 {dimension_numbers = #tpu.dot_dimension_numbers<[1], [0], [0], [1], [0, 0, 1, 1], [], []>} : vector<8x8xbf16>, vector<8x128xbf16>, vector<8x128xf32> -> vector<8x128xf32>
    %374 = vector.extract_strided_slice %25 {offsets = [2, 0, 0], sizes = [1, 8, 1], strides = [1, 1, 1]} : vector<3x8x1xf32> to vector<1x8x1xf32>
    %375 = vector.shape_cast %374 : vector<1x8x1xf32> to vector<8x1xf32>
    %376 = vector.broadcast %375 : vector<8x1xf32> to vector<8x128xf32>
    %377 = arith.addf %373, %376 : vector<8x128xf32>
    %378 = vector.extract_strided_slice %27 {offsets = [2, 0, 0], sizes = [1, 8, 1], strides = [1, 1, 1]} : vector<3x8x1xf32> to vector<1x8x1xf32>
    %379 = vector.shape_cast %378 : vector<1x8x1xf32> to vector<8x1xf32>
    %380 = vector.extract_strided_slice %29 {offsets = [2, 0, 0], sizes = [1, 8, 1], strides = [1, 1, 1]} : vector<3x8x1xf32> to vector<1x8x1xf32>
    %381 = vector.shape_cast %380 : vector<1x8x1xf32> to vector<8x1xf32>
    %cst_117 = arith.constant dense<0.000000e+00> : vector<128xf32>
    %382 = vector.multi_reduction <add>, %377, %cst_117 [0] : vector<8x128xf32> to vector<128xf32>
    %383 = vector.shape_cast %382 : vector<128xf32> to vector<1x128xf32>
    %cst_118 = arith.constant 1.250000e-01 : f32
    %384 = vector.broadcast %cst_118 : f32 to vector<1x128xf32>
    %385 = arith.mulf %383, %384 : vector<1x128xf32>
    %386 = arith.mulf %377, %377 : vector<8x128xf32>
    %cst_119 = arith.constant dense<0.000000e+00> : vector<128xf32>
    %387 = vector.multi_reduction <add>, %386, %cst_119 [0] : vector<8x128xf32> to vector<128xf32>
    %388 = vector.shape_cast %387 : vector<128xf32> to vector<1x128xf32>
    %cst_120 = arith.constant 1.250000e-01 : f32
    %389 = vector.broadcast %cst_120 : f32 to vector<1x128xf32>
    %390 = arith.mulf %388, %389 : vector<1x128xf32>
    %391 = arith.mulf %385, %385 : vector<1x128xf32>
    %392 = arith.subf %390, %391 : vector<1x128xf32>
    %cst_121 = arith.constant 0.000000e+00 : f32
    %393 = vector.broadcast %cst_121 : f32 to vector<1x128xf32>
    %394 = arith.maximumf %392, %393 : vector<1x128xf32>
    %395 = vector.broadcast %385 : vector<1x128xf32> to vector<8x128xf32>
    %396 = arith.subf %377, %395 : vector<8x128xf32>
    %cst_122 = arith.constant 9.99999974E-6 : f32
    %397 = vector.broadcast %cst_122 : f32 to vector<1x128xf32>
    %398 = arith.addf %394, %397 : vector<1x128xf32>
    %399 = math.rsqrt %398 : vector<1x128xf32>
    %400 = vector.broadcast %399 : vector<1x128xf32> to vector<8x128xf32>
    %401 = arith.mulf %396, %400 : vector<8x128xf32>
    %402 = vector.broadcast %379 : vector<8x1xf32> to vector<8x128xf32>
    %403 = arith.mulf %401, %402 : vector<8x128xf32>
    %404 = vector.broadcast %381 : vector<8x1xf32> to vector<8x128xf32>
    %405 = arith.addf %403, %404 : vector<8x128xf32>
    %cst_123 = arith.constant 5.000000e-01 : f32
    %406 = vector.broadcast %cst_123 : f32 to vector<8x128xf32>
    %407 = arith.mulf %406, %405 : vector<8x128xf32>
    %cst_124 = arith.constant 4.471500e-02 : f32
    %408 = vector.broadcast %cst_124 : f32 to vector<8x128xf32>
    %409 = arith.mulf %408, %405 : vector<8x128xf32>
    %410 = arith.mulf %409, %405 : vector<8x128xf32>
    %411 = arith.mulf %410, %405 : vector<8x128xf32>
    %412 = arith.addf %405, %411 : vector<8x128xf32>
    %cst_125 = arith.constant 0.797884583 : f32
    %413 = vector.broadcast %cst_125 : f32 to vector<8x128xf32>
    %414 = arith.mulf %413, %412 : vector<8x128xf32>
    %415 = math.tanh %414 : vector<8x128xf32>
    %cst_126 = arith.constant 1.000000e+00 : f32
    %416 = vector.broadcast %cst_126 : f32 to vector<8x128xf32>
    %417 = arith.addf %416, %415 : vector<8x128xf32>
    %418 = arith.mulf %407, %417 : vector<8x128xf32>
    %419 = arith.addf %293, %418 : vector<8x128xf32>
    %420 = vector.broadcast %1 : vector<1x128xf32> to vector<8x128xf32>
    %421 = arith.mulf %419, %420 : vector<8x128xf32>
    %422 = arith.truncf %31 : vector<29x8xf32> to vector<29x8xbf16>
    %423 = arith.truncf %421 : vector<8x128xf32> to vector<8x128xbf16>
    %cst_127 = arith.constant dense<0.000000e+00> : vector<29x128xf32>
    %424 = tpu.matmul %422, %423, %cst_127 {dimension_numbers = #tpu.dot_dimension_numbers<[1], [0], [0], [1], [0, 0, 1, 1], [], []>} : vector<29x8xbf16>, vector<8x128xbf16>, vector<29x128xf32> -> vector<29x128xf32>
    %425 = vector.broadcast %33 : vector<29x1xf32> to vector<29x128xf32>
    %426 = arith.addf %424, %425 : vector<29x128xf32>
    %427 = vector.broadcast %1 : vector<1x128xf32> to vector<29x128xf32>
    %428 = arith.mulf %426, %427 : vector<29x128xf32>
    %429 = vector.extract_strided_slice %428 {offsets = [0, 0], sizes = [10, 128], strides = [1, 1]} : vector<29x128xf32> to vector<10x128xf32>
    %cst_128 = arith.constant 0.353553385 : f32
    %430 = vector.broadcast %cst_128 : f32 to vector<10x128xf32>
    %431 = arith.mulf %429, %430 : vector<10x128xf32>
    %432 = vector.extract_strided_slice %428 {offsets = [10, 0], sizes = [10, 128], strides = [1, 1]} : vector<29x128xf32> to vector<10x128xf32>
    %cst_129 = arith.constant 0.353553385 : f32
    %433 = vector.broadcast %cst_129 : f32 to vector<10x128xf32>
    %434 = arith.mulf %432, %433 : vector<10x128xf32>
    %435 = vector.extract_strided_slice %428 {offsets = [20, 0], sizes = [9, 128], strides = [1, 1]} : vector<29x128xf32> to vector<9x128xf32>
    %cst_130 = arith.constant -5.000000e+00 : f32
    %436 = vector.broadcast %cst_130 : f32 to vector<1x128xf32>
    %437 = arith.cmpf oge, %7, %436 : vector<1x128xf32>
    %cst_131 = arith.constant 5.000000e+00 : f32
    %438 = vector.broadcast %cst_131 : f32 to vector<1x128xf32>
    %439 = arith.cmpf ole, %7, %438 : vector<1x128xf32>
    %440 = arith.andi %437, %439 : vector<1x128xi1>
    %cst_132 = arith.constant -5.000000e+00 : f32
    %cst_133 = arith.constant 5.000000e+00 : f32
    %441 = vector.broadcast %cst_132 : f32 to vector<1x128xf32>
    %442 = arith.maximumf %441, %7 : vector<1x128xf32>
    %443 = vector.broadcast %cst_133 : f32 to vector<1x128xf32>
    %444 = arith.minimumf %443, %442 : vector<1x128xf32>
    %445 = tpu.iota {dimensions = array<i32: 0>} : vector<11x10xi32>
    %446 = tpu.iota {dimensions = array<i32: 1>} : vector<11x10xi32>
    %447 = arith.cmpi slt, %446, %445 : vector<11x10xi32>
    %448 = arith.extui %447 : vector<11x10xi1> to vector<11x10xi32>
    %449 = arith.sitofp %448 : vector<11x10xi32> to vector<11x10xf32>
    %450 = tpu.concatenate %431, %434 in 1 : vector<10x128xf32>, vector<10x128xf32> -> vector<10x256xf32>
    %cst_134 = arith.constant dense<0xFF800000> : vector<256xf32>
    %451 = vector.multi_reduction <maximumf>, %450, %cst_134 [0] : vector<10x256xf32> to vector<256xf32>
    %452 = vector.shape_cast %451 : vector<256xf32> to vector<1x256xf32>
    %453 = vector.broadcast %452 : vector<1x256xf32> to vector<10x256xf32>
    %454 = arith.subf %450, %453 : vector<10x256xf32>
    %455 = math.exp %454 : vector<10x256xf32>
    %cst_135 = arith.constant dense<0.000000e+00> : vector<256xf32>
    %456 = vector.multi_reduction <add>, %455, %cst_135 [0] : vector<10x256xf32> to vector<256xf32>
    %457 = vector.shape_cast %456 : vector<256xf32> to vector<1x256xf32>
    %458 = tpu.reciprocal %457 : vector<1x256xf32> -> vector<1x256xf32>
    %459 = vector.broadcast %458 : vector<1x256xf32> to vector<10x256xf32>
    %460 = arith.mulf %455, %459 : vector<10x256xf32>
    %cst_136 = arith.constant 9.900000e-01 : f32
    %461 = vector.broadcast %cst_136 : f32 to vector<10x256xf32>
    %462 = arith.mulf %461, %460 : vector<10x256xf32>
    %cst_137 = arith.constant 1.000000e-03 : f32
    %463 = vector.broadcast %cst_137 : f32 to vector<10x256xf32>
    %464 = arith.addf %463, %462 : vector<10x256xf32>
    %cst_138 = arith.constant dense<0.000000e+00> : vector<11x256xf32>
    %465 = tpu.matmul %449, %464, %cst_138 {dimension_numbers = #tpu.dot_dimension_numbers<[1], [0], [0], [1], [0, 0, 1, 1], [], []>} : vector<11x10xf32>, vector<10x256xf32>, vector<11x256xf32> -> vector<11x256xf32>
    %cst_139 = arith.constant 1.000000e+01 : f32
    %466 = vector.broadcast %cst_139 : f32 to vector<11x256xf32>
    %467 = arith.mulf %466, %465 : vector<11x256xf32>
    %cst_140 = arith.constant -5.000000e+00 : f32
    %468 = vector.broadcast %cst_140 : f32 to vector<11x256xf32>
    %469 = arith.addf %467, %468 : vector<11x256xf32>
    %470 = tpu.iota {dimensions = array<i32: 0>} : vector<11x256xi32>
    %c10_i32 = arith.constant 10 : i32
    %471 = vector.broadcast %c10_i32 : i32 to vector<11x256xi32>
    %472 = arith.cmpi eq, %470, %471 : vector<11x256xi32>
    %cst_141 = arith.constant 5.000000e+00 : f32
    %473 = vector.broadcast %cst_141 : f32 to vector<11x256xf32>
    %474 = arith.select %472, %473, %469 : vector<11x256xi1>, vector<11x256xf32>
    %475 = vector.extract_strided_slice %474 {offsets = [1, 0], sizes = [10, 256], strides = [1, 1]} : vector<11x256xf32> to vector<10x256xf32>
    %476 = vector.extract_strided_slice %474 {offsets = [0, 0], sizes = [10, 256], strides = [1, 1]} : vector<11x256xf32> to vector<10x256xf32>
    %477 = arith.subf %475, %476 : vector<10x256xf32>
    %478 = vector.extract_strided_slice %474 {offsets = [0, 0], sizes = [11, 128], strides = [1, 1]} : vector<11x256xf32> to vector<11x128xf32>
    %479 = vector.extract_strided_slice %474 {offsets = [0, 128], sizes = [11, 128], strides = [1, 1]} : vector<11x256xf32> to vector<11x128xf32>
    %480 = vector.extract_strided_slice %477 {offsets = [0, 0], sizes = [10, 128], strides = [1, 1]} : vector<10x256xf32> to vector<10x128xf32>
    %481 = vector.extract_strided_slice %477 {offsets = [0, 128], sizes = [10, 128], strides = [1, 1]} : vector<10x256xf32> to vector<10x128xf32>
    %cst_142 = arith.constant 0.000000e+00 : f32
    %482 = vector.broadcast %cst_142 : f32 to vector<9x128xf32>
    %483 = arith.maximumf %435, %482 : vector<9x128xf32>
    %484 = math.absf %435 : vector<9x128xf32>
    %cst_143 = arith.constant 0.000000e+00 : f32
    %485 = vector.broadcast %cst_143 : f32 to vector<9x128xf32>
    %486 = arith.subf %485, %484 : vector<9x128xf32>
    %487 = math.exp %486 : vector<9x128xf32>
    %cst_144 = arith.constant 1.000000e+00 : f32
    %488 = vector.broadcast %cst_144 : f32 to vector<9x128xf32>
    %489 = arith.addf %488, %487 : vector<9x128xf32>
    %490 = math.log %489 : vector<9x128xf32>
    %491 = arith.addf %483, %490 : vector<9x128xf32>
    %cst_145 = arith.constant 1.000000e-03 : f32
    %492 = vector.broadcast %cst_145 : f32 to vector<9x128xf32>
    %493 = arith.addf %492, %491 : vector<9x128xf32>
    %cst_146 = arith.constant 1.000000e+00 : f32
    %494 = vector.broadcast %cst_146 : f32 to vector<1x128xf32>
    %495 = tpu.concatenate %494, %493 in 0 : vector<1x128xf32>, vector<9x128xf32> -> vector<10x128xf32>
    %496 = tpu.concatenate %493, %494 in 0 : vector<9x128xf32>, vector<1x128xf32> -> vector<10x128xf32>
    %497 = tpu.iota {dimensions = array<i32: 0>} : vector<11x128xi32>
    %c10_i32_147 = arith.constant 10 : i32
    %498 = vector.broadcast %c10_i32_147 : i32 to vector<11x128xi32>
    %499 = arith.cmpi eq, %497, %498 : vector<11x128xi32>
    %cst_148 = arith.constant 9.99999997E-7 : f32
    %500 = vector.broadcast %cst_148 : f32 to vector<11x128xf32>
    %501 = arith.addf %478, %500 : vector<11x128xf32>
    %502 = arith.select %499, %501, %478 : vector<11x128xi1>, vector<11x128xf32>
    %503 = vector.broadcast %444 : vector<1x128xf32> to vector<11x128xf32>
    %504 = arith.cmpf oge, %503, %502 : vector<11x128xf32>
    %505 = arith.extui %504 : vector<11x128xi1> to vector<11x128xi32>
    %cst_149 = arith.constant dense<0> : vector<128xi32>
    %506 = vector.multi_reduction <add>, %505, %cst_149 [0] : vector<11x128xi32> to vector<128xi32>
    %507 = vector.shape_cast %506 : vector<128xi32> to vector<1x128xi32>
    %c1_i32_150 = arith.constant 1 : i32
    %508 = vector.broadcast %c1_i32_150 : i32 to vector<1x128xi32>
    %509 = arith.subi %507, %508 : vector<1x128xi32>
    %c0_i32_151 = arith.constant 0 : i32
    %c9_i32_152 = arith.constant 9 : i32
    %510 = vector.broadcast %c0_i32_151 : i32 to vector<1x128xi32>
    %511 = arith.maxsi %510, %509 : vector<1x128xi32>
    %512 = vector.broadcast %c9_i32_152 : i32 to vector<1x128xi32>
    %513 = arith.minsi %512, %511 : vector<1x128xi32>
    %514 = tpu.iota {dimensions = array<i32: 0>} : vector<10x128xi32>
    %515 = vector.broadcast %513 : vector<1x128xi32> to vector<10x128xi32>
    %516 = arith.cmpi eq, %514, %515 : vector<10x128xi32>
    %517 = arith.extui %516 : vector<10x128xi1> to vector<10x128xi32>
    %518 = arith.sitofp %517 : vector<10x128xi32> to vector<10x128xf32>
    %519 = vector.extract_strided_slice %478 {offsets = [0, 0], sizes = [10, 128], strides = [1, 1]} : vector<11x128xf32> to vector<10x128xf32>
    %520 = arith.mulf %519, %518 : vector<10x128xf32>
    %cst_153 = arith.constant dense<0.000000e+00> : vector<128xf32>
    %521 = vector.multi_reduction <add>, %520, %cst_153 [0] : vector<10x128xf32> to vector<128xf32>
    %522 = vector.shape_cast %521 : vector<128xf32> to vector<1x128xf32>
    %523 = arith.mulf %480, %518 : vector<10x128xf32>
    %cst_154 = arith.constant dense<0.000000e+00> : vector<128xf32>
    %524 = vector.multi_reduction <add>, %523, %cst_154 [0] : vector<10x128xf32> to vector<128xf32>
    %525 = vector.shape_cast %524 : vector<128xf32> to vector<1x128xf32>
    %526 = vector.extract_strided_slice %479 {offsets = [0, 0], sizes = [10, 128], strides = [1, 1]} : vector<11x128xf32> to vector<10x128xf32>
    %527 = arith.mulf %526, %518 : vector<10x128xf32>
    %cst_155 = arith.constant dense<0.000000e+00> : vector<128xf32>
    %528 = vector.multi_reduction <add>, %527, %cst_155 [0] : vector<10x128xf32> to vector<128xf32>
    %529 = vector.shape_cast %528 : vector<128xf32> to vector<1x128xf32>
    %530 = arith.mulf %481, %518 : vector<10x128xf32>
    %cst_156 = arith.constant dense<0.000000e+00> : vector<128xf32>
    %531 = vector.multi_reduction <add>, %530, %cst_156 [0] : vector<10x128xf32> to vector<128xf32>
    %532 = vector.shape_cast %531 : vector<128xf32> to vector<1x128xf32>
    %533 = arith.mulf %495, %518 : vector<10x128xf32>
    %cst_157 = arith.constant dense<0.000000e+00> : vector<128xf32>
    %534 = vector.multi_reduction <add>, %533, %cst_157 [0] : vector<10x128xf32> to vector<128xf32>
    %535 = vector.shape_cast %534 : vector<128xf32> to vector<1x128xf32>
    %536 = arith.mulf %496, %518 : vector<10x128xf32>
    %cst_158 = arith.constant dense<0.000000e+00> : vector<128xf32>
    %537 = vector.multi_reduction <add>, %536, %cst_158 [0] : vector<10x128xf32> to vector<128xf32>
    %538 = vector.shape_cast %537 : vector<128xf32> to vector<1x128xf32>
    %539 = tpu.reciprocal %525 : vector<1x128xf32> -> vector<1x128xf32>
    %540 = arith.mulf %532, %539 : vector<1x128xf32>
    %541 = arith.subf %444, %522 : vector<1x128xf32>
    %542 = arith.mulf %541, %539 : vector<1x128xf32>
    %cst_159 = arith.constant 1.000000e+00 : f32
    %543 = vector.broadcast %cst_159 : f32 to vector<1x128xf32>
    %544 = arith.subf %543, %542 : vector<1x128xf32>
    %545 = arith.mulf %542, %544 : vector<1x128xf32>
    %546 = arith.mulf %540, %542 : vector<1x128xf32>
    %547 = arith.mulf %546, %542 : vector<1x128xf32>
    %548 = arith.mulf %535, %545 : vector<1x128xf32>
    %549 = arith.addf %547, %548 : vector<1x128xf32>
    %550 = arith.mulf %532, %549 : vector<1x128xf32>
    %551 = arith.addf %535, %538 : vector<1x128xf32>
    %cst_160 = arith.constant 2.000000e+00 : f32
    %552 = vector.broadcast %cst_160 : f32 to vector<1x128xf32>
    %553 = arith.mulf %552, %540 : vector<1x128xf32>
    %554 = arith.subf %551, %553 : vector<1x128xf32>
    %555 = arith.mulf %554, %545 : vector<1x128xf32>
    %556 = arith.addf %540, %555 : vector<1x128xf32>
    %557 = tpu.reciprocal %556 : vector<1x128xf32> -> vector<1x128xf32>
    %558 = arith.mulf %550, %557 : vector<1x128xf32>
    %559 = arith.addf %529, %558 : vector<1x128xf32>
    %560 = arith.mulf %540, %540 : vector<1x128xf32>
    %561 = arith.mulf %538, %542 : vector<1x128xf32>
    %562 = arith.mulf %561, %542 : vector<1x128xf32>
    %cst_161 = arith.constant 2.000000e+00 : f32
    %563 = vector.broadcast %cst_161 : f32 to vector<1x128xf32>
    %564 = arith.mulf %563, %540 : vector<1x128xf32>
    %565 = arith.mulf %564, %545 : vector<1x128xf32>
    %566 = arith.addf %562, %565 : vector<1x128xf32>
    %cst_162 = arith.constant 1.000000e+00 : f32
    %567 = vector.broadcast %cst_162 : f32 to vector<1x128xf32>
    %568 = arith.subf %567, %542 : vector<1x128xf32>
    %569 = arith.mulf %535, %568 : vector<1x128xf32>
    %cst_163 = arith.constant 1.000000e+00 : f32
    %570 = vector.broadcast %cst_163 : f32 to vector<1x128xf32>
    %571 = arith.subf %570, %542 : vector<1x128xf32>
    %572 = arith.mulf %569, %571 : vector<1x128xf32>
    %573 = arith.addf %566, %572 : vector<1x128xf32>
    %574 = arith.mulf %560, %573 : vector<1x128xf32>
    %575 = arith.mulf %557, %557 : vector<1x128xf32>
    %576 = arith.mulf %574, %575 : vector<1x128xf32>
    %577 = math.log %576 : vector<1x128xf32>
    %578 = arith.select %440, %559, %7 : vector<1x128xi1>, vector<1x128xf32>
    %cst_164 = arith.constant 0.000000e+00 : f32
    %579 = vector.broadcast %cst_164 : f32 to vector<1x128xf32>
    %580 = arith.select %440, %577, %579 : vector<1x128xi1>, vector<1x128xf32>
    %581 = arith.mulf %580, %1 : vector<1x128xf32>
    %cst_165 = arith.constant dense<0.000000e+00> : vector<1xf32>
    %582 = vector.multi_reduction <add>, %581, %cst_165 [1] : vector<1x128xf32> to vector<1xf32>
    %583 = vector.shape_cast %582 : vector<1xf32> to vector<1x1xf32>
    %cst_166 = arith.constant dense<0.000000e+00> : vector<1xf32>
    %584 = vector.multi_reduction <add>, %583, %cst_166 [0] : vector<1x1xf32> to vector<1xf32>
    %585 = vector.shape_cast %584 : vector<1xf32> to vector<1x1xf32>
    %586 = arith.mulf %578, %1 : vector<1x128xf32>
    %c0_167 = arith.constant 0 : index
    %c0_168 = arith.constant 0 : index
    %587 = vector.load %arg21[%c0_167, %c0_168] : memref<2x128xf32, #tpu.memory_space<vmem>>, vector<1x128xf32>
    tpu.vector_store %arg21[%c0_167, %c0_168], %586 {strides = array<i32>} : memref<2x128xf32, #tpu.memory_space<vmem>>, vector<1x128xf32>,
    %588 = arith.mulf %6, %1 : vector<1x128xf32>
    %c1 = arith.constant 1 : index
    %c0_169 = arith.constant 0 : index
    %589 = vector.load %arg21[%c1, %c0_169] : memref<2x128xf32, #tpu.memory_space<vmem>>, vector<1x128xf32>
    tpu.vector_store %arg21[%c1, %c0_169], %588 {strides = array<i32>} : memref<2x128xf32, #tpu.memory_space<vmem>>, vector<1x128xf32>,
    %cst_170 = arith.constant 0.000000e+00 : f32
    %590 = vector.broadcast %cst_170 : f32 to vector<1x1xf32>
    %c4_i32 = arith.constant 4 : i32
    %591 = arith.cmpi slt, %arg1, %c4_i32 : i32
    %c0_171 = arith.constant 0 : index
    %c0_172 = arith.constant 0 : index
    %592 = vector.load %arg22[%c0_171, %c0_172] : memref<1x1xf32, #tpu.memory_space<vmem>>, vector<1x1xf32>
    %593 = arith.select %591, %585, %590 : vector<1x1xf32>
    %594 = arith.addf %592, %593 : vector<1x1xf32>
    %c0_173 = arith.constant 0 : index
    %c0_174 = arith.constant 0 : index
    %595 = vector.load %arg22[%c0_173, %c0_174] : memref<1x1xf32, #tpu.memory_space<vmem>>, vector<1x1xf32>
    tpu.vector_store %arg22[%c0_173, %c0_174], %594 {strides = array<i32>} : memref<1x1xf32, #tpu.memory_space<vmem>>, vector<1x1xf32>,
    %c0_175 = arith.constant 0 : index
    %c0_176 = arith.constant 0 : index
    %596 = vector.load %arg23[%c0_175, %c0_176] : memref<1x1xf32, #tpu.memory_space<vmem>>, vector<1x1xf32>
    %597 = arith.select %591, %590, %585 : vector<1x1xf32>
    %598 = arith.addf %596, %597 : vector<1x1xf32>
    %c0_177 = arith.constant 0 : index
    %c0_178 = arith.constant 0 : index
    %599 = vector.load %arg23[%c0_177, %c0_178] : memref<1x1xf32, #tpu.memory_space<vmem>>, vector<1x1xf32>
    tpu.vector_store %arg23[%c0_177, %c0_178], %598 {strides = array<i32>} : memref<1x1xf32, #tpu.memory_space<vmem>>, vector<1x1xf32>,
    %c3_i32_179 = arith.constant 3 : i32
    %600 = arith.cmpi eq, %arg1, %c3_i32_179 : i32
    %601 = arith.extui %600 : i1 to i32
    %c0_i32_180 = arith.constant 0 : i32
    %602 = arith.cmpi ne, %601, %c0_i32_180 : i32
    scf.if %602 {
      %c0_182 = arith.constant 0 : index
      %c0_183 = arith.constant 0 : index
      %606 = vector.load %arg21[%c0_182, %c0_183] : memref<2x128xf32, #tpu.memory_space<vmem>>, vector<2x128xf32>
      %607 = vector.extract_strided_slice %606 {offsets = [0, 0], sizes = [1, 128], strides = [1, 1]} : vector<2x128xf32> to vector<1x128xf32>
      %608 = vector.extract_strided_slice %606 {offsets = [1, 0], sizes = [1, 128], strides = [1, 1]} : vector<2x128xf32> to vector<1x128xf32>
      %c0_184 = arith.constant 0 : index
      %c0_185 = arith.constant 0 : index
      %c0_186 = arith.constant 0 : index
      %609 = vector.load %arg3[%c0_184, %c0_185, %c0_186] : memref<1x1x128xf32, #tpu.memory_space<vmem>>, vector<1x1x128xf32>
      %610 = vector.shape_cast %609 : vector<1x1x128xf32> to vector<1x128xf32>
      %cst_187 = arith.constant 5.000000e-01 : f32
      %611 = vector.broadcast %cst_187 : f32 to vector<1x128xf32>
      %612 = arith.mulf %611, %607 : vector<1x128xf32>
      %613 = math.tanh %612 : vector<1x128xf32>
      %cst_188 = arith.constant 1.000000e+00 : f32
      %614 = vector.broadcast %cst_188 : f32 to vector<1x128xf32>
      %615 = arith.addf %613, %614 : vector<1x128xf32>
      %cst_189 = arith.constant 5.000000e-01 : f32
      %616 = vector.broadcast %cst_189 : f32 to vector<1x128xf32>
      %617 = arith.mulf %616, %615 : vector<1x128xf32>
      %618 = arith.mulf %617, %1 : vector<1x128xf32>
      %619 = arith.subf %610, %618 : vector<1x128xf32>
      %620 = arith.mulf %619, %1 : vector<1x128xf32>
      %c0_190 = arith.constant 0 : index
      %c0_191 = arith.constant 0 : index
      %621 = vector.load %arg22[%c0_190, %c0_191] : memref<1x1xf32, #tpu.memory_space<vmem>>, vector<1x1xf32>
      %cst_192 = arith.constant 0.000000e+00 : f32
      %622 = vector.broadcast %cst_192 : f32 to vector<1x128xf32>
      %623 = arith.subf %622, %607 : vector<1x128xf32>
      %cst_193 = arith.constant 0.000000e+00 : f32
      %624 = vector.broadcast %cst_193 : f32 to vector<1x128xf32>
      %625 = arith.maximumf %623, %624 : vector<1x128xf32>
      %626 = math.absf %623 : vector<1x128xf32>
      %cst_194 = arith.constant 0.000000e+00 : f32
      %627 = vector.broadcast %cst_194 : f32 to vector<1x128xf32>
      %628 = arith.subf %627, %626 : vector<1x128xf32>
      %629 = math.exp %628 : vector<1x128xf32>
      %cst_195 = arith.constant 1.000000e+00 : f32
      %630 = vector.broadcast %cst_195 : f32 to vector<1x128xf32>
      %631 = arith.addf %630, %629 : vector<1x128xf32>
      %632 = math.log %631 : vector<1x128xf32>
      %633 = arith.addf %625, %632 : vector<1x128xf32>
      %cst_196 = arith.constant 0.000000e+00 : f32
      %634 = vector.broadcast %cst_196 : f32 to vector<1x128xf32>
      %635 = arith.subf %634, %633 : vector<1x128xf32>
      %cst_197 = arith.constant 0.000000e+00 : f32
      %636 = vector.broadcast %cst_197 : f32 to vector<1x128xf32>
      %637 = arith.subf %636, %607 : vector<1x128xf32>
      %cst_198 = arith.constant 0.000000e+00 : f32
      %638 = vector.broadcast %cst_198 : f32 to vector<1x128xf32>
      %639 = arith.subf %638, %637 : vector<1x128xf32>
      %cst_199 = arith.constant 0.000000e+00 : f32
      %640 = vector.broadcast %cst_199 : f32 to vector<1x128xf32>
      %641 = arith.maximumf %639, %640 : vector<1x128xf32>
      %642 = math.absf %639 : vector<1x128xf32>
      %cst_200 = arith.constant 0.000000e+00 : f32
      %643 = vector.broadcast %cst_200 : f32 to vector<1x128xf32>
      %644 = arith.subf %643, %642 : vector<1x128xf32>
      %645 = math.exp %644 : vector<1x128xf32>
      %cst_201 = arith.constant 1.000000e+00 : f32
      %646 = vector.broadcast %cst_201 : f32 to vector<1x128xf32>
      %647 = arith.addf %646, %645 : vector<1x128xf32>
      %648 = math.log %647 : vector<1x128xf32>
      %649 = arith.addf %641, %648 : vector<1x128xf32>
      %cst_202 = arith.constant 0.000000e+00 : f32
      %650 = vector.broadcast %cst_202 : f32 to vector<1x128xf32>
      %651 = arith.subf %650, %649 : vector<1x128xf32>
      %652 = arith.addf %635, %651 : vector<1x128xf32>
      %653 = arith.mulf %652, %1 : vector<1x128xf32>
      %cst_203 = arith.constant dense<0.000000e+00> : vector<1xf32>
      %654 = vector.multi_reduction <add>, %653, %cst_203 [1] : vector<1x128xf32> to vector<1xf32>
      %655 = vector.shape_cast %654 : vector<1xf32> to vector<1x1xf32>
      %cst_204 = arith.constant dense<0.000000e+00> : vector<1xf32>
      %656 = vector.multi_reduction <add>, %655, %cst_204 [0] : vector<1x1xf32> to vector<1xf32>
      %657 = vector.shape_cast %656 : vector<1xf32> to vector<1x1xf32>
      %658 = arith.addf %621, %657 : vector<1x1xf32>
      %c0_205 = arith.constant 0 : index
      %c0_206 = arith.constant 0 : index
      %659 = vector.load %arg22[%c0_205, %c0_206] : memref<1x1xf32, #tpu.memory_space<vmem>>, vector<1x1xf32>
      tpu.vector_store %arg22[%c0_205, %c0_206], %658 {strides = array<i32>} : memref<1x1xf32, #tpu.memory_space<vmem>>, vector<1x1xf32>,
      %cst_207 = arith.constant 9.99999974E-6 : f32
      %660 = vector.broadcast %cst_207 : f32 to vector<1x128xf32>
      %661 = arith.maximumf %620, %660 : vector<1x128xf32>
      %662 = math.log %661 : vector<1x128xf32>
      %663 = arith.mulf %662, %1 : vector<1x128xf32>
      %c0_208 = arith.constant 0 : index
      %c0_209 = arith.constant 0 : index
      %664 = vector.load %arg23[%c0_208, %c0_209] : memref<1x1xf32, #tpu.memory_space<vmem>>, vector<1x1xf32>
      %cst_210 = arith.constant 0.000000e+00 : f32
      %665 = vector.broadcast %cst_210 : f32 to vector<1x128xf32>
      %666 = arith.subf %665, %663 : vector<1x128xf32>
      %cst_211 = arith.constant dense<0.000000e+00> : vector<1xf32>
      %667 = vector.multi_reduction <add>, %666, %cst_211 [1] : vector<1x128xf32> to vector<1xf32>
      %668 = vector.shape_cast %667 : vector<1xf32> to vector<1x1xf32>
      %cst_212 = arith.constant dense<0.000000e+00> : vector<1xf32>
      %669 = vector.multi_reduction <add>, %668, %cst_212 [0] : vector<1x1xf32> to vector<1xf32>
      %670 = vector.shape_cast %669 : vector<1xf32> to vector<1x1xf32>
      %671 = arith.addf %664, %670 : vector<1x1xf32>
      %c0_213 = arith.constant 0 : index
      %c0_214 = arith.constant 0 : index
      %672 = vector.load %arg23[%c0_213, %c0_214] : memref<1x1xf32, #tpu.memory_space<vmem>>, vector<1x1xf32>
      tpu.vector_store %arg23[%c0_213, %c0_214], %671 {strides = array<i32>} : memref<1x1xf32, #tpu.memory_space<vmem>>, vector<1x1xf32>,
      %c0_215 = arith.constant 0 : index
      %c0_216 = arith.constant 0 : index
      %c0_217 = arith.constant 0 : index
      %673 = vector.load %arg7[%c0_215, %c0_216, %c0_217] : memref<2x2x1xf32, #tpu.memory_space<vmem>>, vector<1x2x1xf32>
      %674 = vector.shape_cast %673 : vector<1x2x1xf32> to vector<2x1xf32>
      %c1_218 = arith.constant 1 : index
      %c0_219 = arith.constant 0 : index
      %c0_220 = arith.constant 0 : index
      %675 = vector.load %arg7[%c1_218, %c0_219, %c0_220] : memref<2x2x1xf32, #tpu.memory_space<vmem>>, vector<1x2x1xf32>
      %676 = vector.shape_cast %675 : vector<1x2x1xf32> to vector<2x1xf32>
      %677 = vector.extract_strided_slice %674 {offsets = [0, 0], sizes = [1, 1], strides = [1, 1]} : vector<2x1xf32> to vector<1x1xf32>
      %678 = vector.extract_strided_slice %676 {offsets = [0, 0], sizes = [1, 1], strides = [1, 1]} : vector<2x1xf32> to vector<1x1xf32>
      %679 = math.exp %678 : vector<1x1xf32>
      %680 = vector.broadcast %679 : vector<1x1xf32> to vector<1x128xf32>
      %681 = arith.mulf %680, %663 : vector<1x128xf32>
      %682 = vector.broadcast %677 : vector<1x1xf32> to vector<1x128xf32>
      %683 = arith.addf %682, %681 : vector<1x128xf32>
      %684 = arith.mulf %683, %1 : vector<1x128xf32>
      %c0_221 = arith.constant 0 : index
      %c0_222 = arith.constant 0 : index
      %685 = vector.load %arg21[%c0_221, %c0_222] : memref<2x128xf32, #tpu.memory_space<vmem>>, vector<1x128xf32>
      tpu.vector_store %arg21[%c0_221, %c0_222], %684 {strides = array<i32>} : memref<2x128xf32, #tpu.memory_space<vmem>>, vector<1x128xf32>,
      %686 = vector.extract_strided_slice %674 {offsets = [1, 0], sizes = [1, 1], strides = [1, 1]} : vector<2x1xf32> to vector<1x1xf32>
      %687 = vector.extract_strided_slice %676 {offsets = [1, 0], sizes = [1, 1], strides = [1, 1]} : vector<2x1xf32> to vector<1x1xf32>
      %688 = math.exp %687 : vector<1x1xf32>
      %689 = vector.broadcast %688 : vector<1x1xf32> to vector<1x128xf32>
      %690 = arith.mulf %689, %608 : vector<1x128xf32>
      %691 = vector.broadcast %686 : vector<1x1xf32> to vector<1x128xf32>
      %692 = arith.addf %691, %690 : vector<1x128xf32>
      %693 = arith.mulf %692, %1 : vector<1x128xf32>
      %c1_223 = arith.constant 1 : index
      %c0_224 = arith.constant 0 : index
      %694 = vector.load %arg21[%c1_223, %c0_224] : memref<2x128xf32, #tpu.memory_space<vmem>>, vector<1x128xf32>
      tpu.vector_store %arg21[%c1_223, %c0_224], %693 {strides = array<i32>} : memref<2x128xf32, #tpu.memory_space<vmem>>, vector<1x128xf32>,
      %c0_225 = arith.constant 0 : index
      %c0_226 = arith.constant 0 : index
      %695 = vector.load %arg23[%c0_225, %c0_226] : memref<1x1xf32, #tpu.memory_space<vmem>>, vector<1x1xf32>
      %696 = vector.broadcast %676 : vector<2x1xf32> to vector<2x128xf32>
      %697 = vector.broadcast %1 : vector<1x128xf32> to vector<2x128xf32>
      %698 = arith.mulf %696, %697 : vector<2x128xf32>
      %cst_227 = arith.constant dense<0.000000e+00> : vector<2xf32>
      %699 = vector.multi_reduction <add>, %698, %cst_227 [1] : vector<2x128xf32> to vector<2xf32>
      %700 = vector.shape_cast %699 : vector<2xf32> to vector<2x1xf32>
      %cst_228 = arith.constant dense<0.000000e+00> : vector<1xf32>
      %701 = vector.multi_reduction <add>, %700, %cst_228 [0] : vector<2x1xf32> to vector<1xf32>
      %702 = vector.shape_cast %701 : vector<1xf32> to vector<1x1xf32>
      %703 = arith.addf %695, %702 : vector<1x1xf32>
      %c0_229 = arith.constant 0 : index
      %c0_230 = arith.constant 0 : index
      %704 = vector.load %arg23[%c0_229, %c0_230] : memref<1x1xf32, #tpu.memory_space<vmem>>, vector<1x1xf32>
      tpu.vector_store %arg23[%c0_229, %c0_230], %703 {strides = array<i32>} : memref<1x1xf32, #tpu.memory_space<vmem>>, vector<1x1xf32>,
    } else {
    }
    %c7_i32 = arith.constant 7 : i32
    %603 = arith.cmpi eq, %arg1, %c7_i32 : i32
    %604 = arith.extui %603 : i1 to i32
    %c0_i32_181 = arith.constant 0 : i32
    %605 = arith.cmpi ne, %604, %c0_i32_181 : i32
    scf.if %605 {
      %c0_182 = arith.constant 0 : index
      %c0_183 = arith.constant 0 : index
      %606 = vector.load %arg21[%c0_182, %c0_183] : memref<2x128xf32, #tpu.memory_space<vmem>>, vector<2x128xf32>
      %607 = arith.mulf %606, %606 : vector<2x128xf32>
      %cst_184 = arith.constant 1.83787704 : f32
      %608 = vector.broadcast %cst_184 : f32 to vector<2x128xf32>
      %609 = arith.addf %608, %607 : vector<2x128xf32>
      %cst_185 = arith.constant 5.000000e-01 : f32
      %610 = vector.broadcast %cst_185 : f32 to vector<2x128xf32>
      %611 = arith.mulf %610, %609 : vector<2x128xf32>
      %612 = vector.broadcast %1 : vector<1x128xf32> to vector<2x128xf32>
      %613 = arith.mulf %611, %612 : vector<2x128xf32>
      %cst_186 = arith.constant dense<0.000000e+00> : vector<2xf32>
      %614 = vector.multi_reduction <add>, %613, %cst_186 [1] : vector<2x128xf32> to vector<2xf32>
      %615 = vector.shape_cast %614 : vector<2xf32> to vector<2x1xf32>
      %cst_187 = arith.constant dense<0.000000e+00> : vector<1xf32>
      %616 = vector.multi_reduction <add>, %615, %cst_187 [0] : vector<2x1xf32> to vector<1xf32>
      %617 = vector.shape_cast %616 : vector<1xf32> to vector<1x1xf32>
      %c0_188 = arith.constant 0 : index
      %c0_189 = arith.constant 0 : index
      %618 = vector.load %arg23[%c0_188, %c0_189] : memref<1x1xf32, #tpu.memory_space<vmem>>, vector<1x1xf32>
      %619 = arith.subf %617, %618 : vector<1x1xf32>
      %c0_190 = arith.constant 0 : index
      %c0_191 = arith.constant 0 : index
      %620 = vector.load %arg24[%c0_190, %c0_191] : memref<1x1xf32, #tpu.memory_space<vmem>>, vector<1x1xf32>
      %c0_192 = arith.constant 0 : index
      %c0_193 = arith.constant 0 : index
      %621 = vector.load %arg22[%c0_192, %c0_193] : memref<1x1xf32, #tpu.memory_space<vmem>>, vector<1x1xf32>
      %622 = arith.subf %620, %621 : vector<1x1xf32>
      %623 = arith.addf %619, %622 : vector<1x1xf32>
      %c0_194 = arith.constant 0 : index
      %c0_195 = arith.constant 0 : index
      %c0_196 = arith.constant 0 : index
      %624 = vector.load %arg20[%c0_194, %c0_195, %c0_196] : memref<1x1x1xf32, #tpu.memory_space<vmem>>, vector<1x1x1xf32>
      %625 = vector.shape_cast %624 : vector<1x1x1xf32> to vector<1x1xf32>
      %626 = vector.shape_cast %623 : vector<1x1xf32> to vector<1x1x1xf32>
      tpu.vector_store %arg20[%c0_194, %c0_195, %c0_196], %626 {strides = array<i32>} : memref<1x1x1xf32, #tpu.memory_space<vmem>>, vector<1x1x1xf32>,
    } else {
    }
    return
  }
  func.func @transform_0(%arg0: i32, %arg1: i32) -> (i32, i32, i32) {
    %c0_i32 = arith.constant 0 : i32
    %c0_i32_0 = arith.constant 0 : i32
    %c0_i32_1 = arith.constant 0 : i32
    return %arg0, %c0_i32, %c0_i32_0 : i32, i32, i32
  }
  func.func @transform_1(%arg0: i32, %arg1: i32) -> (i32, i32, i32) {
    %c0_i32 = arith.constant 0 : i32
    %c0_i32_0 = arith.constant 0 : i32
    %c0_i32_1 = arith.constant 0 : i32
    return %arg0, %c0_i32, %c0_i32_0 : i32, i32, i32
  }
  func.func @transform_2(%arg0: i32, %arg1: i32) -> (i32, i32, i32) {
    %c0_i32 = arith.constant 0 : i32
    %c0_i32_0 = arith.constant 0 : i32
    %c0_i32_1 = arith.constant 0 : i32
    return %arg0, %c0_i32, %c0_i32_0 : i32, i32, i32
  }
  func.func @transform_3(%arg0: i32, %arg1: i32) -> (i32, i32, i32, i32) {
    %c4_i32 = arith.constant 4 : i32
    %0 = arith.cmpi sge, %arg1, %c4_i32 : i32
    %1 = arith.extui %0 : i1 to i32
    %c0_i32 = arith.constant 0 : i32
    %c0_i32_0 = arith.constant 0 : i32
    %c0_i32_1 = arith.constant 0 : i32
    return %arg0, %1, %c0_i32, %c0_i32_0 : i32, i32, i32, i32
  }
  func.func @transform_4(%arg0: i32, %arg1: i32) -> (i32, i32, i32) {
    %c0_i32 = arith.constant 0 : i32
    %c0_i32_0 = arith.constant 0 : i32
    %c0_i32_1 = arith.constant 0 : i32
    %c0_i32_2 = arith.constant 0 : i32
    return %c0_i32, %c0_i32_0, %c0_i32_1 : i32, i32, i32
  }
  func.func @transform_5(%arg0: i32, %arg1: i32) -> (i32, i32, i32) {
    %c0_i32 = arith.constant 0 : i32
    %c0_i32_0 = arith.constant 0 : i32
    %c0_i32_1 = arith.constant 0 : i32
    %c0_i32_2 = arith.constant 0 : i32
    return %c0_i32, %c0_i32_0, %c0_i32_1 : i32, i32, i32
  }
  func.func @transform_6(%arg0: i32, %arg1: i32) -> (i32, i32, i32) {
    %c0_i32 = arith.constant 0 : i32
    %c0_i32_0 = arith.constant 0 : i32
    %c0_i32_1 = arith.constant 0 : i32
    return %arg1, %c0_i32, %c0_i32_0 : i32, i32, i32
  }
  func.func @transform_7(%arg0: i32, %arg1: i32) -> (i32, i32, i32) {
    %c0_i32 = arith.constant 0 : i32
    %c0_i32_0 = arith.constant 0 : i32
    %c0_i32_1 = arith.constant 0 : i32
    return %arg1, %c0_i32, %c0_i32_0 : i32, i32, i32
  }
  func.func @transform_8(%arg0: i32, %arg1: i32) -> (i32, i32, i32, i32) {
    %c0_i32 = arith.constant 0 : i32
    %c0_i32_0 = arith.constant 0 : i32
    %c0_i32_1 = arith.constant 0 : i32
    %c0_i32_2 = arith.constant 0 : i32
    return %arg1, %c0_i32, %c0_i32_0, %c0_i32_1 : i32, i32, i32, i32
  }
  func.func @transform_9(%arg0: i32, %arg1: i32) -> (i32, i32, i32, i32) {
    %c0_i32 = arith.constant 0 : i32
    %c0_i32_0 = arith.constant 0 : i32
    %c0_i32_1 = arith.constant 0 : i32
    %c0_i32_2 = arith.constant 0 : i32
    return %arg1, %c0_i32, %c0_i32_0, %c0_i32_1 : i32, i32, i32, i32
  }
  func.func @transform_10(%arg0: i32, %arg1: i32) -> (i32, i32, i32, i32) {
    %c0_i32 = arith.constant 0 : i32
    %c0_i32_0 = arith.constant 0 : i32
    %c0_i32_1 = arith.constant 0 : i32
    %c0_i32_2 = arith.constant 0 : i32
    return %arg1, %c0_i32, %c0_i32_0, %c0_i32_1 : i32, i32, i32, i32
  }
  func.func @transform_11(%arg0: i32, %arg1: i32) -> (i32, i32, i32, i32) {
    %c0_i32 = arith.constant 0 : i32
    %c0_i32_0 = arith.constant 0 : i32
    %c0_i32_1 = arith.constant 0 : i32
    %c0_i32_2 = arith.constant 0 : i32
    return %arg1, %c0_i32, %c0_i32_0, %c0_i32_1 : i32, i32, i32, i32
  }
  func.func @transform_12(%arg0: i32, %arg1: i32) -> (i32, i32, i32, i32) {
    %c0_i32 = arith.constant 0 : i32
    %c0_i32_0 = arith.constant 0 : i32
    %c0_i32_1 = arith.constant 0 : i32
    %c0_i32_2 = arith.constant 0 : i32
    return %arg1, %c0_i32, %c0_i32_0, %c0_i32_1 : i32, i32, i32, i32
  }
  func.func @transform_13(%arg0: i32, %arg1: i32) -> (i32, i32, i32, i32) {
    %c0_i32 = arith.constant 0 : i32
    %c0_i32_0 = arith.constant 0 : i32
    %c0_i32_1 = arith.constant 0 : i32
    %c0_i32_2 = arith.constant 0 : i32
    return %arg1, %c0_i32, %c0_i32_0, %c0_i32_1 : i32, i32, i32, i32
  }
  func.func @transform_14(%arg0: i32, %arg1: i32) -> (i32, i32, i32, i32) {
    %c0_i32 = arith.constant 0 : i32
    %c0_i32_0 = arith.constant 0 : i32
    %c0_i32_1 = arith.constant 0 : i32
    %c0_i32_2 = arith.constant 0 : i32
    return %arg1, %c0_i32, %c0_i32_0, %c0_i32_1 : i32, i32, i32, i32
  }
  func.func @transform_15(%arg0: i32, %arg1: i32) -> (i32, i32, i32, i32) {
    %c0_i32 = arith.constant 0 : i32
    %c0_i32_0 = arith.constant 0 : i32
    %c0_i32_1 = arith.constant 0 : i32
    %c0_i32_2 = arith.constant 0 : i32
    return %arg1, %c0_i32, %c0_i32_0, %c0_i32_1 : i32, i32, i32, i32
  }
  func.func @transform_16(%arg0: i32, %arg1: i32) -> (i32, i32, i32) {
    %c0_i32 = arith.constant 0 : i32
    %c0_i32_0 = arith.constant 0 : i32
    %c0_i32_1 = arith.constant 0 : i32
    return %arg1, %c0_i32, %c0_i32_0 : i32, i32, i32
  }
  func.func @transform_17(%arg0: i32, %arg1: i32) -> (i32, i32, i32) {
    %c0_i32 = arith.constant 0 : i32
    %c0_i32_0 = arith.constant 0 : i32
    %c0_i32_1 = arith.constant 0 : i32
    return %arg1, %c0_i32, %c0_i32_0 : i32, i32, i32
  }
  func.func @transform_18(%arg0: i32, %arg1: i32) -> (i32, i32, i32) {
    %c0_i32 = arith.constant 0 : i32
    %c0_i32_0 = arith.constant 0 : i32
    %c0_i32_1 = arith.constant 0 : i32
    return %arg0, %c0_i32, %c0_i32_0 : i32, i32, i32
  }
}

</mosaic_0001>

<llo_original>
// kernel: sdp_forward.2
$region0: #{sdp_forward.2}
  #allocation0 [shape = 'u32[]', space=smem, size = 0x4, offset = 0x4, fixed_abs, tag = 'smem constant byte address 0x4 - core index']
  #allocation1 [shape = 'u32[72,128]{1,0:T(1,128)}', space=vmem, size = 0x9000, scoped, tag = 'internal scratch']
  %s0 = inlined_call_operand.vmem [shape: f32[2,8,128], index: 0, kind: input, shape index: {}]
  %s1 = inlined_call_operand.vmem [shape: f32[2,1,128], index: 1, kind: input, shape index: {}]
  %s2 = inlined_call_operand.vmem [shape: f32[2,1,128], index: 2, kind: input, shape index: {}]
  %s3 = inlined_call_operand.vmem [shape: f32[8,8], index: 3, kind: input, shape index: {}]
  %s4 = inlined_call_operand.vmem [shape: f32[8,1], index: 4, kind: input, shape index: {}]
  %s5 = inlined_call_operand.vmem [shape: f32[3,8,3], index: 5, kind: input, shape index: {}]
  %s6 = inlined_call_operand.vmem [shape: f32[3,8,1], index: 6, kind: input, shape index: {}]
  %s7 = inlined_call_operand.vmem [shape: f32[3,8,1], index: 7, kind: input, shape index: {}]
  %s8 = inlined_call_operand.vmem [shape: f32[3,8,1], index: 8, kind: input, shape index: {}]
  %s9 = inlined_call_operand.vmem [shape: f32[3,8,8], index: 9, kind: input, shape index: {}]
  %s10 = inlined_call_operand.vmem [shape: f32[3,8,1], index: 10, kind: input, shape index: {}]
  %s11 = inlined_call_operand.vmem [shape: f32[3,8,1], index: 11, kind: input, shape index: {}]
  %s12 = inlined_call_operand.vmem [shape: f32[3,8,1], index: 12, kind: input, shape index: {}]
  %s13 = inlined_call_operand.vmem [shape: f32[8,8], index: 13, kind: input, shape index: {}]
  %s14 = inlined_call_operand.vmem [shape: f32[8,1], index: 14, kind: input, shape index: {}]
  %s15 = inlined_call_operand.vmem [shape: f32[8,1], index: 15, kind: input, shape index: {}]
  %s16 = inlined_call_operand.vmem [shape: f32[8,1], index: 16, kind: input, shape index: {}]
  %s17 = inlined_call_operand.vmem [shape: f32[3,8,3], index: 17, kind: input, shape index: {}]
  %s18 = inlined_call_operand.vmem [shape: f32[3,8,1], index: 18, kind: input, shape index: {}]
  %s19 = inlined_call_operand.vmem [shape: f32[3,8,1], index: 19, kind: input, shape index: {}]
  %s20 = inlined_call_operand.vmem [shape: f32[3,8,1], index: 20, kind: input, shape index: {}]
  %s21 = inlined_call_operand.vmem [shape: f32[3,8,8], index: 21, kind: input, shape index: {}]
  %s22 = inlined_call_operand.vmem [shape: f32[3,8,1], index: 22, kind: input, shape index: {}]
  %s23 = inlined_call_operand.vmem [shape: f32[3,8,1], index: 23, kind: input, shape index: {}]
  %s24 = inlined_call_operand.vmem [shape: f32[3,8,1], index: 24, kind: input, shape index: {}]
  %s25 = inlined_call_operand.vmem [shape: f32[8,8], index: 25, kind: input, shape index: {}]
  %s26 = inlined_call_operand.vmem [shape: f32[8,1], index: 26, kind: input, shape index: {}]
  %s27 = inlined_call_operand.vmem [shape: bf16[2,2,8,128], index: 27, kind: output, shape index: {}]
  %s28 = sld [smem:[#allocation0]]
  $region141: #{sdp_forward.2} parent=0
    _
  %s30 = ssub.s32 1, %s28
  %s31 = scalar_select 0, %s30, %s28
  loop: start=0, step=1, limit=4
  $region2: #{sdp_forward.2} parent=0 // loop_pre_header
    _
  $region3: #{sdp_forward.2} parent=0 // loop_header
    %s33 = sphi 0, %s37
    %p34 = scmp.ge.s32.totalorder %s33, 4
    %s43 = sphi 0, %s45
    %s46 = sphi 0, %s43
    %s47 = sphi 0, %s46
    %s63 = sphi 0, %s47
    %s69 = sphi 0, %s71
    %s72 = sphi 0, %s69
    %s73 = sphi 0, %s72
    %s89 = sphi 0, %s73
    %s95 = sphi 0, %s97
    %s98 = sphi 0, %s95
    %s99 = sphi 0, %s98
    %s115 = sphi 0, %s99
    %s119 = sphi 0, %s119
    %s121 = sphi 0, %s119
    %s122 = sphi 0, %s121
    %s136 = sphi 0, %s122
    %s140 = sphi 0, %s140
    %s142 = sphi 0, %s140
    %s143 = sphi 0, %s142
    %s157 = sphi 0, %s143
    %s161 = sphi 0, %s161
    %s163 = sphi 0, %s161
    %s164 = sphi 0, %s163
    %s178 = sphi 0, %s164
    %s182 = sphi 0, %s182
    %s184 = sphi 0, %s182
    %s185 = sphi 0, %s184
    %s199 = sphi 0, %s185
    %s203 = sphi 0, %s203
    %s205 = sphi 0, %s203
    %s206 = sphi 0, %s205
    %s220 = sphi 0, %s206
    %s224 = sphi 0, %s224
    %s226 = sphi 0, %s224
    %s227 = sphi 0, %s226
    %s241 = sphi 0, %s227
    %s245 = sphi 0, %s245
    %s247 = sphi 0, %s245
    %s248 = sphi 0, %s247
    %s262 = sphi 0, %s248
    %s266 = sphi 0, %s266
    %s268 = sphi 0, %s266
    %s269 = sphi 0, %s268
    %s283 = sphi 0, %s269
    %s287 = sphi 0, %s287
    %s289 = sphi 0, %s287
    %s290 = sphi 0, %s289
    %s304 = sphi 0, %s290
    %s308 = sphi 0, %s308
    %s310 = sphi 0, %s308
    %s311 = sphi 0, %s310
    %s325 = sphi 0, %s311
    %s329 = sphi 0, %s329
    %s331 = sphi 0, %s329
    %s332 = sphi 0, %s331
    %s346 = sphi 0, %s332
    %s350 = sphi 0, %s350
    %s352 = sphi 0, %s350
    %s353 = sphi 0, %s352
    %s367 = sphi 0, %s353
    %s371 = sphi 0, %s371
    %s373 = sphi 0, %s371
    %s374 = sphi 0, %s373
    %s388 = sphi 0, %s374
    %s392 = sphi 0, %s392
    %s394 = sphi 0, %s392
    %s395 = sphi 0, %s394
    %s409 = sphi 0, %s395
    %s413 = sphi 0, %s413
    %s415 = sphi 0, %s413
    %s416 = sphi 0, %s415
    %s430 = sphi 0, %s416
    %s434 = sphi 0, %s434
    %s436 = sphi 0, %s434
    %s437 = sphi 0, %s436
    %s451 = sphi 0, %s437
    %s455 = sphi 0, %s455
    %s457 = sphi 0, %s455
    %s458 = sphi 0, %s457
    %s472 = sphi 0, %s458
    %s476 = sphi 0, %s476
    %s478 = sphi 0, %s476
    %s479 = sphi 0, %s478
    %s493 = sphi 0, %s479
    %s497 = sphi 0, %s497
    %s499 = sphi 0, %s497
    %s500 = sphi 0, %s499
    %s514 = sphi 0, %s500
    %s518 = sphi 0, %s518
    %s520 = sphi 0, %s518
    %s521 = sphi 0, %s520
    %s535 = sphi 0, %s521
    %s539 = sphi 0, %s539
    %s541 = sphi 0, %s539
    %s542 = sphi 0, %s541
    %s556 = sphi 0, %s542
    %s560 = sphi 0, %s560
    %s562 = sphi 0, %s560
    %s563 = sphi 0, %s562
    %s577 = sphi 0, %s563
    %s581 = sphi 0, %s581
    %s583 = sphi 0, %s581
    %s584 = sphi 0, %s583
    %s598 = sphi 0, %s584
    %s602 = sphi 0, %s602
    %s604 = sphi 0, %s602
    %s605 = sphi 0, %s604
    %s619 = sphi 0, %s605
    %s625 = sphi 0, %s627
    %s628 = sphi 0, %s625
    %s629 = sphi 0, %s628
    %s645 = sphi 0, %s629
  $region4: #{sdp_forward.2} parent=0 // loop_header_branch
    %36 = sbr.rel (%p34) target = $region8
  $region5: #{sdp_forward.2} parent=0 // loop_body
    %s38 = ssub.s32 %s33, 1
    %s39 = ssub.s32 %s33, 2
    %s40 = sadd.s32 %s33, 1
    %s41 = ssub.s32 %s33, %s40
    %p42 = scmp.eq.s32.totalorder %s41, 0
    %s44 = sadd.s32 %s43, 1
    %s45 = scalar_select %p42, %s43, %s44
    %p48 = pneg %p42
    %p49 = scmp.eq.s32.totalorder %s33, 1
    %p50 = por %p48, %p49
    %p51 = scmp.ne.s32.totalorder %s43, %s46
    %p52 = scmp.eq.s32.totalorder %s33, 0
    %p53 = por %p51, %p52
    %p54 = scmp.ne.s32.totalorder %s43, %s46
    %p55 = scmp.eq.s32.totalorder %s38, 1
    %p56 = por %p54, %p55
    %p57 = scmp.ne.s32.totalorder %s46, %s47
    %p58 = scmp.eq.s32.totalorder %s38, 0
    %p59 = por %p57, %p58
    %p60 = scmp.ne.s32.totalorder %s46, %s47
    %p61 = scmp.eq.s32.totalorder %s39, 1
    %p62 = por %p60, %p61
    %p64 = scmp.ne.s32.totalorder %s47, %s63
    %p65 = scmp.eq.s32.totalorder %s39, 0
    %p66 = por %p64, %p65
    %s67 = ssub.s32 %s33, %s40
    %p68 = scmp.eq.s32.totalorder %s67, 0
    %s70 = sadd.s32 %s69, 1
    %s71 = scalar_select %p68, %s69, %s70
    %p74 = pneg %p68
    %p75 = scmp.eq.s32.totalorder %s33, 1
    %p76 = por %p74, %p75
    %p77 = scmp.ne.s32.totalorder %s69, %s72
    %p78 = scmp.eq.s32.totalorder %s33, 0
    %p79 = por %p77, %p78
    %p80 = scmp.ne.s32.totalorder %s69, %s72
    %p81 = scmp.eq.s32.totalorder %s38, 1
    %p82 = por %p80, %p81
    %p83 = scmp.ne.s32.totalorder %s72, %s73
    %p84 = scmp.eq.s32.totalorder %s38, 0
    %p85 = por %p83, %p84
    %p86 = scmp.ne.s32.totalorder %s72, %s73
    %p87 = scmp.eq.s32.totalorder %s39, 1
    %p88 = por %p86, %p87
    %p90 = scmp.ne.s32.totalorder %s73, %s89
    %p91 = scmp.eq.s32.totalorder %s39, 0
    %p92 = por %p90, %p91
    %s93 = ssub.s32 %s33, %s40
    %p94 = scmp.eq.s32.totalorder %s93, 0
    %s96 = sadd.s32 %s95, 1
    %s97 = scalar_select %p94, %s95, %s96
    %p100 = pneg %p94
    %p101 = scmp.eq.s32.totalorder %s33, 1
    %p102 = por %p100, %p101
    %p103 = scmp.ne.s32.totalorder %s95, %s98
    %p104 = scmp.eq.s32.totalorder %s33, 0
    %p105 = por %p103, %p104
    %p106 = scmp.ne.s32.totalorder %s95, %s98
    %p107 = scmp.eq.s32.totalorder %s38, 1
    %p108 = por %p106, %p107
    %p109 = scmp.ne.s32.totalorder %s98, %s99
    %p110 = scmp.eq.s32.totalorder %s38, 0
    %p111 = por %p109, %p110
    %p112 = scmp.ne.s32.totalorder %s98, %s99
    %p113 = scmp.eq.s32.totalorder %s39, 1
    %p114 = por %p112, %p113
    %p116 = scmp.ne.s32.totalorder %s99, %s115
    %p117 = scmp.eq.s32.totalorder %s39, 0
    %p118 = por %p116, %p117
    %s120 = sadd.s32 %s119, 1
    %p123 = scmp.eq.s32.totalorder %s33, 1
    %p124 = scmp.ne.s32.totalorder %s119, %s121
    %p125 = scmp.eq.s32.totalorder %s33, 0
    %p126 = por %p124, %p125
    %p127 = scmp.ne.s32.totalorder %s119, %s121
    %p128 = scmp.eq.s32.totalorder %s38, 1
    %p129 = por %p127, %p128
    %p130 = scmp.ne.s32.totalorder %s121, %s122
    %p131 = scmp.eq.s32.totalorder %s38, 0
    %p132 = por %p130, %p131
    %p133 = scmp.ne.s32.totalorder %s121, %s122
    %p134 = scmp.eq.s32.totalorder %s39, 1
    %p135 = por %p133, %p134
    %p137 = scmp.ne.s32.totalorder %s122, %s136
    %p138 = scmp.eq.s32.totalorder %s39, 0
    %p139 = por %p137, %p138
    %s141 = sadd.s32 %s140, 1
    %p144 = scmp.eq.s32.totalorder %s33, 1
    %p145 = scmp.ne.s32.totalorder %s140, %s142
    %p146 = scmp.eq.s32.totalorder %s33, 0
    %p147 = por %p145, %p146
    %p148 = scmp.ne.s32.totalorder %s140, %s142
    %p149 = scmp.eq.s32.totalorder %s38, 1
    %p150 = por %p148, %p149
    %p151 = scmp.ne.s32.totalorder %s142, %s143
    %p152 = scmp.eq.s32.totalorder %s38, 0
    %p153 = por %p151, %p152
    %p154 = scmp.ne.s32.totalorder %s142, %s143
    %p155 = scmp.eq.s32.totalorder %s39, 1
    %p156 = por %p154, %p155
    %p158 = scmp.ne.s32.totalorder %s143, %s157
    %p159 = scmp.eq.s32.totalorder %s39, 0
    %p160 = por %p158, %p159
    %s162 = sadd.s32 %s161, 1
    %p165 = scmp.eq.s32.totalorder %s33, 1
    %p166 = scmp.ne.s32.totalorder %s161, %s163
    %p167 = scmp.eq.s32.totalorder %s33, 0
    %p168 = por %p166, %p167
    %p169 = scmp.ne.s32.totalorder %s161, %s163
    %p170 = scmp.eq.s32.totalorder %s38, 1
    %p171 = por %p169, %p170
    %p172 = scmp.ne.s32.totalorder %s163, %s164
    %p173 = scmp.eq.s32.totalorder %s38, 0
    %p174 = por %p172, %p173
    %p175 = scmp.ne.s32.totalorder %s163, %s164
    %p176 = scmp.eq.s32.totalorder %s39, 1
    %p177 = por %p175, %p176
    %p179 = scmp.ne.s32.totalorder %s164, %s178
    %p180 = scmp.eq.s32.totalorder %s39, 0
    %p181 = por %p179, %p180
    %s183 = sadd.s32 %s182, 1
    %p186 = scmp.eq.s32.totalorder %s33, 1
    %p187 = scmp.ne.s32.totalorder %s182, %s184
    %p188 = scmp.eq.s32.totalorder %s33, 0
    %p189 = por %p187, %p188
    %p190 = scmp.ne.s32.totalorder %s182, %s184
    %p191 = scmp.eq.s32.totalorder %s38, 1
    %p192 = por %p190, %p191
    %p193 = scmp.ne.s32.totalorder %s184, %s185
    %p194 = scmp.eq.s32.totalorder %s38, 0
    %p195 = por %p193, %p194
    %p196 = scmp.ne.s32.totalorder %s184, %s185
    %p197 = scmp.eq.s32.totalorder %s39, 1
    %p198 = por %p196, %p197
    %p200 = scmp.ne.s32.totalorder %s185, %s199
    %p201 = scmp.eq.s32.totalorder %s39, 0
    %p202 = por %p200, %p201
    %s204 = sadd.s32 %s203, 1
    %p207 = scmp.eq.s32.totalorder %s33, 1
    %p208 = scmp.ne.s32.totalorder %s203, %s205
    %p209 = scmp.eq.s32.totalorder %s33, 0
    %p210 = por %p208, %p209
    %p211 = scmp.ne.s32.totalorder %s203, %s205
    %p212 = scmp.eq.s32.totalorder %s38, 1
    %p213 = por %p211, %p212
    %p214 = scmp.ne.s32.totalorder %s205, %s206
    %p215 = scmp.eq.s32.totalorder %s38, 0
    %p216 = por %p214, %p215
    %p217 = scmp.ne.s32.totalorder %s205, %s206
    %p218 = scmp.eq.s32.totalorder %s39, 1
    %p219 = por %p217, %p218
    %p221 = scmp.ne.s32.totalorder %s206, %s220
    %p222 = scmp.eq.s32.totalorder %s39, 0
    %p223 = por %p221, %p222
    %s225 = sadd.s32 %s224, 1
    %p228 = scmp.eq.s32.totalorder %s33, 1
    %p229 = scmp.ne.s32.totalorder %s224, %s226
    %p230 = scmp.eq.s32.totalorder %s33, 0
    %p231 = por %p229, %p230
    %p232 = scmp.ne.s32.totalorder %s224, %s226
    %p233 = scmp.eq.s32.totalorder %s38, 1
    %p234 = por %p232, %p233
    %p235 = scmp.ne.s32.totalorder %s226, %s227
    %p236 = scmp.eq.s32.totalorder %s38, 0
    %p237 = por %p235, %p236
    %p238 = scmp.ne.s32.totalorder %s226, %s227
    %p239 = scmp.eq.s32.totalorder %s39, 1
    %p240 = por %p238, %p239
    %p242 = scmp.ne.s32.totalorder %s227, %s241
    %p243 = scmp.eq.s32.totalorder %s39, 0
    %p244 = por %p242, %p243
    %s246 = sadd.s32 %s245, 1
    %p249 = scmp.eq.s32.totalorder %s33, 1
    %p250 = scmp.ne.s32.totalorder %s245, %s247
    %p251 = scmp.eq.s32.totalorder %s33, 0
    %p252 = por %p250, %p251
    %p253 = scmp.ne.s32.totalorder %s245, %s247
    %p254 = scmp.eq.s32.totalorder %s38, 1
    %p255 = por %p253, %p254
    %p256 = scmp.ne.s32.totalorder %s247, %s248
    %p257 = scmp.eq.s32.totalorder %s38, 0
    %p258 = por %p256, %p257
    %p259 = scmp.ne.s32.totalorder %s247, %s248
    %p260 = scmp.eq.s32.totalorder %s39, 1
    %p261 = por %p259, %p260
    %p263 = scmp.ne.s32.totalorder %s248, %s262
    %p264 = scmp.eq.s32.totalorder %s39, 0
    %p265 = por %p263, %p264
    %s267 = sadd.s32 %s266, 1
    %p270 = scmp.eq.s32.totalorder %s33, 1
    %p271 = scmp.ne.s32.totalorder %s266, %s268
    %p272 = scmp.eq.s32.totalorder %s33, 0
    %p273 = por %p271, %p272
    %p274 = scmp.ne.s32.totalorder %s266, %s268
    %p275 = scmp.eq.s32.totalorder %s38, 1
    %p276 = por %p274, %p275
    %p277 = scmp.ne.s32.totalorder %s268, %s269
    %p278 = scmp.eq.s32.totalorder %s38, 0
    %p279 = por %p277, %p278
    %p280 = scmp.ne.s32.totalorder %s268, %s269
    %p281 = scmp.eq.s32.totalorder %s39, 1
    %p282 = por %p280, %p281
    %p284 = scmp.ne.s32.totalorder %s269, %s283
    %p285 = scmp.eq.s32.totalorder %s39, 0
    %p286 = por %p284, %p285
    %s288 = sadd.s32 %s287, 1
    %p291 = scmp.eq.s32.totalorder %s33, 1
    %p292 = scmp.ne.s32.totalorder %s287, %s289
    %p293 = scmp.eq.s32.totalorder %s33, 0
    %p294 = por %p292, %p293
    %p295 = scmp.ne.s32.totalorder %s287, %s289
    %p296 = scmp.eq.s32.totalorder %s38, 1
    %p297 = por %p295, %p296
    %p298 = scmp.ne.s32.totalorder %s289, %s290
    %p299 = scmp.eq.s32.totalorder %s38, 0
    %p300 = por %p298, %p299
    %p301 = scmp.ne.s32.totalorder %s289, %s290
    %p302 = scmp.eq.s32.totalorder %s39, 1
    %p303 = por %p301, %p302
    %p305 = scmp.ne.s32.totalorder %s290, %s304
    %p306 = scmp.eq.s32.totalorder %s39, 0
    %p307 = por %p305, %p306
    %s309 = sadd.s32 %s308, 1
    %p312 = scmp.eq.s32.totalorder %s33, 1
    %p313 = scmp.ne.s32.totalorder %s308, %s310
    %p314 = scmp.eq.s32.totalorder %s33, 0
    %p315 = por %p313, %p314
    %p316 = scmp.ne.s32.totalorder %s308, %s310
    %p317 = scmp.eq.s32.totalorder %s38, 1
    %p318 = por %p316, %p317
    %p319 = scmp.ne.s32.totalorder %s310, %s311
    %p320 = scmp.eq.s32.totalorder %s38, 0
    %p321 = por %p319, %p320
    %p322 = scmp.ne.s32.totalorder %s310, %s311
    %p323 = scmp.eq.s32.totalorder %s39, 1
    %p324 = por %p322, %p323
    %p326 = scmp.ne.s32.totalorder %s311, %s325
    %p327 = scmp.eq.s32.totalorder %s39, 0
    %p328 = por %p326, %p327
    %s330 = sadd.s32 %s329, 1
    %p333 = scmp.eq.s32.totalorder %s33, 1
    %p334 = scmp.ne.s32.totalorder %s329, %s331
    %p335 = scmp.eq.s32.totalorder %s33, 0
    %p336 = por %p334, %p335
    %p337 = scmp.ne.s32.totalorder %s329, %s331
    %p338 = scmp.eq.s32.totalorder %s38, 1
    %p339 = por %p337, %p338
    %p340 = scmp.ne.s32.totalorder %s331, %s332
    %p341 = scmp.eq.s32.totalorder %s38, 0
    %p342 = por %p340, %p341
    %p343 = scmp.ne.s32.totalorder %s331, %s332
    %p344 = scmp.eq.s32.totalorder %s39, 1
    %p345 = por %p343, %p344
    %p347 = scmp.ne.s32.totalorder %s332, %s346
    %p348 = scmp.eq.s32.totalorder %s39, 0
    %p349 = por %p347, %p348
    %s351 = sadd.s32 %s350, 1
    %p354 = scmp.eq.s32.totalorder %s33, 1
    %p355 = scmp.ne.s32.totalorder %s350, %s352
    %p356 = scmp.eq.s32.totalorder %s33, 0
    %p357 = por %p355, %p356
    %p358 = scmp.ne.s32.totalorder %s350, %s352
    %p359 = scmp.eq.s32.totalorder %s38, 1
    %p360 = por %p358, %p359
    %p361 = scmp.ne.s32.totalorder %s352, %s353
    %p362 = scmp.eq.s32.totalorder %s38, 0
    %p363 = por %p361, %p362
    %p364 = scmp.ne.s32.totalorder %s352, %s353
    %p365 = scmp.eq.s32.totalorder %s39, 1
    %p366 = por %p364, %p365
    %p368 = scmp.ne.s32.totalorder %s353, %s367
    %p369 = scmp.eq.s32.totalorder %s39, 0
    %p370 = por %p368, %p369
    %s372 = sadd.s32 %s371, 1
    %p375 = scmp.eq.s32.totalorder %s33, 1
    %p376 = scmp.ne.s32.totalorder %s371, %s373
    %p377 = scmp.eq.s32.totalorder %s33, 0
    %p378 = por %p376, %p377
    %p379 = scmp.ne.s32.totalorder %s371, %s373
    %p380 = scmp.eq.s32.totalorder %s38, 1
    %p381 = por %p379, %p380
    %p382 = scmp.ne.s32.totalorder %s373, %s374
    %p383 = scmp.eq.s32.totalorder %s38, 0
    %p384 = por %p382, %p383
    %p385 = scmp.ne.s32.totalorder %s373, %s374
    %p386 = scmp.eq.s32.totalorder %s39, 1
    %p387 = por %p385, %p386
    %p389 = scmp.ne.s32.totalorder %s374, %s388
    %p390 = scmp.eq.s32.totalorder %s39, 0
    %p391 = por %p389, %p390
    %s393 = sadd.s32 %s392, 1
    %p396 = scmp.eq.s32.totalorder %s33, 1
    %p397 = scmp.ne.s32.totalorder %s392, %s394
    %p398 = scmp.eq.s32.totalorder %s33, 0
    %p399 = por %p397, %p398
    %p400 = scmp.ne.s32.totalorder %s392, %s394
    %p401 = scmp.eq.s32.totalorder %s38, 1
    %p402 = por %p400, %p401
    %p403 = scmp.ne.s32.totalorder %s394, %s395
    %p404 = scmp.eq.s32.totalorder %s38, 0
    %p405 = por %p403, %p404
    %p406 = scmp.ne.s32.totalorder %s394, %s395
    %p407 = scmp.eq.s32.totalorder %s39, 1
    %p408 = por %p406, %p407
    %p410 = scmp.ne.s32.totalorder %s395, %s409
    %p411 = scmp.eq.s32.totalorder %s39, 0
    %p412 = por %p410, %p411
    %s414 = sadd.s32 %s413, 1
    %p417 = scmp.eq.s32.totalorder %s33, 1
    %p418 = scmp.ne.s32.totalorder %s413, %s415
    %p419 = scmp.eq.s32.totalorder %s33, 0
    %p420 = por %p418, %p419
    %p421 = scmp.ne.s32.totalorder %s413, %s415
    %p422 = scmp.eq.s32.totalorder %s38, 1
    %p423 = por %p421, %p422
    %p424 = scmp.ne.s32.totalorder %s415, %s416
    %p425 = scmp.eq.s32.totalorder %s38, 0
    %p426 = por %p424, %p425
    %p427 = scmp.ne.s32.totalorder %s415, %s416
    %p428 = scmp.eq.s32.totalorder %s39, 1
    %p429 = por %p427, %p428
    %p431 = scmp.ne.s32.totalorder %s416, %s430
    %p432 = scmp.eq.s32.totalorder %s39, 0
    %p433 = por %p431, %p432
    %s435 = sadd.s32 %s434, 1
    %p438 = scmp.eq.s32.totalorder %s33, 1
    %p439 = scmp.ne.s32.totalorder %s434, %s436
    %p440 = scmp.eq.s32.totalorder %s33, 0
    %p441 = por %p439, %p440
    %p442 = scmp.ne.s32.totalorder %s434, %s436
    %p443 = scmp.eq.s32.totalorder %s38, 1
    %p444 = por %p442, %p443
    %p445 = scmp.ne.s32.totalorder %s436, %s437
    %p446 = scmp.eq.s32.totalorder %s38, 0
    %p447 = por %p445, %p446
    %p448 = scmp.ne.s32.totalorder %s436, %s437
    %p449 = scmp.eq.s32.totalorder %s39, 1
    %p450 = por %p448, %p449
    %p452 = scmp.ne.s32.totalorder %s437, %s451
    %p453 = scmp.eq.s32.totalorder %s39, 0
    %p454 = por %p452, %p453
    %s456 = sadd.s32 %s455, 1
    %p459 = scmp.eq.s32.totalorder %s33, 1
    %p460 = scmp.ne.s32.totalorder %s455, %s457
    %p461 = scmp.eq.s32.totalorder %s33, 0
    %p462 = por %p460, %p461
    %p463 = scmp.ne.s32.totalorder %s455, %s457
    %p464 = scmp.eq.s32.totalorder %s38, 1
    %p465 = por %p463, %p464
    %p466 = scmp.ne.s32.totalorder %s457, %s458
    %p467 = scmp.eq.s32.totalorder %s38, 0
    %p468 = por %p466, %p467
    %p469 = scmp.ne.s32.totalorder %s457, %s458
    %p470 = scmp.eq.s32.totalorder %s39, 1
    %p471 = por %p469, %p470
    %p473 = scmp.ne.s32.totalorder %s458, %s472
    %p474 = scmp.eq.s32.totalorder %s39, 0
    %p475 = por %p473, %p474
    %s477 = sadd.s32 %s476, 1
    %p480 = scmp.eq.s32.totalorder %s33, 1
    %p481 = scmp.ne.s32.totalorder %s476, %s478
    %p482 = scmp.eq.s32.totalorder %s33, 0
    %p483 = por %p481, %p482
    %p484 = scmp.ne.s32.totalorder %s476, %s478
    %p485 = scmp.eq.s32.totalorder %s38, 1
    %p486 = por %p484, %p485
    %p487 = scmp.ne.s32.totalorder %s478, %s479
    %p488 = scmp.eq.s32.totalorder %s38, 0
    %p489 = por %p487, %p488
    %p490 = scmp.ne.s32.totalorder %s478, %s479
    %p491 = scmp.eq.s32.totalorder %s39, 1
    %p492 = por %p490, %p491
    %p494 = scmp.ne.s32.totalorder %s479, %s493
    %p495 = scmp.eq.s32.totalorder %s39, 0
    %p496 = por %p494, %p495
    %s498 = sadd.s32 %s497, 1
    %p501 = scmp.eq.s32.totalorder %s33, 1
    %p502 = scmp.ne.s32.totalorder %s497, %s499
    %p503 = scmp.eq.s32.totalorder %s33, 0
    %p504 = por %p502, %p503
    %p505 = scmp.ne.s32.totalorder %s497, %s499
    %p506 = scmp.eq.s32.totalorder %s38, 1
    %p507 = por %p505, %p506
    %p508 = scmp.ne.s32.totalorder %s499, %s500
    %p509 = scmp.eq.s32.totalorder %s38, 0
    %p510 = por %p508, %p509
    %p511 = scmp.ne.s32.totalorder %s499, %s500
    %p512 = scmp.eq.s32.totalorder %s39, 1
    %p513 = por %p511, %p512
    %p515 = scmp.ne.s32.totalorder %s500, %s514
    %p516 = scmp.eq.s32.totalorder %s39, 0
    %p517 = por %p515, %p516
    %s519 = sadd.s32 %s518, 1
    %p522 = scmp.eq.s32.totalorder %s33, 1
    %p523 = scmp.ne.s32.totalorder %s518, %s520
    %p524 = scmp.eq.s32.totalorder %s33, 0
    %p525 = por %p523, %p524
    %p526 = scmp.ne.s32.totalorder %s518, %s520
    %p527 = scmp.eq.s32.totalorder %s38, 1
    %p528 = por %p526, %p527
    %p529 = scmp.ne.s32.totalorder %s520, %s521
    %p530 = scmp.eq.s32.totalorder %s38, 0
    %p531 = por %p529, %p530
    %p532 = scmp.ne.s32.totalorder %s520, %s521
    %p533 = scmp.eq.s32.totalorder %s39, 1
    %p534 = por %p532, %p533
    %p536 = scmp.ne.s32.totalorder %s521, %s535
    %p537 = scmp.eq.s32.totalorder %s39, 0
    %p538 = por %p536, %p537
    %s540 = sadd.s32 %s539, 1
    %p543 = scmp.eq.s32.totalorder %s33, 1
    %p544 = scmp.ne.s32.totalorder %s539, %s541
    %p545 = scmp.eq.s32.totalorder %s33, 0
    %p546 = por %p544, %p545
    %p547 = scmp.ne.s32.totalorder %s539, %s541
    %p548 = scmp.eq.s32.totalorder %s38, 1
    %p549 = por %p547, %p548
    %p550 = scmp.ne.s32.totalorder %s541, %s542
    %p551 = scmp.eq.s32.totalorder %s38, 0
    %p552 = por %p550, %p551
    %p553 = scmp.ne.s32.totalorder %s541, %s542
    %p554 = scmp.eq.s32.totalorder %s39, 1
    %p555 = por %p553, %p554
    %p557 = scmp.ne.s32.totalorder %s542, %s556
    %p558 = scmp.eq.s32.totalorder %s39, 0
    %p559 = por %p557, %p558
    %s561 = sadd.s32 %s560, 1
    %p564 = scmp.eq.s32.totalorder %s33, 1
    %p565 = scmp.ne.s32.totalorder %s560, %s562
    %p566 = scmp.eq.s32.totalorder %s33, 0
    %p567 = por %p565, %p566
    %p568 = scmp.ne.s32.totalorder %s560, %s562
    %p569 = scmp.eq.s32.totalorder %s38, 1
    %p570 = por %p568, %p569
    %p571 = scmp.ne.s32.totalorder %s562, %s563
    %p572 = scmp.eq.s32.totalorder %s38, 0
    %p573 = por %p571, %p572
    %p574 = scmp.ne.s32.totalorder %s562, %s563
    %p575 = scmp.eq.s32.totalorder %s39, 1
    %p576 = por %p574, %p575
    %p578 = scmp.ne.s32.totalorder %s563, %s577
    %p579 = scmp.eq.s32.totalorder %s39, 0
    %p580 = por %p578, %p579
    %s582 = sadd.s32 %s581, 1
    %p585 = scmp.eq.s32.totalorder %s33, 1
    %p586 = scmp.ne.s32.totalorder %s581, %s583
    %p587 = scmp.eq.s32.totalorder %s33, 0
    %p588 = por %p586, %p587
    %p589 = scmp.ne.s32.totalorder %s581, %s583
    %p590 = scmp.eq.s32.totalorder %s38, 1
    %p591 = por %p589, %p590
    %p592 = scmp.ne.s32.totalorder %s583, %s584
    %p593 = scmp.eq.s32.totalorder %s38, 0
    %p594 = por %p592, %p593
    %p595 = scmp.ne.s32.totalorder %s583, %s584
    %p596 = scmp.eq.s32.totalorder %s39, 1
    %p597 = por %p595, %p596
    %p599 = scmp.ne.s32.totalorder %s584, %s598
    %p600 = scmp.eq.s32.totalorder %s39, 0
    %p601 = por %p599, %p600
    %s603 = sadd.s32 %s602, 1
    %p606 = scmp.eq.s32.totalorder %s33, 1
    %p607 = scmp.ne.s32.totalorder %s602, %s604
    %p608 = scmp.eq.s32.totalorder %s33, 0
    %p609 = por %p607, %p608
    %p610 = scmp.ne.s32.totalorder %s602, %s604
    %p611 = scmp.eq.s32.totalorder %s38, 1
    %p612 = por %p610, %p611
    %p613 = scmp.ne.s32.totalorder %s604, %s605
    %p614 = scmp.eq.s32.totalorder %s38, 0
    %p615 = por %p613, %p614
    %p616 = scmp.ne.s32.totalorder %s604, %s605
    %p617 = scmp.eq.s32.totalorder %s39, 1
    %p618 = por %p616, %p617
    %p620 = scmp.ne.s32.totalorder %s605, %s619
    %p621 = scmp.eq.s32.totalorder %s39, 0
    %p622 = por %p620, %p621
    %s623 = ssub.s32 %s33, %s40
    %p624 = scmp.eq.s32.totalorder %s623, 0
    %s626 = sadd.s32 %s625, 1
    %s627 = scalar_select %p624, %s625, %s626
    %p630 = pneg %p624
    %p631 = scmp.eq.s32.totalorder %s33, 1
    %p632 = por %p630, %p631
    %p633 = scmp.ne.s32.totalorder %s625, %s628
    %p634 = scmp.eq.s32.totalorder %s33, 0
    %p635 = por %p633, %p634
    %p636 = scmp.ne.s32.totalorder %s625, %s628
    %p637 = scmp.eq.s32.totalorder %s38, 1
    %p638 = por %p636, %p637
    %p639 = scmp.ne.s32.totalorder %s628, %s629
    %p640 = scmp.eq.s32.totalorder %s38, 0
    %p641 = por %p639, %p640
    %p642 = scmp.ne.s32.totalorder %s628, %s629
    %p643 = scmp.eq.s32.totalorder %s39, 1
    %p644 = por %p642, %p643
    %p646 = scmp.ne.s32.totalorder %s629, %s645
    %p647 = scmp.eq.s32.totalorder %s39, 0
    %p648 = por %p646, %p647
    %p649 = scmp.le.s32.totalorder 1, %s33
    %p650 = scmp.lt.s32.totalorder %s33, 3
    %p651 = pnand %p649, %p650
    %p652 = pneg %p651
    // Predicated region
    $region9: #{sdp_forward.2} parent=5 // pred_check
      _
    $region10: #{sdp_forward.2} parent=5 // pred_check_branch
      %654 = sbr.rel (%p651) target = $region12
    $region11: #{sdp_forward.2} parent=5 // pred_region
      %s655 = ssub.s32 %s33, 1
      // Predicated region
      $region13: #{sdp_forward.2} parent=11 // pred_check
        %p656 = pneg %p132
      $region14: #{sdp_forward.2} parent=11 // pred_check_branch
        %658 = sbr.rel (%p656) target = $region16
      $region15: #{sdp_forward.2} parent=11 // pred_region
        _
      $region16: #{sdp_forward.2} parent=11 // pred_fallthru
        _
      // Predicated region
      $region17: #{sdp_forward.2} parent=11 // pred_check
        %p659 = pneg %p153
      $region18: #{sdp_forward.2} parent=11 // pred_check_branch
        %661 = sbr.rel (%p659) target = $region20
      $region19: #{sdp_forward.2} parent=11 // pred_region
        _
      $region20: #{sdp_forward.2} parent=11 // pred_fallthru
        _
      // Predicated region
      $region21: #{sdp_forward.2} parent=11 // pred_check
        %p662 = pneg %p174
      $region22: #{sdp_forward.2} parent=11 // pred_check_branch
        %664 = sbr.rel (%p662) target = $region24
      $region23: #{sdp_forward.2} parent=11 // pred_region
        _
      $region24: #{sdp_forward.2} parent=11 // pred_fallthru
        _
      // Predicated region
      $region25: #{sdp_forward.2} parent=11 // pred_check
        %p665 = pneg %p195
      $region26: #{sdp_forward.2} parent=11 // pred_check_branch
        %667 = sbr.rel (%p665) target = $region28
      $region27: #{sdp_forward.2} parent=11 // pred_region
        _
      $region28: #{sdp_forward.2} parent=11 // pred_fallthru
        _
      // Predicated region
      $region29: #{sdp_forward.2} parent=11 // pred_check
        %p668 = pneg %p216
      $region30: #{sdp_forward.2} parent=11 // pred_check_branch
        %670 = sbr.rel (%p668) target = $region32
      $region31: #{sdp_forward.2} parent=11 // pred_region
        _
      $region32: #{sdp_forward.2} parent=11 // pred_fallthru
        _
      // Predicated region
      $region33: #{sdp_forward.2} parent=11 // pred_check
        %p671 = pneg %p237
      $region34: #{sdp_forward.2} parent=11 // pred_check_branch
        %673 = sbr.rel (%p671) target = $region36
      $region35: #{sdp_forward.2} parent=11 // pred_region
        _
      $region36: #{sdp_forward.2} parent=11 // pred_fallthru
        _
      // Predicated region
      $region37: #{sdp_forward.2} parent=11 // pred_check
        %p674 = pneg %p258
      $region38: #{sdp_forward.2} parent=11 // pred_check_branch
        %676 = sbr.rel (%p674) target = $region40
      $region39: #{sdp_forward.2} parent=11 // pred_region
        _
      $region40: #{sdp_forward.2} parent=11 // pred_fallthru
        _
      // Predicated region
      $region41: #{sdp_forward.2} parent=11 // pred_check
        %p677 = pneg %p279
      $region42: #{sdp_forward.2} parent=11 // pred_check_branch
        %679 = sbr.rel (%p677) target = $region44
      $region43: #{sdp_forward.2} parent=11 // pred_region
        _
      $region44: #{sdp_forward.2} parent=11 // pred_fallthru
        _
      // Predicated region
      $region45: #{sdp_forward.2} parent=11 // pred_check
        %p680 = pneg %p300
      $region46: #{sdp_forward.2} parent=11 // pred_check_branch
        %682 = sbr.rel (%p680) target = $region48
      $region47: #{sdp_forward.2} parent=11 // pred_region
        _
      $region48: #{sdp_forward.2} parent=11 // pred_fallthru
        _
      // Predicated region
      $region49: #{sdp_forward.2} parent=11 // pred_check
        %p683 = pneg %p321
      $region50: #{sdp_forward.2} parent=11 // pred_check_branch
        %685 = sbr.rel (%p683) target = $region52
      $region51: #{sdp_forward.2} parent=11 // pred_region
        _
      $region52: #{sdp_forward.2} parent=11 // pred_fallthru
        _
      // Predicated region
      $region53: #{sdp_forward.2} parent=11 // pred_check
        %p686 = pneg %p342
      $region54: #{sdp_forward.2} parent=11 // pred_check_branch
        %688 = sbr.rel (%p686) target = $region56
      $region55: #{sdp_forward.2} parent=11 // pred_region
        _
      $region56: #{sdp_forward.2} parent=11 // pred_fallthru
        _
      // Predicated region
      $region57: #{sdp_forward.2} parent=11 // pred_check
        %p689 = pneg %p363
      $region58: #{sdp_forward.2} parent=11 // pred_check_branch
        %691 = sbr.rel (%p689) target = $region60
      $region59: #{sdp_forward.2} parent=11 // pred_region
        _
      $region60: #{sdp_forward.2} parent=11 // pred_fallthru
        _
      // Predicated region
      $region61: #{sdp_forward.2} parent=11 // pred_check
        %p692 = pneg %p384
      $region62: #{sdp_forward.2} parent=11 // pred_check_branch
        %694 = sbr.rel (%p692) target = $region64
      $region63: #{sdp_forward.2} parent=11 // pred_region
        _
      $region64: #{sdp_forward.2} parent=11 // pred_fallthru
        _
      // Predicated region
      $region65: #{sdp_forward.2} parent=11 // pred_check
        %p695 = pneg %p405
      $region66: #{sdp_forward.2} parent=11 // pred_check_branch
        %697 = sbr.rel (%p695) target = $region68
      $region67: #{sdp_forward.2} parent=11 // pred_region
        _
      $region68: #{sdp_forward.2} parent=11 // pred_fallthru
        _
      // Predicated region
      $region69: #{sdp_forward.2} parent=11 // pred_check
        %p698 = pneg %p426
      $region70: #{sdp_forward.2} parent=11 // pred_check_branch
        %700 = sbr.rel (%p698) target = $region72
      $region71: #{sdp_forward.2} parent=11 // pred_region
        _
      $region72: #{sdp_forward.2} parent=11 // pred_fallthru
        _
      // Predicated region
      $region73: #{sdp_forward.2} parent=11 // pred_check
        %p701 = pneg %p447
      $region74: #{sdp_forward.2} parent=11 // pred_check_branch
        %703 = sbr.rel (%p701) target = $region76
      $region75: #{sdp_forward.2} parent=11 // pred_region
        _
      $region76: #{sdp_forward.2} parent=11 // pred_fallthru
        _
      // Predicated region
      $region77: #{sdp_forward.2} parent=11 // pred_check
        %p704 = pneg %p468
      $region78: #{sdp_forward.2} parent=11 // pred_check_branch
        %706 = sbr.rel (%p704) target = $region80
      $region79: #{sdp_forward.2} parent=11 // pred_region
        _
      $region80: #{sdp_forward.2} parent=11 // pred_fallthru
        _
      // Predicated region
      $region81: #{sdp_forward.2} parent=11 // pred_check
        %p707 = pneg %p489
      $region82: #{sdp_forward.2} parent=11 // pred_check_branch
        %709 = sbr.rel (%p707) target = $region84
      $region83: #{sdp_forward.2} parent=11 // pred_region
        _
      $region84: #{sdp_forward.2} parent=11 // pred_fallthru
        _
      // Predicated region
      $region85: #{sdp_forward.2} parent=11 // pred_check
        %p710 = pneg %p510
      $region86: #{sdp_forward.2} parent=11 // pred_check_branch
        %712 = sbr.rel (%p710) target = $region88
      $region87: #{sdp_forward.2} parent=11 // pred_region
        _
      $region88: #{sdp_forward.2} parent=11 // pred_fallthru
        _
      // Predicated region
      $region89: #{sdp_forward.2} parent=11 // pred_check
        %p713 = pneg %p531
      $region90: #{sdp_forward.2} parent=11 // pred_check_branch
        %715 = sbr.rel (%p713) target = $region92
      $region91: #{sdp_forward.2} parent=11 // pred_region
        _
      $region92: #{sdp_forward.2} parent=11 // pred_fallthru
        _
      // Predicated region
      $region93: #{sdp_forward.2} parent=11 // pred_check
        %p716 = pneg %p552
      $region94: #{sdp_forward.2} parent=11 // pred_check_branch
        %718 = sbr.rel (%p716) target = $region96
      $region95: #{sdp_forward.2} parent=11 // pred_region
        _
      $region96: #{sdp_forward.2} parent=11 // pred_fallthru
        _
      // Predicated region
      $region97: #{sdp_forward.2} parent=11 // pred_check
        %p719 = pneg %p573
      $region98: #{sdp_forward.2} parent=11 // pred_check_branch
        %721 = sbr.rel (%p719) target = $region100
      $region99: #{sdp_forward.2} parent=11 // pred_region
        _
      $region100: #{sdp_forward.2} parent=11 // pred_fallthru
        _
      // Predicated region
      $region101: #{sdp_forward.2} parent=11 // pred_check
        %p722 = pneg %p594
      $region102: #{sdp_forward.2} parent=11 // pred_check_branch
        %724 = sbr.rel (%p722) target = $region104
      $region103: #{sdp_forward.2} parent=11 // pred_region
        _
      $region104: #{sdp_forward.2} parent=11 // pred_fallthru
        _
      // Predicated region
      $region105: #{sdp_forward.2} parent=11 // pred_check
        %p725 = pneg %p615
      $region106: #{sdp_forward.2} parent=11 // pred_check_branch
        %727 = sbr.rel (%p725) target = $region108
      $region107: #{sdp_forward.2} parent=11 // pred_region
        _
      $region108: #{sdp_forward.2} parent=11 // pred_fallthru
        _
    $region12: #{sdp_forward.2} parent=5 // pred_fallthru
      _
    %p728 = scmp.lt.s32.totalorder %s33, 2
    // Predicated region
    $region109: #{sdp_forward.2} parent=5 // pred_check
      %p729 = pneg %p728
    $region110: #{sdp_forward.2} parent=5 // pred_check_branch
      %731 = sbr.rel (%p729) target = $region112
    $region111: #{sdp_forward.2} parent=5 // pred_region
      // Predicated region
      $region113: #{sdp_forward.2} parent=111 // pred_check
        %p732 = pneg %p53
      $region114: #{sdp_forward.2} parent=111 // pred_check_branch
        %734 = sbr.rel (%p732) target = $region116
      $region115: #{sdp_forward.2} parent=111 // pred_region
        %p735 = scmp.lt.s32.totalorder %s33, 1
        %s736 = scalar_select %p735, %s33, 1
        %s737 = smul.addr %s736, 8
        %s738 = scalar_lea.vmem %s0, %s737
      $region116: #{sdp_forward.2} parent=111 // pred_fallthru
        _
      // Predicated region
      $region117: #{sdp_forward.2} parent=111 // pred_check
        %p739 = pneg %p79
      $region118: #{sdp_forward.2} parent=111 // pred_check_branch
        %741 = sbr.rel (%p739) target = $region120
      $region119: #{sdp_forward.2} parent=111 // pred_region
        %p742 = scmp.lt.s32.totalorder %s33, 1
        %s743 = scalar_select %p742, %s33, 1
        %s744 = scalar_lea.vmem %s1, %s743
      $region120: #{sdp_forward.2} parent=111 // pred_fallthru
        _
      // Predicated region
      $region121: #{sdp_forward.2} parent=111 // pred_check
        %p745 = pneg %p105
      $region122: #{sdp_forward.2} parent=111 // pred_check_branch
        %747 = sbr.rel (%p745) target = $region124
      $region123: #{sdp_forward.2} parent=111 // pred_region
        %p748 = scmp.lt.s32.totalorder %s33, 1
        %s749 = scalar_select %p748, %s33, 1
        %s750 = scalar_lea.vmem %s2, %s749
      $region124: #{sdp_forward.2} parent=111 // pred_fallthru
        _
    $region112: #{sdp_forward.2} parent=5 // pred_fallthru
      _
    %p751 = scmp.le.s32.totalorder 1, %s33
    %p752 = scmp.lt.s32.totalorder %s33, 3
    %p753 = pnand %p751, %p752
    %p754 = pneg %p753
    // Predicated region
    $region125: #{sdp_forward.2} parent=5 // pred_check
      _
    $region126: #{sdp_forward.2} parent=5 // pred_check_branch
      %756 = sbr.rel (%p753) target = $region128
    $region127: #{sdp_forward.2} parent=5 // pred_region
      %s757 = ssub.s32 %s33, 1
      %p758 = scmp.lt.s32.totalorder %s38, 1
      %s759 = scalar_select %p758, %s38, 1
      %s760 = smul.addr %s759, 8
      %s761 = scalar_lea.vmem %s0, %s760
      %p762 = pneg %p59
      %p763 = pneg %p56
      %p764 = scmp.lt.s32.totalorder %s38, 1
      %s765 = scalar_select %p764, %s38, 1
      %s766 = scalar_lea.vmem %s1, %s765
      %p767 = pneg %p85
      %p768 = pneg %p82
      %p769 = scmp.lt.s32.totalorder %s38, 1
      %s770 = scalar_select %p769, %s38, 1
      %s771 = scalar_lea.vmem %s2, %s770
      %p772 = pneg %p111
      %p773 = pneg %p108
      %p774 = pneg %p132
      %p775 = pneg %p129
      %p776 = pneg %p153
      %p777 = pneg %p150
      %p778 = pneg %p174
      %p779 = pneg %p171
      %p780 = pneg %p195
      %p781 = pneg %p192
      %p782 = pneg %p216
      %p783 = pneg %p213
      %p784 = pneg %p237
      %p785 = pneg %p234
      %p786 = pneg %p258
      %p787 = pneg %p255
      %p788 = pneg %p279
      %p789 = pneg %p276
      %p790 = pneg %p300
      %p791 = pneg %p297
      %p792 = pneg %p321
      %p793 = pneg %p318
      %p794 = pneg %p342
      %p795 = pneg %p339
      %p796 = pneg %p363
      %p797 = pneg %p360
      %p798 = pneg %p384
      %p799 = pneg %p381
      %p800 = pneg %p405
      %p801 = pneg %p402
      %p802 = pneg %p426
      %p803 = pneg %p423
      %p804 = pneg %p447
      %p805 = pneg %p444
      %p806 = pneg %p468
      %p807 = pneg %p465
      %p808 = pneg %p489
      %p809 = pneg %p486
      %p810 = pneg %p510
      %p811 = pneg %p507
      %p812 = pneg %p531
      %p813 = pneg %p528
      %p814 = pneg %p552
      %p815 = pneg %p549
      %p816 = pneg %p573
      %p817 = pneg %p570
      %p818 = pneg %p594
      %p819 = pneg %p591
      %p820 = pneg %p615
      %p821 = pneg %p612
      %p822 = pneg %p641
      %p823 = pneg %p638
      %p824 = scmp.lt.s32.totalorder %s38, 1
      %s825 = scalar_select %p824, %s38, 1
      %s826 = smul.addr %s825, 2
      %s827 = smul.addr %s826, 4
      %s828 = scalar_lea.vmem %s27, %s827
      %p829 = scmp.lt.s32.totalorder %s38, 1
      %s830 = scalar_select %p829, %s38, 1
      %s831 = smul.addr %s830, 8
      %s832 = scalar_lea.vmem %s0, %s831
      %p833 = scmp.lt.s32.totalorder %s38, 1
      %s834 = scalar_select %p833, %s38, 1
      %s835 = scalar_lea.vmem %s1, %s834
      %p836 = scmp.lt.s32.totalorder %s38, 1
      %s837 = scalar_select %p836, %s38, 1
      %s838 = scalar_lea.vmem %s2, %s837
      %p839 = scmp.lt.s32.totalorder %s38, 1
      %s840 = scalar_select %p839, %s38, 1
      %s841 = smul.addr %s840, 2
      %s842 = smul.addr %s841, 4
      %s843 = scalar_lea.vmem %s27, %s842
      %v845 = vld [vmem:[%s832] sm:$0xff]
      %v846 = vld [vmem:[%s835] sm:$0x1]
      %v847 = vld [vmem:[%s838] sm:$0x1]
      %v848 = vld [vmem:[%s3] sm:$0xff]
      %v849 = vld [vmem:[%s4] sm:$0xff]
      %v850 = vld [vmem:[%s5] sm:$0xff]
      %v851 = vld [vmem:[%s5 + $0x8] sm:$0xff]
      %v852 = vld [vmem:[%s5 + $0x10] sm:$0xff]
      %v853 = vld [vmem:[%s6] sm:$0xff]
      %v854 = vld [vmem:[%s6 + $0x8] sm:$0xff]
      %v855 = vld [vmem:[%s6 + $0x10] sm:$0xff]
      %v856 = vld [vmem:[%s7] sm:$0xff]
      %v857 = vld [vmem:[%s7 + $0x8] sm:$0xff]
      %v858 = vld [vmem:[%s7 + $0x10] sm:$0xff]
      %v859 = vld [vmem:[%s8] sm:$0xff]
      %v860 = vld [vmem:[%s8 + $0x8] sm:$0xff]
      %v861 = vld [vmem:[%s8 + $0x10] sm:$0xff]
      %v862 = vld [vmem:[%s9] sm:$0xff]
      %v863 = vld [vmem:[%s9 + $0x8] sm:$0xff]
      %v864 = vld [vmem:[%s9 + $0x10] sm:$0xff]
      %v865 = vld [vmem:[%s10] sm:$0xff]
      %v866 = vld [vmem:[%s10 + $0x8] sm:$0xff]
      %v867 = vld [vmem:[%s10 + $0x10] sm:$0xff]
      %v868 = vld [vmem:[%s11] sm:$0xff]
      %v869 = vld [vmem:[%s11 + $0x8] sm:$0xff]
      %v870 = vld [vmem:[%s11 + $0x10] sm:$0xff]
      %v871 = vld [vmem:[%s12] sm:$0xff]
      %v872 = vld [vmem:[%s12 + $0x8] sm:$0xff]
      %v873 = vld [vmem:[%s12 + $0x10] sm:$0xff]
      %v874 = vld [vmem:[%s13] sm:$0xff]
      %v875 = vld [vmem:[%s14] sm:$0xff]
      %v876 = vpack.c.bf16 %v848, %v848
      %v877 = vpack.c.bf16 %v845, %v845
      %879 = vset.pattern.permute.xlu0 0
      %880 = vperm.xlu0 %879, %v849
      %v881 = vpop.permute.xlu0 %880
      %vm883 = vcmask 64512
      %v885 = vsel %vm883, %v876, 0
      %vm887 = vcmask 1043456
      %v889 = vsel %vm887, %v877, 0
      %891 = vmatpush.bf16.msra.mxu0 0
      %892 = vmatpush.bf16.msra.mxu0 0
      %893 = vmatpush.bf16.msra.mxu0 0
      %894 = vmatpush.bf16.msra.mxu0 0
      %895 = vmatpush.bf16.msra.mxu0 0
      %896 = vmatpush.bf16.msra.mxu0 0
      %897 = vmatpush.bf16.msra.mxu0 0
      %898 = vmatpush.bf16.msra.mxu0 %v889
      %899 = vmatmul.bf16.gmra.mxu0 %v885
      %v900 = vpop.f32.mrf.mxu0
      %v901 = vadd.f32 %v881, %v900
      %v902 = vpop.f32.mrf.mxu0
      %903 = vdwg.mxu0
      %v904 = vlaneseq
      %v905 = vand.u32 %v904, 127
      %v907 = vperm.slane %v847, 0
      %v909 = vmul.f32 %v901, %v907
      %910 = vrot.lane.b32.xlu0 %v909, 1
      %v911 = vpop.permute.xlu0 %910
      %vm912 = vcmp.ge.s32.totalorder %v905, 1
      %v913 = vsel %vm912, 1, 0
      %vm914 = vcmp.eq.s32.totalorder %v913, 1
      %v915 = vsel %vm914, %v911, 0.0
      %917 = vset.pattern.permute.xlu0 0
      %918 = vperm.xlu0 %917, %v850
      %v919 = vpop.permute.xlu0 %918
      %v921 = vmul.f32 %v919, %v915
      %922 = vset.pattern.permute.xlu0 1
      %923 = vperm.xlu0 %922, %v850
      %v924 = vpop.permute.xlu0 %923
      %v926 = vmul.f32 %v924, %v909
      %v927 = vadd.f32 %v921, %v926
      %928 = vrot.lane.b32.xlu0 %v909, 127
      %v929 = vpop.permute.xlu0 %928
      %vm930 = vcmp.lt.s32.totalorder %v905, 127
      %v931 = vsel %vm930, 1, 0
      %vm932 = vcmp.eq.s32.totalorder %v931, 1
      %v933 = vsel %vm932, %v929, 0.0
      %934 = vset.pattern.permute.xlu0 2
      %935 = vperm.xlu0 %934, %v850
      %v936 = vpop.permute.xlu0 %935
      %v938 = vmul.f32 %v936, %v933
      %v939 = vadd.f32 %v927, %v938
      %941 = vset.pattern.permute.xlu0 0
      %942 = vperm.xlu0 %941, %v853
      %v943 = vpop.permute.xlu0 %942
      %v945 = vadd.f32 %v939, %v943
      %v946 = vrot.slane %v945, 4
      %v947 = vadd.f32 %v945, %v946
      %v948 = vrot.slane %v947, 2
      %v949 = vadd.f32 %v947, %v948
      %v950 = vrot.slane %v949, 1
      %v951 = vadd.f32 %v949, %v950
      %v952 = vmul.f32 %v951, 0.125
      %v953 = vmul.f32 %v945, %v945
      %v954 = vrot.slane %v953, 4
      %v955 = vadd.f32 %v953, %v954
      %v956 = vrot.slane %v955, 2
      %v957 = vadd.f32 %v955, %v956
      %v958 = vrot.slane %v957, 1
      %v959 = vadd.f32 %v957, %v958
      %v960 = vmul.f32 %v959, 0.125
      %v961 = vmul.f32 %v952, %v952
      %v962 = vsub.f32 %v960, %v961
      %v963 = vmax.f32 %v962, 0.0
      %v964 = vsub.f32 %v945, %v952
      %v965 = vadd.f32 %v963, 1e-05
      %v966 = vrsqrt.pop %v965
      %v967 = vmul.f32 %v966, %v965
      %v968 = vmul.f32 %v967, %v966
      %v969 = vmul.f32 0.5, %v968
      %v970 = vsub.f32 1.5, %v969
      %v971 = vmul.f32 %v966, %v970
      %vm972 = vweird.f32 %v965
      %vm973 = vweird.f32 %v966
      %vm974 = vmor %vm972, %vm973
      %v975 = vsel %vm974, %v966, %v971
      %v976 = vmul.f32 %v964, %v975
      %978 = vset.pattern.permute.xlu0 0
      %979 = vperm.xlu0 %978, %v856
      %v980 = vpop.permute.xlu0 %979
      %v982 = vmul.f32 %v976, %v980
      %984 = vset.pattern.permute.xlu0 0
      %985 = vperm.xlu0 %984, %v859
      %v986 = vpop.permute.xlu0 %985
      %v988 = vadd.f32 %v982, %v986
      %v989 = vmul.f32 %v988, 0.5
      %v990 = vmul.f32 %v988, 0.044715
      %v991 = vmul.f32 %v990, %v988
      %v992 = vmul.f32 %v991, %v988
      %v993 = vadd.f32 %v988, %v992
      %v994 = vmul.f32 %v993, 0.7978846
      %v995 = vtanh.pop %v994
      %v996 = vadd.f32 %v995, 1.0
      %v997 = vmul.f32 %v989, %v996
      %v998 = vpack.c.bf16 %v862, %v862
      %v999 = vpack.c.bf16 %v997, %v997
      %1001 = vset.pattern.permute.xlu0 0
      %1002 = vperm.xlu0 %1001, %v865
      %v1003 = vpop.permute.xlu0 %1002
      %v1006 = vsel %vm883, %v998, 0
      %v1009 = vsel %vm887, %v999, 0
      %1011 = vmatpush.bf16.msra.mxu0 0
      %1012 = vmatpush.bf16.msra.mxu0 0
      %1013 = vmatpush.bf16.msra.mxu0 0
      %1014 = vmatpush.bf16.msra.mxu0 0
      %1015 = vmatpush.bf16.msra.mxu0 0
      %1016 = vmatpush.bf16.msra.mxu0 0
      %1017 = vmatpush.bf16.msra.mxu0 0
      %1018 = vmatpush.bf16.msra.mxu0 %v1009
      %1019 = vmatmul.bf16.gmra.mxu0 %v1006
      %v1020 = vpop.f32.mrf.mxu0
      %v1021 = vadd.f32 %v1003, %v1020
      %v1022 = vpop.f32.mrf.mxu0
      %1023 = vdwg.mxu0
      %v1024 = vrot.slane %v1021, 4
      %v1025 = vadd.f32 %v1021, %v1024
      %v1026 = vrot.slane %v1025, 2
      %v1027 = vadd.f32 %v1025, %v1026
      %v1028 = vrot.slane %v1027, 1
      %v1029 = vadd.f32 %v1027, %v1028
      %v1030 = vmul.f32 %v1029, 0.125
      %v1031 = vmul.f32 %v1021, %v1021
      %v1032 = vrot.slane %v1031, 4
      %v1033 = vadd.f32 %v1031, %v1032
      %v1034 = vrot.slane %v1033, 2
      %v1035 = vadd.f32 %v1033, %v1034
      %v1036 = vrot.slane %v1035, 1
      %v1037 = vadd.f32 %v1035, %v1036
      %v1038 = vmul.f32 %v1037, 0.125
      %v1039 = vmul.f32 %v1030, %v1030
      %v1040 = vsub.f32 %v1038, %v1039
      %v1041 = vmax.f32 %v1040, 0.0
      %v1042 = vsub.f32 %v1021, %v1030
      %v1043 = vadd.f32 %v1041, 1e-05
      %v1044 = vrsqrt.pop %v1043
      %v1045 = vmul.f32 %v1044, %v1043
      %v1046 = vmul.f32 %v1045, %v1044
      %v1047 = vmul.f32 0.5, %v1046
      %v1048 = vsub.f32 1.5, %v1047
      %v1049 = vmul.f32 %v1044, %v1048
      %vm1050 = vweird.f32 %v1043
      %vm1051 = vweird.f32 %v1044
      %vm1052 = vmor %vm1050, %vm1051
      %v1053 = vsel %vm1052, %v1044, %v1049
      %v1054 = vmul.f32 %v1042, %v1053
      %1056 = vset.pattern.permute.xlu0 0
      %1057 = vperm.xlu0 %1056, %v868
      %v1058 = vpop.permute.xlu0 %1057
      %v1060 = vmul.f32 %v1054, %v1058
      %1062 = vset.pattern.permute.xlu0 0
      %1063 = vperm.xlu0 %1062, %v871
      %v1064 = vpop.permute.xlu0 %1063
      %v1066 = vadd.f32 %v1060, %v1064
      %v1067 = vmul.f32 %v1066, 0.5
      %v1068 = vmul.f32 %v1066, 0.044715
      %v1069 = vmul.f32 %v1068, %v1066
      %v1070 = vmul.f32 %v1069, %v1066
      %v1071 = vadd.f32 %v1066, %v1070
      %v1072 = vmul.f32 %v1071, 0.7978846
      %v1073 = vtanh.pop %v1072
      %v1074 = vadd.f32 %v1073, 1.0
      %v1075 = vmul.f32 %v1067, %v1074
      %v1076 = vadd.f32 %v901, %v1075
      %v1077 = vmul.f32 %v1076, %v907
      %1078 = vrot.lane.b32.xlu0 %v1077, 3
      %v1079 = vpop.permute.xlu0 %1078
      %vm1080 = vcmp.ge.s32.totalorder %v905, 3
      %v1081 = vsel %vm1080, 1, 0
      %vm1082 = vcmp.eq.s32.totalorder %v1081, 1
      %v1083 = vsel %vm1082, %v1079, 0.0
      %1085 = vset.pattern.permute.xlu0 0
      %1086 = vperm.xlu0 %1085, %v851
      %v1087 = vpop.permute.xlu0 %1086
      %v1089 = vmul.f32 %v1087, %v1083
      %1090 = vset.pattern.permute.xlu0 1
      %1091 = vperm.xlu0 %1090, %v851
      %v1092 = vpop.permute.xlu0 %1091
      %v1094 = vmul.f32 %v1092, %v1077
      %v1095 = vadd.f32 %v1089, %v1094
      %1096 = vrot.lane.b32.xlu0 %v1077, 125
      %v1097 = vpop.permute.xlu0 %1096
      %vm1098 = vcmp.lt.s32.totalorder %v905, 125
      %v1099 = vsel %vm1098, 1, 0
      %vm1100 = vcmp.eq.s32.totalorder %v1099, 1
      %v1101 = vsel %vm1100, %v1097, 0.0
      %1102 = vset.pattern.permute.xlu0 2
      %1103 = vperm.xlu0 %1102, %v851
      %v1104 = vpop.permute.xlu0 %1103
      %v1106 = vmul.f32 %v1104, %v1101
      %v1107 = vadd.f32 %v1095, %v1106
      %1109 = vset.pattern.permute.xlu0 0
      %1110 = vperm.xlu0 %1109, %v854
      %v1111 = vpop.permute.xlu0 %1110
      %v1113 = vadd.f32 %v1107, %v1111
      %v1114 = vrot.slane %v1113, 4
      %v1115 = vadd.f32 %v1113, %v1114
      %v1116 = vrot.slane %v1115, 2
      %v1117 = vadd.f32 %v1115, %v1116
      %v1118 = vrot.slane %v1117, 1
      %v1119 = vadd.f32 %v1117, %v1118
      %v1120 = vmul.f32 %v1119, 0.125
      %v1121 = vmul.f32 %v1113, %v1113
      %v1122 = vrot.slane %v1121, 4
      %v1123 = vadd.f32 %v1121, %v1122
      %v1124 = vrot.slane %v1123, 2
      %v1125 = vadd.f32 %v1123, %v1124
      %v1126 = vrot.slane %v1125, 1
      %v1127 = vadd.f32 %v1125, %v1126
      %v1128 = vmul.f32 %v1127, 0.125
      %v1129 = vmul.f32 %v1120, %v1120
      %v1130 = vsub.f32 %v1128, %v1129
      %v1131 = vmax.f32 %v1130, 0.0
      %v1132 = vsub.f32 %v1113, %v1120
      %v1133 = vadd.f32 %v1131, 1e-05
      %v1134 = vrsqrt.pop %v1133
      %v1135 = vmul.f32 %v1134, %v1133
      %v1136 = vmul.f32 %v1135, %v1134
      %v1137 = vmul.f32 0.5, %v1136
      %v1138 = vsub.f32 1.5, %v1137
      %v1139 = vmul.f32 %v1134, %v1138
      %vm1140 = vweird.f32 %v1133
      %vm1141 = vweird.f32 %v1134
      %vm1142 = vmor %vm1140, %vm1141
      %v1143 = vsel %vm1142, %v1134, %v1139
      %v1144 = vmul.f32 %v1132, %v1143
      %1146 = vset.pattern.permute.xlu0 0
      %1147 = vperm.xlu0 %1146, %v857
      %v1148 = vpop.permute.xlu0 %1147
      %v1150 = vmul.f32 %v1144, %v1148
      %1152 = vset.pattern.permute.xlu0 0
      %1153 = vperm.xlu0 %1152, %v860
      %v1154 = vpop.permute.xlu0 %1153
      %v1156 = vadd.f32 %v1150, %v1154
      %v1157 = vmul.f32 %v1156, 0.5
      %v1158 = vmul.f32 %v1156, 0.044715
      %v1159 = vmul.f32 %v1158, %v1156
      %v1160 = vmul.f32 %v1159, %v1156
      %v1161 = vadd.f32 %v1156, %v1160
      %v1162 = vmul.f32 %v1161, 0.7978846
      %v1163 = vtanh.pop %v1162
      %v1164 = vadd.f32 %v1163, 1.0
      %v1165 = vmul.f32 %v1157, %v1164
      %v1166 = vpack.c.bf16 %v863, %v863
      %v1167 = vpack.c.bf16 %v1165, %v1165
      %1169 = vset.pattern.permute.xlu0 0
      %1170 = vperm.xlu0 %1169, %v866
      %v1171 = vpop.permute.xlu0 %1170
      %v1174 = vsel %vm883, %v1166, 0
      %v1177 = vsel %vm887, %v1167, 0
      %1179 = vmatpush.bf16.msra.mxu0 0
      %1180 = vmatpush.bf16.msra.mxu0 0
      %1181 = vmatpush.bf16.msra.mxu0 0
      %1182 = vmatpush.bf16.msra.mxu0 0
      %1183 = vmatpush.bf16.msra.mxu0 0
      %1184 = vmatpush.bf16.msra.mxu0 0
      %1185 = vmatpush.bf16.msra.mxu0 0
      %1186 = vmatpush.bf16.msra.mxu0 %v1177
      %1187 = vmatmul.bf16.gmra.mxu0 %v1174
      %v1188 = vpop.f32.mrf.mxu0
      %v1189 = vadd.f32 %v1171, %v1188
      %v1190 = vpop.f32.mrf.mxu0
      %1191 = vdwg.mxu0
      %v1192 = vrot.slane %v1189, 4
      %v1193 = vadd.f32 %v1189, %v1192
      %v1194 = vrot.slane %v1193, 2
      %v1195 = vadd.f32 %v1193, %v1194
      %v1196 = vrot.slane %v1195, 1
      %v1197 = vadd.f32 %v1195, %v1196
      %v1198 = vmul.f32 %v1197, 0.125
      %v1199 = vmul.f32 %v1189, %v1189
      %v1200 = vrot.slane %v1199, 4
      %v1201 = vadd.f32 %v1199, %v1200
      %v1202 = vrot.slane %v1201, 2
      %v1203 = vadd.f32 %v1201, %v1202
      %v1204 = vrot.slane %v1203, 1
      %v1205 = vadd.f32 %v1203, %v1204
      %v1206 = vmul.f32 %v1205, 0.125
      %v1207 = vmul.f32 %v1198, %v1198
      %v1208 = vsub.f32 %v1206, %v1207
      %v1209 = vmax.f32 %v1208, 0.0
      %v1210 = vsub.f32 %v1189, %v1198
      %v1211 = vadd.f32 %v1209, 1e-05
      %v1212 = vrsqrt.pop %v1211
      %v1213 = vmul.f32 %v1212, %v1211
      %v1214 = vmul.f32 %v1213, %v1212
      %v1215 = vmul.f32 0.5, %v1214
      %v1216 = vsub.f32 1.5, %v1215
      %v1217 = vmul.f32 %v1212, %v1216
      %vm1218 = vweird.f32 %v1211
      %vm1219 = vweird.f32 %v1212
      %vm1220 = vmor %vm1218, %vm1219
      %v1221 = vsel %vm1220, %v1212, %v1217
      %v1222 = vmul.f32 %v1210, %v1221
      %1224 = vset.pattern.permute.xlu0 0
      %1225 = vperm.xlu0 %1224, %v869
      %v1226 = vpop.permute.xlu0 %1225
      %v1228 = vmul.f32 %v1222, %v1226
      %1230 = vset.pattern.permute.xlu0 0
      %1231 = vperm.xlu0 %1230, %v872
      %v1232 = vpop.permute.xlu0 %1231
      %v1234 = vadd.f32 %v1228, %v1232
      %v1235 = vmul.f32 %v1234, 0.5
      %v1236 = vmul.f32 %v1234, 0.044715
      %v1237 = vmul.f32 %v1236, %v1234
      %v1238 = vmul.f32 %v1237, %v1234
      %v1239 = vadd.f32 %v1234, %v1238
      %v1240 = vmul.f32 %v1239, 0.7978846
      %v1241 = vtanh.pop %v1240
      %v1242 = vadd.f32 %v1241, 1.0
      %v1243 = vmul.f32 %v1235, %v1242
      %v1244 = vadd.f32 %v1076, %v1243
      %v1245 = vmul.f32 %v1244, %v907
      %1246 = vrot.lane.b32.xlu0 %v1245, 9
      %v1247 = vpop.permute.xlu0 %1246
      %vm1248 = vcmp.ge.s32.totalorder %v905, 9
      %v1249 = vsel %vm1248, 1, 0
      %vm1250 = vcmp.eq.s32.totalorder %v1249, 1
      %v1251 = vsel %vm1250, %v1247, 0.0
      %1253 = vset.pattern.permute.xlu0 0
      %1254 = vperm.xlu0 %1253, %v852
      %v1255 = vpop.permute.xlu0 %1254
      %v1257 = vmul.f32 %v1255, %v1251
      %1258 = vset.pattern.permute.xlu0 1
      %1259 = vperm.xlu0 %1258, %v852
      %v1260 = vpop.permute.xlu0 %1259
      %v1262 = vmul.f32 %v1260, %v1245
      %v1263 = vadd.f32 %v1257, %v1262
      %1264 = vrot.lane.b32.xlu0 %v1245, 119
      %v1265 = vpop.permute.xlu0 %1264
      %vm1266 = vcmp.lt.s32.totalorder %v905, 119
      %v1267 = vsel %vm1266, 1, 0
      %vm1268 = vcmp.eq.s32.totalorder %v1267, 1
      %v1269 = vsel %vm1268, %v1265, 0.0
      %1270 = vset.pattern.permute.xlu0 2
      %1271 = vperm.xlu0 %1270, %v852
      %v1272 = vpop.permute.xlu0 %1271
      %v1274 = vmul.f32 %v1272, %v1269
      %v1275 = vadd.f32 %v1263, %v1274
      %1277 = vset.pattern.permute.xlu0 0
      %1278 = vperm.xlu0 %1277, %v855
      %v1279 = vpop.permute.xlu0 %1278
      %v1281 = vadd.f32 %v1275, %v1279
      %v1282 = vrot.slane %v1281, 4
      %v1283 = vadd.f32 %v1281, %v1282
      %v1284 = vrot.slane %v1283, 2
      %v1285 = vadd.f32 %v1283, %v1284
      %v1286 = vrot.slane %v1285, 1
      %v1287 = vadd.f32 %v1285, %v1286
      %v1288 = vmul.f32 %v1287, 0.125
      %v1289 = vmul.f32 %v1281, %v1281
      %v1290 = vrot.slane %v1289, 4
      %v1291 = vadd.f32 %v1289, %v1290
      %v1292 = vrot.slane %v1291, 2
      %v1293 = vadd.f32 %v1291, %v1292
      %v1294 = vrot.slane %v1293, 1
      %v1295 = vadd.f32 %v1293, %v1294
      %v1296 = vmul.f32 %v1295, 0.125
      %v1297 = vmul.f32 %v1288, %v1288
      %v1298 = vsub.f32 %v1296, %v1297
      %v1299 = vmax.f32 %v1298, 0.0
      %v1300 = vsub.f32 %v1281, %v1288
      %v1301 = vadd.f32 %v1299, 1e-05
      %v1302 = vrsqrt.pop %v1301
      %v1303 = vmul.f32 %v1302, %v1301
      %v1304 = vmul.f32 %v1303, %v1302
      %v1305 = vmul.f32 0.5, %v1304
      %v1306 = vsub.f32 1.5, %v1305
      %v1307 = vmul.f32 %v1302, %v1306
      %vm1308 = vweird.f32 %v1301
      %vm1309 = vweird.f32 %v1302
      %vm1310 = vmor %vm1308, %vm1309
      %v1311 = vsel %vm1310, %v1302, %v1307
      %v1312 = vmul.f32 %v1300, %v1311
      %1314 = vset.pattern.permute.xlu0 0
      %1315 = vperm.xlu0 %1314, %v858
      %v1316 = vpop.permute.xlu0 %1315
      %v1318 = vmul.f32 %v1312, %v1316
      %1320 = vset.pattern.permute.xlu0 0
      %1321 = vperm.xlu0 %1320, %v861
      %v1322 = vpop.permute.xlu0 %1321
      %v1324 = vadd.f32 %v1318, %v1322
      %v1325 = vmul.f32 %v1324, 0.5
      %v1326 = vmul.f32 %v1324, 0.044715
      %v1327 = vmul.f32 %v1326, %v1324
      %v1328 = vmul.f32 %v1327, %v1324
      %v1329 = vadd.f32 %v1324, %v1328
      %v1330 = vmul.f32 %v1329, 0.7978846
      %v1331 = vtanh.pop %v1330
      %v1332 = vadd.f32 %v1331, 1.0
      %v1333 = vmul.f32 %v1325, %v1332
      %v1334 = vpack.c.bf16 %v864, %v864
      %v1335 = vpack.c.bf16 %v1333, %v1333
      %1337 = vset.pattern.permute.xlu0 0
      %1338 = vperm.xlu0 %1337, %v867
      %v1339 = vpop.permute.xlu0 %1338
      %v1342 = vsel %vm883, %v1334, 0
      %v1345 = vsel %vm887, %v1335, 0
      %1347 = vmatpush.bf16.msra.mxu0 0
      %1348 = vmatpush.bf16.msra.mxu0 0
      %1349 = vmatpush.bf16.msra.mxu0 0
      %1350 = vmatpush.bf16.msra.mxu0 0
      %1351 = vmatpush.bf16.msra.mxu0 0
      %1352 = vmatpush.bf16.msra.mxu0 0
      %1353 = vmatpush.bf16.msra.mxu0 0
      %1354 = vmatpush.bf16.msra.mxu0 %v1345
      %1355 = vmatmul.bf16.gmra.mxu0 %v1342
      %v1356 = vpop.f32.mrf.mxu0
      %v1357 = vadd.f32 %v1339, %v1356
      %v1358 = vpop.f32.mrf.mxu0
      %1359 = vdwg.mxu0
      %v1360 = vrot.slane %v1357, 4
      %v1361 = vadd.f32 %v1357, %v1360
      %v1362 = vrot.slane %v1361, 2
      %v1363 = vadd.f32 %v1361, %v1362
      %v1364 = vrot.slane %v1363, 1
      %v1365 = vadd.f32 %v1363, %v1364
      %v1366 = vmul.f32 %v1365, 0.125
      %v1367 = vmul.f32 %v1357, %v1357
      %v1368 = vrot.slane %v1367, 4
      %v1369 = vadd.f32 %v1367, %v1368
      %v1370 = vrot.slane %v1369, 2
      %v1371 = vadd.f32 %v1369, %v1370
      %v1372 = vrot.slane %v1371, 1
      %v1373 = vadd.f32 %v1371, %v1372
      %v1374 = vmul.f32 %v1373, 0.125
      %v1375 = vmul.f32 %v1366, %v1366
      %v1376 = vsub.f32 %v1374, %v1375
      %v1377 = vmax.f32 %v1376, 0.0
      %v1378 = vsub.f32 %v1357, %v1366
      %v1379 = vadd.f32 %v1377, 1e-05
      %v1380 = vrsqrt.pop %v1379
      %v1381 = vmul.f32 %v1380, %v1379
      %v1382 = vmul.f32 %v1381, %v1380
      %v1383 = vmul.f32 0.5, %v1382
      %v1384 = vsub.f32 1.5, %v1383
      %v1385 = vmul.f32 %v1380, %v1384
      %vm1386 = vweird.f32 %v1379
      %vm1387 = vweird.f32 %v1380
      %vm1388 = vmor %vm1386, %vm1387
      %v1389 = vsel %vm1388, %v1380, %v1385
      %v1390 = vmul.f32 %v1378, %v1389
      %1392 = vset.pattern.permute.xlu0 0
      %1393 = vperm.xlu0 %1392, %v870
      %v1394 = vpop.permute.xlu0 %1393
      %v1396 = vmul.f32 %v1390, %v1394
      %1398 = vset.pattern.permute.xlu0 0
      %1399 = vperm.xlu0 %1398, %v873
      %v1400 = vpop.permute.xlu0 %1399
      %v1402 = vadd.f32 %v1396, %v1400
      %v1403 = vmul.f32 %v1402, 0.5
      %v1404 = vmul.f32 %v1402, 0.044715
      %v1405 = vmul.f32 %v1404, %v1402
      %v1406 = vmul.f32 %v1405, %v1402
      %v1407 = vadd.f32 %v1402, %v1406
      %v1408 = vmul.f32 %v1407, 0.7978846
      %v1409 = vtanh.pop %v1408
      %v1410 = vadd.f32 %v1409, 1.0
      %v1411 = vmul.f32 %v1403, %v1410
      %v1412 = vadd.f32 %v1244, %v1411
      %v1413 = vmul.f32 %v1412, %v907
      %v1414 = vpack.c.bf16 %v874, %v874
      %v1415 = vpack.c.bf16 %v1413, %v1413
      %1417 = vset.pattern.permute.xlu0 0
      %1418 = vperm.xlu0 %1417, %v875
      %v1419 = vpop.permute.xlu0 %1418
      %v1422 = vsel %vm883, %v1414, 0
      %v1425 = vsel %vm887, %v1415, 0
      %1427 = vmatpush.bf16.msra.mxu0 0
      %1428 = vmatpush.bf16.msra.mxu0 0
      %1429 = vmatpush.bf16.msra.mxu0 0
      %1430 = vmatpush.bf16.msra.mxu0 0
      %1431 = vmatpush.bf16.msra.mxu0 0
      %1432 = vmatpush.bf16.msra.mxu0 0
      %1433 = vmatpush.bf16.msra.mxu0 0
      %1434 = vmatpush.bf16.msra.mxu0 %v1425
      %1435 = vmatmul.bf16.gmra.mxu0 %v1422
      %v1436 = vpop.f32.mrf.mxu0
      %v1437 = vadd.f32 %v1419, %v1436
      %v1438 = vpop.f32.mrf.mxu0
      %1439 = vdwg.mxu0
      %v1440 = vmul.f32 %v1437, %v907
      %v1441 = vld [vmem:[%s15] sm:$0xff]
      %v1442 = vld [vmem:[%s16] sm:$0xff]
      %v1443 = vld [vmem:[%s17] sm:$0xff]
      %v1444 = vld [vmem:[%s17 + $0x8] sm:$0xff]
      %v1445 = vld [vmem:[%s17 + $0x10] sm:$0xff]
      %v1446 = vld [vmem:[%s18] sm:$0xff]
      %v1447 = vld [vmem:[%s18 + $0x8] sm:$0xff]
      %v1448 = vld [vmem:[%s18 + $0x10] sm:$0xff]
      %v1449 = vld [vmem:[%s19] sm:$0xff]
      %v1450 = vld [vmem:[%s19 + $0x8] sm:$0xff]
      %v1451 = vld [vmem:[%s19 + $0x10] sm:$0xff]
      %v1452 = vld [vmem:[%s20] sm:$0xff]
      %v1453 = vld [vmem:[%s20 + $0x8] sm:$0xff]
      %v1454 = vld [vmem:[%s20 + $0x10] sm:$0xff]
      %v1455 = vld [vmem:[%s21] sm:$0xff]
      %v1456 = vld [vmem:[%s21 + $0x8] sm:$0xff]
      %v1457 = vld [vmem:[%s21 + $0x10] sm:$0xff]
      %v1458 = vld [vmem:[%s22] sm:$0xff]
      %v1459 = vld [vmem:[%s22 + $0x8] sm:$0xff]
      %v1460 = vld [vmem:[%s22 + $0x10] sm:$0xff]
      %v1461 = vld [vmem:[%s23] sm:$0xff]
      %v1462 = vld [vmem:[%s23 + $0x8] sm:$0xff]
      %v1463 = vld [vmem:[%s23 + $0x10] sm:$0xff]
      %v1464 = vld [vmem:[%s24] sm:$0xff]
      %v1465 = vld [vmem:[%s24 + $0x8] sm:$0xff]
      %v1466 = vld [vmem:[%s24 + $0x10] sm:$0xff]
      %v1467 = vld [vmem:[%s25] sm:$0xff]
      %v1468 = vld [vmem:[%s26] sm:$0xff]
      %1470 = vset.pattern.permute.xlu0 0
      %1471 = vperm.xlu0 %1470, %v1441
      %v1472 = vpop.permute.xlu0 %1471
      %v1475 = vperm.slane %v846, 0
      %v1477 = vmul.f32 %v1472, %v1475
      %1479 = vset.pattern.permute.xlu0 0
      %1480 = vperm.xlu0 %1479, %v1442
      %v1481 = vpop.permute.xlu0 %1480
      %v1483 = vadd.f32 %v1477, %v1481
      %v1484 = vmul.f32 %v1483, %v907
      %1485 = vrot.lane.b32.xlu0 %v1484, 1
      %v1486 = vpop.permute.xlu0 %1485
      %v1487 = vsel %vm914, %v1486, 0.0
      %1489 = vset.pattern.permute.xlu0 0
      %1490 = vperm.xlu0 %1489, %v1443
      %v1491 = vpop.permute.xlu0 %1490
      %v1493 = vmul.f32 %v1491, %v1487
      %1494 = vset.pattern.permute.xlu0 1
      %1495 = vperm.xlu0 %1494, %v1443
      %v1496 = vpop.permute.xlu0 %1495
      %v1498 = vmul.f32 %v1496, %v1484
      %v1499 = vadd.f32 %v1493, %v1498
      %1500 = vrot.lane.b32.xlu0 %v1484, 127
      %v1501 = vpop.permute.xlu0 %1500
      %v1502 = vsel %vm932, %v1501, 0.0
      %1503 = vset.pattern.permute.xlu0 2
      %1504 = vperm.xlu0 %1503, %v1443
      %v1505 = vpop.permute.xlu0 %1504
      %v1507 = vmul.f32 %v1505, %v1502
      %v1508 = vadd.f32 %v1499, %v1507
      %1510 = vset.pattern.permute.xlu0 0
      %1511 = vperm.xlu0 %1510, %v1446
      %v1512 = vpop.permute.xlu0 %1511
      %v1514 = vadd.f32 %v1508, %v1512
      %v1515 = vrot.slane %v1514, 4
      %v1516 = vadd.f32 %v1514, %v1515
      %v1517 = vrot.slane %v1516, 2
      %v1518 = vadd.f32 %v1516, %v1517
      %v1519 = vrot.slane %v1518, 1
      %v1520 = vadd.f32 %v1518, %v1519
      %v1521 = vmul.f32 %v1520, 0.125
      %v1522 = vmul.f32 %v1514, %v1514
      %v1523 = vrot.slane %v1522, 4
      %v1524 = vadd.f32 %v1522, %v1523
      %v1525 = vrot.slane %v1524, 2
      %v1526 = vadd.f32 %v1524, %v1525
      %v1527 = vrot.slane %v1526, 1
      %v1528 = vadd.f32 %v1526, %v1527
      %v1529 = vmul.f32 %v1528, 0.125
      %v1530 = vmul.f32 %v1521, %v1521
      %v1531 = vsub.f32 %v1529, %v1530
      %v1532 = vmax.f32 %v1531, 0.0
      %v1533 = vsub.f32 %v1514, %v1521
      %v1534 = vadd.f32 %v1532, 1e-05
      %v1535 = vrsqrt.pop %v1534
      %v1536 = vmul.f32 %v1535, %v1534
      %v1537 = vmul.f32 %v1536, %v1535
      %v1538 = vmul.f32 0.5, %v1537
      %v1539 = vsub.f32 1.5, %v1538
      %v1540 = vmul.f32 %v1535, %v1539
      %vm1541 = vweird.f32 %v1534
      %vm1542 = vweird.f32 %v1535
      %vm1543 = vmor %vm1541, %vm1542
      %v1544 = vsel %vm1543, %v1535, %v1540
      %v1545 = vmul.f32 %v1533, %v1544
      %1547 = vset.pattern.permute.xlu0 0
      %1548 = vperm.xlu0 %1547, %v1449
      %v1549 = vpop.permute.xlu0 %1548
      %v1551 = vmul.f32 %v1545, %v1549
      %1553 = vset.pattern.permute.xlu0 0
      %1554 = vperm.xlu0 %1553, %v1452
      %v1555 = vpop.permute.xlu0 %1554
      %v1557 = vadd.f32 %v1551, %v1555
      %v1558 = vmul.f32 %v1557, 0.5
      %v1559 = vmul.f32 %v1557, 0.044715
      %v1560 = vmul.f32 %v1559, %v1557
      %v1561 = vmul.f32 %v1560, %v1557
      %v1562 = vadd.f32 %v1557, %v1561
      %v1563 = vmul.f32 %v1562, 0.7978846
      %v1564 = vtanh.pop %v1563
      %v1565 = vadd.f32 %v1564, 1.0
      %v1566 = vmul.f32 %v1558, %v1565
      %v1567 = vpack.c.bf16 %v1455, %v1455
      %v1568 = vpack.c.bf16 %v1566, %v1566
      %1570 = vset.pattern.permute.xlu0 0
      %1571 = vperm.xlu0 %1570, %v1458
      %v1572 = vpop.permute.xlu0 %1571
      %v1575 = vsel %vm883, %v1567, 0
      %v1578 = vsel %vm887, %v1568, 0
      %1580 = vmatpush.bf16.msra.mxu0 0
      %1581 = vmatpush.bf16.msra.mxu0 0
      %1582 = vmatpush.bf16.msra.mxu0 0
      %1583 = vmatpush.bf16.msra.mxu0 0
      %1584 = vmatpush.bf16.msra.mxu0 0
      %1585 = vmatpush.bf16.msra.mxu0 0
      %1586 = vmatpush.bf16.msra.mxu0 0
      %1587 = vmatpush.bf16.msra.mxu0 %v1578
      %1588 = vmatmul.bf16.gmra.mxu0 %v1575
      %v1589 = vpop.f32.mrf.mxu0
      %v1590 = vadd.f32 %v1572, %v1589
      %v1591 = vpop.f32.mrf.mxu0
      %1592 = vdwg.mxu0
      %v1593 = vrot.slane %v1590, 4
      %v1594 = vadd.f32 %v1590, %v1593
      %v1595 = vrot.slane %v1594, 2
      %v1596 = vadd.f32 %v1594, %v1595
      %v1597 = vrot.slane %v1596, 1
      %v1598 = vadd.f32 %v1596, %v1597
      %v1599 = vmul.f32 %v1598, 0.125
      %v1600 = vmul.f32 %v1590, %v1590
      %v1601 = vrot.slane %v1600, 4
      %v1602 = vadd.f32 %v1600, %v1601
      %v1603 = vrot.slane %v1602, 2
      %v1604 = vadd.f32 %v1602, %v1603
      %v1605 = vrot.slane %v1604, 1
      %v1606 = vadd.f32 %v1604, %v1605
      %v1607 = vmul.f32 %v1606, 0.125
      %v1608 = vmul.f32 %v1599, %v1599
      %v1609 = vsub.f32 %v1607, %v1608
      %v1610 = vmax.f32 %v1609, 0.0
      %v1611 = vsub.f32 %v1590, %v1599
      %v1612 = vadd.f32 %v1610, 1e-05
      %v1613 = vrsqrt.pop %v1612
      %v1614 = vmul.f32 %v1613, %v1612
      %v1615 = vmul.f32 %v1614, %v1613
      %v1616 = vmul.f32 0.5, %v1615
      %v1617 = vsub.f32 1.5, %v1616
      %v1618 = vmul.f32 %v1613, %v1617
      %vm1619 = vweird.f32 %v1612
      %vm1620 = vweird.f32 %v1613
      %vm1621 = vmor %vm1619, %vm1620
      %v1622 = vsel %vm1621, %v1613, %v1618
      %v1623 = vmul.f32 %v1611, %v1622
      %1625 = vset.pattern.permute.xlu0 0
      %1626 = vperm.xlu0 %1625, %v1461
      %v1627 = vpop.permute.xlu0 %1626
      %v1629 = vmul.f32 %v1623, %v1627
      %1631 = vset.pattern.permute.xlu0 0
      %1632 = vperm.xlu0 %1631, %v1464
      %v1633 = vpop.permute.xlu0 %1632
      %v1635 = vadd.f32 %v1629, %v1633
      %v1636 = vmul.f32 %v1635, 0.5
      %v1637 = vmul.f32 %v1635, 0.044715
      %v1638 = vmul.f32 %v1637, %v1635
      %v1639 = vmul.f32 %v1638, %v1635
      %v1640 = vadd.f32 %v1635, %v1639
      %v1641 = vmul.f32 %v1640, 0.7978846
      %v1642 = vtanh.pop %v1641
      %v1643 = vadd.f32 %v1642, 1.0
      %v1644 = vmul.f32 %v1636, %v1643
      %v1645 = vadd.f32 %v1483, %v1644
      %v1646 = vmul.f32 %v1645, %v907
      %1647 = vrot.lane.b32.xlu0 %v1646, 3
      %v1648 = vpop.permute.xlu0 %1647
      %v1649 = vsel %vm1082, %v1648, 0.0
      %1651 = vset.pattern.permute.xlu0 0
      %1652 = vperm.xlu0 %1651, %v1444
      %v1653 = vpop.permute.xlu0 %1652
      %v1655 = vmul.f32 %v1653, %v1649
      %1656 = vset.pattern.permute.xlu0 1
      %1657 = vperm.xlu0 %1656, %v1444
      %v1658 = vpop.permute.xlu0 %1657
      %v1660 = vmul.f32 %v1658, %v1646
      %v1661 = vadd.f32 %v1655, %v1660
      %1662 = vrot.lane.b32.xlu0 %v1646, 125
      %v1663 = vpop.permute.xlu0 %1662
      %v1664 = vsel %vm1100, %v1663, 0.0
      %1665 = vset.pattern.permute.xlu0 2
      %1666 = vperm.xlu0 %1665, %v1444
      %v1667 = vpop.permute.xlu0 %1666
      %v1669 = vmul.f32 %v1667, %v1664
      %v1670 = vadd.f32 %v1661, %v1669
      %1672 = vset.pattern.permute.xlu0 0
      %1673 = vperm.xlu0 %1672, %v1447
      %v1674 = vpop.permute.xlu0 %1673
      %v1676 = vadd.f32 %v1670, %v1674
      %v1677 = vrot.slane %v1676, 4
      %v1678 = vadd.f32 %v1676, %v1677
      %v1679 = vrot.slane %v1678, 2
      %v1680 = vadd.f32 %v1678, %v1679
      %v1681 = vrot.slane %v1680, 1
      %v1682 = vadd.f32 %v1680, %v1681
      %v1683 = vmul.f32 %v1682, 0.125
      %v1684 = vmul.f32 %v1676, %v1676
      %v1685 = vrot.slane %v1684, 4
      %v1686 = vadd.f32 %v1684, %v1685
      %v1687 = vrot.slane %v1686, 2
      %v1688 = vadd.f32 %v1686, %v1687
      %v1689 = vrot.slane %v1688, 1
      %v1690 = vadd.f32 %v1688, %v1689
      %v1691 = vmul.f32 %v1690, 0.125
      %v1692 = vmul.f32 %v1683, %v1683
      %v1693 = vsub.f32 %v1691, %v1692
      %v1694 = vmax.f32 %v1693, 0.0
      %v1695 = vsub.f32 %v1676, %v1683
      %v1696 = vadd.f32 %v1694, 1e-05
      %v1697 = vrsqrt.pop %v1696
      %v1698 = vmul.f32 %v1697, %v1696
      %v1699 = vmul.f32 %v1698, %v1697
      %v1700 = vmul.f32 0.5, %v1699
      %v1701 = vsub.f32 1.5, %v1700
      %v1702 = vmul.f32 %v1697, %v1701
      %vm1703 = vweird.f32 %v1696
      %vm1704 = vweird.f32 %v1697
      %vm1705 = vmor %vm1703, %vm1704
      %v1706 = vsel %vm1705, %v1697, %v1702
      %v1707 = vmul.f32 %v1695, %v1706
      %1709 = vset.pattern.permute.xlu0 0
      %1710 = vperm.xlu0 %1709, %v1450
      %v1711 = vpop.permute.xlu0 %1710
      %v1713 = vmul.f32 %v1707, %v1711
      %1715 = vset.pattern.permute.xlu0 0
      %1716 = vperm.xlu0 %1715, %v1453
      %v1717 = vpop.permute.xlu0 %1716
      %v1719 = vadd.f32 %v1713, %v1717
      %v1720 = vmul.f32 %v1719, 0.5
      %v1721 = vmul.f32 %v1719, 0.044715
      %v1722 = vmul.f32 %v1721, %v1719
      %v1723 = vmul.f32 %v1722, %v1719
      %v1724 = vadd.f32 %v1719, %v1723
      %v1725 = vmul.f32 %v1724, 0.7978846
      %v1726 = vtanh.pop %v1725
      %v1727 = vadd.f32 %v1726, 1.0
      %v1728 = vmul.f32 %v1720, %v1727
      %v1729 = vpack.c.bf16 %v1456, %v1456
      %v1730 = vpack.c.bf16 %v1728, %v1728
      %1732 = vset.pattern.permute.xlu0 0
      %1733 = vperm.xlu0 %1732, %v1459
      %v1734 = vpop.permute.xlu0 %1733
      %v1737 = vsel %vm883, %v1729, 0
      %v1740 = vsel %vm887, %v1730, 0
      %1742 = vmatpush.bf16.msra.mxu0 0
      %1743 = vmatpush.bf16.msra.mxu0 0
      %1744 = vmatpush.bf16.msra.mxu0 0
      %1745 = vmatpush.bf16.msra.mxu0 0
      %1746 = vmatpush.bf16.msra.mxu0 0
      %1747 = vmatpush.bf16.msra.mxu0 0
      %1748 = vmatpush.bf16.msra.mxu0 0
      %1749 = vmatpush.bf16.msra.mxu0 %v1740
      %1750 = vmatmul.bf16.gmra.mxu0 %v1737
      %v1751 = vpop.f32.mrf.mxu0
      %v1752 = vadd.f32 %v1734, %v1751
      %v1753 = vpop.f32.mrf.mxu0
      %1754 = vdwg.mxu0
      %v1755 = vrot.slane %v1752, 4
      %v1756 = vadd.f32 %v1752, %v1755
      %v1757 = vrot.slane %v1756, 2
      %v1758 = vadd.f32 %v1756, %v1757
      %v1759 = vrot.slane %v1758, 1
      %v1760 = vadd.f32 %v1758, %v1759
      %v1761 = vmul.f32 %v1760, 0.125
      %v1762 = vmul.f32 %v1752, %v1752
      %v1763 = vrot.slane %v1762, 4
      %v1764 = vadd.f32 %v1762, %v1763
      %v1765 = vrot.slane %v1764, 2
      %v1766 = vadd.f32 %v1764, %v1765
      %v1767 = vrot.slane %v1766, 1
      %v1768 = vadd.f32 %v1766, %v1767
      %v1769 = vmul.f32 %v1768, 0.125
      %v1770 = vmul.f32 %v1761, %v1761
      %v1771 = vsub.f32 %v1769, %v1770
      %v1772 = vmax.f32 %v1771, 0.0
      %v1773 = vsub.f32 %v1752, %v1761
      %v1774 = vadd.f32 %v1772, 1e-05
      %v1775 = vrsqrt.pop %v1774
      %v1776 = vmul.f32 %v1775, %v1774
      %v1777 = vmul.f32 %v1776, %v1775
      %v1778 = vmul.f32 0.5, %v1777
      %v1779 = vsub.f32 1.5, %v1778
      %v1780 = vmul.f32 %v1775, %v1779
      %vm1781 = vweird.f32 %v1774
      %vm1782 = vweird.f32 %v1775
      %vm1783 = vmor %vm1781, %vm1782
      %v1784 = vsel %vm1783, %v1775, %v1780
      %v1785 = vmul.f32 %v1773, %v1784
      %1787 = vset.pattern.permute.xlu0 0
      %1788 = vperm.xlu0 %1787, %v1462
      %v1789 = vpop.permute.xlu0 %1788
      %v1791 = vmul.f32 %v1785, %v1789
      %1793 = vset.pattern.permute.xlu0 0
      %1794 = vperm.xlu0 %1793, %v1465
      %v1795 = vpop.permute.xlu0 %1794
      %v1797 = vadd.f32 %v1791, %v1795
      %v1798 = vmul.f32 %v1797, 0.5
      %v1799 = vmul.f32 %v1797, 0.044715
      %v1800 = vmul.f32 %v1799, %v1797
      %v1801 = vmul.f32 %v1800, %v1797
      %v1802 = vadd.f32 %v1797, %v1801
      %v1803 = vmul.f32 %v1802, 0.7978846
      %v1804 = vtanh.pop %v1803
      %v1805 = vadd.f32 %v1804, 1.0
      %v1806 = vmul.f32 %v1798, %v1805
      %v1807 = vadd.f32 %v1645, %v1806
      %v1808 = vmul.f32 %v1807, %v907
      %1809 = vrot.lane.b32.xlu0 %v1808, 9
      %v1810 = vpop.permute.xlu0 %1809
      %v1811 = vsel %vm1250, %v1810, 0.0
      %1813 = vset.pattern.permute.xlu0 0
      %1814 = vperm.xlu0 %1813, %v1445
      %v1815 = vpop.permute.xlu0 %1814
      %v1817 = vmul.f32 %v1815, %v1811
      %1818 = vset.pattern.permute.xlu0 1
      %1819 = vperm.xlu0 %1818, %v1445
      %v1820 = vpop.permute.xlu0 %1819
      %v1822 = vmul.f32 %v1820, %v1808
      %v1823 = vadd.f32 %v1817, %v1822
      %1824 = vrot.lane.b32.xlu0 %v1808, 119
      %v1825 = vpop.permute.xlu0 %1824
      %v1826 = vsel %vm1268, %v1825, 0.0
      %1827 = vset.pattern.permute.xlu0 2
      %1828 = vperm.xlu0 %1827, %v1445
      %v1829 = vpop.permute.xlu0 %1828
      %v1831 = vmul.f32 %v1829, %v1826
      %v1832 = vadd.f32 %v1823, %v1831
      %1834 = vset.pattern.permute.xlu0 0
      %1835 = vperm.xlu0 %1834, %v1448
      %v1836 = vpop.permute.xlu0 %1835
      %v1838 = vadd.f32 %v1832, %v1836
      %v1839 = vrot.slane %v1838, 4
      %v1840 = vadd.f32 %v1838, %v1839
      %v1841 = vrot.slane %v1840, 2
      %v1842 = vadd.f32 %v1840, %v1841
      %v1843 = vrot.slane %v1842, 1
      %v1844 = vadd.f32 %v1842, %v1843
      %v1845 = vmul.f32 %v1844, 0.125
      %v1846 = vmul.f32 %v1838, %v1838
      %v1847 = vrot.slane %v1846, 4
      %v1848 = vadd.f32 %v1846, %v1847
      %v1849 = vrot.slane %v1848, 2
      %v1850 = vadd.f32 %v1848, %v1849
      %v1851 = vrot.slane %v1850, 1
      %v1852 = vadd.f32 %v1850, %v1851
      %v1853 = vmul.f32 %v1852, 0.125
      %v1854 = vmul.f32 %v1845, %v1845
      %v1855 = vsub.f32 %v1853, %v1854
      %v1856 = vmax.f32 %v1855, 0.0
      %v1857 = vsub.f32 %v1838, %v1845
      %v1858 = vadd.f32 %v1856, 1e-05
      %v1859 = vrsqrt.pop %v1858
      %v1860 = vmul.f32 %v1859, %v1858
      %v1861 = vmul.f32 %v1860, %v1859
      %v1862 = vmul.f32 0.5, %v1861
      %v1863 = vsub.f32 1.5, %v1862
      %v1864 = vmul.f32 %v1859, %v1863
      %vm1865 = vweird.f32 %v1858
      %vm1866 = vweird.f32 %v1859
      %vm1867 = vmor %vm1865, %vm1866
      %v1868 = vsel %vm1867, %v1859, %v1864
      %v1869 = vmul.f32 %v1857, %v1868
      %1871 = vset.pattern.permute.xlu0 0
      %1872 = vperm.xlu0 %1871, %v1451
      %v1873 = vpop.permute.xlu0 %1872
      %v1875 = vmul.f32 %v1869, %v1873
      %1877 = vset.pattern.permute.xlu0 0
      %1878 = vperm.xlu0 %1877, %v1454
      %v1879 = vpop.permute.xlu0 %1878
      %v1881 = vadd.f32 %v1875, %v1879
      %v1882 = vmul.f32 %v1881, 0.5
      %v1883 = vmul.f32 %v1881, 0.044715
      %v1884 = vmul.f32 %v1883, %v1881
      %v1885 = vmul.f32 %v1884, %v1881
      %v1886 = vadd.f32 %v1881, %v1885
      %v1887 = vmul.f32 %v1886, 0.7978846
      %v1888 = vtanh.pop %v1887
      %v1889 = vadd.f32 %v1888, 1.0
      %v1890 = vmul.f32 %v1882, %v1889
      %v1891 = vpack.c.bf16 %v1457, %v1457
      %v1892 = vpack.c.bf16 %v1890, %v1890
      %1894 = vset.pattern.permute.xlu0 0
      %1895 = vperm.xlu0 %1894, %v1460
      %v1896 = vpop.permute.xlu0 %1895
      %v1899 = vsel %vm883, %v1891, 0
      %v1902 = vsel %vm887, %v1892, 0
      %1904 = vmatpush.bf16.msra.mxu0 0
      %1905 = vmatpush.bf16.msra.mxu0 0
      %1906 = vmatpush.bf16.msra.mxu0 0
      %1907 = vmatpush.bf16.msra.mxu0 0
      %1908 = vmatpush.bf16.msra.mxu0 0
      %1909 = vmatpush.bf16.msra.mxu0 0
      %1910 = vmatpush.bf16.msra.mxu0 0
      %1911 = vmatpush.bf16.msra.mxu0 %v1902
      %1912 = vmatmul.bf16.gmra.mxu0 %v1899
      %v1913 = vpop.f32.mrf.mxu0
      %v1914 = vadd.f32 %v1896, %v1913
      %v1915 = vpop.f32.mrf.mxu0
      %1916 = vdwg.mxu0
      %v1917 = vrot.slane %v1914, 4
      %v1918 = vadd.f32 %v1914, %v1917
      %v1919 = vrot.slane %v1918, 2
      %v1920 = vadd.f32 %v1918, %v1919
      %v1921 = vrot.slane %v1920, 1
      %v1922 = vadd.f32 %v1920, %v1921
      %v1923 = vmul.f32 %v1922, 0.125
      %v1924 = vmul.f32 %v1914, %v1914
      %v1925 = vrot.slane %v1924, 4
      %v1926 = vadd.f32 %v1924, %v1925
      %v1927 = vrot.slane %v1926, 2
      %v1928 = vadd.f32 %v1926, %v1927
      %v1929 = vrot.slane %v1928, 1
      %v1930 = vadd.f32 %v1928, %v1929
      %v1931 = vmul.f32 %v1930, 0.125
      %v1932 = vmul.f32 %v1923, %v1923
      %v1933 = vsub.f32 %v1931, %v1932
      %v1934 = vmax.f32 %v1933, 0.0
      %v1935 = vsub.f32 %v1914, %v1923
      %v1936 = vadd.f32 %v1934, 1e-05
      %v1937 = vrsqrt.pop %v1936
      %v1938 = vmul.f32 %v1937, %v1936
      %v1939 = vmul.f32 %v1938, %v1937
      %v1940 = vmul.f32 0.5, %v1939
      %v1941 = vsub.f32 1.5, %v1940
      %v1942 = vmul.f32 %v1937, %v1941
      %vm1943 = vweird.f32 %v1936
      %vm1944 = vweird.f32 %v1937
      %vm1945 = vmor %vm1943, %vm1944
      %v1946 = vsel %vm1945, %v1937, %v1942
      %v1947 = vmul.f32 %v1935, %v1946
      %1949 = vset.pattern.permute.xlu0 0
      %1950 = vperm.xlu0 %1949, %v1463
      %v1951 = vpop.permute.xlu0 %1950
      %v1953 = vmul.f32 %v1947, %v1951
      %1955 = vset.pattern.permute.xlu0 0
      %1956 = vperm.xlu0 %1955, %v1466
      %v1957 = vpop.permute.xlu0 %1956
      %v1959 = vadd.f32 %v1953, %v1957
      %v1960 = vmul.f32 %v1959, 0.5
      %v1961 = vmul.f32 %v1959, 0.044715
      %v1962 = vmul.f32 %v1961, %v1959
      %v1963 = vmul.f32 %v1962, %v1959
      %v1964 = vadd.f32 %v1959, %v1963
      %v1965 = vmul.f32 %v1964, 0.7978846
      %v1966 = vtanh.pop %v1965
      %v1967 = vadd.f32 %v1966, 1.0
      %v1968 = vmul.f32 %v1960, %v1967
      %v1969 = vadd.f32 %v1807, %v1968
      %v1970 = vmul.f32 %v1969, %v907
      %v1971 = vpack.c.bf16 %v1467, %v1467
      %v1972 = vpack.c.bf16 %v1970, %v1970
      %1974 = vset.pattern.permute.xlu0 0
      %1975 = vperm.xlu0 %1974, %v1468
      %v1976 = vpop.permute.xlu0 %1975
      %v1979 = vsel %vm883, %v1971, 0
      %v1982 = vsel %vm887, %v1972, 0
      %1984 = vmatpush.bf16.msra.mxu0 0
      %1985 = vmatpush.bf16.msra.mxu0 0
      %1986 = vmatpush.bf16.msra.mxu0 0
      %1987 = vmatpush.bf16.msra.mxu0 0
      %1988 = vmatpush.bf16.msra.mxu0 0
      %1989 = vmatpush.bf16.msra.mxu0 0
      %1990 = vmatpush.bf16.msra.mxu0 0
      %1991 = vmatpush.bf16.msra.mxu0 %v1982
      %1992 = vmatmul.bf16.gmra.mxu0 %v1979
      %v1993 = vpop.f32.mrf.mxu0
      %v1994 = vadd.f32 %v1976, %v1993
      %v1995 = vpop.f32.mrf.mxu0
      %1996 = vdwg.mxu0
      %v1997 = vmul.f32 %v1994, %v907
      %v1998 = vadd.f32 %v1440, %v1997
      %v1999 = vpack.c.bf16 %v1998, %v1998
      %2000 = vst [vmem:[%s843] sm:$0xf] %v1999
      %v2001 = vpack.c.bf16 %v1440, %v1440
      %s2002 = scalar_lea.vmem %s843, 4
      %2003 = vst [vmem:[%s2002] sm:$0xf] %v2001
      %p2004 = scmp.lt.s32.totalorder %s38, 1
      %s2005 = scalar_select %p2004, %s38, 1
      %s2006 = smul.addr %s2005, 2
      %s2007 = smul.addr %s2006, 4
      %s2008 = scalar_lea.vmem %s27, %s2007
      // Predicated region
      $region129: #{sdp_forward.2} parent=127 // pred_check
        %p2009 = pneg %p638
      $region130: #{sdp_forward.2} parent=127 // pred_check_branch
        %2011 = sbr.rel (%p2009) target = $region132
      $region131: #{sdp_forward.2} parent=127 // pred_region
        _
      $region132: #{sdp_forward.2} parent=127 // pred_fallthru
        _
    $region128: #{sdp_forward.2} parent=5 // pred_fallthru
      _
    %p2012 = scmp.le.s32.totalorder 2, %s33
    // Predicated region
    $region133: #{sdp_forward.2} parent=5 // pred_check
      %p2013 = pneg %p2012
    $region134: #{sdp_forward.2} parent=5 // pred_check_branch
      %2015 = sbr.rel (%p2013) target = $region136
    $region135: #{sdp_forward.2} parent=5 // pred_region
      %s2016 = ssub.s32 %s33, 2
      // Predicated region
      $region137: #{sdp_forward.2} parent=135 // pred_check
        %p2017 = pneg %p644
      $region138: #{sdp_forward.2} parent=135 // pred_check_branch
        %2019 = sbr.rel (%p2017) target = $region140
      $region139: #{sdp_forward.2} parent=135 // pred_region
        %p2020 = scmp.lt.s32.totalorder %s39, 1
        %s2021 = scalar_select %p2020, %s39, 1
        %s2022 = smul.addr %s2021, 2
        %s2023 = smul.addr %s2022, 4
        %s2024 = scalar_lea.vmem %s27, %s2023
      $region140: #{sdp_forward.2} parent=135 // pred_fallthru
        _
    $region136: #{sdp_forward.2} parent=5 // pred_fallthru
      _
  $region6: #{sdp_forward.2} parent=0 // loop_footer
    %s37 = sadd.s32 1, %s33
  $region7: #{sdp_forward.2} parent=0 // loop_footer_branch
    %32 = sbr.rel target = $region3
  $region8: #{sdp_forward.2} parent=0 // loop_exit
    _

// kernel: sdp_forward.3
$region0: #{sdp_forward.3}
  #allocation0 [shape = 'u32[]', space=smem, size = 0x4, offset = 0x4, fixed_abs, tag = 'smem constant byte address 0x4 - core index']
  #allocation1 [shape = 'u32[72,128]{1,0:T(1,128)}', space=vmem, size = 0x9000, scoped, tag = 'internal scratch']
  #allocation2 [shape = 'f32[2,128]{1,0:T(2,128)}', space=vmem, size = 0x400, scoped, tag = 'scratch operand']
  #allocation3 [shape = 'f32[1,1]{1,0:T(1,128)}', space=vmem, size = 0x200, scoped, tag = 'scratch operand']
  #allocation4 [shape = 'f32[1,1]{1,0:T(1,128)}', space=vmem, size = 0x200, scoped, tag = 'scratch operand']
  #allocation5 [shape = 'f32[1,1]{1,0:T(1,128)}', space=vmem, size = 0x200, scoped, tag = 'scratch operand']
  %s0 = inlined_call_operand.vmem [shape: f32[2,2,128], index: 0, kind: input, shape index: {}]
  %s1 = inlined_call_operand.vmem [shape: f32[2,1,128], index: 1, kind: input, shape index: {}]
  %s2 = inlined_call_operand.vmem [shape: f32[2,1,128], index: 2, kind: input, shape index: {}]
  %s3 = inlined_call_operand.vmem [shape: bf16[2,2,8,128], index: 3, kind: input, shape index: {}]
  %s4 = inlined_call_operand.vmem [shape: f32[2,2,1], index: 4, kind: input, shape index: {}]
  %s5 = inlined_call_operand.vmem [shape: f32[2,2,1], index: 5, kind: input, shape index: {}]
  %s6 = inlined_call_operand.vmem [shape: f32[8,8,1], index: 6, kind: input, shape index: {}]
  %s7 = inlined_call_operand.vmem [shape: f32[8,8,1], index: 7, kind: input, shape index: {}]
  %s8 = inlined_call_operand.vmem [shape: f32[8,3,8,3], index: 8, kind: input, shape index: {}]
  %s9 = inlined_call_operand.vmem [shape: f32[8,3,8,1], index: 9, kind: input, shape index: {}]
  %s10 = inlined_call_operand.vmem [shape: f32[8,3,8,1], index: 10, kind: input, shape index: {}]
  %s11 = inlined_call_operand.vmem [shape: f32[8,3,8,1], index: 11, kind: input, shape index: {}]
  %s12 = inlined_call_operand.vmem [shape: f32[8,3,8,8], index: 12, kind: input, shape index: {}]
  %s13 = inlined_call_operand.vmem [shape: f32[8,3,8,1], index: 13, kind: input, shape index: {}]
  %s14 = inlined_call_operand.vmem [shape: f32[8,3,8,1], index: 14, kind: input, shape index: {}]
  %s15 = inlined_call_operand.vmem [shape: f32[8,3,8,1], index: 15, kind: input, shape index: {}]
  %s16 = inlined_call_operand.vmem [shape: f32[8,29,8], index: 16, kind: input, shape index: {}]
  %s17 = inlined_call_operand.vmem [shape: f32[8,29,1], index: 17, kind: input, shape index: {}]
  %s18 = inlined_call_operand.vmem [shape: f32[2,1,1], index: 18, kind: output, shape index: {}]
  %s19 = sld [smem:[#allocation0]]
  $region117: #{sdp_forward.3} parent=0
    _
  %s21 = ssub.s32 1, %s19
  %s22 = scalar_select 0, %s21, %s19
  loop: start=0, step=1, limit=18
  $region2: #{sdp_forward.3} parent=0 // loop_pre_header
    _
  $region3: #{sdp_forward.3} parent=0 // loop_header
    %s24 = sphi 0, %s28
    %p25 = scmp.ge.s32.totalorder %s24, 18
    %s31 = sphi 0, %s43
    %s32 = sphi 0, %s39
    %s33 = sphi 0, %s31
    %s34 = sphi 0, %s32
    %s35 = sphi 0, %s33
    %s36 = sphi 0, %s34
    %s46 = sphi 0, %s48
    %s49 = sphi 0, %s46
    %s50 = sphi 0, %s49
    %s66 = sphi 0, %s50
    %s72 = sphi 0, %s74
    %s75 = sphi 0, %s72
    %s76 = sphi 0, %s75
    %s92 = sphi 0, %s76
    %s98 = sphi 0, %s100
    %s101 = sphi 0, %s98
    %s102 = sphi 0, %s101
    %s118 = sphi 0, %s102
    %s130 = sphi 0, %s132
    %s133 = sphi 0, %s130
    %s134 = sphi 0, %s133
    %s150 = sphi 0, %s134
    %s154 = sphi 0, %s154
    %s156 = sphi 0, %s154
    %s157 = sphi 0, %s156
    %s171 = sphi 0, %s157
    %s175 = sphi 0, %s175
    %s177 = sphi 0, %s175
    %s178 = sphi 0, %s177
    %s192 = sphi 0, %s178
    %s198 = sphi 0, %s200
    %s201 = sphi 0, %s198
    %s202 = sphi 0, %s201
    %s218 = sphi 0, %s202
    %s224 = sphi 0, %s226
    %s227 = sphi 0, %s224
    %s228 = sphi 0, %s227
    %s244 = sphi 0, %s228
    %s250 = sphi 0, %s252
    %s253 = sphi 0, %s250
    %s254 = sphi 0, %s253
    %s270 = sphi 0, %s254
    %s276 = sphi 0, %s278
    %s279 = sphi 0, %s276
    %s280 = sphi 0, %s279
    %s296 = sphi 0, %s280
    %s302 = sphi 0, %s304
    %s305 = sphi 0, %s302
    %s306 = sphi 0, %s305
    %s322 = sphi 0, %s306
    %s328 = sphi 0, %s330
    %s331 = sphi 0, %s328
    %s332 = sphi 0, %s331
    %s348 = sphi 0, %s332
    %s354 = sphi 0, %s356
    %s357 = sphi 0, %s354
    %s358 = sphi 0, %s357
    %s374 = sphi 0, %s358
    %s380 = sphi 0, %s382
    %s383 = sphi 0, %s380
    %s384 = sphi 0, %s383
    %s400 = sphi 0, %s384
    %s406 = sphi 0, %s408
    %s409 = sphi 0, %s406
    %s410 = sphi 0, %s409
    %s426 = sphi 0, %s410
    %s432 = sphi 0, %s434
    %s435 = sphi 0, %s432
    %s436 = sphi 0, %s435
    %s452 = sphi 0, %s436
    %s458 = sphi 0, %s460
    %s461 = sphi 0, %s458
    %s462 = sphi 0, %s461
    %s478 = sphi 0, %s462
    %s484 = sphi 0, %s486
    %s487 = sphi 0, %s484
    %s488 = sphi 0, %s487
    %s504 = sphi 0, %s488
    %s510 = sphi 0, %s512
    %s513 = sphi 0, %s510
    %s514 = sphi 0, %s513
    %s530 = sphi 0, %s514
  $region4: #{sdp_forward.3} parent=0 // loop_header_branch
    %27 = sbr.rel (%p25) target = $region8
  $region5: #{sdp_forward.3} parent=0 // loop_body
    %s29 = ssub.s32 %s24, 1
    %s30 = ssub.s32 %s24, 2
    %s37 = sadd.s32 1, %s32
    %p38 = scmp.ge.s32.totalorder %s37, 8
    %s39 = scalar_select %p38, 0, %s37
    %s40 = sadd.s32 1, %s31
    %s41 = scalar_select %p38, %s40, %s31
    %p42 = scmp.ge.s32.totalorder %s41, 2
    %s43 = scalar_select %p42, 0, %s41
    %s44 = ssub.s32 %s31, %s43
    %p45 = scmp.eq.s32.totalorder %s44, 0
    %s47 = sadd.s32 %s46, 1
    %s48 = scalar_select %p45, %s46, %s47
    %p51 = pneg %p45
    %p52 = scmp.eq.s32.totalorder %s24, 15
    %p53 = por %p51, %p52
    %p54 = scmp.ne.s32.totalorder %s46, %s49
    %p55 = scmp.eq.s32.totalorder %s24, 0
    %p56 = por %p54, %p55
    %p57 = scmp.ne.s32.totalorder %s46, %s49
    %p58 = scmp.eq.s32.totalorder %s29, 15
    %p59 = por %p57, %p58
    %p60 = scmp.ne.s32.totalorder %s49, %s50
    %p61 = scmp.eq.s32.totalorder %s29, 0
    %p62 = por %p60, %p61
    %p63 = scmp.ne.s32.totalorder %s49, %s50
    %p64 = scmp.eq.s32.totalorder %s30, 15
    %p65 = por %p63, %p64
    %p67 = scmp.ne.s32.totalorder %s50, %s66
    %p68 = scmp.eq.s32.totalorder %s30, 0
    %p69 = por %p67, %p68
    %s70 = ssub.s32 %s31, %s43
    %p71 = scmp.eq.s32.totalorder %s70, 0
    %s73 = sadd.s32 %s72, 1
    %s74 = scalar_select %p71, %s72, %s73
    %p77 = pneg %p71
    %p78 = scmp.eq.s32.totalorder %s24, 15
    %p79 = por %p77, %p78
    %p80 = scmp.ne.s32.totalorder %s72, %s75
    %p81 = scmp.eq.s32.totalorder %s24, 0
    %p82 = por %p80, %p81
    %p83 = scmp.ne.s32.totalorder %s72, %s75
    %p84 = scmp.eq.s32.totalorder %s29, 15
    %p85 = por %p83, %p84
    %p86 = scmp.ne.s32.totalorder %s75, %s76
    %p87 = scmp.eq.s32.totalorder %s29, 0
    %p88 = por %p86, %p87
    %p89 = scmp.ne.s32.totalorder %s75, %s76
    %p90 = scmp.eq.s32.totalorder %s30, 15
    %p91 = por %p89, %p90
    %p93 = scmp.ne.s32.totalorder %s76, %s92
    %p94 = scmp.eq.s32.totalorder %s30, 0
    %p95 = por %p93, %p94
    %s96 = ssub.s32 %s31, %s43
    %p97 = scmp.eq.s32.totalorder %s96, 0
    %s99 = sadd.s32 %s98, 1
    %s100 = scalar_select %p97, %s98, %s99
    %p103 = pneg %p97
    %p104 = scmp.eq.s32.totalorder %s24, 15
    %p105 = por %p103, %p104
    %p106 = scmp.ne.s32.totalorder %s98, %s101
    %p107 = scmp.eq.s32.totalorder %s24, 0
    %p108 = por %p106, %p107
    %p109 = scmp.ne.s32.totalorder %s98, %s101
    %p110 = scmp.eq.s32.totalorder %s29, 15
    %p111 = por %p109, %p110
    %p112 = scmp.ne.s32.totalorder %s101, %s102
    %p113 = scmp.eq.s32.totalorder %s29, 0
    %p114 = por %p112, %p113
    %p115 = scmp.ne.s32.totalorder %s101, %s102
    %p116 = scmp.eq.s32.totalorder %s30, 15
    %p117 = por %p115, %p116
    %p119 = scmp.ne.s32.totalorder %s102, %s118
    %p120 = scmp.eq.s32.totalorder %s30, 0
    %p121 = por %p119, %p120
    %p122 = scmp.ge.s32.totalorder %s32, 4
    %s123 = scalar_select %p122, 1, 0
    %p124 = scmp.ge.s32.totalorder %s39, 4
    %s125 = scalar_select %p124, 1, 0
    %s126 = ssub.s32 %s31, %s43
    %s127 = ssub.s32 %s123, %s125
    %s128 = sor.u32 %s126, %s127
    %p129 = scmp.eq.s32.totalorder %s128, 0
    %s131 = sadd.s32 %s130, 1
    %s132 = scalar_select %p129, %s130, %s131
    %p135 = pneg %p129
    %p136 = scmp.eq.s32.totalorder %s24, 15
    %p137 = por %p135, %p136
    %p138 = scmp.ne.s32.totalorder %s130, %s133
    %p139 = scmp.eq.s32.totalorder %s24, 0
    %p140 = por %p138, %p139
    %p141 = scmp.ne.s32.totalorder %s130, %s133
    %p142 = scmp.eq.s32.totalorder %s29, 15
    %p143 = por %p141, %p142
    %p144 = scmp.ne.s32.totalorder %s133, %s134
    %p145 = scmp.eq.s32.totalorder %s29, 0
    %p146 = por %p144, %p145
    %p147 = scmp.ne.s32.totalorder %s133, %s134
    %p148 = scmp.eq.s32.totalorder %s30, 15
    %p149 = por %p147, %p148
    %p151 = scmp.ne.s32.totalorder %s134, %s150
    %p152 = scmp.eq.s32.totalorder %s30, 0
    %p153 = por %p151, %p152
    %s155 = sadd.s32 %s154, 1
    %p158 = scmp.eq.s32.totalorder %s24, 15
    %p159 = scmp.ne.s32.totalorder %s154, %s156
    %p160 = scmp.eq.s32.totalorder %s24, 0
    %p161 = por %p159, %p160
    %p162 = scmp.ne.s32.totalorder %s154, %s156
    %p163 = scmp.eq.s32.totalorder %s29, 15
    %p164 = por %p162, %p163
    %p165 = scmp.ne.s32.totalorder %s156, %s157
    %p166 = scmp.eq.s32.totalorder %s29, 0
    %p167 = por %p165, %p166
    %p168 = scmp.ne.s32.totalorder %s156, %s157
    %p169 = scmp.eq.s32.totalorder %s30, 15
    %p170 = por %p168, %p169
    %p172 = scmp.ne.s32.totalorder %s157, %s171
    %p173 = scmp.eq.s32.totalorder %s30, 0
    %p174 = por %p172, %p173
    %s176 = sadd.s32 %s175, 1
    %p179 = scmp.eq.s32.totalorder %s24, 15
    %p180 = scmp.ne.s32.totalorder %s175, %s177
    %p181 = scmp.eq.s32.totalorder %s24, 0
    %p182 = por %p180, %p181
    %p183 = scmp.ne.s32.totalorder %s175, %s177
    %p184 = scmp.eq.s32.totalorder %s29, 15
    %p185 = por %p183, %p184
    %p186 = scmp.ne.s32.totalorder %s177, %s178
    %p187 = scmp.eq.s32.totalorder %s29, 0
    %p188 = por %p186, %p187
    %p189 = scmp.ne.s32.totalorder %s177, %s178
    %p190 = scmp.eq.s32.totalorder %s30, 15
    %p191 = por %p189, %p190
    %p193 = scmp.ne.s32.totalorder %s178, %s192
    %p194 = scmp.eq.s32.totalorder %s30, 0
    %p195 = por %p193, %p194
    %s196 = ssub.s32 %s32, %s39
    %p197 = scmp.eq.s32.totalorder %s196, 0
    %s199 = sadd.s32 %s198, 1
    %s200 = scalar_select %p197, %s198, %s199
    %p203 = pneg %p197
    %p204 = scmp.eq.s32.totalorder %s24, 15
    %p205 = por %p203, %p204
    %p206 = scmp.ne.s32.totalorder %s198, %s201
    %p207 = scmp.eq.s32.totalorder %s24, 0
    %p208 = por %p206, %p207
    %p209 = scmp.ne.s32.totalorder %s198, %s201
    %p210 = scmp.eq.s32.totalorder %s29, 15
    %p211 = por %p209, %p210
    %p212 = scmp.ne.s32.totalorder %s201, %s202
    %p213 = scmp.eq.s32.totalorder %s29, 0
    %p214 = por %p212, %p213
    %p215 = scmp.ne.s32.totalorder %s201, %s202
    %p216 = scmp.eq.s32.totalorder %s30, 15
    %p217 = por %p215, %p216
    %p219 = scmp.ne.s32.totalorder %s202, %s218
    %p220 = scmp.eq.s32.totalorder %s30, 0
    %p221 = por %p219, %p220
    %s222 = ssub.s32 %s32, %s39
    %p223 = scmp.eq.s32.totalorder %s222, 0
    %s225 = sadd.s32 %s224, 1
    %s226 = scalar_select %p223, %s224, %s225
    %p229 = pneg %p223
    %p230 = scmp.eq.s32.totalorder %s24, 15
    %p231 = por %p229, %p230
    %p232 = scmp.ne.s32.totalorder %s224, %s227
    %p233 = scmp.eq.s32.totalorder %s24, 0
    %p234 = por %p232, %p233
    %p235 = scmp.ne.s32.totalorder %s224, %s227
    %p236 = scmp.eq.s32.totalorder %s29, 15
    %p237 = por %p235, %p236
    %p238 = scmp.ne.s32.totalorder %s227, %s228
    %p239 = scmp.eq.s32.totalorder %s29, 0
    %p240 = por %p238, %p239
    %p241 = scmp.ne.s32.totalorder %s227, %s228
    %p242 = scmp.eq.s32.totalorder %s30, 15
    %p243 = por %p241, %p242
    %p245 = scmp.ne.s32.totalorder %s228, %s244
    %p246 = scmp.eq.s32.totalorder %s30, 0
    %p247 = por %p245, %p246
    %s248 = ssub.s32 %s32, %s39
    %p249 = scmp.eq.s32.totalorder %s248, 0
    %s251 = sadd.s32 %s250, 1
    %s252 = scalar_select %p249, %s250, %s251
    %p255 = pneg %p249
    %p256 = scmp.eq.s32.totalorder %s24, 15
    %p257 = por %p255, %p256
    %p258 = scmp.ne.s32.totalorder %s250, %s253
    %p259 = scmp.eq.s32.totalorder %s24, 0
    %p260 = por %p258, %p259
    %p261 = scmp.ne.s32.totalorder %s250, %s253
    %p262 = scmp.eq.s32.totalorder %s29, 15
    %p263 = por %p261, %p262
    %p264 = scmp.ne.s32.totalorder %s253, %s254
    %p265 = scmp.eq.s32.totalorder %s29, 0
    %p266 = por %p264, %p265
    %p267 = scmp.ne.s32.totalorder %s253, %s254
    %p268 = scmp.eq.s32.totalorder %s30, 15
    %p269 = por %p267, %p268
    %p271 = scmp.ne.s32.totalorder %s254, %s270
    %p272 = scmp.eq.s32.totalorder %s30, 0
    %p273 = por %p271, %p272
    %s274 = ssub.s32 %s32, %s39
    %p275 = scmp.eq.s32.totalorder %s274, 0
    %s277 = sadd.s32 %s276, 1
    %s278 = scalar_select %p275, %s276, %s277
    %p281 = pneg %p275
    %p282 = scmp.eq.s32.totalorder %s24, 15
    %p283 = por %p281, %p282
    %p284 = scmp.ne.s32.totalorder %s276, %s279
    %p285 = scmp.eq.s32.totalorder %s24, 0
    %p286 = por %p284, %p285
    %p287 = scmp.ne.s32.totalorder %s276, %s279
    %p288 = scmp.eq.s32.totalorder %s29, 15
    %p289 = por %p287, %p288
    %p290 = scmp.ne.s32.totalorder %s279, %s280
    %p291 = scmp.eq.s32.totalorder %s29, 0
    %p292 = por %p290, %p291
    %p293 = scmp.ne.s32.totalorder %s279, %s280
    %p294 = scmp.eq.s32.totalorder %s30, 15
    %p295 = por %p293, %p294
    %p297 = scmp.ne.s32.totalorder %s280, %s296
    %p298 = scmp.eq.s32.totalorder %s30, 0
    %p299 = por %p297, %p298
    %s300 = ssub.s32 %s32, %s39
    %p301 = scmp.eq.s32.totalorder %s300, 0
    %s303 = sadd.s32 %s302, 1
    %s304 = scalar_select %p301, %s302, %s303
    %p307 = pneg %p301
    %p308 = scmp.eq.s32.totalorder %s24, 15
    %p309 = por %p307, %p308
    %p310 = scmp.ne.s32.totalorder %s302, %s305
    %p311 = scmp.eq.s32.totalorder %s24, 0
    %p312 = por %p310, %p311
    %p313 = scmp.ne.s32.totalorder %s302, %s305
    %p314 = scmp.eq.s32.totalorder %s29, 15
    %p315 = por %p313, %p314
    %p316 = scmp.ne.s32.totalorder %s305, %s306
    %p317 = scmp.eq.s32.totalorder %s29, 0
    %p318 = por %p316, %p317
    %p319 = scmp.ne.s32.totalorder %s305, %s306
    %p320 = scmp.eq.s32.totalorder %s30, 15
    %p321 = por %p319, %p320
    %p323 = scmp.ne.s32.totalorder %s306, %s322
    %p324 = scmp.eq.s32.totalorder %s30, 0
    %p325 = por %p323, %p324
    %s326 = ssub.s32 %s32, %s39
    %p327 = scmp.eq.s32.totalorder %s326, 0
    %s329 = sadd.s32 %s328, 1
    %s330 = scalar_select %p327, %s328, %s329
    %p333 = pneg %p327
    %p334 = scmp.eq.s32.totalorder %s24, 15
    %p335 = por %p333, %p334
    %p336 = scmp.ne.s32.totalorder %s328, %s331
    %p337 = scmp.eq.s32.totalorder %s24, 0
    %p338 = por %p336, %p337
    %p339 = scmp.ne.s32.totalorder %s328, %s331
    %p340 = scmp.eq.s32.totalorder %s29, 15
    %p341 = por %p339, %p340
    %p342 = scmp.ne.s32.totalorder %s331, %s332
    %p343 = scmp.eq.s32.totalorder %s29, 0
    %p344 = por %p342, %p343
    %p345 = scmp.ne.s32.totalorder %s331, %s332
    %p346 = scmp.eq.s32.totalorder %s30, 15
    %p347 = por %p345, %p346
    %p349 = scmp.ne.s32.totalorder %s332, %s348
    %p350 = scmp.eq.s32.totalorder %s30, 0
    %p351 = por %p349, %p350
    %s352 = ssub.s32 %s32, %s39
    %p353 = scmp.eq.s32.totalorder %s352, 0
    %s355 = sadd.s32 %s354, 1
    %s356 = scalar_select %p353, %s354, %s355
    %p359 = pneg %p353
    %p360 = scmp.eq.s32.totalorder %s24, 15
    %p361 = por %p359, %p360
    %p362 = scmp.ne.s32.totalorder %s354, %s357
    %p363 = scmp.eq.s32.totalorder %s24, 0
    %p364 = por %p362, %p363
    %p365 = scmp.ne.s32.totalorder %s354, %s357
    %p366 = scmp.eq.s32.totalorder %s29, 15
    %p367 = por %p365, %p366
    %p368 = scmp.ne.s32.totalorder %s357, %s358
    %p369 = scmp.eq.s32.totalorder %s29, 0
    %p370 = por %p368, %p369
    %p371 = scmp.ne.s32.totalorder %s357, %s358
    %p372 = scmp.eq.s32.totalorder %s30, 15
    %p373 = por %p371, %p372
    %p375 = scmp.ne.s32.totalorder %s358, %s374
    %p376 = scmp.eq.s32.totalorder %s30, 0
    %p377 = por %p375, %p376
    %s378 = ssub.s32 %s32, %s39
    %p379 = scmp.eq.s32.totalorder %s378, 0
    %s381 = sadd.s32 %s380, 1
    %s382 = scalar_select %p379, %s380, %s381
    %p385 = pneg %p379
    %p386 = scmp.eq.s32.totalorder %s24, 15
    %p387 = por %p385, %p386
    %p388 = scmp.ne.s32.totalorder %s380, %s383
    %p389 = scmp.eq.s32.totalorder %s24, 0
    %p390 = por %p388, %p389
    %p391 = scmp.ne.s32.totalorder %s380, %s383
    %p392 = scmp.eq.s32.totalorder %s29, 15
    %p393 = por %p391, %p392
    %p394 = scmp.ne.s32.totalorder %s383, %s384
    %p395 = scmp.eq.s32.totalorder %s29, 0
    %p396 = por %p394, %p395
    %p397 = scmp.ne.s32.totalorder %s383, %s384
    %p398 = scmp.eq.s32.totalorder %s30, 15
    %p399 = por %p397, %p398
    %p401 = scmp.ne.s32.totalorder %s384, %s400
    %p402 = scmp.eq.s32.totalorder %s30, 0
    %p403 = por %p401, %p402
    %s404 = ssub.s32 %s32, %s39
    %p405 = scmp.eq.s32.totalorder %s404, 0
    %s407 = sadd.s32 %s406, 1
    %s408 = scalar_select %p405, %s406, %s407
    %p411 = pneg %p405
    %p412 = scmp.eq.s32.totalorder %s24, 15
    %p413 = por %p411, %p412
    %p414 = scmp.ne.s32.totalorder %s406, %s409
    %p415 = scmp.eq.s32.totalorder %s24, 0
    %p416 = por %p414, %p415
    %p417 = scmp.ne.s32.totalorder %s406, %s409
    %p418 = scmp.eq.s32.totalorder %s29, 15
    %p419 = por %p417, %p418
    %p420 = scmp.ne.s32.totalorder %s409, %s410
    %p421 = scmp.eq.s32.totalorder %s29, 0
    %p422 = por %p420, %p421
    %p423 = scmp.ne.s32.totalorder %s409, %s410
    %p424 = scmp.eq.s32.totalorder %s30, 15
    %p425 = por %p423, %p424
    %p427 = scmp.ne.s32.totalorder %s410, %s426
    %p428 = scmp.eq.s32.totalorder %s30, 0
    %p429 = por %p427, %p428
    %s430 = ssub.s32 %s32, %s39
    %p431 = scmp.eq.s32.totalorder %s430, 0
    %s433 = sadd.s32 %s432, 1
    %s434 = scalar_select %p431, %s432, %s433
    %p437 = pneg %p431
    %p438 = scmp.eq.s32.totalorder %s24, 15
    %p439 = por %p437, %p438
    %p440 = scmp.ne.s32.totalorder %s432, %s435
    %p441 = scmp.eq.s32.totalorder %s24, 0
    %p442 = por %p440, %p441
    %p443 = scmp.ne.s32.totalorder %s432, %s435
    %p444 = scmp.eq.s32.totalorder %s29, 15
    %p445 = por %p443, %p444
    %p446 = scmp.ne.s32.totalorder %s435, %s436
    %p447 = scmp.eq.s32.totalorder %s29, 0
    %p448 = por %p446, %p447
    %p449 = scmp.ne.s32.totalorder %s435, %s436
    %p450 = scmp.eq.s32.totalorder %s30, 15
    %p451 = por %p449, %p450
    %p453 = scmp.ne.s32.totalorder %s436, %s452
    %p454 = scmp.eq.s32.totalorder %s30, 0
    %p455 = por %p453, %p454
    %s456 = ssub.s32 %s32, %s39
    %p457 = scmp.eq.s32.totalorder %s456, 0
    %s459 = sadd.s32 %s458, 1
    %s460 = scalar_select %p457, %s458, %s459
    %p463 = pneg %p457
    %p464 = scmp.eq.s32.totalorder %s24, 15
    %p465 = por %p463, %p464
    %p466 = scmp.ne.s32.totalorder %s458, %s461
    %p467 = scmp.eq.s32.totalorder %s24, 0
    %p468 = por %p466, %p467
    %p469 = scmp.ne.s32.totalorder %s458, %s461
    %p470 = scmp.eq.s32.totalorder %s29, 15
    %p471 = por %p469, %p470
    %p472 = scmp.ne.s32.totalorder %s461, %s462
    %p473 = scmp.eq.s32.totalorder %s29, 0
    %p474 = por %p472, %p473
    %p475 = scmp.ne.s32.totalorder %s461, %s462
    %p476 = scmp.eq.s32.totalorder %s30, 15
    %p477 = por %p475, %p476
    %p479 = scmp.ne.s32.totalorder %s462, %s478
    %p480 = scmp.eq.s32.totalorder %s30, 0
    %p481 = por %p479, %p480
    %s482 = ssub.s32 %s32, %s39
    %p483 = scmp.eq.s32.totalorder %s482, 0
    %s485 = sadd.s32 %s484, 1
    %s486 = scalar_select %p483, %s484, %s485
    %p489 = pneg %p483
    %p490 = scmp.eq.s32.totalorder %s24, 15
    %p491 = por %p489, %p490
    %p492 = scmp.ne.s32.totalorder %s484, %s487
    %p493 = scmp.eq.s32.totalorder %s24, 0
    %p494 = por %p492, %p493
    %p495 = scmp.ne.s32.totalorder %s484, %s487
    %p496 = scmp.eq.s32.totalorder %s29, 15
    %p497 = por %p495, %p496
    %p498 = scmp.ne.s32.totalorder %s487, %s488
    %p499 = scmp.eq.s32.totalorder %s29, 0
    %p500 = por %p498, %p499
    %p501 = scmp.ne.s32.totalorder %s487, %s488
    %p502 = scmp.eq.s32.totalorder %s30, 15
    %p503 = por %p501, %p502
    %p505 = scmp.ne.s32.totalorder %s488, %s504
    %p506 = scmp.eq.s32.totalorder %s30, 0
    %p507 = por %p505, %p506
    %s508 = ssub.s32 %s31, %s43
    %p509 = scmp.eq.s32.totalorder %s508, 0
    %s511 = sadd.s32 %s510, 1
    %s512 = scalar_select %p509, %s510, %s511
    %p515 = pneg %p509
    %p516 = scmp.eq.s32.totalorder %s24, 15
    %p517 = por %p515, %p516
    %p518 = scmp.ne.s32.totalorder %s510, %s513
    %p519 = scmp.eq.s32.totalorder %s24, 0
    %p520 = por %p518, %p519
    %p521 = scmp.ne.s32.totalorder %s510, %s513
    %p522 = scmp.eq.s32.totalorder %s29, 15
    %p523 = por %p521, %p522
    %p524 = scmp.ne.s32.totalorder %s513, %s514
    %p525 = scmp.eq.s32.totalorder %s29, 0
    %p526 = por %p524, %p525
    %p527 = scmp.ne.s32.totalorder %s513, %s514
    %p528 = scmp.eq.s32.totalorder %s30, 15
    %p529 = por %p527, %p528
    %p531 = scmp.ne.s32.totalorder %s514, %s530
    %p532 = scmp.eq.s32.totalorder %s30, 0
    %p533 = por %p531, %p532
    %p534 = scmp.le.s32.totalorder 1, %s24
    %p535 = scmp.lt.s32.totalorder %s24, 17
    %p536 = pnand %p534, %p535
    %p537 = pneg %p536
    // Predicated region
    $region9: #{sdp_forward.3} parent=5 // pred_check
      _
    $region10: #{sdp_forward.3} parent=5 // pred_check_branch
      %539 = sbr.rel (%p536) target = $region12
    $region11: #{sdp_forward.3} parent=5 // pred_region
      %s540 = ssub.s32 %s24, 1
      // Predicated region
      $region13: #{sdp_forward.3} parent=11 // pred_check
        %p541 = pneg %p167
      $region14: #{sdp_forward.3} parent=11 // pred_check_branch
        %543 = sbr.rel (%p541) target = $region16
      $region15: #{sdp_forward.3} parent=11 // pred_region
        _
      $region16: #{sdp_forward.3} parent=11 // pred_fallthru
        _
      // Predicated region
      $region17: #{sdp_forward.3} parent=11 // pred_check
        %p544 = pneg %p188
      $region18: #{sdp_forward.3} parent=11 // pred_check_branch
        %546 = sbr.rel (%p544) target = $region20
      $region19: #{sdp_forward.3} parent=11 // pred_region
        _
      $region20: #{sdp_forward.3} parent=11 // pred_fallthru
        _
    $region12: #{sdp_forward.3} parent=5 // pred_fallthru
      _
    %p547 = scmp.lt.s32.totalorder %s24, 16
    // Predicated region
    $region21: #{sdp_forward.3} parent=5 // pred_check
      %p548 = pneg %p547
    $region22: #{sdp_forward.3} parent=5 // pred_check_branch
      %550 = sbr.rel (%p548) target = $region24
    $region23: #{sdp_forward.3} parent=5 // pred_region
      // Predicated region
      $region25: #{sdp_forward.3} parent=23 // pred_check
        %p551 = pneg %p56
      $region26: #{sdp_forward.3} parent=23 // pred_check_branch
        %553 = sbr.rel (%p551) target = $region28
      $region27: #{sdp_forward.3} parent=23 // pred_region
        %p554 = scmp.lt.s32.totalorder %s31, 1
        %s555 = scalar_select %p554, %s31, 1
        %s556 = smul.addr %s555, 2
        %s557 = scalar_lea.vmem %s0, %s556
      $region28: #{sdp_forward.3} parent=23 // pred_fallthru
        _
      // Predicated region
      $region29: #{sdp_forward.3} parent=23 // pred_check
        %p558 = pneg %p82
      $region30: #{sdp_forward.3} parent=23 // pred_check_branch
        %560 = sbr.rel (%p558) target = $region32
      $region31: #{sdp_forward.3} parent=23 // pred_region
        %p561 = scmp.lt.s32.totalorder %s31, 1
        %s562 = scalar_select %p561, %s31, 1
        %s563 = scalar_lea.vmem %s1, %s562
      $region32: #{sdp_forward.3} parent=23 // pred_fallthru
        _
      // Predicated region
      $region33: #{sdp_forward.3} parent=23 // pred_check
        %p564 = pneg %p108
      $region34: #{sdp_forward.3} parent=23 // pred_check_branch
        %566 = sbr.rel (%p564) target = $region36
      $region35: #{sdp_forward.3} parent=23 // pred_region
        %p567 = scmp.lt.s32.totalorder %s31, 1
        %s568 = scalar_select %p567, %s31, 1
        %s569 = scalar_lea.vmem %s2, %s568
      $region36: #{sdp_forward.3} parent=23 // pred_fallthru
        _
      // Predicated region
      $region37: #{sdp_forward.3} parent=23 // pred_check
        %p570 = pneg %p140
      $region38: #{sdp_forward.3} parent=23 // pred_check_branch
        %572 = sbr.rel (%p570) target = $region40
      $region39: #{sdp_forward.3} parent=23 // pred_region
        %p573 = scmp.ge.s32.totalorder %s32, 4
        %s574 = scalar_select %p573, 1, 0
        %p575 = scmp.lt.s32.totalorder %s31, 1
        %s576 = scalar_select %p575, %s31, 1
        %p577 = scmp.lt.s32.totalorder %s574, 1
        %s578 = scalar_select %p577, %s574, 1
        %s579 = smul.addr %s576, 2
        %s580 = sadd.s32 %s578, %s579
        %s581 = smul.addr %s580, 4
        %s582 = scalar_lea.vmem %s3, %s581
        %p583 = scmp.ge.s32.totalorder %s32, 4
        %s584 = scalar_select %p583, 1, 0
      $region40: #{sdp_forward.3} parent=23 // pred_fallthru
        _
      // Predicated region
      $region41: #{sdp_forward.3} parent=23 // pred_check
        %p585 = pneg %p208
      $region42: #{sdp_forward.3} parent=23 // pred_check_branch
        %587 = sbr.rel (%p585) target = $region44
      $region43: #{sdp_forward.3} parent=23 // pred_region
        %p588 = scmp.lt.s32.totalorder %s32, 7
        %s589 = scalar_select %p588, %s32, 7
        %s590 = smul.addr %s589, 8
        %s591 = scalar_lea.vmem %s6, %s590
      $region44: #{sdp_forward.3} parent=23 // pred_fallthru
        _
      // Predicated region
      $region45: #{sdp_forward.3} parent=23 // pred_check
        %p592 = pneg %p234
      $region46: #{sdp_forward.3} parent=23 // pred_check_branch
        %594 = sbr.rel (%p592) target = $region48
      $region47: #{sdp_forward.3} parent=23 // pred_region
        %p595 = scmp.lt.s32.totalorder %s32, 7
        %s596 = scalar_select %p595, %s32, 7
        %s597 = smul.addr %s596, 8
        %s598 = scalar_lea.vmem %s7, %s597
      $region48: #{sdp_forward.3} parent=23 // pred_fallthru
        _
      // Predicated region
      $region49: #{sdp_forward.3} parent=23 // pred_check
        %p599 = pneg %p260
      $region50: #{sdp_forward.3} parent=23 // pred_check_branch
        %601 = sbr.rel (%p599) target = $region52
      $region51: #{sdp_forward.3} parent=23 // pred_region
        %p602 = scmp.lt.s32.totalorder %s32, 7
        %s603 = scalar_select %p602, %s32, 7
        %s604 = smul.addr %s603, 3
        %s605 = smul.addr %s604, 8
        %s606 = scalar_lea.vmem %s8, %s605
      $region52: #{sdp_forward.3} parent=23 // pred_fallthru
        _
      // Predicated region
      $region53: #{sdp_forward.3} parent=23 // pred_check
        %p607 = pneg %p286
      $region54: #{sdp_forward.3} parent=23 // pred_check_branch
        %609 = sbr.rel (%p607) target = $region56
      $region55: #{sdp_forward.3} parent=23 // pred_region
        %p610 = scmp.lt.s32.totalorder %s32, 7
        %s611 = scalar_select %p610, %s32, 7
        %s612 = smul.addr %s611, 3
        %s613 = smul.addr %s612, 8
        %s614 = scalar_lea.vmem %s9, %s613
      $region56: #{sdp_forward.3} parent=23 // pred_fallthru
        _
      // Predicated region
      $region57: #{sdp_forward.3} parent=23 // pred_check
        %p615 = pneg %p312
      $region58: #{sdp_forward.3} parent=23 // pred_check_branch
        %617 = sbr.rel (%p615) target = $region60
      $region59: #{sdp_forward.3} parent=23 // pred_region
        %p618 = scmp.lt.s32.totalorder %s32, 7
        %s619 = scalar_select %p618, %s32, 7
        %s620 = smul.addr %s619, 3
        %s621 = smul.addr %s620, 8
        %s622 = scalar_lea.vmem %s10, %s621
      $region60: #{sdp_forward.3} parent=23 // pred_fallthru
        _
      // Predicated region
      $region61: #{sdp_forward.3} parent=23 // pred_check
        %p623 = pneg %p338
      $region62: #{sdp_forward.3} parent=23 // pred_check_branch
        %625 = sbr.rel (%p623) target = $region64
      $region63: #{sdp_forward.3} parent=23 // pred_region
        %p626 = scmp.lt.s32.totalorder %s32, 7
        %s627 = scalar_select %p626, %s32, 7
        %s628 = smul.addr %s627, 3
        %s629 = smul.addr %s628, 8
        %s630 = scalar_lea.vmem %s11, %s629
      $region64: #{sdp_forward.3} parent=23 // pred_fallthru
        _
      // Predicated region
      $region65: #{sdp_forward.3} parent=23 // pred_check
        %p631 = pneg %p364
      $region66: #{sdp_forward.3} parent=23 // pred_check_branch
        %633 = sbr.rel (%p631) target = $region68
      $region67: #{sdp_forward.3} parent=23 // pred_region
        %p634 = scmp.lt.s32.totalorder %s32, 7
        %s635 = scalar_select %p634, %s32, 7
        %s636 = smul.addr %s635, 3
        %s637 = smul.addr %s636, 8
        %s638 = scalar_lea.vmem %s12, %s637
      $region68: #{sdp_forward.3} parent=23 // pred_fallthru
        _
      // Predicated region
      $region69: #{sdp_forward.3} parent=23 // pred_check
        %p639 = pneg %p390
      $region70: #{sdp_forward.3} parent=23 // pred_check_branch
        %641 = sbr.rel (%p639) target = $region72
      $region71: #{sdp_forward.3} parent=23 // pred_region
        %p642 = scmp.lt.s32.totalorder %s32, 7
        %s643 = scalar_select %p642, %s32, 7
        %s644 = smul.addr %s643, 3
        %s645 = smul.addr %s644, 8
        %s646 = scalar_lea.vmem %s13, %s645
      $region72: #{sdp_forward.3} parent=23 // pred_fallthru
        _
      // Predicated region
      $region73: #{sdp_forward.3} parent=23 // pred_check
        %p647 = pneg %p416
      $region74: #{sdp_forward.3} parent=23 // pred_check_branch
        %649 = sbr.rel (%p647) target = $region76
      $region75: #{sdp_forward.3} parent=23 // pred_region
        %p650 = scmp.lt.s32.totalorder %s32, 7
        %s651 = scalar_select %p650, %s32, 7
        %s652 = smul.addr %s651, 3
        %s653 = smul.addr %s652, 8
        %s654 = scalar_lea.vmem %s14, %s653
      $region76: #{sdp_forward.3} parent=23 // pred_fallthru
        _
      // Predicated region
      $region77: #{sdp_forward.3} parent=23 // pred_check
        %p655 = pneg %p442
      $region78: #{sdp_forward.3} parent=23 // pred_check_branch
        %657 = sbr.rel (%p655) target = $region80
      $region79: #{sdp_forward.3} parent=23 // pred_region
        %p658 = scmp.lt.s32.totalorder %s32, 7
        %s659 = scalar_select %p658, %s32, 7
        %s660 = smul.addr %s659, 3
        %s661 = smul.addr %s660, 8
        %s662 = scalar_lea.vmem %s15, %s661
      $region80: #{sdp_forward.3} parent=23 // pred_fallthru
        _
      // Predicated region
      $region81: #{sdp_forward.3} parent=23 // pred_check
        %p663 = pneg %p468
      $region82: #{sdp_forward.3} parent=23 // pred_check_branch
        %665 = sbr.rel (%p663) target = $region84
      $region83: #{sdp_forward.3} parent=23 // pred_region
        %p666 = scmp.lt.s32.totalorder %s32, 7
        %s667 = scalar_select %p666, %s32, 7
        %s668 = smul.addr %s667, 4
        %s669 = smul.addr %s668, 8
        %s670 = scalar_lea.vmem %s16, %s669
      $region84: #{sdp_forward.3} parent=23 // pred_fallthru
        _
      // Predicated region
      $region85: #{sdp_forward.3} parent=23 // pred_check
        %p671 = pneg %p494
      $region86: #{sdp_forward.3} parent=23 // pred_check_branch
        %673 = sbr.rel (%p671) target = $region88
      $region87: #{sdp_forward.3} parent=23 // pred_region
        %p674 = scmp.lt.s32.totalorder %s32, 7
        %s675 = scalar_select %p674, %s32, 7
        %s676 = smul.addr %s675, 4
        %s677 = smul.addr %s676, 8
        %s678 = scalar_lea.vmem %s17, %s677
      $region88: #{sdp_forward.3} parent=23 // pred_fallthru
        _
    $region24: #{sdp_forward.3} parent=5 // pred_fallthru
      _
    %p679 = scmp.le.s32.totalorder 1, %s24
    %p680 = scmp.lt.s32.totalorder %s24, 17
    %p681 = pnand %p679, %p680
    %p682 = pneg %p681
    // Predicated region
    $region89: #{sdp_forward.3} parent=5 // pred_check
      _
    $region90: #{sdp_forward.3} parent=5 // pred_check_branch
      %684 = sbr.rel (%p681) target = $region92
    $region91: #{sdp_forward.3} parent=5 // pred_region
      %s685 = ssub.s32 %s24, 1
      %p686 = scmp.lt.s32.totalorder %s33, 1
      %s687 = scalar_select %p686, %s33, 1
      %s688 = smul.addr %s687, 2
      %s689 = scalar_lea.vmem %s0, %s688
      %p690 = pneg %p62
      %p691 = pneg %p59
      %p692 = scmp.lt.s32.totalorder %s33, 1
      %s693 = scalar_select %p692, %s33, 1
      %s694 = scalar_lea.vmem %s1, %s693
      %p695 = pneg %p88
      %p696 = pneg %p85
      %p697 = scmp.lt.s32.totalorder %s33, 1
      %s698 = scalar_select %p697, %s33, 1
      %s699 = scalar_lea.vmem %s2, %s698
      %p700 = pneg %p114
      %p701 = pneg %p111
      %p702 = scmp.ge.s32.totalorder %s34, 4
      %s703 = scalar_select %p702, 1, 0
      %p704 = scmp.lt.s32.totalorder %s33, 1
      %s705 = scalar_select %p704, %s33, 1
      %p706 = scmp.lt.s32.totalorder %s703, 1
      %s707 = scalar_select %p706, %s703, 1
      %s708 = smul.addr %s705, 2
      %s709 = sadd.s32 %s707, %s708
      %s710 = smul.addr %s709, 4
      %s711 = scalar_lea.vmem %s3, %s710
      %p712 = pneg %p146
      %p713 = pneg %p143
      %p714 = pneg %p167
      %p715 = pneg %p164
      %p716 = pneg %p188
      %p717 = pneg %p185
      %p718 = scmp.lt.s32.totalorder %s34, 7
      %s719 = scalar_select %p718, %s34, 7
      %s720 = smul.addr %s719, 8
      %s721 = scalar_lea.vmem %s6, %s720
      %p722 = pneg %p214
      %p723 = pneg %p211
      %p724 = scmp.lt.s32.totalorder %s34, 7
      %s725 = scalar_select %p724, %s34, 7
      %s726 = smul.addr %s725, 8
      %s727 = scalar_lea.vmem %s7, %s726
      %p728 = pneg %p240
      %p729 = pneg %p237
      %p730 = scmp.lt.s32.totalorder %s34, 7
      %s731 = scalar_select %p730, %s34, 7
      %s732 = smul.addr %s731, 3
      %s733 = smul.addr %s732, 8
      %s734 = scalar_lea.vmem %s8, %s733
      %p735 = pneg %p266
      %p736 = pneg %p263
      %p737 = scmp.lt.s32.totalorder %s34, 7
      %s738 = scalar_select %p737, %s34, 7
      %s739 = smul.addr %s738, 3
      %s740 = smul.addr %s739, 8
      %s741 = scalar_lea.vmem %s9, %s740
      %p742 = pneg %p292
      %p743 = pneg %p289
      %p744 = scmp.lt.s32.totalorder %s34, 7
      %s745 = scalar_select %p744, %s34, 7
      %s746 = smul.addr %s745, 3
      %s747 = smul.addr %s746, 8
      %s748 = scalar_lea.vmem %s10, %s747
      %p749 = pneg %p318
      %p750 = pneg %p315
      %p751 = scmp.lt.s32.totalorder %s34, 7
      %s752 = scalar_select %p751, %s34, 7
      %s753 = smul.addr %s752, 3
      %s754 = smul.addr %s753, 8
      %s755 = scalar_lea.vmem %s11, %s754
      %p756 = pneg %p344
      %p757 = pneg %p341
      %p758 = scmp.lt.s32.totalorder %s34, 7
      %s759 = scalar_select %p758, %s34, 7
      %s760 = smul.addr %s759, 3
      %s761 = smul.addr %s760, 8
      %s762 = scalar_lea.vmem %s12, %s761
      %p763 = pneg %p370
      %p764 = pneg %p367
      %p765 = scmp.lt.s32.totalorder %s34, 7
      %s766 = scalar_select %p765, %s34, 7
      %s767 = smul.addr %s766, 3
      %s768 = smul.addr %s767, 8
      %s769 = scalar_lea.vmem %s13, %s768
      %p770 = pneg %p396
      %p771 = pneg %p393
      %p772 = scmp.lt.s32.totalorder %s34, 7
      %s773 = scalar_select %p772, %s34, 7
      %s774 = smul.addr %s773, 3
      %s775 = smul.addr %s774, 8
      %s776 = scalar_lea.vmem %s14, %s775
      %p777 = pneg %p422
      %p778 = pneg %p419
      %p779 = scmp.lt.s32.totalorder %s34, 7
      %s780 = scalar_select %p779, %s34, 7
      %s781 = smul.addr %s780, 3
      %s782 = smul.addr %s781, 8
      %s783 = scalar_lea.vmem %s15, %s782
      %p784 = pneg %p448
      %p785 = pneg %p445
      %p786 = scmp.lt.s32.totalorder %s34, 7
      %s787 = scalar_select %p786, %s34, 7
      %s788 = smul.addr %s787, 4
      %s789 = smul.addr %s788, 8
      %s790 = scalar_lea.vmem %s16, %s789
      %p791 = pneg %p474
      %p792 = pneg %p471
      %p793 = scmp.lt.s32.totalorder %s34, 7
      %s794 = scalar_select %p793, %s34, 7
      %s795 = smul.addr %s794, 4
      %s796 = smul.addr %s795, 8
      %s797 = scalar_lea.vmem %s17, %s796
      %p798 = pneg %p500
      %p799 = pneg %p497
      %p800 = pneg %p526
      %p801 = pneg %p523
      %p802 = scmp.lt.s32.totalorder %s33, 1
      %s803 = scalar_select %p802, %s33, 1
      %s804 = scalar_lea.vmem %s18, %s803
      %p805 = scmp.lt.s32.totalorder %s33, 1
      %s806 = scalar_select %p805, %s33, 1
      %s807 = smul.addr %s806, 2
      %s808 = scalar_lea.vmem %s0, %s807
      %p809 = scmp.lt.s32.totalorder %s33, 1
      %s810 = scalar_select %p809, %s33, 1
      %s811 = scalar_lea.vmem %s1, %s810
      %p812 = scmp.lt.s32.totalorder %s33, 1
      %s813 = scalar_select %p812, %s33, 1
      %s814 = scalar_lea.vmem %s2, %s813
      %p815 = scmp.ge.s32.totalorder %s34, 4
      %s816 = scalar_select %p815, 1, 0
      %p817 = scmp.lt.s32.totalorder %s33, 1
      %s818 = scalar_select %p817, %s33, 1
      %p819 = scmp.lt.s32.totalorder %s816, 1
      %s820 = scalar_select %p819, %s816, 1
      %s821 = smul.addr %s818, 2
      %s822 = sadd.s32 %s820, %s821
      %s823 = smul.addr %s822, 4
      %s824 = scalar_lea.vmem %s3, %s823
      %p825 = scmp.ge.s32.totalorder %s34, 4
      %s826 = scalar_select %p825, 1, 0
      %p827 = scmp.lt.s32.totalorder %s34, 7
      %s828 = scalar_select %p827, %s34, 7
      %s829 = smul.addr %s828, 8
      %s830 = scalar_lea.vmem %s6, %s829
      %p831 = scmp.lt.s32.totalorder %s34, 7
      %s832 = scalar_select %p831, %s34, 7
      %s833 = smul.addr %s832, 8
      %s834 = scalar_lea.vmem %s7, %s833
      %p835 = scmp.lt.s32.totalorder %s34, 7
      %s836 = scalar_select %p835, %s34, 7
      %s837 = smul.addr %s836, 3
      %s838 = smul.addr %s837, 8
      %s839 = scalar_lea.vmem %s8, %s838
      %p840 = scmp.lt.s32.totalorder %s34, 7
      %s841 = scalar_select %p840, %s34, 7
      %s842 = smul.addr %s841, 3
      %s843 = smul.addr %s842, 8
      %s844 = scalar_lea.vmem %s9, %s843
      %p845 = scmp.lt.s32.totalorder %s34, 7
      %s846 = scalar_select %p845, %s34, 7
      %s847 = smul.addr %s846, 3
      %s848 = smul.addr %s847, 8
      %s849 = scalar_lea.vmem %s10, %s848
      %p850 = scmp.lt.s32.totalorder %s34, 7
      %s851 = scalar_select %p850, %s34, 7
      %s852 = smul.addr %s851, 3
      %s853 = smul.addr %s852, 8
      %s854 = scalar_lea.vmem %s11, %s853
      %p855 = scmp.lt.s32.totalorder %s34, 7
      %s856 = scalar_select %p855, %s34, 7
      %s857 = smul.addr %s856, 3
      %s858 = smul.addr %s857, 8
      %s859 = scalar_lea.vmem %s12, %s858
      %p860 = scmp.lt.s32.totalorder %s34, 7
      %s861 = scalar_select %p860, %s34, 7
      %s862 = smul.addr %s861, 3
      %s863 = smul.addr %s862, 8
      %s864 = scalar_lea.vmem %s13, %s863
      %p865 = scmp.lt.s32.totalorder %s34, 7
      %s866 = scalar_select %p865, %s34, 7
      %s867 = smul.addr %s866, 3
      %s868 = smul.addr %s867, 8
      %s869 = scalar_lea.vmem %s14, %s868
      %p870 = scmp.lt.s32.totalorder %s34, 7
      %s871 = scalar_select %p870, %s34, 7
      %s872 = smul.addr %s871, 3
      %s873 = smul.addr %s872, 8
      %s874 = scalar_lea.vmem %s15, %s873
      %p875 = scmp.lt.s32.totalorder %s34, 7
      %s876 = scalar_select %p875, %s34, 7
      %s877 = smul.addr %s876, 4
      %s878 = smul.addr %s877, 8
      %s879 = scalar_lea.vmem %s16, %s878
      %p880 = scmp.lt.s32.totalorder %s34, 7
      %s881 = scalar_select %p880, %s34, 7
      %s882 = smul.addr %s881, 4
      %s883 = smul.addr %s882, 8
      %s884 = scalar_lea.vmem %s17, %s883
      %p885 = scmp.lt.s32.totalorder %s33, 1
      %s886 = scalar_select %p885, %s33, 1
      %s887 = scalar_lea.vmem %s18, %s886
      %v889 = vld [vmem:[%s814] sm:$0x1]
      %p890 = scmp.eq.s32.totalorder %s34, 0
      // Predicated region
      $region93: #{sdp_forward.3} parent=91 // pred_check
        %p891 = pneg %p890
      $region94: #{sdp_forward.3} parent=91 // pred_check_branch
        %893 = sbr.rel (%p891) target = $region96
      $region95: #{sdp_forward.3} parent=91 // pred_region
        %v894 = vld [vmem:[%s808] sm:$0x3]
        %v895 = vld [vmem:[%s4] sm:$0x3]
        %s896 = scalar_lea.vmem %s4, 2
        %v897 = vld [vmem:[%s896] sm:$0x3]
        %v898 = vmul.f32 %v897, 1.442695
        %v899 = vpow.pop %v898
        %901 = vset.pattern.permute.xlu0 0
        %902 = vperm.xlu0 %901, %v899
        %v903 = vpop.permute.xlu0 %902
        %v905 = vmul.f32 %v903, %v894
        %907 = vset.pattern.permute.xlu0 0
        %908 = vperm.xlu0 %907, %v895
        %v909 = vpop.permute.xlu0 %908
        %v911 = vadd.f32 %v909, %v905
        %v913 = vperm.slane %v889, 0
        %v915 = vmul.f32 %v911, %v913
        %916 = vst [vmem:[#allocation2] sm:$0x3] %v915
        %918 = vset.pattern.permute.xlu0 0
        %919 = vperm.xlu0 %918, %v897
        %v920 = vpop.permute.xlu0 %919
        %v922 = vmul.f32 %v920, %v913
        %vm923 = vcmask 1041408
        %v924 = vsel %vm923, %v922, 0.0
        %925 = vadd.xlane.f32.xlu0 %v924
        %v926 = vpop.xlane.xlu0 %925
        %v927 = vsel %vm923, %v926, 0.0
        %v928 = vrot.slane %v927, 4
        %v929 = vadd.f32 %v927, %v928
        %v930 = vrot.slane %v929, 2
        %v931 = vadd.f32 %v929, %v930
        %v932 = vrot.slane %v931, 1
        %v933 = vadd.f32 %v931, %v932
        %vm934 = vcmask 0
        %935 = vst.msk [vmem:[#allocation3] sm:$0x1] %vm934, %v933
        %936 = vst.msk [vmem:[#allocation4] sm:$0x1] %vm934, 0.0
        %v937 = vmul.f32 %v894, %v894
        %v938 = vadd.f32 %v937, 1.837877
        %v939 = vmul.f32 %v938, 0.5
        %v940 = vmul.f32 %v939, %v913
        %v941 = vsel %vm923, %v940, 0.0
        %942 = vadd.xlane.f32.xlu0 %v941
        %v943 = vpop.xlane.xlu0 %942
        %v944 = vsel %vm923, %v943, 0.0
        %v945 = vrot.slane %v944, 4
        %v946 = vadd.f32 %v944, %v945
        %v947 = vrot.slane %v946, 2
        %v948 = vadd.f32 %v946, %v947
        %v949 = vrot.slane %v948, 1
        %v950 = vadd.f32 %v948, %v949
        %v951 = vsub.f32 0.0, %v950
        %952 = vst.msk [vmem:[#allocation5] sm:$0x1] %vm934, %v951
      $region96: #{sdp_forward.3} parent=91 // pred_fallthru
        _
      %v953 = vld [vmem:[#allocation2] sm:$0x3]
      %v954 = vld [vmem:[%s824] sm:$0xf]
      %v955 = vld [vmem:[%s830] sm:$0xff]
      %v956 = vld [vmem:[%s834] sm:$0xff]
      %v957 = vld [vmem:[%s839] sm:$0xff]
      %v958 = vld [vmem:[%s839 + $0x8] sm:$0xff]
      %v959 = vld [vmem:[%s839 + $0x10] sm:$0xff]
      %v960 = vld [vmem:[%s844] sm:$0xff]
      %v961 = vld [vmem:[%s844 + $0x8] sm:$0xff]
      %v962 = vld [vmem:[%s844 + $0x10] sm:$0xff]
      %v963 = vld [vmem:[%s849] sm:$0xff]
      %v964 = vld [vmem:[%s849 + $0x8] sm:$0xff]
      %v965 = vld [vmem:[%s849 + $0x10] sm:$0xff]
      %v966 = vld [vmem:[%s854] sm:$0xff]
      %v967 = vld [vmem:[%s854 + $0x8] sm:$0xff]
      %v968 = vld [vmem:[%s854 + $0x10] sm:$0xff]
      %v969 = vld [vmem:[%s859] sm:$0xff]
      %v970 = vld [vmem:[%s859 + $0x8] sm:$0xff]
      %v971 = vld [vmem:[%s859 + $0x10] sm:$0xff]
      %v972 = vld [vmem:[%s864] sm:$0xff]
      %v973 = vld [vmem:[%s864 + $0x8] sm:$0xff]
      %v974 = vld [vmem:[%s864 + $0x10] sm:$0xff]
      %v975 = vld [vmem:[%s869] sm:$0xff]
      %v976 = vld [vmem:[%s869 + $0x8] sm:$0xff]
      %v977 = vld [vmem:[%s869 + $0x10] sm:$0xff]
      %v978 = vld [vmem:[%s874] sm:$0xff]
      %v979 = vld [vmem:[%s874 + $0x8] sm:$0xff]
      %v980 = vld [vmem:[%s874 + $0x10] sm:$0xff]
      %v981 = vld [vmem:[%s879] sm:$0xff]
      %v982 = vld [vmem:[%s879 + $0x8] sm:$0xff]
      %v983 = vld [vmem:[%s879 + $0x10] sm:$0xff]
      %v984 = vld [vmem:[%s879 + $0x18] sm:$0x1f]
      %v985 = vld [vmem:[%s884] sm:$0xff]
      %v986 = vld [vmem:[%s884 + $0x8] sm:$0xff]
      %v987 = vld [vmem:[%s884 + $0x10] sm:$0xff]
      %v988 = vld [vmem:[%s884 + $0x18] sm:$0x1f]
      %990 = vset.pattern.permute.xlu0 0
      %991 = vperm.xlu0 %990, %v955
      %v992 = vpop.permute.xlu0 %991
      %v994 = vperm.slane %v953, 0
      %v995 = vmul.f32 %v992, %v994
      %997 = vset.pattern.permute.xlu0 0
      %998 = vperm.xlu0 %997, %v956
      %v999 = vpop.permute.xlu0 %998
      %v1001 = vadd.f32 %v995, %v999
      %v1002 = vunpack.c.l.bf16 %v954
      %v1003 = vadd.f32 %v1001, %v1002
      %v1004 = vlaneseq
      %v1005 = vand.u32 %v1004, 127
      %v1007 = vperm.slane %v889, 0
      %v1009 = vmul.f32 %v1003, %v1007
      %1010 = vrot.lane.b32.xlu0 %v1009, 1
      %v1011 = vpop.permute.xlu0 %1010
      %vm1012 = vcmp.ge.s32.totalorder %v1005, 1
      %v1013 = vsel %vm1012, 1, 0
      %vm1014 = vcmp.eq.s32.totalorder %v1013, 1
      %v1015 = vsel %vm1014, %v1011, 0.0
      %1017 = vset.pattern.permute.xlu0 0
      %1018 = vperm.xlu0 %1017, %v957
      %v1019 = vpop.permute.xlu0 %1018
      %v1021 = vmul.f32 %v1019, %v1015
      %1022 = vset.pattern.permute.xlu0 1
      %1023 = vperm.xlu0 %1022, %v957
      %v1024 = vpop.permute.xlu0 %1023
      %v1026 = vmul.f32 %v1024, %v1009
      %v1027 = vadd.f32 %v1021, %v1026
      %1028 = vrot.lane.b32.xlu0 %v1009, 127
      %v1029 = vpop.permute.xlu0 %1028
      %vm1030 = vcmp.lt.s32.totalorder %v1005, 127
      %v1031 = vsel %vm1030, 1, 0
      %vm1032 = vcmp.eq.s32.totalorder %v1031, 1
      %v1033 = vsel %vm1032, %v1029, 0.0
      %1034 = vset.pattern.permute.xlu0 2
      %1035 = vperm.xlu0 %1034, %v957
      %v1036 = vpop.permute.xlu0 %1035
      %v1038 = vmul.f32 %v1036, %v1033
      %v1039 = vadd.f32 %v1027, %v1038
      %1041 = vset.pattern.permute.xlu0 0
      %1042 = vperm.xlu0 %1041, %v960
      %v1043 = vpop.permute.xlu0 %1042
      %v1045 = vadd.f32 %v1039, %v1043
      %v1046 = vrot.slane %v1045, 4
      %v1047 = vadd.f32 %v1045, %v1046
      %v1048 = vrot.slane %v1047, 2
      %v1049 = vadd.f32 %v1047, %v1048
      %v1050 = vrot.slane %v1049, 1
      %v1051 = vadd.f32 %v1049, %v1050
      %v1052 = vmul.f32 %v1051, 0.125
      %v1053 = vmul.f32 %v1045, %v1045
      %v1054 = vrot.slane %v1053, 4
      %v1055 = vadd.f32 %v1053, %v1054
      %v1056 = vrot.slane %v1055, 2
      %v1057 = vadd.f32 %v1055, %v1056
      %v1058 = vrot.slane %v1057, 1
      %v1059 = vadd.f32 %v1057, %v1058
      %v1060 = vmul.f32 %v1059, 0.125
      %v1061 = vmul.f32 %v1052, %v1052
      %v1062 = vsub.f32 %v1060, %v1061
      %v1063 = vmax.f32 %v1062, 0.0
      %v1064 = vsub.f32 %v1045, %v1052
      %v1065 = vadd.f32 %v1063, 1e-05
      %v1066 = vrsqrt.pop %v1065
      %v1067 = vmul.f32 %v1066, %v1065
      %v1068 = vmul.f32 %v1067, %v1066
      %v1069 = vmul.f32 0.5, %v1068
      %v1070 = vsub.f32 1.5, %v1069
      %v1071 = vmul.f32 %v1066, %v1070
      %vm1072 = vweird.f32 %v1065
      %vm1073 = vweird.f32 %v1066
      %vm1074 = vmor %vm1072, %vm1073
      %v1075 = vsel %vm1074, %v1066, %v1071
      %v1076 = vmul.f32 %v1064, %v1075
      %1078 = vset.pattern.permute.xlu0 0
      %1079 = vperm.xlu0 %1078, %v963
      %v1080 = vpop.permute.xlu0 %1079
      %v1082 = vmul.f32 %v1076, %v1080
      %1084 = vset.pattern.permute.xlu0 0
      %1085 = vperm.xlu0 %1084, %v966
      %v1086 = vpop.permute.xlu0 %1085
      %v1088 = vadd.f32 %v1082, %v1086
      %v1089 = vmul.f32 %v1088, 0.5
      %v1090 = vmul.f32 %v1088, 0.044715
      %v1091 = vmul.f32 %v1090, %v1088
      %v1092 = vmul.f32 %v1091, %v1088
      %v1093 = vadd.f32 %v1088, %v1092
      %v1094 = vmul.f32 %v1093, 0.7978846
      %v1095 = vtanh.pop %v1094
      %v1096 = vadd.f32 %v1095, 1.0
      %v1097 = vmul.f32 %v1089, %v1096
      %v1098 = vpack.c.bf16 %v969, %v969
      %v1099 = vpack.c.bf16 %v1097, %v1097
      %1101 = vset.pattern.permute.xlu0 0
      %1102 = vperm.xlu0 %1101, %v972
      %v1103 = vpop.permute.xlu0 %1102
      %vm1105 = vcmask 64512
      %v1107 = vsel %vm1105, %v1098, 0
      %vm1109 = vcmask 1043456
      %v1111 = vsel %vm1109, %v1099, 0
      %1113 = vmatpush.bf16.msra.mxu0 0
      %1114 = vmatpush.bf16.msra.mxu0 0
      %1115 = vmatpush.bf16.msra.mxu0 0
      %1116 = vmatpush.bf16.msra.mxu0 0
      %1117 = vmatpush.bf16.msra.mxu0 0
      %1118 = vmatpush.bf16.msra.mxu0 0
      %1119 = vmatpush.bf16.msra.mxu0 0
      %1120 = vmatpush.bf16.msra.mxu0 %v1111
      %1121 = vmatmul.bf16.gmra.mxu0 %v1107
      %v1122 = vpop.f32.mrf.mxu0
      %v1123 = vadd.f32 %v1103, %v1122
      %v1124 = vpop.f32.mrf.mxu0
      %1125 = vdwg.mxu0
      %v1126 = vrot.slane %v1123, 4
      %v1127 = vadd.f32 %v1123, %v1126
      %v1128 = vrot.slane %v1127, 2
      %v1129 = vadd.f32 %v1127, %v1128
      %v1130 = vrot.slane %v1129, 1
      %v1131 = vadd.f32 %v1129, %v1130
      %v1132 = vmul.f32 %v1131, 0.125
      %v1133 = vmul.f32 %v1123, %v1123
      %v1134 = vrot.slane %v1133, 4
      %v1135 = vadd.f32 %v1133, %v1134
      %v1136 = vrot.slane %v1135, 2
      %v1137 = vadd.f32 %v1135, %v1136
      %v1138 = vrot.slane %v1137, 1
      %v1139 = vadd.f32 %v1137, %v1138
      %v1140 = vmul.f32 %v1139, 0.125
      %v1141 = vmul.f32 %v1132, %v1132
      %v1142 = vsub.f32 %v1140, %v1141
      %v1143 = vmax.f32 %v1142, 0.0
      %v1144 = vsub.f32 %v1123, %v1132
      %v1145 = vadd.f32 %v1143, 1e-05
      %v1146 = vrsqrt.pop %v1145
      %v1147 = vmul.f32 %v1146, %v1145
      %v1148 = vmul.f32 %v1147, %v1146
      %v1149 = vmul.f32 0.5, %v1148
      %v1150 = vsub.f32 1.5, %v1149
      %v1151 = vmul.f32 %v1146, %v1150
      %vm1152 = vweird.f32 %v1145
      %vm1153 = vweird.f32 %v1146
      %vm1154 = vmor %vm1152, %vm1153
      %v1155 = vsel %vm1154, %v1146, %v1151
      %v1156 = vmul.f32 %v1144, %v1155
      %1158 = vset.pattern.permute.xlu0 0
      %1159 = vperm.xlu0 %1158, %v975
      %v1160 = vpop.permute.xlu0 %1159
      %v1162 = vmul.f32 %v1156, %v1160
      %1164 = vset.pattern.permute.xlu0 0
      %1165 = vperm.xlu0 %1164, %v978
      %v1166 = vpop.permute.xlu0 %1165
      %v1168 = vadd.f32 %v1162, %v1166
      %v1169 = vmul.f32 %v1168, 0.5
      %v1170 = vmul.f32 %v1168, 0.044715
      %v1171 = vmul.f32 %v1170, %v1168
      %v1172 = vmul.f32 %v1171, %v1168
      %v1173 = vadd.f32 %v1168, %v1172
      %v1174 = vmul.f32 %v1173, 0.7978846
      %v1175 = vtanh.pop %v1174
      %v1176 = vadd.f32 %v1175, 1.0
      %v1177 = vmul.f32 %v1169, %v1176
      %v1178 = vadd.f32 %v1003, %v1177
      %v1179 = vmul.f32 %v1178, %v1007
      %1180 = vrot.lane.b32.xlu0 %v1179, 3
      %v1181 = vpop.permute.xlu0 %1180
      %vm1182 = vcmp.ge.s32.totalorder %v1005, 3
      %v1183 = vsel %vm1182, 1, 0
      %vm1184 = vcmp.eq.s32.totalorder %v1183, 1
      %v1185 = vsel %vm1184, %v1181, 0.0
      %1187 = vset.pattern.permute.xlu0 0
      %1188 = vperm.xlu0 %1187, %v958
      %v1189 = vpop.permute.xlu0 %1188
      %v1191 = vmul.f32 %v1189, %v1185
      %1192 = vset.pattern.permute.xlu0 1
      %1193 = vperm.xlu0 %1192, %v958
      %v1194 = vpop.permute.xlu0 %1193
      %v1196 = vmul.f32 %v1194, %v1179
      %v1197 = vadd.f32 %v1191, %v1196
      %1198 = vrot.lane.b32.xlu0 %v1179, 125
      %v1199 = vpop.permute.xlu0 %1198
      %vm1200 = vcmp.lt.s32.totalorder %v1005, 125
      %v1201 = vsel %vm1200, 1, 0
      %vm1202 = vcmp.eq.s32.totalorder %v1201, 1
      %v1203 = vsel %vm1202, %v1199, 0.0
      %1204 = vset.pattern.permute.xlu0 2
      %1205 = vperm.xlu0 %1204, %v958
      %v1206 = vpop.permute.xlu0 %1205
      %v1208 = vmul.f32 %v1206, %v1203
      %v1209 = vadd.f32 %v1197, %v1208
      %1211 = vset.pattern.permute.xlu0 0
      %1212 = vperm.xlu0 %1211, %v961
      %v1213 = vpop.permute.xlu0 %1212
      %v1215 = vadd.f32 %v1209, %v1213
      %v1216 = vrot.slane %v1215, 4
      %v1217 = vadd.f32 %v1215, %v1216
      %v1218 = vrot.slane %v1217, 2
      %v1219 = vadd.f32 %v1217, %v1218
      %v1220 = vrot.slane %v1219, 1
      %v1221 = vadd.f32 %v1219, %v1220
      %v1222 = vmul.f32 %v1221, 0.125
      %v1223 = vmul.f32 %v1215, %v1215
      %v1224 = vrot.slane %v1223, 4
      %v1225 = vadd.f32 %v1223, %v1224
      %v1226 = vrot.slane %v1225, 2
      %v1227 = vadd.f32 %v1225, %v1226
      %v1228 = vrot.slane %v1227, 1
      %v1229 = vadd.f32 %v1227, %v1228
      %v1230 = vmul.f32 %v1229, 0.125
      %v1231 = vmul.f32 %v1222, %v1222
      %v1232 = vsub.f32 %v1230, %v1231
      %v1233 = vmax.f32 %v1232, 0.0
      %v1234 = vsub.f32 %v1215, %v1222
      %v1235 = vadd.f32 %v1233, 1e-05
      %v1236 = vrsqrt.pop %v1235
      %v1237 = vmul.f32 %v1236, %v1235
      %v1238 = vmul.f32 %v1237, %v1236
      %v1239 = vmul.f32 0.5, %v1238
      %v1240 = vsub.f32 1.5, %v1239
      %v1241 = vmul.f32 %v1236, %v1240
      %vm1242 = vweird.f32 %v1235
      %vm1243 = vweird.f32 %v1236
      %vm1244 = vmor %vm1242, %vm1243
      %v1245 = vsel %vm1244, %v1236, %v1241
      %v1246 = vmul.f32 %v1234, %v1245
      %1248 = vset.pattern.permute.xlu0 0
      %1249 = vperm.xlu0 %1248, %v964
      %v1250 = vpop.permute.xlu0 %1249
      %v1252 = vmul.f32 %v1246, %v1250
      %1254 = vset.pattern.permute.xlu0 0
      %1255 = vperm.xlu0 %1254, %v967
      %v1256 = vpop.permute.xlu0 %1255
      %v1258 = vadd.f32 %v1252, %v1256
      %v1259 = vmul.f32 %v1258, 0.5
      %v1260 = vmul.f32 %v1258, 0.044715
      %v1261 = vmul.f32 %v1260, %v1258
      %v1262 = vmul.f32 %v1261, %v1258
      %v1263 = vadd.f32 %v1258, %v1262
      %v1264 = vmul.f32 %v1263, 0.7978846
      %v1265 = vtanh.pop %v1264
      %v1266 = vadd.f32 %v1265, 1.0
      %v1267 = vmul.f32 %v1259, %v1266
      %v1268 = vpack.c.bf16 %v970, %v970
      %v1269 = vpack.c.bf16 %v1267, %v1267
      %1271 = vset.pattern.permute.xlu0 0
      %1272 = vperm.xlu0 %1271, %v973
      %v1273 = vpop.permute.xlu0 %1272
      %v1276 = vsel %vm1105, %v1268, 0
      %v1279 = vsel %vm1109, %v1269, 0
      %1281 = vmatpush.bf16.msra.mxu0 0
      %1282 = vmatpush.bf16.msra.mxu0 0
      %1283 = vmatpush.bf16.msra.mxu0 0
      %1284 = vmatpush.bf16.msra.mxu0 0
      %1285 = vmatpush.bf16.msra.mxu0 0
      %1286 = vmatpush.bf16.msra.mxu0 0
      %1287 = vmatpush.bf16.msra.mxu0 0
      %1288 = vmatpush.bf16.msra.mxu0 %v1279
      %1289 = vmatmul.bf16.gmra.mxu0 %v1276
      %v1290 = vpop.f32.mrf.mxu0
      %v1291 = vadd.f32 %v1273, %v1290
      %v1292 = vpop.f32.mrf.mxu0
      %1293 = vdwg.mxu0
      %v1294 = vrot.slane %v1291, 4
      %v1295 = vadd.f32 %v1291, %v1294
      %v1296 = vrot.slane %v1295, 2
      %v1297 = vadd.f32 %v1295, %v1296
      %v1298 = vrot.slane %v1297, 1
      %v1299 = vadd.f32 %v1297, %v1298
      %v1300 = vmul.f32 %v1299, 0.125
      %v1301 = vmul.f32 %v1291, %v1291
      %v1302 = vrot.slane %v1301, 4
      %v1303 = vadd.f32 %v1301, %v1302
      %v1304 = vrot.slane %v1303, 2
      %v1305 = vadd.f32 %v1303, %v1304
      %v1306 = vrot.slane %v1305, 1
      %v1307 = vadd.f32 %v1305, %v1306
      %v1308 = vmul.f32 %v1307, 0.125
      %v1309 = vmul.f32 %v1300, %v1300
      %v1310 = vsub.f32 %v1308, %v1309
      %v1311 = vmax.f32 %v1310, 0.0
      %v1312 = vsub.f32 %v1291, %v1300
      %v1313 = vadd.f32 %v1311, 1e-05
      %v1314 = vrsqrt.pop %v1313
      %v1315 = vmul.f32 %v1314, %v1313
      %v1316 = vmul.f32 %v1315, %v1314
      %v1317 = vmul.f32 0.5, %v1316
      %v1318 = vsub.f32 1.5, %v1317
      %v1319 = vmul.f32 %v1314, %v1318
      %vm1320 = vweird.f32 %v1313
      %vm1321 = vweird.f32 %v1314
      %vm1322 = vmor %vm1320, %vm1321
      %v1323 = vsel %vm1322, %v1314, %v1319
      %v1324 = vmul.f32 %v1312, %v1323
      %1326 = vset.pattern.permute.xlu0 0
      %1327 = vperm.xlu0 %1326, %v976
      %v1328 = vpop.permute.xlu0 %1327
      %v1330 = vmul.f32 %v1324, %v1328
      %1332 = vset.pattern.permute.xlu0 0
      %1333 = vperm.xlu0 %1332, %v979
      %v1334 = vpop.permute.xlu0 %1333
      %v1336 = vadd.f32 %v1330, %v1334
      %v1337 = vmul.f32 %v1336, 0.5
      %v1338 = vmul.f32 %v1336, 0.044715
      %v1339 = vmul.f32 %v1338, %v1336
      %v1340 = vmul.f32 %v1339, %v1336
      %v1341 = vadd.f32 %v1336, %v1340
      %v1342 = vmul.f32 %v1341, 0.7978846
      %v1343 = vtanh.pop %v1342
      %v1344 = vadd.f32 %v1343, 1.0
      %v1345 = vmul.f32 %v1337, %v1344
      %v1346 = vadd.f32 %v1178, %v1345
      %v1347 = vmul.f32 %v1346, %v1007
      %1348 = vrot.lane.b32.xlu0 %v1347, 9
      %v1349 = vpop.permute.xlu0 %1348
      %vm1350 = vcmp.ge.s32.totalorder %v1005, 9
      %v1351 = vsel %vm1350, 1, 0
      %vm1352 = vcmp.eq.s32.totalorder %v1351, 1
      %v1353 = vsel %vm1352, %v1349, 0.0
      %1355 = vset.pattern.permute.xlu0 0
      %1356 = vperm.xlu0 %1355, %v959
      %v1357 = vpop.permute.xlu0 %1356
      %v1359 = vmul.f32 %v1357, %v1353
      %1360 = vset.pattern.permute.xlu0 1
      %1361 = vperm.xlu0 %1360, %v959
      %v1362 = vpop.permute.xlu0 %1361
      %v1364 = vmul.f32 %v1362, %v1347
      %v1365 = vadd.f32 %v1359, %v1364
      %1366 = vrot.lane.b32.xlu0 %v1347, 119
      %v1367 = vpop.permute.xlu0 %1366
      %vm1368 = vcmp.lt.s32.totalorder %v1005, 119
      %v1369 = vsel %vm1368, 1, 0
      %vm1370 = vcmp.eq.s32.totalorder %v1369, 1
      %v1371 = vsel %vm1370, %v1367, 0.0
      %1372 = vset.pattern.permute.xlu0 2
      %1373 = vperm.xlu0 %1372, %v959
      %v1374 = vpop.permute.xlu0 %1373
      %v1376 = vmul.f32 %v1374, %v1371
      %v1377 = vadd.f32 %v1365, %v1376
      %1379 = vset.pattern.permute.xlu0 0
      %1380 = vperm.xlu0 %1379, %v962
      %v1381 = vpop.permute.xlu0 %1380
      %v1383 = vadd.f32 %v1377, %v1381
      %v1384 = vrot.slane %v1383, 4
      %v1385 = vadd.f32 %v1383, %v1384
      %v1386 = vrot.slane %v1385, 2
      %v1387 = vadd.f32 %v1385, %v1386
      %v1388 = vrot.slane %v1387, 1
      %v1389 = vadd.f32 %v1387, %v1388
      %v1390 = vmul.f32 %v1389, 0.125
      %v1391 = vmul.f32 %v1383, %v1383
      %v1392 = vrot.slane %v1391, 4
      %v1393 = vadd.f32 %v1391, %v1392
      %v1394 = vrot.slane %v1393, 2
      %v1395 = vadd.f32 %v1393, %v1394
      %v1396 = vrot.slane %v1395, 1
      %v1397 = vadd.f32 %v1395, %v1396
      %v1398 = vmul.f32 %v1397, 0.125
      %v1399 = vmul.f32 %v1390, %v1390
      %v1400 = vsub.f32 %v1398, %v1399
      %v1401 = vmax.f32 %v1400, 0.0
      %v1402 = vsub.f32 %v1383, %v1390
      %v1403 = vadd.f32 %v1401, 1e-05
      %v1404 = vrsqrt.pop %v1403
      %v1405 = vmul.f32 %v1404, %v1403
      %v1406 = vmul.f32 %v1405, %v1404
      %v1407 = vmul.f32 0.5, %v1406
      %v1408 = vsub.f32 1.5, %v1407
      %v1409 = vmul.f32 %v1404, %v1408
      %vm1410 = vweird.f32 %v1403
      %vm1411 = vweird.f32 %v1404
      %vm1412 = vmor %vm1410, %vm1411
      %v1413 = vsel %vm1412, %v1404, %v1409
      %v1414 = vmul.f32 %v1402, %v1413
      %1416 = vset.pattern.permute.xlu0 0
      %1417 = vperm.xlu0 %1416, %v965
      %v1418 = vpop.permute.xlu0 %1417
      %v1420 = vmul.f32 %v1414, %v1418
      %1422 = vset.pattern.permute.xlu0 0
      %1423 = vperm.xlu0 %1422, %v968
      %v1424 = vpop.permute.xlu0 %1423
      %v1426 = vadd.f32 %v1420, %v1424
      %v1427 = vmul.f32 %v1426, 0.5
      %v1428 = vmul.f32 %v1426, 0.044715
      %v1429 = vmul.f32 %v1428, %v1426
      %v1430 = vmul.f32 %v1429, %v1426
      %v1431 = vadd.f32 %v1426, %v1430
      %v1432 = vmul.f32 %v1431, 0.7978846
      %v1433 = vtanh.pop %v1432
      %v1434 = vadd.f32 %v1433, 1.0
      %v1435 = vmul.f32 %v1427, %v1434
      %v1436 = vpack.c.bf16 %v971, %v971
      %v1437 = vpack.c.bf16 %v1435, %v1435
      %1439 = vset.pattern.permute.xlu0 0
      %1440 = vperm.xlu0 %1439, %v974
      %v1441 = vpop.permute.xlu0 %1440
      %v1444 = vsel %vm1105, %v1436, 0
      %v1447 = vsel %vm1109, %v1437, 0
      %1449 = vmatpush.bf16.msra.mxu0 0
      %1450 = vmatpush.bf16.msra.mxu0 0
      %1451 = vmatpush.bf16.msra.mxu0 0
      %1452 = vmatpush.bf16.msra.mxu0 0
      %1453 = vmatpush.bf16.msra.mxu0 0
      %1454 = vmatpush.bf16.msra.mxu0 0
      %1455 = vmatpush.bf16.msra.mxu0 0
      %1456 = vmatpush.bf16.msra.mxu0 %v1447
      %1457 = vmatmul.bf16.gmra.mxu0 %v1444
      %v1458 = vpop.f32.mrf.mxu0
      %v1459 = vadd.f32 %v1441, %v1458
      %v1460 = vpop.f32.mrf.mxu0
      %1461 = vdwg.mxu0
      %v1462 = vrot.slane %v1459, 4
      %v1463 = vadd.f32 %v1459, %v1462
      %v1464 = vrot.slane %v1463, 2
      %v1465 = vadd.f32 %v1463, %v1464
      %v1466 = vrot.slane %v1465, 1
      %v1467 = vadd.f32 %v1465, %v1466
      %v1468 = vmul.f32 %v1467, 0.125
      %v1469 = vmul.f32 %v1459, %v1459
      %v1470 = vrot.slane %v1469, 4
      %v1471 = vadd.f32 %v1469, %v1470
      %v1472 = vrot.slane %v1471, 2
      %v1473 = vadd.f32 %v1471, %v1472
      %v1474 = vrot.slane %v1473, 1
      %v1475 = vadd.f32 %v1473, %v1474
      %v1476 = vmul.f32 %v1475, 0.125
      %v1477 = vmul.f32 %v1468, %v1468
      %v1478 = vsub.f32 %v1476, %v1477
      %v1479 = vmax.f32 %v1478, 0.0
      %v1480 = vsub.f32 %v1459, %v1468
      %v1481 = vadd.f32 %v1479, 1e-05
      %v1482 = vrsqrt.pop %v1481
      %v1483 = vmul.f32 %v1482, %v1481
      %v1484 = vmul.f32 %v1483, %v1482
      %v1485 = vmul.f32 0.5, %v1484
      %v1486 = vsub.f32 1.5, %v1485
      %v1487 = vmul.f32 %v1482, %v1486
      %vm1488 = vweird.f32 %v1481
      %vm1489 = vweird.f32 %v1482
      %vm1490 = vmor %vm1488, %vm1489
      %v1491 = vsel %vm1490, %v1482, %v1487
      %v1492 = vmul.f32 %v1480, %v1491
      %1494 = vset.pattern.permute.xlu0 0
      %1495 = vperm.xlu0 %1494, %v977
      %v1496 = vpop.permute.xlu0 %1495
      %v1498 = vmul.f32 %v1492, %v1496
      %1500 = vset.pattern.permute.xlu0 0
      %1501 = vperm.xlu0 %1500, %v980
      %v1502 = vpop.permute.xlu0 %1501
      %v1504 = vadd.f32 %v1498, %v1502
      %v1505 = vmul.f32 %v1504, 0.5
      %v1506 = vmul.f32 %v1504, 0.044715
      %v1507 = vmul.f32 %v1506, %v1504
      %v1508 = vmul.f32 %v1507, %v1504
      %v1509 = vadd.f32 %v1504, %v1508
      %v1510 = vmul.f32 %v1509, 0.7978846
      %v1511 = vtanh.pop %v1510
      %v1512 = vadd.f32 %v1511, 1.0
      %v1513 = vmul.f32 %v1505, %v1512
      %v1514 = vadd.f32 %v1346, %v1513
      %v1515 = vmul.f32 %v1514, %v1007
      %v1516 = vpack.c.bf16 %v982, %v981
      %v1517 = vpack.c.bf16 %v984, %v983
      %v1518 = vpack.c.bf16 %v1515, %v1515
      %1520 = vset.pattern.permute.xlu0 0
      %1521 = vperm.xlu0 %1520, %v985
      %v1522 = vpop.permute.xlu0 %1521
      %1525 = vset.pattern.permute.xlu0 0
      %1526 = vperm.xlu0 %1525, %v986
      %v1527 = vpop.permute.xlu0 %1526
      %1530 = vset.pattern.permute.xlu0 0
      %1531 = vperm.xlu0 %1530, %v987
      %v1532 = vpop.permute.xlu0 %1531
      %1535 = vset.pattern.permute.xlu0 0
      %1536 = vperm.xlu0 %1535, %v988
      %v1537 = vpop.permute.xlu0 %1536
      %v1540 = vsel %vm1105, %v1516, 0
      %v1543 = vsel %vm1105, %v1517, 0
      %v1546 = vsel %vm1109, %v1518, 0
      %1548 = vmatpush.bf16.msra.mxu0 0
      %1549 = vmatpush.bf16.msra.mxu0 0
      %1550 = vmatpush.bf16.msra.mxu0 0
      %1551 = vmatpush.bf16.msra.mxu0 0
      %1552 = vmatpush.bf16.msra.mxu0 0
      %1553 = vmatpush.bf16.msra.mxu0 0
      %1554 = vmatpush.bf16.msra.mxu0 0
      %1555 = vmatpush.bf16.msra.mxu0 %v1546
      %1556 = vmatmul.bf16.gmra.mxu0 %v1540
      %v1557 = vpop.f32.mrf.mxu0
      %v1558 = vadd.f32 %v1522, %v1557
      %v1559 = vpop.f32.mrf.mxu0
      %v1560 = vadd.f32 %v1527, %v1559
      %1561 = vmatmul.bf16.gmra.mxu0 %v1543
      %v1562 = vpop.f32.mrf.mxu0
      %v1563 = vadd.f32 %v1532, %v1562
      %v1564 = vpop.f32.mrf.mxu0
      %v1565 = vadd.f32 %v1537, %v1564
      %1566 = vdwg.mxu0
      %v1567 = vmul.f32 %v1558, %v1007
      %v1568 = vmul.f32 %v1560, %v1007
      %v1569 = vmul.f32 %v1563, %v1007
      %v1570 = vmul.f32 %v1565, %v1007
      %v1571 = vmul.f32 %v1567, 0.35355338
      %v1572 = vmul.f32 %v1568, 0.35355338
      %v1573 = vmul.f32 %v1569, 0.35355338
      %vm1574 = vcmp.ge.f32.partialorder %v953, -5.0
      %vm1575 = vcmp.le.f32.partialorder %v953, 5.0
      %vm1576 = vmand %vm1574, %vm1575
      %v1577 = vmax.f32 %v953, -5.0
      %v1578 = vmin.f32 %v1577, 5.0
      %v1579 = vlaneseq
      %v1580 = vshrl.u32 %v1579, 7
      %v1581 = vadd.s32 %v1580, 8
      %vm1582 = vcmp.lt.s32.totalorder %v1005, %v1580
      %vm1583 = vcmp.lt.s32.totalorder %v1005, %v1581
      %v1584 = vsel %vm1582, 1, 0
      %v1585 = vsel %vm1583, 1, 0
      %v1586 = vcvt.s32.f32 %v1584
      %v1587 = vcvt.s32.f32 %v1585
      %vm1590 = vcmask 1045504
      %v1591 = vrot.slane %v1572, 2
      %v1592 = vrot.slane %v1573, 2
      %v1593 = vsel %vm1590, %v1591, %v1592
      %vm1596 = vcmask 1041408
      %v1597 = vsel %vm1596, %v1572, -inf
      %v1598 = vmax.f32 %v1571, %v1597
      %v1599 = vrot.slane %v1598, 4
      %v1600 = vmax.f32 %v1598, %v1599
      %v1601 = vrot.slane %v1600, 2
      %v1602 = vmax.f32 %v1600, %v1601
      %v1603 = vrot.slane %v1602, 1
      %v1604 = vmax.f32 %v1602, %v1603
      %v1605 = vsel %vm1596, %v1592, -inf
      %v1606 = vmax.f32 %v1593, %v1605
      %v1607 = vrot.slane %v1606, 4
      %v1608 = vmax.f32 %v1606, %v1607
      %v1609 = vrot.slane %v1608, 2
      %v1610 = vmax.f32 %v1608, %v1609
      %v1611 = vrot.slane %v1610, 1
      %v1612 = vmax.f32 %v1610, %v1611
      %v1613 = vsub.f32 %v1571, %v1604
      %v1614 = vsub.f32 %v1593, %v1612
      %v1615 = vsub.f32 %v1572, %v1604
      %v1616 = vsub.f32 %v1592, %v1612
      %v1617 = vmul.f32 %v1613, 1.442695
      %v1618 = vpow.pop %v1617
      %v1619 = vmul.f32 %v1614, 1.442695
      %v1620 = vpow.pop %v1619
      %v1621 = vmul.f32 %v1615, 1.442695
      %v1622 = vpow.pop %v1621
      %v1623 = vmul.f32 %v1616, 1.442695
      %v1624 = vpow.pop %v1623
      %v1625 = vsel %vm1596, %v1622, 0.0
      %v1626 = vadd.f32 %v1618, %v1625
      %v1627 = vrot.slane %v1626, 4
      %v1628 = vadd.f32 %v1626, %v1627
      %v1629 = vrot.slane %v1628, 2
      %v1630 = vadd.f32 %v1628, %v1629
      %v1631 = vrot.slane %v1630, 1
      %v1632 = vadd.f32 %v1630, %v1631
      %v1633 = vsel %vm1596, %v1624, 0.0
      %v1634 = vadd.f32 %v1620, %v1633
      %v1635 = vrot.slane %v1634, 4
      %v1636 = vadd.f32 %v1634, %v1635
      %v1637 = vrot.slane %v1636, 2
      %v1638 = vadd.f32 %v1636, %v1637
      %v1639 = vrot.slane %v1638, 1
      %v1640 = vadd.f32 %v1638, %v1639
      %v1641 = vrcp.pop %v1632
      %v1642 = vmul.f32 %v1632, %v1641
      %v1643 = vsub.f32 1.0, %v1642
      %v1644 = vmul.f32 %v1641, %v1643
      %v1645 = vadd.f32 %v1641, %v1644
      %vm1646 = vweird.f32 %v1632
      %vm1647 = vweird.f32 %v1641
      %vm1648 = vmor %vm1646, %vm1647
      %v1649 = vsel %vm1648, %v1641, %v1645
      %v1650 = vand.u32 2147483647, %v1632
      %vm1651 = vcmp.eq.f32.partialorder %v1650, 8.507059e+37
      %v1652 = vand.u32 %v1632, 2147483648
      %v1653 = vor.u32 1.1754944e-38, %v1652
      %v1654 = vsel %vm1651, %v1653, %v1649
      %v1655 = vrcp.pop %v1640
      %v1656 = vmul.f32 %v1640, %v1655
      %v1657 = vsub.f32 1.0, %v1656
      %v1658 = vmul.f32 %v1655, %v1657
      %v1659 = vadd.f32 %v1655, %v1658
      %vm1660 = vweird.f32 %v1640
      %vm1661 = vweird.f32 %v1655
      %vm1662 = vmor %vm1660, %vm1661
      %v1663 = vsel %vm1662, %v1655, %v1659
      %v1664 = vand.u32 2147483647, %v1640
      %vm1665 = vcmp.eq.f32.partialorder %v1664, 8.507059e+37
      %v1666 = vand.u32 %v1640, 2147483648
      %v1667 = vor.u32 1.1754944e-38, %v1666
      %v1668 = vsel %vm1665, %v1667, %v1663
      %v1669 = vmul.f32 %v1618, %v1654
      %v1670 = vmul.f32 %v1620, %v1668
      %v1671 = vmul.f32 %v1622, %v1654
      %v1672 = vmul.f32 %v1624, %v1668
      %v1673 = vmul.f32 %v1669, 0.99
      %v1674 = vmul.f32 %v1670, 0.99
      %v1675 = vmul.f32 %v1671, 0.99
      %v1676 = vmul.f32 %v1672, 0.99
      %v1677 = vadd.f32 %v1673, 0.001
      %v1678 = vadd.f32 %v1674, 0.001
      %v1679 = vadd.f32 %v1675, 0.001
      %v1680 = vadd.f32 %v1676, 0.001
      %vm1681 = vcmask 80896
      %v1683 = vsel %vm1681, %v1586, 0
      %v1686 = vsel %vm1681, %v1587, 0
      %v1689 = vsel %vm1596, %v1679, 0
      %v1692 = vsel %vm1596, %v1680, 0
      %1694 = vmatpush.msra.mxu0 0.0
      %1695 = vmatpush.msra.mxu0 0.0
      %1696 = vmatpush.msra.mxu0 0.0
      %1697 = vmatpush.msra.mxu0 0.0
      %1698 = vmatpush.msra.mxu0 0.0
      %1699 = vmatpush.msra.mxu0 0.0
      %1700 = vmatpush.msra.mxu0 0.0
      %1701 = vmatpush.msra.mxu0 0.0
      %1702 = vmatpush.msra.mxu0 0.0
      %1703 = vmatpush.msra.mxu0 0.0
      %1704 = vmatpush.msra.mxu0 0.0
      %1705 = vmatpush.msra.mxu0 0.0
      %1706 = vmatpush.msra.mxu0 0.0
      %1707 = vmatpush.msra.mxu0 0.0
      %1708 = vmatpush.msra.mxu0 %v1689
      %1709 = vmatpush.msra.mxu0 %v1677
      %1710 = vmatmul.f32.gmra.mxu0 %v1683
      %v1711 = vpop.f32.mrf.mxu0
      %v1712 = vadd.f32 0.0, %v1711
      %1713 = vmatmul.f32.gmra.mxu0 %v1686
      %v1714 = vpop.f32.mrf.mxu0
      %v1715 = vadd.f32 0.0, %v1714
      %1716 = vdwg.mxu0
      %1717 = vmatpush.msra.mxu0 0.0
      %1718 = vmatpush.msra.mxu0 0.0
      %1719 = vmatpush.msra.mxu0 0.0
      %1720 = vmatpush.msra.mxu0 0.0
      %1721 = vmatpush.msra.mxu0 0.0
      %1722 = vmatpush.msra.mxu0 0.0
      %1723 = vmatpush.msra.mxu0 0.0
      %1724 = vmatpush.msra.mxu0 0.0
      %1725 = vmatpush.msra.mxu0 0.0
      %1726 = vmatpush.msra.mxu0 0.0
      %1727 = vmatpush.msra.mxu0 0.0
      %1728 = vmatpush.msra.mxu0 0.0
      %1729 = vmatpush.msra.mxu0 0.0
      %1730 = vmatpush.msra.mxu0 0.0
      %1731 = vmatpush.msra.mxu0 %v1692
      %1732 = vmatpush.msra.mxu0 %v1678
      %1733 = vmatmul.f32.gmra.mxu0 %v1683
      %v1734 = vpop.f32.mrf.mxu0
      %v1735 = vadd.f32 0.0, %v1734
      %1736 = vmatmul.f32.gmra.mxu0 %v1686
      %v1737 = vpop.f32.mrf.mxu0
      %v1738 = vadd.f32 0.0, %v1737
      %1739 = vdwg.mxu0
      %v1740 = vmul.f32 %v1712, 10.0
      %v1741 = vmul.f32 %v1735, 10.0
      %v1742 = vmul.f32 %v1715, 10.0
      %v1743 = vmul.f32 %v1738, 10.0
      %v1744 = vadd.f32 %v1740, -5.0
      %v1745 = vadd.f32 %v1741, -5.0
      %v1746 = vadd.f32 %v1742, -5.0
      %v1747 = vadd.f32 %v1743, -5.0
      %vm1748 = vcmp.eq.s32.totalorder %v1580, 10
      %vm1749 = vcmp.eq.s32.totalorder %v1581, 10
      %v1750 = vsel %vm1748, 5.0, %v1744
      %v1751 = vsel %vm1748, 5.0, %v1745
      %v1752 = vsel %vm1749, 5.0, %v1746
      %v1753 = vsel %vm1749, 5.0, %v1747
      %vm1758 = vcmask 1040384
      %v1759 = vrot.slane %v1750, 7
      %v1760 = vrot.slane %v1751, 7
      %v1761 = vrot.slane %v1752, 7
      %v1762 = vsel %vm1758, %v1759, %v1761
      %v1763 = vrot.slane %v1753, 7
      %v1764 = vsel %vm1758, %v1760, %v1763
      %v1769 = vsub.f32 %v1750, %v1759
      %v1770 = vsub.f32 %v1751, %v1760
      %v1771 = vsub.f32 %v1752, %v1762
      %v1772 = vsub.f32 %v1753, %v1764
      %v1773 = vmax.f32 %v1569, 0.0
      %v1774 = vmax.f32 %v1570, 0.0
      %v1775 = vand.u32 2147483647, %v1569
      %v1776 = vand.u32 2147483647, %v1570
      %v1777 = vsub.f32 0.0, %v1775
      %v1778 = vsub.f32 0.0, %v1776
      %v1779 = vmul.f32 %v1777, 1.442695
      %v1780 = vpow.pop %v1779
      %v1781 = vmul.f32 %v1778, 1.442695
      %v1782 = vpow.pop %v1781
      %v1783 = vadd.f32 %v1780, 1.0
      %v1784 = vadd.f32 %v1782, 1.0
      %v1785 = vlog2.pop %v1783
      %v1786 = vmul.f32 %v1785, 0.6931472
      %v1787 = vlog2.pop %v1784
      %v1788 = vmul.f32 %v1787, 0.6931472
      %v1789 = vadd.f32 %v1773, %v1786
      %v1790 = vadd.f32 %v1774, %v1788
      %v1791 = vadd.f32 %v1789, 0.001
      %v1792 = vadd.f32 %v1790, 0.001
      %vm1795 = vcmask 1044480
      %v1796 = vrot.slane %v1791, 3
      %v1797 = vrot.slane %v1792, 3
      %v1798 = vsel %vm1795, %v1796, %v1797
      %v1801 = vsel %vm1758, 1.0, %v1798
      %v1802 = vrot.slane %v1791, 4
      %v1803 = vrot.slane %v1792, 4
      %v1804 = vsel %vm1109, %v1802, %v1803
      %v1807 = vsel %vm1758, %v1803, 1.0
      %v1808 = vadd.f32 %v1750, 1e-06
      %v1809 = vadd.f32 %v1752, 1e-06
      %v1810 = vsel %vm1748, %v1808, %v1750
      %v1811 = vsel %vm1749, %v1809, %v1752
      %v1812 = vperm.slane %v1578, 1
      %vm1813 = vcmp.ge.f32.partialorder %v1812, %v1810
      %vm1814 = vcmp.ge.f32.partialorder %v1812, %v1811
      %v1815 = vsel %vm1813, 1, 0
      %v1816 = vsel %vm1814, 1, 0
      %vm1817 = vcmask 1042432
      %v1818 = vsel %vm1817, %v1816, 0
      %v1819 = vadd.s32 %v1815, %v1818
      %v1820 = vrot.slane %v1819, 4
      %v1821 = vadd.s32 %v1819, %v1820
      %v1822 = vrot.slane %v1821, 2
      %v1823 = vadd.s32 %v1821, %v1822
      %v1824 = vrot.slane %v1823, 1
      %v1825 = vadd.s32 %v1823, %v1824
      %v1826 = vsub.s32 %v1825, 1
      %vm1827 = vcmp.gt.s32.totalorder %v1826, 0
      %v1828 = vsel %vm1827, %v1826, 0
      %vm1829 = vcmp.lt.s32.totalorder %v1828, 9
      %v1830 = vsel %vm1829, %v1828, 9
      %vm1831 = vcmp.eq.s32.totalorder %v1580, %v1830
      %vm1832 = vcmp.eq.s32.totalorder %v1581, %v1830
      %v1833 = vsel %vm1831, 1, 0
      %v1834 = vsel %vm1832, 1, 0
      %v1835 = vcvt.s32.f32 %v1833
      %v1836 = vcvt.s32.f32 %v1834
      %v1837 = vmul.f32 %v1750, %v1835
      %v1838 = vmul.f32 %v1752, %v1836
      %v1839 = vsel %vm1596, %v1838, 0.0
      %v1840 = vadd.f32 %v1837, %v1839
      %v1841 = vrot.slane %v1840, 4
      %v1842 = vadd.f32 %v1840, %v1841
      %v1843 = vrot.slane %v1842, 2
      %v1844 = vadd.f32 %v1842, %v1843
      %v1845 = vrot.slane %v1844, 1
      %v1846 = vadd.f32 %v1844, %v1845
      %v1849 = vrot.slane %v1835, 7
      %v1850 = vrot.slane %v1836, 7
      %v1851 = vsel %vm1758, %v1849, %v1850
      %v1854 = vmul.f32 %v1769, %v1849
      %v1855 = vmul.f32 %v1771, %v1851
      %vm1858 = vcmask 1046528
      %v1859 = vrot.slane %v1854, 1
      %v1860 = vrot.slane %v1855, 1
      %v1861 = vsel %vm1858, %v1859, %v1860
      %v1864 = vsel %vm1596, %v1860, 0.0
      %v1865 = vadd.f32 %v1861, %v1864
      %v1866 = vrot.slane %v1865, 4
      %v1867 = vadd.f32 %v1865, %v1866
      %v1868 = vrot.slane %v1867, 2
      %v1869 = vadd.f32 %v1867, %v1868
      %v1870 = vrot.slane %v1869, 1
      %v1871 = vadd.f32 %v1869, %v1870
      %v1872 = vmul.f32 %v1751, %v1835
      %v1873 = vmul.f32 %v1753, %v1836
      %v1874 = vsel %vm1596, %v1873, 0.0
      %v1875 = vadd.f32 %v1872, %v1874
      %v1876 = vrot.slane %v1875, 4
      %v1877 = vadd.f32 %v1875, %v1876
      %v1878 = vrot.slane %v1877, 2
      %v1879 = vadd.f32 %v1877, %v1878
      %v1880 = vrot.slane %v1879, 1
      %v1881 = vadd.f32 %v1879, %v1880
      %v1882 = vmul.f32 %v1770, %v1849
      %v1883 = vmul.f32 %v1772, %v1851
      %v1886 = vrot.slane %v1882, 1
      %v1887 = vrot.slane %v1883, 1
      %v1888 = vsel %vm1858, %v1886, %v1887
      %v1891 = vsel %vm1596, %v1887, 0.0
      %v1892 = vadd.f32 %v1888, %v1891
      %v1893 = vrot.slane %v1892, 4
      %v1894 = vadd.f32 %v1892, %v1893
      %v1895 = vrot.slane %v1894, 2
      %v1896 = vadd.f32 %v1894, %v1895
      %v1897 = vrot.slane %v1896, 1
      %v1898 = vadd.f32 %v1896, %v1897
      %v1899 = vmul.f32 %v1801, %v1835
      %v1900 = vmul.f32 %v1797, %v1836
      %v1901 = vsel %vm1596, %v1900, 0.0
      %v1902 = vadd.f32 %v1899, %v1901
      %v1903 = vrot.slane %v1902, 4
      %v1904 = vadd.f32 %v1902, %v1903
      %v1905 = vrot.slane %v1904, 2
      %v1906 = vadd.f32 %v1904, %v1905
      %v1907 = vrot.slane %v1906, 1
      %v1908 = vadd.f32 %v1906, %v1907
      %v1909 = vmul.f32 %v1804, %v1835
      %v1910 = vmul.f32 %v1807, %v1836
      %v1911 = vsel %vm1596, %v1910, 0.0
      %v1912 = vadd.f32 %v1909, %v1911
      %v1913 = vrot.slane %v1912, 4
      %v1914 = vadd.f32 %v1912, %v1913
      %v1915 = vrot.slane %v1914, 2
      %v1916 = vadd.f32 %v1914, %v1915
      %v1917 = vrot.slane %v1916, 1
      %v1918 = vadd.f32 %v1916, %v1917
      %v1919 = vrcp.pop %v1871
      %v1920 = vmul.f32 %v1871, %v1919
      %v1921 = vsub.f32 1.0, %v1920
      %v1922 = vmul.f32 %v1919, %v1921
      %v1923 = vadd.f32 %v1919, %v1922
      %vm1924 = vweird.f32 %v1871
      %vm1925 = vweird.f32 %v1919
      %vm1926 = vmor %vm1924, %vm1925
      %v1927 = vsel %vm1926, %v1919, %v1923
      %v1928 = vand.u32 2147483647, %v1871
      %vm1929 = vcmp.eq.f32.partialorder %v1928, 8.507059e+37
      %v1930 = vand.u32 %v1871, 2147483648
      %v1931 = vor.u32 1.1754944e-38, %v1930
      %v1932 = vsel %vm1929, %v1931, %v1927
      %v1933 = vmul.f32 %v1898, %v1932
      %v1934 = vsub.f32 %v1578, %v1846
      %v1935 = vmul.f32 %v1934, %v1932
      %v1936 = vsub.f32 1.0, %v1935
      %v1937 = vmul.f32 %v1935, %v1936
      %v1938 = vmul.f32 %v1933, %v1935
      %v1939 = vmul.f32 %v1938, %v1935
      %v1940 = vmul.f32 %v1908, %v1937
      %v1941 = vadd.f32 %v1939, %v1940
      %v1942 = vmul.f32 %v1898, %v1941
      %v1943 = vadd.f32 %v1908, %v1918
      %v1944 = vmul.f32 %v1933, 2.0
      %v1945 = vsub.f32 %v1943, %v1944
      %v1946 = vmul.f32 %v1945, %v1937
      %v1947 = vadd.f32 %v1933, %v1946
      %v1948 = vrcp.pop %v1947
      %v1949 = vmul.f32 %v1947, %v1948
      %v1950 = vsub.f32 1.0, %v1949
      %v1951 = vmul.f32 %v1948, %v1950
      %v1952 = vadd.f32 %v1948, %v1951
      %vm1953 = vweird.f32 %v1947
      %vm1954 = vweird.f32 %v1948
      %vm1955 = vmor %vm1953, %vm1954
      %v1956 = vsel %vm1955, %v1948, %v1952
      %v1957 = vand.u32 2147483647, %v1947
      %vm1958 = vcmp.eq.f32.partialorder %v1957, 8.507059e+37
      %v1959 = vand.u32 %v1947, 2147483648
      %v1960 = vor.u32 1.1754944e-38, %v1959
      %v1961 = vsel %vm1958, %v1960, %v1956
      %v1962 = vmul.f32 %v1942, %v1961
      %v1963 = vadd.f32 %v1881, %v1962
      %v1964 = vmul.f32 %v1933, %v1933
      %v1965 = vmul.f32 %v1918, %v1935
      %v1966 = vmul.f32 %v1965, %v1935
      %v1967 = vmul.f32 %v1944, %v1937
      %v1968 = vadd.f32 %v1966, %v1967
      %v1969 = vmul.f32 %v1908, %v1936
      %v1970 = vmul.f32 %v1969, %v1936
      %v1971 = vadd.f32 %v1968, %v1970
      %v1972 = vmul.f32 %v1964, %v1971
      %v1973 = vmul.f32 %v1961, %v1961
      %v1974 = vmul.f32 %v1972, %v1973
      %v1975 = vlog2.pop %v1974
      %v1976 = vmul.f32 %v1975, 0.6931472
      %v1977 = vsel %vm1576, %v1963, %v953
      %v1978 = vsel %vm1576, %v1976, 0.0
      %v1979 = vmul.f32 %v1978, %v1007
      %vm1980 = vcmask 1041409
      %v1981 = vsel %vm1980, %v1979, 0.0
      %1982 = vadd.xlane.f32.xlu0 %v1981
      %v1983 = vpop.xlane.xlu0 %1982
      %v1984 = vadd.f32 %v1983, 0.0
      %v1985 = vmul.f32 %v1977, %v1007
      %1986 = vst [vmem:[#allocation2 - $0x1] sm:$0x2] %v1985
      %v1987 = vmul.f32 %v953, %v889
      %1988 = vst [vmem:[#allocation2 + $0x1] sm:$0x1] %v1987
      %p1989 = scmp.lt.s32.totalorder %s34, 4
      %v1990 = vld [vmem:[#allocation3] sm:$0x1]
      %s1991 = scalar_select %p1989, 1, 0
      %v1992 = vstv %s1991
      %vm1993 = vcmp.eq.s32.totalorder %v1992, 1
      %v1994 = vsel %vm1993, %v1984, 0.0
      %v1996 = vperm.slane %v1994, 1
      %v1998 = vadd.f32 %v1990, %v1996
      %vm1999 = vcmask 0
      %2000 = vst.msk [vmem:[#allocation3] sm:$0x1] %vm1999, %v1998
      %v2001 = vld [vmem:[#allocation4] sm:$0x1]
      %v2002 = vsel %vm1993, 0.0, %v1984
      %v2004 = vperm.slane %v2002, 1
      %v2006 = vadd.f32 %v2001, %v2004
      %2007 = vst.msk [vmem:[#allocation4] sm:$0x1] %vm1999, %v2006
      %p2008 = scmp.eq.s32.totalorder %s34, 3
      // Predicated region
      $region97: #{sdp_forward.3} parent=91 // pred_check
        %p2009 = pneg %p2008
      $region98: #{sdp_forward.3} parent=91 // pred_check_branch
        %2011 = sbr.rel (%p2009) target = $region100
      $region99: #{sdp_forward.3} parent=91 // pred_region
        %v2012 = vld [vmem:[#allocation2] sm:$0x3]
        %v2013 = vld [vmem:[%s811] sm:$0x1]
        %v2014 = vmul.f32 %v2012, 0.5
        %v2015 = vtanh.pop %v2014
        %v2016 = vadd.f32 %v2015, 1.0
        %v2017 = vmul.f32 %v2016, 0.5
        %v2018 = vmul.f32 %v2017, %v889
        %v2019 = vsub.f32 %v2013, %v2018
        %v2020 = vmul.f32 %v2019, %v889
        %v2021 = vld [vmem:[#allocation3] sm:$0x1]
        %v2022 = vsub.f32 0.0, %v2012
        %v2023 = vmax.f32 %v2022, 0.0
        %v2024 = vand.u32 2147483647, %v2022
        %v2025 = vsub.f32 0.0, %v2024
        %v2026 = vmul.f32 %v2025, 1.442695
        %v2027 = vpow.pop %v2026
        %v2028 = vadd.f32 %v2027, 1.0
        %v2029 = vlog2.pop %v2028
        %v2030 = vmul.f32 %v2029, 0.6931472
        %v2031 = vadd.f32 %v2023, %v2030
        %v2032 = vsub.f32 0.0, %v2031
        %v2033 = vsub.f32 0.0, %v2022
        %v2034 = vmax.f32 %v2033, 0.0
        %v2035 = vand.u32 2147483647, %v2033
        %v2036 = vsub.f32 0.0, %v2035
        %v2037 = vmul.f32 %v2036, 1.442695
        %v2038 = vpow.pop %v2037
        %v2039 = vadd.f32 %v2038, 1.0
        %v2040 = vlog2.pop %v2039
        %v2041 = vmul.f32 %v2040, 0.6931472
        %v2042 = vadd.f32 %v2034, %v2041
        %v2043 = vsub.f32 0.0, %v2042
        %v2044 = vadd.f32 %v2032, %v2043
        %v2045 = vmul.f32 %v2044, %v889
        %v2046 = vsel %vm1758, %v2045, 0.0
        %2047 = vadd.xlane.f32.xlu0 %v2046
        %v2048 = vpop.xlane.xlu0 %2047
        %v2049 = vadd.f32 %v2048, 0.0
        %v2050 = vadd.f32 %v2021, %v2049
        %2051 = vst.msk [vmem:[#allocation3] sm:$0x1] %vm1999, %v2050
        %v2052 = vmax.f32 %v2020, 1e-05
        %v2053 = vlog2.pop %v2052
        %v2054 = vmul.f32 %v2053, 0.6931472
        %v2055 = vmul.f32 %v2054, %v889
        %v2056 = vld [vmem:[#allocation4] sm:$0x1]
        %v2057 = vsub.f32 0.0, %v2055
        %v2058 = vsel %vm1758, %v2057, 0.0
        %2059 = vadd.xlane.f32.xlu0 %v2058
        %v2060 = vpop.xlane.xlu0 %2059
        %v2061 = vadd.f32 %v2060, 0.0
        %v2062 = vadd.f32 %v2056, %v2061
        %2063 = vst.msk [vmem:[#allocation4] sm:$0x1] %vm1999, %v2062
        %v2064 = vld [vmem:[%s5] sm:$0x3]
        %s2065 = scalar_lea.vmem %s5, 2
        %v2066 = vld [vmem:[%s2065] sm:$0x3]
        %v2067 = vmul.f32 %v2066, 1.442695
        %v2068 = vpow.pop %v2067
        %2070 = vset.pattern.permute.xlu0 0
        %2071 = vperm.xlu0 %2070, %v2068
        %v2072 = vpop.permute.xlu0 %2071
        %v2074 = vmul.f32 %v2072, %v2055
        %2076 = vset.pattern.permute.xlu0 0
        %2077 = vperm.xlu0 %2076, %v2064
        %v2078 = vpop.permute.xlu0 %2077
        %v2080 = vadd.f32 %v2078, %v2074
        %v2081 = vmul.f32 %v2080, %v889
        %2082 = vst [vmem:[#allocation2] sm:$0x1] %v2081
        %v2083 = vmul.f32 %v2072, %v2012
        %v2084 = vadd.f32 %v2078, %v2083
        %v2085 = vmul.f32 %v2084, %v1007
        %2086 = vst [vmem:[#allocation2] sm:$0x2] %v2085
        %v2087 = vld [vmem:[#allocation4] sm:$0x1]
        %2089 = vset.pattern.permute.xlu0 0
        %2090 = vperm.xlu0 %2089, %v2066
        %v2091 = vpop.permute.xlu0 %2090
        %v2093 = vmul.f32 %v2091, %v1007
        %v2094 = vsel %vm1596, %v2093, 0.0
        %2095 = vadd.xlane.f32.xlu0 %v2094
        %v2096 = vpop.xlane.xlu0 %2095
        %v2097 = vsel %vm1596, %v2096, 0.0
        %v2098 = vrot.slane %v2097, 4
        %v2099 = vadd.f32 %v2097, %v2098
        %v2100 = vrot.slane %v2099, 2
        %v2101 = vadd.f32 %v2099, %v2100
        %v2102 = vrot.slane %v2101, 1
        %v2103 = vadd.f32 %v2101, %v2102
        %v2104 = vadd.f32 %v2087, %v2103
        %2105 = vst.msk [vmem:[#allocation4] sm:$0x1] %vm1999, %v2104
      $region100: #{sdp_forward.3} parent=91 // pred_fallthru
        _
      %p2106 = scmp.eq.s32.totalorder %s34, 7
      // Predicated region
      $region101: #{sdp_forward.3} parent=91 // pred_check
        %p2107 = pneg %p2106
      $region102: #{sdp_forward.3} parent=91 // pred_check_branch
        %2109 = sbr.rel (%p2107) target = $region104
      $region103: #{sdp_forward.3} parent=91 // pred_region
        %v2110 = vld [vmem:[#allocation2] sm:$0x3]
        %v2111 = vmul.f32 %v2110, %v2110
        %v2112 = vadd.f32 %v2111, 1.837877
        %v2113 = vmul.f32 %v2112, 0.5
        %v2114 = vmul.f32 %v2113, %v1007
        %v2115 = vsel %vm1596, %v2114, 0.0
        %2116 = vadd.xlane.f32.xlu0 %v2115
        %v2117 = vpop.xlane.xlu0 %2116
        %v2118 = vsel %vm1596, %v2117, 0.0
        %v2119 = vrot.slane %v2118, 4
        %v2120 = vadd.f32 %v2118, %v2119
        %v2121 = vrot.slane %v2120, 2
        %v2122 = vadd.f32 %v2120, %v2121
        %v2123 = vrot.slane %v2122, 1
        %v2124 = vadd.f32 %v2122, %v2123
        %v2125 = vld [vmem:[#allocation4] sm:$0x1]
        %v2126 = vsub.f32 %v2124, %v2125
        %v2127 = vld [vmem:[#allocation5] sm:$0x1]
        %v2128 = vld [vmem:[#allocation3] sm:$0x1]
        %v2129 = vsub.f32 %v2127, %v2128
        %v2130 = vadd.f32 %v2126, %v2129
        %2131 = vst.msk [vmem:[%s887] sm:$0x1] %vm1999, %v2130
      $region104: #{sdp_forward.3} parent=91 // pred_fallthru
        _
      %p2132 = scmp.lt.s32.totalorder %s33, 1
      %s2133 = scalar_select %p2132, %s33, 1
      %s2134 = scalar_lea.vmem %s18, %s2133
      // Predicated region
      $region105: #{sdp_forward.3} parent=91 // pred_check
        %p2135 = pneg %p523
      $region106: #{sdp_forward.3} parent=91 // pred_check_branch
        %2137 = sbr.rel (%p2135) target = $region108
      $region107: #{sdp_forward.3} parent=91 // pred_region
        _
      $region108: #{sdp_forward.3} parent=91 // pred_fallthru
        _
    $region92: #{sdp_forward.3} parent=5 // pred_fallthru
      _
    %p2138 = scmp.le.s32.totalorder 2, %s24
    // Predicated region
    $region109: #{sdp_forward.3} parent=5 // pred_check
      %p2139 = pneg %p2138
    $region110: #{sdp_forward.3} parent=5 // pred_check_branch
      %2141 = sbr.rel (%p2139) target = $region112
    $region111: #{sdp_forward.3} parent=5 // pred_region
      %s2142 = ssub.s32 %s24, 2
      // Predicated region
      $region113: #{sdp_forward.3} parent=111 // pred_check
        %p2143 = pneg %p529
      $region114: #{sdp_forward.3} parent=111 // pred_check_branch
        %2145 = sbr.rel (%p2143) target = $region116
      $region115: #{sdp_forward.3} parent=111 // pred_region
        %p2146 = scmp.lt.s32.totalorder %s35, 1
        %s2147 = scalar_select %p2146, %s35, 1
        %s2148 = scalar_lea.vmem %s18, %s2147
      $region116: #{sdp_forward.3} parent=111 // pred_fallthru
        _
    $region112: #{sdp_forward.3} parent=5 // pred_fallthru
      _
  $region6: #{sdp_forward.3} parent=0 // loop_footer
    %s28 = sadd.s32 1, %s24
  $region7: #{sdp_forward.3} parent=0 // loop_footer_branch
    %23 = sbr.rel target = $region3
  $region8: #{sdp_forward.3} parent=0 // loop_exit
    _

</llo_original>
